<compile_context>
chip_gen: v5e
topology: v5e:2x2
jax: 0.10.0
libtpu: 0.0.40
codegen_flags: <defaults>
</compile_context>

<pallas_src>
import functools

import jax
import jax.numpy as jnp
from jax.experimental import pallas as pl
from jax.experimental.pallas import tpu as pltpu

IN_CH = 3
EMBED = 768
PATCH = 16
IMG = 224
NPATCH = (IMG // PATCH) * (IMG // PATCH)      # 196 patch tokens per image
SEQ = NPATCH + 1                              # 197 (cls appended at the end)
PDIM = IN_CH * PATCH * PATCH                  # 768 im2col columns, order (c, ph, pw)
RPI = 208                                     # padded rows/image: multiple of 16 (bf16
                                              # packing) and 8 (f32 sublanes)


def _up_to_encoder_kernel(p_ref, w_ref, bias_ref, o_ref, acc_ref, *, bt):
    """One grid step = `bt` images.

    p_ref    : (bt*208, 768) bf16  flattened patches (rows 196..207 per image are zero)
    w_ref    : (768, 768)    bf16  conv weight reshaped to (in=c*ph*pw, out=embed)
    bias_ref : (197, 768)    f32   rows :196 = pos[:196]+conv_b, row 196 = cls+pos[196]
    o_ref    : (bt, 197, 768)      output tokens
    acc_ref  : (bt*208, 768) f32   VMEM scratch for the merged matmul result
    """
    # One long-M matmul per step: MXU weight pushes amortized over all bt images.
    acc_ref[...] = jnp.dot(p_ref[...], w_ref[...], preferred_element_type=jnp.float32)
    bias = bias_ref[...]
    for b in range(bt):                       # static unroll, bt <= 8
        # Per-image slab starts at 208*b (sublane aligned -> no relayout).  Row 196
        # of the slab is zero (padded patch row), so adding the folded bias makes it
        # exactly cls + pos[196]; rows :196 become patch_emb + conv_b + pos[:196].
        slab = acc_ref[b * RPI:b * RPI + SEQ, :]
        o_ref[b] = (slab + bias).astype(o_ref.dtype)


def _is_dual_tensorcore():
    """True on parts with two TensorCores per chip (v7x)."""
    try:
        kind = jax.devices()[0].device_kind.lower()
    except Exception:
        return False
    return ("v7" in kind) or ("7x" in kind)


def _pick_batch_tile(batch, dual_tc):
    """Largest of (8, 4, 2, 1) dividing the batch.  On dual-TC chips prefer an even
    number of grid steps so both TensorCores get balanced work; on single-TC chips
    just take the biggest tile (fewer per-step pipeline overheads, bigger matmul)."""
    cands = [t for t in (8, 4, 2, 1) if batch % t == 0]
    if dual_tc and batch >= 2:
        for t in cands:
            if (batch // t) % 2 == 0:
                return t
        for t in cands:
            if batch // t >= 2:
                return t
    return cands[0]


@functools.partial(jax.jit, static_argnames=("out_dtype",))
def up_to_encoder(x, conv_w, conv_b, cls_token, pos_token, *, out_dtype=jnp.float32):
    """x: (B, 3, 224, 224) NCHW float32 -> (B, 197, 768) out_dtype."""
    B, C, H, W = x.shape
    hp, wp = H // PATCH, W // PATCH

    # ---- im2col for a stride==kernel conv (no overlap), done in bf16 so the XLA
    # transpose moves half the bytes.  Column order (c, ph, pw) matches the
    # flattened Conv2d weight (out, in, kh, kw).  Each image is zero-padded from
    # 196 to 208 rows so the final flatten is a pure bitcast and the kernel's
    # per-image slabs stay sublane aligned.
    xb = x.astype(jnp.bfloat16)
    xp = xb.reshape(B, C, hp, PATCH, wp, PATCH).transpose(0, 2, 4, 1, 3, 5)
    patches = xp.reshape(B, hp * wp, C * PATCH * PATCH)             # (B,196,768) bf16
    patches = jnp.pad(patches, ((0, 0), (0, RPI - NPATCH), (0, 0)))  # (B,208,768)
    patches = patches.reshape(B * RPI, PDIM)                         # (B*208,768) bf16

    w_mat = conv_w.reshape(EMBED, PDIM).T.astype(jnp.bfloat16)       # (768,768) bf16

    # Fold all additive constants into one (197,768) f32 bias.
    pos = pos_token.reshape(SEQ, EMBED).astype(jnp.float32)
    bias = jnp.concatenate(
        [pos[:NPATCH] + conv_b.reshape(1, EMBED),
         pos[NPATCH:] + cls_token.reshape(1, EMBED)], axis=0)        # (197,768) f32

    bt = _pick_batch_tile(B, _is_dual_tensorcore())
    grid = (B // bt,)

    kernel = functools.partial(_up_to_encoder_kernel, bt=bt)
    out = pl.pallas_call(
        kernel,
        out_shape=jax.ShapeDtypeStruct((B, SEQ, EMBED), out_dtype),
        grid_spec=pltpu.PrefetchScalarGridSpec(
            num_scalar_prefetch=0,
            grid=grid,
            in_specs=[
                pl.BlockSpec((bt * RPI, PDIM), lambda i: (i, 0)),
                pl.BlockSpec((PDIM, EMBED), lambda i: (0, 0)),
                pl.BlockSpec((SEQ, EMBED), lambda i: (0, 0)),
            ],
            out_specs=pl.BlockSpec((bt, SEQ, EMBED), lambda i: (i, 0, 0)),
            scratch_shapes=[pltpu.VMEM((bt * RPI, EMBED), jnp.float32)],
        ),
        compiler_params=pltpu.CompilerParams(
            dimension_semantics=("parallel",),
            # ~23 MiB working set at bt=8 (double-buffered in/out + resident
            # weight/bias + matmul scratch); 40 MiB is safe on v5e/v6e (128 MiB
            # VMEM) and v7x (64 MiB per TC).
            vmem_limit_bytes=40 * 1024 * 1024,
        ),
        cost_estimate=pl.CostEstimate(
            flops=2 * B * RPI * PDIM * EMBED,
            bytes_accessed=(patches.size * 2 + w_mat.size * 2 + bias.size * 4
                            + B * SEQ * EMBED * jnp.dtype(out_dtype).itemsize),
            transcendentals=0,
        ),
    )(patches, w_mat, bias)
    return out


def _reference(x, conv_w, conv_b, cls_token, pos_token):
    """Pure-JAX f32 reference mirroring the PyTorch forward (for validation)."""
    y = jax.lax.conv_general_dilated(
        x, conv_w, window_strides=(PATCH, PATCH), padding="VALID",
        dimension_numbers=("NCHW", "OIHW", "NCHW"),
        precision=jax.lax.Precision.HIGHEST)
    y = y + conv_b.reshape(1, EMBED, 1, 1)
    B = x.shape[0]
    y = y.reshape(B, EMBED, NPATCH).transpose(0, 2, 1)               # (B,196,768)
    cls = jnp.broadcast_to(cls_token.reshape(1, 1, EMBED), (B, 1, EMBED))
    y = jnp.concatenate([y, cls], axis=1)                            # cls at the END
    return y + pos_token.reshape(1, SEQ, EMBED)


if __name__ == "__main__":
    key = jax.random.PRNGKey(0)
    k_x, k_w, k_b, k_cls, k_pos = jax.random.split(key, 5)

    # Deterministic synthetic parameters (shapes from UpToEncoder.__init__/forward).
    conv_w = jax.random.normal(k_w, (EMBED, IN_CH, PATCH, PATCH), dtype=jnp.float32) * 0.02
    conv_b = jax.random.normal(k_b, (EMBED,), dtype=jnp.float32) * 0.02
    cls_token = jax.random.normal(k_cls, (1, 1, EMBED), dtype=jnp.float32)
    pos_token = jax.random.normal(k_pos, (1, SEQ, EMBED), dtype=jnp.float32)

    # B=2 exercises the small-tile path; B=8 exercises the full merged-matmul path.
    for B in (2, 8):
        kx = jax.random.fold_in(k_x, B)
        x = jax.random.normal(kx, (B, IN_CH, IMG, IMG), dtype=jnp.float32)

        out = jax.block_until_ready(up_to_encoder(x, conv_w, conv_b, cls_token, pos_token))
        ref = jax.block_until_ready(_reference(x, conv_w, conv_b, cls_token, pos_token))

        assert out.shape == (B, SEQ, EMBED), out.shape
        max_err = float(jnp.max(jnp.abs(out - ref)))
        # bf16 inputs + f32 accumulation vs f32 reference -> loosened tolerance.
        assert jnp.allclose(out, ref, atol=3e-2, rtol=3e-2), max_err

    print("KERNEL_OK")
</pallas_src>

<mosaic_0001>
module attributes {stable_mosaic.version = 11 : i64} {
  func.func @_up_to_encoder_kernel(%arg0: i32, %arg1: memref<416x768xbf16, #tpu.memory_space<vmem>>, %arg2: memref<768x768xbf16, #tpu.memory_space<vmem>>, %arg3: memref<197x768xf32, #tpu.memory_space<vmem>>, %arg4: memref<2x197x768xf32, #tpu.memory_space<vmem>>, %arg5: memref<416x768xf32, #tpu.memory_space<vmem>>) attributes {dimension_semantics = [#tpu.dimension_semantics<parallel>], iteration_bounds = array<i64: 1>, scalar_prefetch = 0 : i64, scratch_operands = 1 : i64, tpu.core_type = #tpu.core_type<tc>, window_params = [{transform_indices = @transform_0, window_bounds = array<i64: 416, 768>}, {pipeline_mode = #tpu.pipeline_mode<synchronous>, transform_indices = @transform_1, window_bounds = array<i64: 768, 768>}, {pipeline_mode = #tpu.pipeline_mode<synchronous>, transform_indices = @transform_2, window_bounds = array<i64: 197, 768>}, {transform_indices = @transform_3, window_bounds = array<i64: 2, 197, 768>}]} {
    %c0 = arith.constant 0 : index
    %c0_0 = arith.constant 0 : index
    %0 = vector.load %arg1[%c0, %c0_0] : memref<416x768xbf16, #tpu.memory_space<vmem>>, vector<416x768xbf16>
    %c0_1 = arith.constant 0 : index
    %c0_2 = arith.constant 0 : index
    %1 = vector.load %arg2[%c0_1, %c0_2] : memref<768x768xbf16, #tpu.memory_space<vmem>>, vector<768x768xbf16>
    %cst = arith.constant dense<0.000000e+00> : vector<416x768xf32>
    %2 = tpu.matmul %0, %1, %cst {dimension_numbers = #tpu.dot_dimension_numbers<[1], [0], [0], [1], [0, 0, 1, 1], [], []>} : vector<416x768xbf16>, vector<768x768xbf16>, vector<416x768xf32> -> vector<416x768xf32>
    %c0_3 = arith.constant 0 : index
    %c0_4 = arith.constant 0 : index
    %3 = vector.load %arg5[%c0_3, %c0_4] : memref<416x768xf32, #tpu.memory_space<vmem>>, vector<416x768xf32>
    tpu.vector_store %arg5[%c0_3, %c0_4], %2 {strides = array<i32>} : memref<416x768xf32, #tpu.memory_space<vmem>>, vector<416x768xf32>,
    %c0_5 = arith.constant 0 : index
    %c0_6 = arith.constant 0 : index
    %4 = vector.load %arg3[%c0_5, %c0_6] : memref<197x768xf32, #tpu.memory_space<vmem>>, vector<197x768xf32>
    %c0_7 = arith.constant 0 : index
    %c0_8 = arith.constant 0 : index
    %5 = vector.load %arg5[%c0_7, %c0_8] : memref<416x768xf32, #tpu.memory_space<vmem>>, vector<197x768xf32>
    %6 = arith.addf %5, %4 : vector<197x768xf32>
    %c0_9 = arith.constant 0 : index
    %c0_10 = arith.constant 0 : index
    %c0_11 = arith.constant 0 : index
    %7 = vector.load %arg4[%c0_9, %c0_10, %c0_11] : memref<2x197x768xf32, #tpu.memory_space<vmem>>, vector<1x197x768xf32>
    %8 = vector.shape_cast %7 : vector<1x197x768xf32> to vector<197x768xf32>
    %9 = vector.shape_cast %6 : vector<197x768xf32> to vector<1x197x768xf32>
    tpu.vector_store %arg4[%c0_9, %c0_10, %c0_11], %9 {strides = array<i32>} : memref<2x197x768xf32, #tpu.memory_space<vmem>>, vector<1x197x768xf32>,
    %c208 = arith.constant 208 : index
    %c0_12 = arith.constant 0 : index
    %10 = vector.load %arg5[%c208, %c0_12] : memref<416x768xf32, #tpu.memory_space<vmem>>, vector<197x768xf32>
    %11 = arith.addf %10, %4 : vector<197x768xf32>
    %c1 = arith.constant 1 : index
    %c0_13 = arith.constant 0 : index
    %c0_14 = arith.constant 0 : index
    %12 = vector.load %arg4[%c1, %c0_13, %c0_14] : memref<2x197x768xf32, #tpu.memory_space<vmem>>, vector<1x197x768xf32>
    %13 = vector.shape_cast %12 : vector<1x197x768xf32> to vector<197x768xf32>
    %14 = vector.shape_cast %11 : vector<197x768xf32> to vector<1x197x768xf32>
    tpu.vector_store %arg4[%c1, %c0_13, %c0_14], %14 {strides = array<i32>} : memref<2x197x768xf32, #tpu.memory_space<vmem>>, vector<1x197x768xf32>,
    return
  }
  func.func @transform_0(%arg0: i32) -> (i32, i32) {
    %c0_i32 = arith.constant 0 : i32
    %c0_i32_0 = arith.constant 0 : i32
    return %arg0, %c0_i32 : i32, i32
  }
  func.func @transform_1(%arg0: i32) -> (i32, i32) {
    %c0_i32 = arith.constant 0 : i32
    %c0_i32_0 = arith.constant 0 : i32
    %c0_i32_1 = arith.constant 0 : i32
    return %c0_i32, %c0_i32_0 : i32, i32
  }
  func.func @transform_2(%arg0: i32) -> (i32, i32) {
    %c0_i32 = arith.constant 0 : i32
    %c0_i32_0 = arith.constant 0 : i32
    %c0_i32_1 = arith.constant 0 : i32
    return %c0_i32, %c0_i32_0 : i32, i32
  }
  func.func @transform_3(%arg0: i32) -> (i32, i32, i32) {
    %c0_i32 = arith.constant 0 : i32
    %c0_i32_0 = arith.constant 0 : i32
    %c0_i32_1 = arith.constant 0 : i32
    return %arg0, %c0_i32, %c0_i32_0 : i32, i32, i32
  }
}

</mosaic_0001>

<llo_original>
// kernel: up_to_encoder.1
$region0: #{up_to_encoder.1}
  #allocation0 [shape = 'u32[]', space=smem, size = 0x4, offset = 0x4, fixed_abs, tag = 'smem constant byte address 0x4 - core index']
  #allocation1 [shape = 'u32[72,128]{1,0:T(1,128)}', space=vmem, size = 0x9000, scoped, tag = 'internal scratch']
  #allocation2 [shape = 'f32[416,768]{1,0:T(8,128)}', space=vmem, size = 0x138000, scoped, tag = 'scratch operand']
  %s0 = inlined_call_operand.vmem [shape: bf16[416,768], index: 0, kind: input, shape index: {}]
  %s1 = inlined_call_operand.vmem [shape: bf16[768,768], index: 1, kind: input, shape index: {}]
  %s2 = inlined_call_operand.vmem [shape: f32[197,768], index: 2, kind: input, shape index: {}]
  %s3 = inlined_call_operand.vmem [shape: f32[2,197,768], index: 3, kind: output, shape index: {}]
  %s4 = sld [smem:[#allocation0]]
  $region22: #{up_to_encoder.1} parent=0
    _
  %s6 = ssub.s32 1, %s4
  %s7 = scalar_select 0, %s6, %s4
  // Predicated region
  $region2: #{up_to_encoder.1} parent=0 // pred_check
    _
  $region3: #{up_to_encoder.1} parent=0 // pred_check_branch
    %9 = sbr.rel (0) target = $region5
  $region4: #{up_to_encoder.1} parent=0 // pred_region
    _
  $region5: #{up_to_encoder.1} parent=0 // pred_fallthru
    _
  // Predicated region
  $region6: #{up_to_encoder.1} parent=0 // pred_check
    _
  $region7: #{up_to_encoder.1} parent=0 // pred_check_branch
    %11 = sbr.rel (0) target = $region9
  $region8: #{up_to_encoder.1} parent=0 // pred_region
    _
  $region9: #{up_to_encoder.1} parent=0 // pred_fallthru
    _
  // Predicated region
  $region10: #{up_to_encoder.1} parent=0 // pred_check
    _
  $region11: #{up_to_encoder.1} parent=0 // pred_check_branch
    %13 = sbr.rel (0) target = $region13
  $region12: #{up_to_encoder.1} parent=0 // pred_region
    _
  $region13: #{up_to_encoder.1} parent=0 // pred_fallthru
    _
  %v14 = vld [vmem:[%s0] sm:$0xff]
  %v15 = vld [vmem:[%s0 + $0x8] sm:$0xff]
  %v16 = vld [vmem:[%s0 + $0x10] sm:$0xff]
  %v17 = vld [vmem:[%s0 + $0x18] sm:$0xff]
  %v18 = vld [vmem:[%s0 + $0x20] sm:$0xff]
  %v19 = vld [vmem:[%s0 + $0x28] sm:$0xff]
  %v20 = vld [vmem:[%s0 + $0x30] sm:$0xff]
  %v21 = vld [vmem:[%s0 + $0x38] sm:$0xff]
  %v22 = vld [vmem:[%s0 + $0x40] sm:$0xff]
  %v23 = vld [vmem:[%s0 + $0x48] sm:$0xff]
  %v24 = vld [vmem:[%s0 + $0x50] sm:$0xff]
  %v25 = vld [vmem:[%s0 + $0x58] sm:$0xff]
  %v26 = vld [vmem:[%s0 + $0x60] sm:$0xff]
  %v27 = vld [vmem:[%s0 + $0x68] sm:$0xff]
  %v28 = vld [vmem:[%s0 + $0x70] sm:$0xff]
  %v29 = vld [vmem:[%s0 + $0x78] sm:$0xff]
  %v30 = vld [vmem:[%s0 + $0x80] sm:$0xff]
  %v31 = vld [vmem:[%s0 + $0x88] sm:$0xff]
  %v32 = vld [vmem:[%s0 + $0x90] sm:$0xff]
  %v33 = vld [vmem:[%s0 + $0x98] sm:$0xff]
  %v34 = vld [vmem:[%s0 + $0xa0] sm:$0xff]
  %v35 = vld [vmem:[%s0 + $0xa8] sm:$0xff]
  %v36 = vld [vmem:[%s0 + $0xb0] sm:$0xff]
  %v37 = vld [vmem:[%s0 + $0xb8] sm:$0xff]
  %v38 = vld [vmem:[%s0 + $0xc0] sm:$0xff]
  %v39 = vld [vmem:[%s0 + $0xc8] sm:$0xff]
  %v40 = vld [vmem:[%s0 + $0xd0] sm:$0xff]
  %v41 = vld [vmem:[%s0 + $0xd8] sm:$0xff]
  %v42 = vld [vmem:[%s0 + $0xe0] sm:$0xff]
  %v43 = vld [vmem:[%s0 + $0xe8] sm:$0xff]
  %v44 = vld [vmem:[%s0 + $0xf0] sm:$0xff]
  %v45 = vld [vmem:[%s0 + $0xf8] sm:$0xff]
  %v46 = vld [vmem:[%s0 + $0x100] sm:$0xff]
  %v47 = vld [vmem:[%s0 + $0x108] sm:$0xff]
  %v48 = vld [vmem:[%s0 + $0x110] sm:$0xff]
  %v49 = vld [vmem:[%s0 + $0x118] sm:$0xff]
  %v50 = vld [vmem:[%s0 + $0x120] sm:$0xff]
  %v51 = vld [vmem:[%s0 + $0x128] sm:$0xff]
  %v52 = vld [vmem:[%s0 + $0x130] sm:$0xff]
  %v53 = vld [vmem:[%s0 + $0x138] sm:$0xff]
  %v54 = vld [vmem:[%s0 + $0x140] sm:$0xff]
  %v55 = vld [vmem:[%s0 + $0x148] sm:$0xff]
  %v56 = vld [vmem:[%s0 + $0x150] sm:$0xff]
  %v57 = vld [vmem:[%s0 + $0x158] sm:$0xff]
  %v58 = vld [vmem:[%s0 + $0x160] sm:$0xff]
  %v59 = vld [vmem:[%s0 + $0x168] sm:$0xff]
  %v60 = vld [vmem:[%s0 + $0x170] sm:$0xff]
  %v61 = vld [vmem:[%s0 + $0x178] sm:$0xff]
  %v62 = vld [vmem:[%s0 + $0x180] sm:$0xff]
  %v63 = vld [vmem:[%s0 + $0x188] sm:$0xff]
  %v64 = vld [vmem:[%s0 + $0x190] sm:$0xff]
  %v65 = vld [vmem:[%s0 + $0x198] sm:$0xff]
  %v66 = vld [vmem:[%s0 + $0x1a0] sm:$0xff]
  %v67 = vld [vmem:[%s0 + $0x1a8] sm:$0xff]
  %v68 = vld [vmem:[%s0 + $0x1b0] sm:$0xff]
  %v69 = vld [vmem:[%s0 + $0x1b8] sm:$0xff]
  %v70 = vld [vmem:[%s0 + $0x1c0] sm:$0xff]
  %v71 = vld [vmem:[%s0 + $0x1c8] sm:$0xff]
  %v72 = vld [vmem:[%s0 + $0x1d0] sm:$0xff]
  %v73 = vld [vmem:[%s0 + $0x1d8] sm:$0xff]
  %v74 = vld [vmem:[%s0 + $0x1e0] sm:$0xff]
  %v75 = vld [vmem:[%s0 + $0x1e8] sm:$0xff]
  %v76 = vld [vmem:[%s0 + $0x1f0] sm:$0xff]
  %v77 = vld [vmem:[%s0 + $0x1f8] sm:$0xff]
  %v78 = vld [vmem:[%s0 + $0x200] sm:$0xff]
  %v79 = vld [vmem:[%s0 + $0x208] sm:$0xff]
  %v80 = vld [vmem:[%s0 + $0x210] sm:$0xff]
  %v81 = vld [vmem:[%s0 + $0x218] sm:$0xff]
  %v82 = vld [vmem:[%s0 + $0x220] sm:$0xff]
  %v83 = vld [vmem:[%s0 + $0x228] sm:$0xff]
  %v84 = vld [vmem:[%s0 + $0x230] sm:$0xff]
  %v85 = vld [vmem:[%s0 + $0x238] sm:$0xff]
  %v86 = vld [vmem:[%s0 + $0x240] sm:$0xff]
  %v87 = vld [vmem:[%s0 + $0x248] sm:$0xff]
  %v88 = vld [vmem:[%s0 + $0x250] sm:$0xff]
  %v89 = vld [vmem:[%s0 + $0x258] sm:$0xff]
  %v90 = vld [vmem:[%s0 + $0x260] sm:$0xff]
  %v91 = vld [vmem:[%s0 + $0x268] sm:$0xff]
  %v92 = vld [vmem:[%s0 + $0x270] sm:$0xff]
  %v93 = vld [vmem:[%s0 + $0x278] sm:$0xff]
  %v94 = vld [vmem:[%s0 + $0x280] sm:$0xff]
  %v95 = vld [vmem:[%s0 + $0x288] sm:$0xff]
  %v96 = vld [vmem:[%s0 + $0x290] sm:$0xff]
  %v97 = vld [vmem:[%s0 + $0x298] sm:$0xff]
  %v98 = vld [vmem:[%s0 + $0x2a0] sm:$0xff]
  %v99 = vld [vmem:[%s0 + $0x2a8] sm:$0xff]
  %v100 = vld [vmem:[%s0 + $0x2b0] sm:$0xff]
  %v101 = vld [vmem:[%s0 + $0x2b8] sm:$0xff]
  %v102 = vld [vmem:[%s0 + $0x2c0] sm:$0xff]
  %v103 = vld [vmem:[%s0 + $0x2c8] sm:$0xff]
  %v104 = vld [vmem:[%s0 + $0x2d0] sm:$0xff]
  %v105 = vld [vmem:[%s0 + $0x2d8] sm:$0xff]
  %v106 = vld [vmem:[%s0 + $0x2e0] sm:$0xff]
  %v107 = vld [vmem:[%s0 + $0x2e8] sm:$0xff]
  %v108 = vld [vmem:[%s0 + $0x2f0] sm:$0xff]
  %v109 = vld [vmem:[%s0 + $0x2f8] sm:$0xff]
  %v110 = vld [vmem:[%s0 + $0x300] sm:$0xff]
  %v111 = vld [vmem:[%s0 + $0x308] sm:$0xff]
  %v112 = vld [vmem:[%s0 + $0x310] sm:$0xff]
  %v113 = vld [vmem:[%s0 + $0x318] sm:$0xff]
  %v114 = vld [vmem:[%s0 + $0x320] sm:$0xff]
  %v115 = vld [vmem:[%s0 + $0x328] sm:$0xff]
  %v116 = vld [vmem:[%s0 + $0x330] sm:$0xff]
  %v117 = vld [vmem:[%s0 + $0x338] sm:$0xff]
  %v118 = vld [vmem:[%s0 + $0x340] sm:$0xff]
  %v119 = vld [vmem:[%s0 + $0x348] sm:$0xff]
  %v120 = vld [vmem:[%s0 + $0x350] sm:$0xff]
  %v121 = vld [vmem:[%s0 + $0x358] sm:$0xff]
  %v122 = vld [vmem:[%s0 + $0x360] sm:$0xff]
  %v123 = vld [vmem:[%s0 + $0x368] sm:$0xff]
  %v124 = vld [vmem:[%s0 + $0x370] sm:$0xff]
  %v125 = vld [vmem:[%s0 + $0x378] sm:$0xff]
  %v126 = vld [vmem:[%s0 + $0x380] sm:$0xff]
  %v127 = vld [vmem:[%s0 + $0x388] sm:$0xff]
  %v128 = vld [vmem:[%s0 + $0x390] sm:$0xff]
  %v129 = vld [vmem:[%s0 + $0x398] sm:$0xff]
  %v130 = vld [vmem:[%s0 + $0x3a0] sm:$0xff]
  %v131 = vld [vmem:[%s0 + $0x3a8] sm:$0xff]
  %v132 = vld [vmem:[%s0 + $0x3b0] sm:$0xff]
  %v133 = vld [vmem:[%s0 + $0x3b8] sm:$0xff]
  %v134 = vld [vmem:[%s0 + $0x3c0] sm:$0xff]
  %v135 = vld [vmem:[%s0 + $0x3c8] sm:$0xff]
  %v136 = vld [vmem:[%s0 + $0x3d0] sm:$0xff]
  %v137 = vld [vmem:[%s0 + $0x3d8] sm:$0xff]
  %v138 = vld [vmem:[%s0 + $0x3e0] sm:$0xff]
  %v139 = vld [vmem:[%s0 + $0x3e8] sm:$0xff]
  %v140 = vld [vmem:[%s0 + $0x3f0] sm:$0xff]
  %v141 = vld [vmem:[%s0 + $0x3f8] sm:$0xff]
  %v142 = vld [vmem:[%s0 + $0x400] sm:$0xff]
  %v143 = vld [vmem:[%s0 + $0x408] sm:$0xff]
  %v144 = vld [vmem:[%s0 + $0x410] sm:$0xff]
  %v145 = vld [vmem:[%s0 + $0x418] sm:$0xff]
  %v146 = vld [vmem:[%s0 + $0x420] sm:$0xff]
  %v147 = vld [vmem:[%s0 + $0x428] sm:$0xff]
  %v148 = vld [vmem:[%s0 + $0x430] sm:$0xff]
  %v149 = vld [vmem:[%s0 + $0x438] sm:$0xff]
  %v150 = vld [vmem:[%s0 + $0x440] sm:$0xff]
  %v151 = vld [vmem:[%s0 + $0x448] sm:$0xff]
  %v152 = vld [vmem:[%s0 + $0x450] sm:$0xff]
  %v153 = vld [vmem:[%s0 + $0x458] sm:$0xff]
  %v154 = vld [vmem:[%s0 + $0x460] sm:$0xff]
  %v155 = vld [vmem:[%s0 + $0x468] sm:$0xff]
  %v156 = vld [vmem:[%s0 + $0x470] sm:$0xff]
  %v157 = vld [vmem:[%s0 + $0x478] sm:$0xff]
  %v158 = vld [vmem:[%s0 + $0x480] sm:$0xff]
  %v159 = vld [vmem:[%s0 + $0x488] sm:$0xff]
  %v160 = vld [vmem:[%s0 + $0x490] sm:$0xff]
  %v161 = vld [vmem:[%s0 + $0x498] sm:$0xff]
  %v162 = vld [vmem:[%s0 + $0x4a0] sm:$0xff]
  %v163 = vld [vmem:[%s0 + $0x4a8] sm:$0xff]
  %v164 = vld [vmem:[%s0 + $0x4b0] sm:$0xff]
  %v165 = vld [vmem:[%s0 + $0x4b8] sm:$0xff]
  %v166 = vld [vmem:[%s0 + $0x4c0] sm:$0xff]
  %v167 = vld [vmem:[%s0 + $0x4c8] sm:$0xff]
  %v168 = vld [vmem:[%s0 + $0x4d0] sm:$0xff]
  %v169 = vld [vmem:[%s0 + $0x4d8] sm:$0xff]
  %v170 = vld [vmem:[%s1] sm:$0xff]
  %v171 = vld [vmem:[%s1 + $0x8] sm:$0xff]
  %v172 = vld [vmem:[%s1 + $0x10] sm:$0xff]
  %v173 = vld [vmem:[%s1 + $0x18] sm:$0xff]
  %v174 = vld [vmem:[%s1 + $0x20] sm:$0xff]
  %v175 = vld [vmem:[%s1 + $0x28] sm:$0xff]
  %v176 = vld [vmem:[%s1 + $0x30] sm:$0xff]
  %v177 = vld [vmem:[%s1 + $0x38] sm:$0xff]
  %v178 = vld [vmem:[%s1 + $0x40] sm:$0xff]
  %v179 = vld [vmem:[%s1 + $0x48] sm:$0xff]
  %v180 = vld [vmem:[%s1 + $0x50] sm:$0xff]
  %v181 = vld [vmem:[%s1 + $0x58] sm:$0xff]
  %v182 = vld [vmem:[%s1 + $0x60] sm:$0xff]
  %v183 = vld [vmem:[%s1 + $0x68] sm:$0xff]
  %v184 = vld [vmem:[%s1 + $0x70] sm:$0xff]
  %v185 = vld [vmem:[%s1 + $0x78] sm:$0xff]
  %v186 = vld [vmem:[%s1 + $0x80] sm:$0xff]
  %v187 = vld [vmem:[%s1 + $0x88] sm:$0xff]
  %v188 = vld [vmem:[%s1 + $0x90] sm:$0xff]
  %v189 = vld [vmem:[%s1 + $0x98] sm:$0xff]
  %v190 = vld [vmem:[%s1 + $0xa0] sm:$0xff]
  %v191 = vld [vmem:[%s1 + $0xa8] sm:$0xff]
  %v192 = vld [vmem:[%s1 + $0xb0] sm:$0xff]
  %v193 = vld [vmem:[%s1 + $0xb8] sm:$0xff]
  %v194 = vld [vmem:[%s1 + $0xc0] sm:$0xff]
  %v195 = vld [vmem:[%s1 + $0xc8] sm:$0xff]
  %v196 = vld [vmem:[%s1 + $0xd0] sm:$0xff]
  %v197 = vld [vmem:[%s1 + $0xd8] sm:$0xff]
  %v198 = vld [vmem:[%s1 + $0xe0] sm:$0xff]
  %v199 = vld [vmem:[%s1 + $0xe8] sm:$0xff]
  %v200 = vld [vmem:[%s1 + $0xf0] sm:$0xff]
  %v201 = vld [vmem:[%s1 + $0xf8] sm:$0xff]
  %v202 = vld [vmem:[%s1 + $0x100] sm:$0xff]
  %v203 = vld [vmem:[%s1 + $0x108] sm:$0xff]
  %v204 = vld [vmem:[%s1 + $0x110] sm:$0xff]
  %v205 = vld [vmem:[%s1 + $0x118] sm:$0xff]
  %v206 = vld [vmem:[%s1 + $0x120] sm:$0xff]
  %v207 = vld [vmem:[%s1 + $0x128] sm:$0xff]
  %v208 = vld [vmem:[%s1 + $0x130] sm:$0xff]
  %v209 = vld [vmem:[%s1 + $0x138] sm:$0xff]
  %v210 = vld [vmem:[%s1 + $0x140] sm:$0xff]
  %v211 = vld [vmem:[%s1 + $0x148] sm:$0xff]
  %v212 = vld [vmem:[%s1 + $0x150] sm:$0xff]
  %v213 = vld [vmem:[%s1 + $0x158] sm:$0xff]
  %v214 = vld [vmem:[%s1 + $0x160] sm:$0xff]
  %v215 = vld [vmem:[%s1 + $0x168] sm:$0xff]
  %v216 = vld [vmem:[%s1 + $0x170] sm:$0xff]
  %v217 = vld [vmem:[%s1 + $0x178] sm:$0xff]
  %v218 = vld [vmem:[%s1 + $0x180] sm:$0xff]
  %v219 = vld [vmem:[%s1 + $0x188] sm:$0xff]
  %v220 = vld [vmem:[%s1 + $0x190] sm:$0xff]
  %v221 = vld [vmem:[%s1 + $0x198] sm:$0xff]
  %v222 = vld [vmem:[%s1 + $0x1a0] sm:$0xff]
  %v223 = vld [vmem:[%s1 + $0x1a8] sm:$0xff]
  %v224 = vld [vmem:[%s1 + $0x1b0] sm:$0xff]
  %v225 = vld [vmem:[%s1 + $0x1b8] sm:$0xff]
  %v226 = vld [vmem:[%s1 + $0x1c0] sm:$0xff]
  %v227 = vld [vmem:[%s1 + $0x1c8] sm:$0xff]
  %v228 = vld [vmem:[%s1 + $0x1d0] sm:$0xff]
  %v229 = vld [vmem:[%s1 + $0x1d8] sm:$0xff]
  %v230 = vld [vmem:[%s1 + $0x1e0] sm:$0xff]
  %v231 = vld [vmem:[%s1 + $0x1e8] sm:$0xff]
  %v232 = vld [vmem:[%s1 + $0x1f0] sm:$0xff]
  %v233 = vld [vmem:[%s1 + $0x1f8] sm:$0xff]
  %v234 = vld [vmem:[%s1 + $0x200] sm:$0xff]
  %v235 = vld [vmem:[%s1 + $0x208] sm:$0xff]
  %v236 = vld [vmem:[%s1 + $0x210] sm:$0xff]
  %v237 = vld [vmem:[%s1 + $0x218] sm:$0xff]
  %v238 = vld [vmem:[%s1 + $0x220] sm:$0xff]
  %v239 = vld [vmem:[%s1 + $0x228] sm:$0xff]
  %v240 = vld [vmem:[%s1 + $0x230] sm:$0xff]
  %v241 = vld [vmem:[%s1 + $0x238] sm:$0xff]
  %v242 = vld [vmem:[%s1 + $0x240] sm:$0xff]
  %v243 = vld [vmem:[%s1 + $0x248] sm:$0xff]
  %v244 = vld [vmem:[%s1 + $0x250] sm:$0xff]
  %v245 = vld [vmem:[%s1 + $0x258] sm:$0xff]
  %v246 = vld [vmem:[%s1 + $0x260] sm:$0xff]
  %v247 = vld [vmem:[%s1 + $0x268] sm:$0xff]
  %v248 = vld [vmem:[%s1 + $0x270] sm:$0xff]
  %v249 = vld [vmem:[%s1 + $0x278] sm:$0xff]
  %v250 = vld [vmem:[%s1 + $0x280] sm:$0xff]
  %v251 = vld [vmem:[%s1 + $0x288] sm:$0xff]
  %v252 = vld [vmem:[%s1 + $0x290] sm:$0xff]
  %v253 = vld [vmem:[%s1 + $0x298] sm:$0xff]
  %v254 = vld [vmem:[%s1 + $0x2a0] sm:$0xff]
  %v255 = vld [vmem:[%s1 + $0x2a8] sm:$0xff]
  %v256 = vld [vmem:[%s1 + $0x2b0] sm:$0xff]
  %v257 = vld [vmem:[%s1 + $0x2b8] sm:$0xff]
  %v258 = vld [vmem:[%s1 + $0x2c0] sm:$0xff]
  %v259 = vld [vmem:[%s1 + $0x2c8] sm:$0xff]
  %v260 = vld [vmem:[%s1 + $0x2d0] sm:$0xff]
  %v261 = vld [vmem:[%s1 + $0x2d8] sm:$0xff]
  %v262 = vld [vmem:[%s1 + $0x2e0] sm:$0xff]
  %v263 = vld [vmem:[%s1 + $0x2e8] sm:$0xff]
  %v264 = vld [vmem:[%s1 + $0x2f0] sm:$0xff]
  %v265 = vld [vmem:[%s1 + $0x2f8] sm:$0xff]
  %v266 = vld [vmem:[%s1 + $0x300] sm:$0xff]
  %v267 = vld [vmem:[%s1 + $0x308] sm:$0xff]
  %v268 = vld [vmem:[%s1 + $0x310] sm:$0xff]
  %v269 = vld [vmem:[%s1 + $0x318] sm:$0xff]
  %v270 = vld [vmem:[%s1 + $0x320] sm:$0xff]
  %v271 = vld [vmem:[%s1 + $0x328] sm:$0xff]
  %v272 = vld [vmem:[%s1 + $0x330] sm:$0xff]
  %v273 = vld [vmem:[%s1 + $0x338] sm:$0xff]
  %v274 = vld [vmem:[%s1 + $0x340] sm:$0xff]
  %v275 = vld [vmem:[%s1 + $0x348] sm:$0xff]
  %v276 = vld [vmem:[%s1 + $0x350] sm:$0xff]
  %v277 = vld [vmem:[%s1 + $0x358] sm:$0xff]
  %v278 = vld [vmem:[%s1 + $0x360] sm:$0xff]
  %v279 = vld [vmem:[%s1 + $0x368] sm:$0xff]
  %v280 = vld [vmem:[%s1 + $0x370] sm:$0xff]
  %v281 = vld [vmem:[%s1 + $0x378] sm:$0xff]
  %v282 = vld [vmem:[%s1 + $0x380] sm:$0xff]
  %v283 = vld [vmem:[%s1 + $0x388] sm:$0xff]
  %v284 = vld [vmem:[%s1 + $0x390] sm:$0xff]
  %v285 = vld [vmem:[%s1 + $0x398] sm:$0xff]
  %v286 = vld [vmem:[%s1 + $0x3a0] sm:$0xff]
  %v287 = vld [vmem:[%s1 + $0x3a8] sm:$0xff]
  %v288 = vld [vmem:[%s1 + $0x3b0] sm:$0xff]
  %v289 = vld [vmem:[%s1 + $0x3b8] sm:$0xff]
  %v290 = vld [vmem:[%s1 + $0x3c0] sm:$0xff]
  %v291 = vld [vmem:[%s1 + $0x3c8] sm:$0xff]
  %v292 = vld [vmem:[%s1 + $0x3d0] sm:$0xff]
  %v293 = vld [vmem:[%s1 + $0x3d8] sm:$0xff]
  %v294 = vld [vmem:[%s1 + $0x3e0] sm:$0xff]
  %v295 = vld [vmem:[%s1 + $0x3e8] sm:$0xff]
  %v296 = vld [vmem:[%s1 + $0x3f0] sm:$0xff]
  %v297 = vld [vmem:[%s1 + $0x3f8] sm:$0xff]
  %v298 = vld [vmem:[%s1 + $0x400] sm:$0xff]
  %v299 = vld [vmem:[%s1 + $0x408] sm:$0xff]
  %v300 = vld [vmem:[%s1 + $0x410] sm:$0xff]
  %v301 = vld [vmem:[%s1 + $0x418] sm:$0xff]
  %v302 = vld [vmem:[%s1 + $0x420] sm:$0xff]
  %v303 = vld [vmem:[%s1 + $0x428] sm:$0xff]
  %v304 = vld [vmem:[%s1 + $0x430] sm:$0xff]
  %v305 = vld [vmem:[%s1 + $0x438] sm:$0xff]
  %v306 = vld [vmem:[%s1 + $0x440] sm:$0xff]
  %v307 = vld [vmem:[%s1 + $0x448] sm:$0xff]
  %v308 = vld [vmem:[%s1 + $0x450] sm:$0xff]
  %v309 = vld [vmem:[%s1 + $0x458] sm:$0xff]
  %v310 = vld [vmem:[%s1 + $0x460] sm:$0xff]
  %v311 = vld [vmem:[%s1 + $0x468] sm:$0xff]
  %v312 = vld [vmem:[%s1 + $0x470] sm:$0xff]
  %v313 = vld [vmem:[%s1 + $0x478] sm:$0xff]
  %v314 = vld [vmem:[%s1 + $0x480] sm:$0xff]
  %v315 = vld [vmem:[%s1 + $0x488] sm:$0xff]
  %v316 = vld [vmem:[%s1 + $0x490] sm:$0xff]
  %v317 = vld [vmem:[%s1 + $0x498] sm:$0xff]
  %v318 = vld [vmem:[%s1 + $0x4a0] sm:$0xff]
  %v319 = vld [vmem:[%s1 + $0x4a8] sm:$0xff]
  %v320 = vld [vmem:[%s1 + $0x4b0] sm:$0xff]
  %v321 = vld [vmem:[%s1 + $0x4b8] sm:$0xff]
  %v322 = vld [vmem:[%s1 + $0x4c0] sm:$0xff]
  %v323 = vld [vmem:[%s1 + $0x4c8] sm:$0xff]
  %v324 = vld [vmem:[%s1 + $0x4d0] sm:$0xff]
  %v325 = vld [vmem:[%s1 + $0x4d8] sm:$0xff]
  %v326 = vld [vmem:[%s1 + $0x4e0] sm:$0xff]
  %v327 = vld [vmem:[%s1 + $0x4e8] sm:$0xff]
  %v328 = vld [vmem:[%s1 + $0x4f0] sm:$0xff]
  %v329 = vld [vmem:[%s1 + $0x4f8] sm:$0xff]
  %v330 = vld [vmem:[%s1 + $0x500] sm:$0xff]
  %v331 = vld [vmem:[%s1 + $0x508] sm:$0xff]
  %v332 = vld [vmem:[%s1 + $0x510] sm:$0xff]
  %v333 = vld [vmem:[%s1 + $0x518] sm:$0xff]
  %v334 = vld [vmem:[%s1 + $0x520] sm:$0xff]
  %v335 = vld [vmem:[%s1 + $0x528] sm:$0xff]
  %v336 = vld [vmem:[%s1 + $0x530] sm:$0xff]
  %v337 = vld [vmem:[%s1 + $0x538] sm:$0xff]
  %v338 = vld [vmem:[%s1 + $0x540] sm:$0xff]
  %v339 = vld [vmem:[%s1 + $0x548] sm:$0xff]
  %v340 = vld [vmem:[%s1 + $0x550] sm:$0xff]
  %v341 = vld [vmem:[%s1 + $0x558] sm:$0xff]
  %v342 = vld [vmem:[%s1 + $0x560] sm:$0xff]
  %v343 = vld [vmem:[%s1 + $0x568] sm:$0xff]
  %v344 = vld [vmem:[%s1 + $0x570] sm:$0xff]
  %v345 = vld [vmem:[%s1 + $0x578] sm:$0xff]
  %v346 = vld [vmem:[%s1 + $0x580] sm:$0xff]
  %v347 = vld [vmem:[%s1 + $0x588] sm:$0xff]
  %v348 = vld [vmem:[%s1 + $0x590] sm:$0xff]
  %v349 = vld [vmem:[%s1 + $0x598] sm:$0xff]
  %v350 = vld [vmem:[%s1 + $0x5a0] sm:$0xff]
  %v351 = vld [vmem:[%s1 + $0x5a8] sm:$0xff]
  %v352 = vld [vmem:[%s1 + $0x5b0] sm:$0xff]
  %v353 = vld [vmem:[%s1 + $0x5b8] sm:$0xff]
  %v354 = vld [vmem:[%s1 + $0x5c0] sm:$0xff]
  %v355 = vld [vmem:[%s1 + $0x5c8] sm:$0xff]
  %v356 = vld [vmem:[%s1 + $0x5d0] sm:$0xff]
  %v357 = vld [vmem:[%s1 + $0x5d8] sm:$0xff]
  %v358 = vld [vmem:[%s1 + $0x5e0] sm:$0xff]
  %v359 = vld [vmem:[%s1 + $0x5e8] sm:$0xff]
  %v360 = vld [vmem:[%s1 + $0x5f0] sm:$0xff]
  %v361 = vld [vmem:[%s1 + $0x5f8] sm:$0xff]
  %v362 = vld [vmem:[%s1 + $0x600] sm:$0xff]
  %v363 = vld [vmem:[%s1 + $0x608] sm:$0xff]
  %v364 = vld [vmem:[%s1 + $0x610] sm:$0xff]
  %v365 = vld [vmem:[%s1 + $0x618] sm:$0xff]
  %v366 = vld [vmem:[%s1 + $0x620] sm:$0xff]
  %v367 = vld [vmem:[%s1 + $0x628] sm:$0xff]
  %v368 = vld [vmem:[%s1 + $0x630] sm:$0xff]
  %v369 = vld [vmem:[%s1 + $0x638] sm:$0xff]
  %v370 = vld [vmem:[%s1 + $0x640] sm:$0xff]
  %v371 = vld [vmem:[%s1 + $0x648] sm:$0xff]
  %v372 = vld [vmem:[%s1 + $0x650] sm:$0xff]
  %v373 = vld [vmem:[%s1 + $0x658] sm:$0xff]
  %v374 = vld [vmem:[%s1 + $0x660] sm:$0xff]
  %v375 = vld [vmem:[%s1 + $0x668] sm:$0xff]
  %v376 = vld [vmem:[%s1 + $0x670] sm:$0xff]
  %v377 = vld [vmem:[%s1 + $0x678] sm:$0xff]
  %v378 = vld [vmem:[%s1 + $0x680] sm:$0xff]
  %v379 = vld [vmem:[%s1 + $0x688] sm:$0xff]
  %v380 = vld [vmem:[%s1 + $0x690] sm:$0xff]
  %v381 = vld [vmem:[%s1 + $0x698] sm:$0xff]
  %v382 = vld [vmem:[%s1 + $0x6a0] sm:$0xff]
  %v383 = vld [vmem:[%s1 + $0x6a8] sm:$0xff]
  %v384 = vld [vmem:[%s1 + $0x6b0] sm:$0xff]
  %v385 = vld [vmem:[%s1 + $0x6b8] sm:$0xff]
  %v386 = vld [vmem:[%s1 + $0x6c0] sm:$0xff]
  %v387 = vld [vmem:[%s1 + $0x6c8] sm:$0xff]
  %v388 = vld [vmem:[%s1 + $0x6d0] sm:$0xff]
  %v389 = vld [vmem:[%s1 + $0x6d8] sm:$0xff]
  %v390 = vld [vmem:[%s1 + $0x6e0] sm:$0xff]
  %v391 = vld [vmem:[%s1 + $0x6e8] sm:$0xff]
  %v392 = vld [vmem:[%s1 + $0x6f0] sm:$0xff]
  %v393 = vld [vmem:[%s1 + $0x6f8] sm:$0xff]
  %v394 = vld [vmem:[%s1 + $0x700] sm:$0xff]
  %v395 = vld [vmem:[%s1 + $0x708] sm:$0xff]
  %v396 = vld [vmem:[%s1 + $0x710] sm:$0xff]
  %v397 = vld [vmem:[%s1 + $0x718] sm:$0xff]
  %v398 = vld [vmem:[%s1 + $0x720] sm:$0xff]
  %v399 = vld [vmem:[%s1 + $0x728] sm:$0xff]
  %v400 = vld [vmem:[%s1 + $0x730] sm:$0xff]
  %v401 = vld [vmem:[%s1 + $0x738] sm:$0xff]
  %v402 = vld [vmem:[%s1 + $0x740] sm:$0xff]
  %v403 = vld [vmem:[%s1 + $0x748] sm:$0xff]
  %v404 = vld [vmem:[%s1 + $0x750] sm:$0xff]
  %v405 = vld [vmem:[%s1 + $0x758] sm:$0xff]
  %v406 = vld [vmem:[%s1 + $0x760] sm:$0xff]
  %v407 = vld [vmem:[%s1 + $0x768] sm:$0xff]
  %v408 = vld [vmem:[%s1 + $0x770] sm:$0xff]
  %v409 = vld [vmem:[%s1 + $0x778] sm:$0xff]
  %v410 = vld [vmem:[%s1 + $0x780] sm:$0xff]
  %v411 = vld [vmem:[%s1 + $0x788] sm:$0xff]
  %v412 = vld [vmem:[%s1 + $0x790] sm:$0xff]
  %v413 = vld [vmem:[%s1 + $0x798] sm:$0xff]
  %v414 = vld [vmem:[%s1 + $0x7a0] sm:$0xff]
  %v415 = vld [vmem:[%s1 + $0x7a8] sm:$0xff]
  %v416 = vld [vmem:[%s1 + $0x7b0] sm:$0xff]
  %v417 = vld [vmem:[%s1 + $0x7b8] sm:$0xff]
  %v418 = vld [vmem:[%s1 + $0x7c0] sm:$0xff]
  %v419 = vld [vmem:[%s1 + $0x7c8] sm:$0xff]
  %v420 = vld [vmem:[%s1 + $0x7d0] sm:$0xff]
  %v421 = vld [vmem:[%s1 + $0x7d8] sm:$0xff]
  %v422 = vld [vmem:[%s1 + $0x7e0] sm:$0xff]
  %v423 = vld [vmem:[%s1 + $0x7e8] sm:$0xff]
  %v424 = vld [vmem:[%s1 + $0x7f0] sm:$0xff]
  %v425 = vld [vmem:[%s1 + $0x7f8] sm:$0xff]
  %v426 = vld [vmem:[%s1 + $0x800] sm:$0xff]
  %v427 = vld [vmem:[%s1 + $0x808] sm:$0xff]
  %v428 = vld [vmem:[%s1 + $0x810] sm:$0xff]
  %v429 = vld [vmem:[%s1 + $0x818] sm:$0xff]
  %v430 = vld [vmem:[%s1 + $0x820] sm:$0xff]
  %v431 = vld [vmem:[%s1 + $0x828] sm:$0xff]
  %v432 = vld [vmem:[%s1 + $0x830] sm:$0xff]
  %v433 = vld [vmem:[%s1 + $0x838] sm:$0xff]
  %v434 = vld [vmem:[%s1 + $0x840] sm:$0xff]
  %v435 = vld [vmem:[%s1 + $0x848] sm:$0xff]
  %v436 = vld [vmem:[%s1 + $0x850] sm:$0xff]
  %v437 = vld [vmem:[%s1 + $0x858] sm:$0xff]
  %v438 = vld [vmem:[%s1 + $0x860] sm:$0xff]
  %v439 = vld [vmem:[%s1 + $0x868] sm:$0xff]
  %v440 = vld [vmem:[%s1 + $0x870] sm:$0xff]
  %v441 = vld [vmem:[%s1 + $0x878] sm:$0xff]
  %v442 = vld [vmem:[%s1 + $0x880] sm:$0xff]
  %v443 = vld [vmem:[%s1 + $0x888] sm:$0xff]
  %v444 = vld [vmem:[%s1 + $0x890] sm:$0xff]
  %v445 = vld [vmem:[%s1 + $0x898] sm:$0xff]
  %v446 = vld [vmem:[%s1 + $0x8a0] sm:$0xff]
  %v447 = vld [vmem:[%s1 + $0x8a8] sm:$0xff]
  %v448 = vld [vmem:[%s1 + $0x8b0] sm:$0xff]
  %v449 = vld [vmem:[%s1 + $0x8b8] sm:$0xff]
  %v450 = vld [vmem:[%s1 + $0x8c0] sm:$0xff]
  %v451 = vld [vmem:[%s1 + $0x8c8] sm:$0xff]
  %v452 = vld [vmem:[%s1 + $0x8d0] sm:$0xff]
  %v453 = vld [vmem:[%s1 + $0x8d8] sm:$0xff]
  %v454 = vld [vmem:[%s1 + $0x8e0] sm:$0xff]
  %v455 = vld [vmem:[%s1 + $0x8e8] sm:$0xff]
  %v456 = vld [vmem:[%s1 + $0x8f0] sm:$0xff]
  %v457 = vld [vmem:[%s1 + $0x8f8] sm:$0xff]
  %v614 = vunpack.c.l.b16 %v14
  %v615 = vunpack.c.h.b16 %v14
  %v616 = vunpack.c.l.b16 %v15
  %v617 = vunpack.c.h.b16 %v15
  %v618 = vunpack.c.l.b16 %v16
  %v619 = vunpack.c.h.b16 %v16
  %v620 = vunpack.c.l.b16 %v17
  %v621 = vunpack.c.h.b16 %v17
  %v622 = vunpack.c.l.b16 %v18
  %v623 = vunpack.c.h.b16 %v18
  %v624 = vunpack.c.l.b16 %v19
  %v625 = vunpack.c.h.b16 %v19
  %v626 = vunpack.c.l.b16 %v20
  %v627 = vunpack.c.h.b16 %v20
  %v628 = vunpack.c.l.b16 %v21
  %v629 = vunpack.c.h.b16 %v21
  %v630 = vunpack.c.l.b16 %v22
  %v631 = vunpack.c.h.b16 %v22
  %v632 = vunpack.c.l.b16 %v23
  %v633 = vunpack.c.h.b16 %v23
  %v634 = vunpack.c.l.b16 %v24
  %v635 = vunpack.c.h.b16 %v24
  %v636 = vunpack.c.l.b16 %v25
  %v637 = vunpack.c.h.b16 %v25
  %v638 = vunpack.c.l.b16 %v26
  %v639 = vunpack.c.h.b16 %v26
  %v640 = vunpack.c.l.b16 %v27
  %v641 = vunpack.c.h.b16 %v27
  %v642 = vunpack.c.l.b16 %v28
  %v643 = vunpack.c.h.b16 %v28
  %v644 = vunpack.c.l.b16 %v29
  %v645 = vunpack.c.h.b16 %v29
  %v646 = vunpack.c.l.b16 %v30
  %v647 = vunpack.c.h.b16 %v30
  %v648 = vunpack.c.l.b16 %v31
  %v649 = vunpack.c.h.b16 %v31
  %v650 = vunpack.c.l.b16 %v32
  %v651 = vunpack.c.h.b16 %v32
  %v652 = vunpack.c.l.b16 %v33
  %v653 = vunpack.c.h.b16 %v33
  %v654 = vunpack.c.l.b16 %v34
  %v655 = vunpack.c.h.b16 %v34
  %v656 = vunpack.c.l.b16 %v35
  %v657 = vunpack.c.h.b16 %v35
  %v658 = vunpack.c.l.b16 %v36
  %v659 = vunpack.c.h.b16 %v36
  %v660 = vunpack.c.l.b16 %v37
  %v661 = vunpack.c.h.b16 %v37
  %v662 = vunpack.c.l.b16 %v38
  %v663 = vunpack.c.h.b16 %v38
  %v664 = vunpack.c.l.b16 %v39
  %v665 = vunpack.c.h.b16 %v39
  %v666 = vunpack.c.l.b16 %v40
  %v667 = vunpack.c.h.b16 %v40
  %v668 = vunpack.c.l.b16 %v41
  %v669 = vunpack.c.h.b16 %v41
  %v670 = vunpack.c.l.b16 %v42
  %v671 = vunpack.c.h.b16 %v42
  %v672 = vunpack.c.l.b16 %v43
  %v673 = vunpack.c.h.b16 %v43
  %v674 = vunpack.c.l.b16 %v44
  %v675 = vunpack.c.h.b16 %v44
  %v676 = vunpack.c.l.b16 %v45
  %v677 = vunpack.c.h.b16 %v45
  %v678 = vunpack.c.l.b16 %v46
  %v679 = vunpack.c.h.b16 %v46
  %v680 = vunpack.c.l.b16 %v47
  %v681 = vunpack.c.h.b16 %v47
  %v682 = vunpack.c.l.b16 %v48
  %v683 = vunpack.c.h.b16 %v48
  %v684 = vunpack.c.l.b16 %v49
  %v685 = vunpack.c.h.b16 %v49
  %v686 = vunpack.c.l.b16 %v50
  %v687 = vunpack.c.h.b16 %v50
  %v688 = vunpack.c.l.b16 %v51
  %v689 = vunpack.c.h.b16 %v51
  %v690 = vunpack.c.l.b16 %v52
  %v691 = vunpack.c.h.b16 %v52
  %v692 = vunpack.c.l.b16 %v53
  %v693 = vunpack.c.h.b16 %v53
  %v694 = vunpack.c.l.b16 %v54
  %v695 = vunpack.c.h.b16 %v54
  %v696 = vunpack.c.l.b16 %v55
  %v697 = vunpack.c.h.b16 %v55
  %v698 = vunpack.c.l.b16 %v56
  %v699 = vunpack.c.h.b16 %v56
  %v700 = vunpack.c.l.b16 %v57
  %v701 = vunpack.c.h.b16 %v57
  %v702 = vunpack.c.l.b16 %v58
  %v703 = vunpack.c.h.b16 %v58
  %v704 = vunpack.c.l.b16 %v59
  %v705 = vunpack.c.h.b16 %v59
  %v706 = vunpack.c.l.b16 %v60
  %v707 = vunpack.c.h.b16 %v60
  %v708 = vunpack.c.l.b16 %v61
  %v709 = vunpack.c.h.b16 %v61
  %v710 = vunpack.c.l.b16 %v62
  %v711 = vunpack.c.h.b16 %v62
  %v712 = vunpack.c.l.b16 %v63
  %v713 = vunpack.c.h.b16 %v63
  %v714 = vunpack.c.l.b16 %v64
  %v715 = vunpack.c.h.b16 %v64
  %v716 = vunpack.c.l.b16 %v65
  %v717 = vunpack.c.h.b16 %v65
  %v718 = vunpack.c.l.b16 %v66
  %v719 = vunpack.c.h.b16 %v66
  %v720 = vunpack.c.l.b16 %v67
  %v721 = vunpack.c.h.b16 %v67
  %v722 = vunpack.c.l.b16 %v68
  %v723 = vunpack.c.h.b16 %v68
  %v724 = vunpack.c.l.b16 %v69
  %v725 = vunpack.c.h.b16 %v69
  %v726 = vunpack.c.l.b16 %v70
  %v727 = vunpack.c.h.b16 %v70
  %v728 = vunpack.c.l.b16 %v71
  %v729 = vunpack.c.h.b16 %v71
  %v730 = vunpack.c.l.b16 %v72
  %v731 = vunpack.c.h.b16 %v72
  %v732 = vunpack.c.l.b16 %v73
  %v733 = vunpack.c.h.b16 %v73
  %v734 = vunpack.c.l.b16 %v74
  %v735 = vunpack.c.h.b16 %v74
  %v736 = vunpack.c.l.b16 %v75
  %v737 = vunpack.c.h.b16 %v75
  %v738 = vunpack.c.l.b16 %v76
  %v739 = vunpack.c.h.b16 %v76
  %v740 = vunpack.c.l.b16 %v77
  %v741 = vunpack.c.h.b16 %v77
  %v742 = vunpack.c.l.b16 %v78
  %v743 = vunpack.c.h.b16 %v78
  %v744 = vunpack.c.l.b16 %v79
  %v745 = vunpack.c.h.b16 %v79
  %v746 = vunpack.c.l.b16 %v80
  %v747 = vunpack.c.h.b16 %v80
  %v748 = vunpack.c.l.b16 %v81
  %v749 = vunpack.c.h.b16 %v81
  %v750 = vunpack.c.l.b16 %v82
  %v751 = vunpack.c.h.b16 %v82
  %v752 = vunpack.c.l.b16 %v83
  %v753 = vunpack.c.h.b16 %v83
  %v754 = vunpack.c.l.b16 %v84
  %v755 = vunpack.c.h.b16 %v84
  %v756 = vunpack.c.l.b16 %v85
  %v757 = vunpack.c.h.b16 %v85
  %v758 = vunpack.c.l.b16 %v86
  %v759 = vunpack.c.h.b16 %v86
  %v760 = vunpack.c.l.b16 %v87
  %v761 = vunpack.c.h.b16 %v87
  %v762 = vunpack.c.l.b16 %v88
  %v763 = vunpack.c.h.b16 %v88
  %v764 = vunpack.c.l.b16 %v89
  %v765 = vunpack.c.h.b16 %v89
  %v766 = vunpack.c.l.b16 %v90
  %v767 = vunpack.c.h.b16 %v90
  %v768 = vunpack.c.l.b16 %v91
  %v769 = vunpack.c.h.b16 %v91
  %v770 = vunpack.c.l.b16 %v92
  %v771 = vunpack.c.h.b16 %v92
  %v772 = vunpack.c.l.b16 %v93
  %v773 = vunpack.c.h.b16 %v93
  %v774 = vunpack.c.l.b16 %v94
  %v775 = vunpack.c.h.b16 %v94
  %v776 = vunpack.c.l.b16 %v95
  %v777 = vunpack.c.h.b16 %v95
  %v778 = vunpack.c.l.b16 %v96
  %v779 = vunpack.c.h.b16 %v96
  %v780 = vunpack.c.l.b16 %v97
  %v781 = vunpack.c.h.b16 %v97
  %v782 = vunpack.c.l.b16 %v98
  %v783 = vunpack.c.h.b16 %v98
  %v784 = vunpack.c.l.b16 %v99
  %v785 = vunpack.c.h.b16 %v99
  %v786 = vunpack.c.l.b16 %v100
  %v787 = vunpack.c.h.b16 %v100
  %v788 = vunpack.c.l.b16 %v101
  %v789 = vunpack.c.h.b16 %v101
  %v790 = vunpack.c.l.b16 %v102
  %v791 = vunpack.c.h.b16 %v102
  %v792 = vunpack.c.l.b16 %v103
  %v793 = vunpack.c.h.b16 %v103
  %v794 = vunpack.c.l.b16 %v104
  %v795 = vunpack.c.h.b16 %v104
  %v796 = vunpack.c.l.b16 %v105
  %v797 = vunpack.c.h.b16 %v105
  %v798 = vunpack.c.l.b16 %v106
  %v799 = vunpack.c.h.b16 %v106
  %v800 = vunpack.c.l.b16 %v107
  %v801 = vunpack.c.h.b16 %v107
  %v802 = vunpack.c.l.b16 %v108
  %v803 = vunpack.c.h.b16 %v108
  %v804 = vunpack.c.l.b16 %v109
  %v805 = vunpack.c.h.b16 %v109
  %v806 = vunpack.c.l.b16 %v110
  %v807 = vunpack.c.h.b16 %v110
  %v808 = vunpack.c.l.b16 %v111
  %v809 = vunpack.c.h.b16 %v111
  %v810 = vunpack.c.l.b16 %v112
  %v811 = vunpack.c.h.b16 %v112
  %v812 = vunpack.c.l.b16 %v113
  %v813 = vunpack.c.h.b16 %v113
  %v814 = vunpack.c.l.b16 %v114
  %v815 = vunpack.c.h.b16 %v114
  %v816 = vunpack.c.l.b16 %v115
  %v817 = vunpack.c.h.b16 %v115
  %v818 = vunpack.c.l.b16 %v116
  %v819 = vunpack.c.h.b16 %v116
  %v820 = vunpack.c.l.b16 %v117
  %v821 = vunpack.c.h.b16 %v117
  %v822 = vunpack.c.l.b16 %v118
  %v823 = vunpack.c.h.b16 %v118
  %v824 = vunpack.c.l.b16 %v119
  %v825 = vunpack.c.h.b16 %v119
  %v826 = vunpack.c.l.b16 %v120
  %v827 = vunpack.c.h.b16 %v120
  %v828 = vunpack.c.l.b16 %v121
  %v829 = vunpack.c.h.b16 %v121
  %v830 = vunpack.c.l.b16 %v122
  %v831 = vunpack.c.h.b16 %v122
  %v832 = vunpack.c.l.b16 %v123
  %v833 = vunpack.c.h.b16 %v123
  %v834 = vunpack.c.l.b16 %v124
  %v835 = vunpack.c.h.b16 %v124
  %v836 = vunpack.c.l.b16 %v125
  %v837 = vunpack.c.h.b16 %v125
  %v838 = vunpack.c.l.b16 %v126
  %v839 = vunpack.c.h.b16 %v126
  %v840 = vunpack.c.l.b16 %v127
  %v841 = vunpack.c.h.b16 %v127
  %v842 = vunpack.c.l.b16 %v128
  %v843 = vunpack.c.h.b16 %v128
  %v844 = vunpack.c.l.b16 %v129
  %v845 = vunpack.c.h.b16 %v129
  %v846 = vunpack.c.l.b16 %v130
  %v847 = vunpack.c.h.b16 %v130
  %v848 = vunpack.c.l.b16 %v131
  %v849 = vunpack.c.h.b16 %v131
  %v850 = vunpack.c.l.b16 %v132
  %v851 = vunpack.c.h.b16 %v132
  %v852 = vunpack.c.l.b16 %v133
  %v853 = vunpack.c.h.b16 %v133
  %v854 = vunpack.c.l.b16 %v134
  %v855 = vunpack.c.h.b16 %v134
  %v856 = vunpack.c.l.b16 %v135
  %v857 = vunpack.c.h.b16 %v135
  %v858 = vunpack.c.l.b16 %v136
  %v859 = vunpack.c.h.b16 %v136
  %v860 = vunpack.c.l.b16 %v137
  %v861 = vunpack.c.h.b16 %v137
  %v862 = vunpack.c.l.b16 %v138
  %v863 = vunpack.c.h.b16 %v138
  %v864 = vunpack.c.l.b16 %v139
  %v865 = vunpack.c.h.b16 %v139
  %v866 = vunpack.c.l.b16 %v140
  %v867 = vunpack.c.h.b16 %v140
  %v868 = vunpack.c.l.b16 %v141
  %v869 = vunpack.c.h.b16 %v141
  %v870 = vunpack.c.l.b16 %v142
  %v871 = vunpack.c.h.b16 %v142
  %v872 = vunpack.c.l.b16 %v143
  %v873 = vunpack.c.h.b16 %v143
  %v874 = vunpack.c.l.b16 %v144
  %v875 = vunpack.c.h.b16 %v144
  %v876 = vunpack.c.l.b16 %v145
  %v877 = vunpack.c.h.b16 %v145
  %v878 = vunpack.c.l.b16 %v146
  %v879 = vunpack.c.h.b16 %v146
  %v880 = vunpack.c.l.b16 %v147
  %v881 = vunpack.c.h.b16 %v147
  %v882 = vunpack.c.l.b16 %v148
  %v883 = vunpack.c.h.b16 %v148
  %v884 = vunpack.c.l.b16 %v149
  %v885 = vunpack.c.h.b16 %v149
  %v886 = vunpack.c.l.b16 %v150
  %v887 = vunpack.c.h.b16 %v150
  %v888 = vunpack.c.l.b16 %v151
  %v889 = vunpack.c.h.b16 %v151
  %v890 = vunpack.c.l.b16 %v152
  %v891 = vunpack.c.h.b16 %v152
  %v892 = vunpack.c.l.b16 %v153
  %v893 = vunpack.c.h.b16 %v153
  %v894 = vunpack.c.l.b16 %v154
  %v895 = vunpack.c.h.b16 %v154
  %v896 = vunpack.c.l.b16 %v155
  %v897 = vunpack.c.h.b16 %v155
  %v898 = vunpack.c.l.b16 %v156
  %v899 = vunpack.c.h.b16 %v156
  %v900 = vunpack.c.l.b16 %v157
  %v901 = vunpack.c.h.b16 %v157
  %v902 = vunpack.c.l.b16 %v158
  %v903 = vunpack.c.h.b16 %v158
  %v904 = vunpack.c.l.b16 %v159
  %v905 = vunpack.c.h.b16 %v159
  %v906 = vunpack.c.l.b16 %v160
  %v907 = vunpack.c.h.b16 %v160
  %v908 = vunpack.c.l.b16 %v161
  %v909 = vunpack.c.h.b16 %v161
  %v910 = vunpack.c.l.b16 %v162
  %v911 = vunpack.c.h.b16 %v162
  %v912 = vunpack.c.l.b16 %v163
  %v913 = vunpack.c.h.b16 %v163
  %v914 = vunpack.c.l.b16 %v164
  %v915 = vunpack.c.h.b16 %v164
  %v916 = vunpack.c.l.b16 %v165
  %v917 = vunpack.c.h.b16 %v165
  %v918 = vunpack.c.l.b16 %v166
  %v919 = vunpack.c.h.b16 %v166
  %v920 = vunpack.c.l.b16 %v167
  %v921 = vunpack.c.h.b16 %v167
  %v922 = vunpack.c.l.b16 %v168
  %v923 = vunpack.c.h.b16 %v168
  %v924 = vunpack.c.l.b16 %v169
  %v925 = vunpack.c.h.b16 %v169
  %v926 = vpack.c.b16 %v620, %v614
  %v927 = vpack.c.b16 %v621, %v615
  %v928 = vpack.c.b16 %v622, %v616
  %v929 = vpack.c.b16 %v623, %v617
  %v930 = vpack.c.b16 %v624, %v618
  %v931 = vpack.c.b16 %v625, %v619
  %v932 = vpack.c.b16 %v632, %v626
  %v933 = vpack.c.b16 %v633, %v627
  %v934 = vpack.c.b16 %v634, %v628
  %v935 = vpack.c.b16 %v635, %v629
  %v936 = vpack.c.b16 %v636, %v630
  %v937 = vpack.c.b16 %v637, %v631
  %v938 = vpack.c.b16 %v644, %v638
  %v939 = vpack.c.b16 %v645, %v639
  %v940 = vpack.c.b16 %v646, %v640
  %v941 = vpack.c.b16 %v647, %v641
  %v942 = vpack.c.b16 %v648, %v642
  %v943 = vpack.c.b16 %v649, %v643
  %v944 = vpack.c.b16 %v656, %v650
  %v945 = vpack.c.b16 %v657, %v651
  %v946 = vpack.c.b16 %v658, %v652
  %v947 = vpack.c.b16 %v659, %v653
  %v948 = vpack.c.b16 %v660, %v654
  %v949 = vpack.c.b16 %v661, %v655
  %v950 = vpack.c.b16 %v668, %v662
  %v951 = vpack.c.b16 %v669, %v663
  %v952 = vpack.c.b16 %v670, %v664
  %v953 = vpack.c.b16 %v671, %v665
  %v954 = vpack.c.b16 %v672, %v666
  %v955 = vpack.c.b16 %v673, %v667
  %v956 = vpack.c.b16 %v680, %v674
  %v957 = vpack.c.b16 %v681, %v675
  %v958 = vpack.c.b16 %v682, %v676
  %v959 = vpack.c.b16 %v683, %v677
  %v960 = vpack.c.b16 %v684, %v678
  %v961 = vpack.c.b16 %v685, %v679
  %v962 = vpack.c.b16 %v692, %v686
  %v963 = vpack.c.b16 %v693, %v687
  %v964 = vpack.c.b16 %v694, %v688
  %v965 = vpack.c.b16 %v695, %v689
  %v966 = vpack.c.b16 %v696, %v690
  %v967 = vpack.c.b16 %v697, %v691
  %v968 = vpack.c.b16 %v704, %v698
  %v969 = vpack.c.b16 %v705, %v699
  %v970 = vpack.c.b16 %v706, %v700
  %v971 = vpack.c.b16 %v707, %v701
  %v972 = vpack.c.b16 %v708, %v702
  %v973 = vpack.c.b16 %v709, %v703
  %v974 = vpack.c.b16 %v716, %v710
  %v975 = vpack.c.b16 %v717, %v711
  %v976 = vpack.c.b16 %v718, %v712
  %v977 = vpack.c.b16 %v719, %v713
  %v978 = vpack.c.b16 %v720, %v714
  %v979 = vpack.c.b16 %v721, %v715
  %v980 = vpack.c.b16 %v728, %v722
  %v981 = vpack.c.b16 %v729, %v723
  %v982 = vpack.c.b16 %v730, %v724
  %v983 = vpack.c.b16 %v731, %v725
  %v984 = vpack.c.b16 %v732, %v726
  %v985 = vpack.c.b16 %v733, %v727
  %v986 = vpack.c.b16 %v740, %v734
  %v987 = vpack.c.b16 %v741, %v735
  %v988 = vpack.c.b16 %v742, %v736
  %v989 = vpack.c.b16 %v743, %v737
  %v990 = vpack.c.b16 %v744, %v738
  %v991 = vpack.c.b16 %v745, %v739
  %v992 = vpack.c.b16 %v752, %v746
  %v993 = vpack.c.b16 %v753, %v747
  %v994 = vpack.c.b16 %v754, %v748
  %v995 = vpack.c.b16 %v755, %v749
  %v996 = vpack.c.b16 %v756, %v750
  %v997 = vpack.c.b16 %v757, %v751
  %v998 = vpack.c.b16 %v764, %v758
  %v999 = vpack.c.b16 %v765, %v759
  %v1000 = vpack.c.b16 %v766, %v760
  %v1001 = vpack.c.b16 %v767, %v761
  %v1002 = vpack.c.b16 %v768, %v762
  %v1003 = vpack.c.b16 %v769, %v763
  %v1004 = vpack.c.b16 %v776, %v770
  %v1005 = vpack.c.b16 %v777, %v771
  %v1006 = vpack.c.b16 %v778, %v772
  %v1007 = vpack.c.b16 %v779, %v773
  %v1008 = vpack.c.b16 %v780, %v774
  %v1009 = vpack.c.b16 %v781, %v775
  %v1010 = vpack.c.b16 %v788, %v782
  %v1011 = vpack.c.b16 %v789, %v783
  %v1012 = vpack.c.b16 %v790, %v784
  %v1013 = vpack.c.b16 %v791, %v785
  %v1014 = vpack.c.b16 %v792, %v786
  %v1015 = vpack.c.b16 %v793, %v787
  %v1016 = vpack.c.b16 %v800, %v794
  %v1017 = vpack.c.b16 %v801, %v795
  %v1018 = vpack.c.b16 %v802, %v796
  %v1019 = vpack.c.b16 %v803, %v797
  %v1020 = vpack.c.b16 %v804, %v798
  %v1021 = vpack.c.b16 %v805, %v799
  %v1022 = vpack.c.b16 %v812, %v806
  %v1023 = vpack.c.b16 %v813, %v807
  %v1024 = vpack.c.b16 %v814, %v808
  %v1025 = vpack.c.b16 %v815, %v809
  %v1026 = vpack.c.b16 %v816, %v810
  %v1027 = vpack.c.b16 %v817, %v811
  %v1028 = vpack.c.b16 %v824, %v818
  %v1029 = vpack.c.b16 %v825, %v819
  %v1030 = vpack.c.b16 %v826, %v820
  %v1031 = vpack.c.b16 %v827, %v821
  %v1032 = vpack.c.b16 %v828, %v822
  %v1033 = vpack.c.b16 %v829, %v823
  %v1034 = vpack.c.b16 %v836, %v830
  %v1035 = vpack.c.b16 %v837, %v831
  %v1036 = vpack.c.b16 %v838, %v832
  %v1037 = vpack.c.b16 %v839, %v833
  %v1038 = vpack.c.b16 %v840, %v834
  %v1039 = vpack.c.b16 %v841, %v835
  %v1040 = vpack.c.b16 %v848, %v842
  %v1041 = vpack.c.b16 %v849, %v843
  %v1042 = vpack.c.b16 %v850, %v844
  %v1043 = vpack.c.b16 %v851, %v845
  %v1044 = vpack.c.b16 %v852, %v846
  %v1045 = vpack.c.b16 %v853, %v847
  %v1046 = vpack.c.b16 %v860, %v854
  %v1047 = vpack.c.b16 %v861, %v855
  %v1048 = vpack.c.b16 %v862, %v856
  %v1049 = vpack.c.b16 %v863, %v857
  %v1050 = vpack.c.b16 %v864, %v858
  %v1051 = vpack.c.b16 %v865, %v859
  %v1052 = vpack.c.b16 %v872, %v866
  %v1053 = vpack.c.b16 %v873, %v867
  %v1054 = vpack.c.b16 %v874, %v868
  %v1055 = vpack.c.b16 %v875, %v869
  %v1056 = vpack.c.b16 %v876, %v870
  %v1057 = vpack.c.b16 %v877, %v871
  %v1058 = vpack.c.b16 %v884, %v878
  %v1059 = vpack.c.b16 %v885, %v879
  %v1060 = vpack.c.b16 %v886, %v880
  %v1061 = vpack.c.b16 %v887, %v881
  %v1062 = vpack.c.b16 %v888, %v882
  %v1063 = vpack.c.b16 %v889, %v883
  %v1064 = vpack.c.b16 %v896, %v890
  %v1065 = vpack.c.b16 %v897, %v891
  %v1066 = vpack.c.b16 %v898, %v892
  %v1067 = vpack.c.b16 %v899, %v893
  %v1068 = vpack.c.b16 %v900, %v894
  %v1069 = vpack.c.b16 %v901, %v895
  %v1070 = vpack.c.b16 %v908, %v902
  %v1071 = vpack.c.b16 %v909, %v903
  %v1072 = vpack.c.b16 %v910, %v904
  %v1073 = vpack.c.b16 %v911, %v905
  %v1074 = vpack.c.b16 %v912, %v906
  %v1075 = vpack.c.b16 %v913, %v907
  %v1076 = vpack.c.b16 %v920, %v914
  %v1077 = vpack.c.b16 %v921, %v915
  %v1078 = vpack.c.b16 %v922, %v916
  %v1079 = vpack.c.b16 %v923, %v917
  %v1080 = vpack.c.b16 %v924, %v918
  %v1081 = vpack.c.b16 %v925, %v919
  %v1526 = vunpack.c.l.b16 %v170
  %v1527 = vunpack.c.h.b16 %v170
  %v1528 = vunpack.c.l.b16 %v171
  %v1529 = vunpack.c.h.b16 %v171
  %v1530 = vunpack.c.l.b16 %v172
  %v1531 = vunpack.c.h.b16 %v172
  %v1532 = vunpack.c.l.b16 %v173
  %v1533 = vunpack.c.h.b16 %v173
  %v1534 = vunpack.c.l.b16 %v174
  %v1535 = vunpack.c.h.b16 %v174
  %v1536 = vunpack.c.l.b16 %v175
  %v1537 = vunpack.c.h.b16 %v175
  %v1538 = vunpack.c.l.b16 %v176
  %v1539 = vunpack.c.h.b16 %v176
  %v1540 = vunpack.c.l.b16 %v177
  %v1541 = vunpack.c.h.b16 %v177
  %v1542 = vunpack.c.l.b16 %v178
  %v1543 = vunpack.c.h.b16 %v178
  %v1544 = vunpack.c.l.b16 %v179
  %v1545 = vunpack.c.h.b16 %v179
  %v1546 = vunpack.c.l.b16 %v180
  %v1547 = vunpack.c.h.b16 %v180
  %v1548 = vunpack.c.l.b16 %v181
  %v1549 = vunpack.c.h.b16 %v181
  %v1550 = vunpack.c.l.b16 %v182
  %v1551 = vunpack.c.h.b16 %v182
  %v1552 = vunpack.c.l.b16 %v183
  %v1553 = vunpack.c.h.b16 %v183
  %v1554 = vunpack.c.l.b16 %v184
  %v1555 = vunpack.c.h.b16 %v184
  %v1556 = vunpack.c.l.b16 %v185
  %v1557 = vunpack.c.h.b16 %v185
  %v1558 = vunpack.c.l.b16 %v186
  %v1559 = vunpack.c.h.b16 %v186
  %v1560 = vunpack.c.l.b16 %v187
  %v1561 = vunpack.c.h.b16 %v187
  %v1562 = vunpack.c.l.b16 %v188
  %v1563 = vunpack.c.h.b16 %v188
  %v1564 = vunpack.c.l.b16 %v189
  %v1565 = vunpack.c.h.b16 %v189
  %v1566 = vunpack.c.l.b16 %v190
  %v1567 = vunpack.c.h.b16 %v190
  %v1568 = vunpack.c.l.b16 %v191
  %v1569 = vunpack.c.h.b16 %v191
  %v1570 = vunpack.c.l.b16 %v192
  %v1571 = vunpack.c.h.b16 %v192
  %v1572 = vunpack.c.l.b16 %v193
  %v1573 = vunpack.c.h.b16 %v193
  %v1574 = vunpack.c.l.b16 %v194
  %v1575 = vunpack.c.h.b16 %v194
  %v1576 = vunpack.c.l.b16 %v195
  %v1577 = vunpack.c.h.b16 %v195
  %v1578 = vunpack.c.l.b16 %v196
  %v1579 = vunpack.c.h.b16 %v196
  %v1580 = vunpack.c.l.b16 %v197
  %v1581 = vunpack.c.h.b16 %v197
  %v1582 = vunpack.c.l.b16 %v198
  %v1583 = vunpack.c.h.b16 %v198
  %v1584 = vunpack.c.l.b16 %v199
  %v1585 = vunpack.c.h.b16 %v199
  %v1586 = vunpack.c.l.b16 %v200
  %v1587 = vunpack.c.h.b16 %v200
  %v1588 = vunpack.c.l.b16 %v201
  %v1589 = vunpack.c.h.b16 %v201
  %v1590 = vunpack.c.l.b16 %v202
  %v1591 = vunpack.c.h.b16 %v202
  %v1592 = vunpack.c.l.b16 %v203
  %v1593 = vunpack.c.h.b16 %v203
  %v1594 = vunpack.c.l.b16 %v204
  %v1595 = vunpack.c.h.b16 %v204
  %v1596 = vunpack.c.l.b16 %v205
  %v1597 = vunpack.c.h.b16 %v205
  %v1598 = vunpack.c.l.b16 %v206
  %v1599 = vunpack.c.h.b16 %v206
  %v1600 = vunpack.c.l.b16 %v207
  %v1601 = vunpack.c.h.b16 %v207
  %v1602 = vunpack.c.l.b16 %v208
  %v1603 = vunpack.c.h.b16 %v208
  %v1604 = vunpack.c.l.b16 %v209
  %v1605 = vunpack.c.h.b16 %v209
  %v1606 = vunpack.c.l.b16 %v210
  %v1607 = vunpack.c.h.b16 %v210
  %v1608 = vunpack.c.l.b16 %v211
  %v1609 = vunpack.c.h.b16 %v211
  %v1610 = vunpack.c.l.b16 %v212
  %v1611 = vunpack.c.h.b16 %v212
  %v1612 = vunpack.c.l.b16 %v213
  %v1613 = vunpack.c.h.b16 %v213
  %v1614 = vunpack.c.l.b16 %v214
  %v1615 = vunpack.c.h.b16 %v214
  %v1616 = vunpack.c.l.b16 %v215
  %v1617 = vunpack.c.h.b16 %v215
  %v1618 = vunpack.c.l.b16 %v216
  %v1619 = vunpack.c.h.b16 %v216
  %v1620 = vunpack.c.l.b16 %v217
  %v1621 = vunpack.c.h.b16 %v217
  %v1622 = vunpack.c.l.b16 %v218
  %v1623 = vunpack.c.h.b16 %v218
  %v1624 = vunpack.c.l.b16 %v219
  %v1625 = vunpack.c.h.b16 %v219
  %v1626 = vunpack.c.l.b16 %v220
  %v1627 = vunpack.c.h.b16 %v220
  %v1628 = vunpack.c.l.b16 %v221
  %v1629 = vunpack.c.h.b16 %v221
  %v1630 = vunpack.c.l.b16 %v222
  %v1631 = vunpack.c.h.b16 %v222
  %v1632 = vunpack.c.l.b16 %v223
  %v1633 = vunpack.c.h.b16 %v223
  %v1634 = vunpack.c.l.b16 %v224
  %v1635 = vunpack.c.h.b16 %v224
  %v1636 = vunpack.c.l.b16 %v225
  %v1637 = vunpack.c.h.b16 %v225
  %v1638 = vunpack.c.l.b16 %v226
  %v1639 = vunpack.c.h.b16 %v226
  %v1640 = vunpack.c.l.b16 %v227
  %v1641 = vunpack.c.h.b16 %v227
  %v1642 = vunpack.c.l.b16 %v228
  %v1643 = vunpack.c.h.b16 %v228
  %v1644 = vunpack.c.l.b16 %v229
  %v1645 = vunpack.c.h.b16 %v229
  %v1646 = vunpack.c.l.b16 %v230
  %v1647 = vunpack.c.h.b16 %v230
  %v1648 = vunpack.c.l.b16 %v231
  %v1649 = vunpack.c.h.b16 %v231
  %v1650 = vunpack.c.l.b16 %v232
  %v1651 = vunpack.c.h.b16 %v232
  %v1652 = vunpack.c.l.b16 %v233
  %v1653 = vunpack.c.h.b16 %v233
  %v1654 = vunpack.c.l.b16 %v234
  %v1655 = vunpack.c.h.b16 %v234
  %v1656 = vunpack.c.l.b16 %v235
  %v1657 = vunpack.c.h.b16 %v235
  %v1658 = vunpack.c.l.b16 %v236
  %v1659 = vunpack.c.h.b16 %v236
  %v1660 = vunpack.c.l.b16 %v237
  %v1661 = vunpack.c.h.b16 %v237
  %v1662 = vunpack.c.l.b16 %v238
  %v1663 = vunpack.c.h.b16 %v238
  %v1664 = vunpack.c.l.b16 %v239
  %v1665 = vunpack.c.h.b16 %v239
  %v1666 = vunpack.c.l.b16 %v240
  %v1667 = vunpack.c.h.b16 %v240
  %v1668 = vunpack.c.l.b16 %v241
  %v1669 = vunpack.c.h.b16 %v241
  %v1670 = vunpack.c.l.b16 %v242
  %v1671 = vunpack.c.h.b16 %v242
  %v1672 = vunpack.c.l.b16 %v243
  %v1673 = vunpack.c.h.b16 %v243
  %v1674 = vunpack.c.l.b16 %v244
  %v1675 = vunpack.c.h.b16 %v244
  %v1676 = vunpack.c.l.b16 %v245
  %v1677 = vunpack.c.h.b16 %v245
  %v1678 = vunpack.c.l.b16 %v246
  %v1679 = vunpack.c.h.b16 %v246
  %v1680 = vunpack.c.l.b16 %v247
  %v1681 = vunpack.c.h.b16 %v247
  %v1682 = vunpack.c.l.b16 %v248
  %v1683 = vunpack.c.h.b16 %v248
  %v1684 = vunpack.c.l.b16 %v249
  %v1685 = vunpack.c.h.b16 %v249
  %v1686 = vunpack.c.l.b16 %v250
  %v1687 = vunpack.c.h.b16 %v250
  %v1688 = vunpack.c.l.b16 %v251
  %v1689 = vunpack.c.h.b16 %v251
  %v1690 = vunpack.c.l.b16 %v252
  %v1691 = vunpack.c.h.b16 %v252
  %v1692 = vunpack.c.l.b16 %v253
  %v1693 = vunpack.c.h.b16 %v253
  %v1694 = vunpack.c.l.b16 %v254
  %v1695 = vunpack.c.h.b16 %v254
  %v1696 = vunpack.c.l.b16 %v255
  %v1697 = vunpack.c.h.b16 %v255
  %v1698 = vunpack.c.l.b16 %v256
  %v1699 = vunpack.c.h.b16 %v256
  %v1700 = vunpack.c.l.b16 %v257
  %v1701 = vunpack.c.h.b16 %v257
  %v1702 = vunpack.c.l.b16 %v258
  %v1703 = vunpack.c.h.b16 %v258
  %v1704 = vunpack.c.l.b16 %v259
  %v1705 = vunpack.c.h.b16 %v259
  %v1706 = vunpack.c.l.b16 %v260
  %v1707 = vunpack.c.h.b16 %v260
  %v1708 = vunpack.c.l.b16 %v261
  %v1709 = vunpack.c.h.b16 %v261
  %v1710 = vunpack.c.l.b16 %v262
  %v1711 = vunpack.c.h.b16 %v262
  %v1712 = vunpack.c.l.b16 %v263
  %v1713 = vunpack.c.h.b16 %v263
  %v1714 = vunpack.c.l.b16 %v264
  %v1715 = vunpack.c.h.b16 %v264
  %v1716 = vunpack.c.l.b16 %v265
  %v1717 = vunpack.c.h.b16 %v265
  %v1718 = vunpack.c.l.b16 %v266
  %v1719 = vunpack.c.h.b16 %v266
  %v1720 = vunpack.c.l.b16 %v267
  %v1721 = vunpack.c.h.b16 %v267
  %v1722 = vunpack.c.l.b16 %v268
  %v1723 = vunpack.c.h.b16 %v268
  %v1724 = vunpack.c.l.b16 %v269
  %v1725 = vunpack.c.h.b16 %v269
  %v1726 = vunpack.c.l.b16 %v270
  %v1727 = vunpack.c.h.b16 %v270
  %v1728 = vunpack.c.l.b16 %v271
  %v1729 = vunpack.c.h.b16 %v271
  %v1730 = vunpack.c.l.b16 %v272
  %v1731 = vunpack.c.h.b16 %v272
  %v1732 = vunpack.c.l.b16 %v273
  %v1733 = vunpack.c.h.b16 %v273
  %v1734 = vunpack.c.l.b16 %v274
  %v1735 = vunpack.c.h.b16 %v274
  %v1736 = vunpack.c.l.b16 %v275
  %v1737 = vunpack.c.h.b16 %v275
  %v1738 = vunpack.c.l.b16 %v276
  %v1739 = vunpack.c.h.b16 %v276
  %v1740 = vunpack.c.l.b16 %v277
  %v1741 = vunpack.c.h.b16 %v277
  %v1742 = vunpack.c.l.b16 %v278
  %v1743 = vunpack.c.h.b16 %v278
  %v1744 = vunpack.c.l.b16 %v279
  %v1745 = vunpack.c.h.b16 %v279
  %v1746 = vunpack.c.l.b16 %v280
  %v1747 = vunpack.c.h.b16 %v280
  %v1748 = vunpack.c.l.b16 %v281
  %v1749 = vunpack.c.h.b16 %v281
  %v1750 = vunpack.c.l.b16 %v282
  %v1751 = vunpack.c.h.b16 %v282
  %v1752 = vunpack.c.l.b16 %v283
  %v1753 = vunpack.c.h.b16 %v283
  %v1754 = vunpack.c.l.b16 %v284
  %v1755 = vunpack.c.h.b16 %v284
  %v1756 = vunpack.c.l.b16 %v285
  %v1757 = vunpack.c.h.b16 %v285
  %v1758 = vunpack.c.l.b16 %v286
  %v1759 = vunpack.c.h.b16 %v286
  %v1760 = vunpack.c.l.b16 %v287
  %v1761 = vunpack.c.h.b16 %v287
  %v1762 = vunpack.c.l.b16 %v288
  %v1763 = vunpack.c.h.b16 %v288
  %v1764 = vunpack.c.l.b16 %v289
  %v1765 = vunpack.c.h.b16 %v289
  %v1766 = vunpack.c.l.b16 %v290
  %v1767 = vunpack.c.h.b16 %v290
  %v1768 = vunpack.c.l.b16 %v291
  %v1769 = vunpack.c.h.b16 %v291
  %v1770 = vunpack.c.l.b16 %v292
  %v1771 = vunpack.c.h.b16 %v292
  %v1772 = vunpack.c.l.b16 %v293
  %v1773 = vunpack.c.h.b16 %v293
  %v1774 = vunpack.c.l.b16 %v294
  %v1775 = vunpack.c.h.b16 %v294
  %v1776 = vunpack.c.l.b16 %v295
  %v1777 = vunpack.c.h.b16 %v295
  %v1778 = vunpack.c.l.b16 %v296
  %v1779 = vunpack.c.h.b16 %v296
  %v1780 = vunpack.c.l.b16 %v297
  %v1781 = vunpack.c.h.b16 %v297
  %v1782 = vunpack.c.l.b16 %v298
  %v1783 = vunpack.c.h.b16 %v298
  %v1784 = vunpack.c.l.b16 %v299
  %v1785 = vunpack.c.h.b16 %v299
  %v1786 = vunpack.c.l.b16 %v300
  %v1787 = vunpack.c.h.b16 %v300
  %v1788 = vunpack.c.l.b16 %v301
  %v1789 = vunpack.c.h.b16 %v301
  %v1790 = vunpack.c.l.b16 %v302
  %v1791 = vunpack.c.h.b16 %v302
  %v1792 = vunpack.c.l.b16 %v303
  %v1793 = vunpack.c.h.b16 %v303
  %v1794 = vunpack.c.l.b16 %v304
  %v1795 = vunpack.c.h.b16 %v304
  %v1796 = vunpack.c.l.b16 %v305
  %v1797 = vunpack.c.h.b16 %v305
  %v1798 = vunpack.c.l.b16 %v306
  %v1799 = vunpack.c.h.b16 %v306
  %v1800 = vunpack.c.l.b16 %v307
  %v1801 = vunpack.c.h.b16 %v307
  %v1802 = vunpack.c.l.b16 %v308
  %v1803 = vunpack.c.h.b16 %v308
  %v1804 = vunpack.c.l.b16 %v309
  %v1805 = vunpack.c.h.b16 %v309
  %v1806 = vunpack.c.l.b16 %v310
  %v1807 = vunpack.c.h.b16 %v310
  %v1808 = vunpack.c.l.b16 %v311
  %v1809 = vunpack.c.h.b16 %v311
  %v1810 = vunpack.c.l.b16 %v312
  %v1811 = vunpack.c.h.b16 %v312
  %v1812 = vunpack.c.l.b16 %v313
  %v1813 = vunpack.c.h.b16 %v313
  %v1814 = vunpack.c.l.b16 %v314
  %v1815 = vunpack.c.h.b16 %v314
  %v1816 = vunpack.c.l.b16 %v315
  %v1817 = vunpack.c.h.b16 %v315
  %v1818 = vunpack.c.l.b16 %v316
  %v1819 = vunpack.c.h.b16 %v316
  %v1820 = vunpack.c.l.b16 %v317
  %v1821 = vunpack.c.h.b16 %v317
  %v1822 = vunpack.c.l.b16 %v318
  %v1823 = vunpack.c.h.b16 %v318
  %v1824 = vunpack.c.l.b16 %v319
  %v1825 = vunpack.c.h.b16 %v319
  %v1826 = vunpack.c.l.b16 %v320
  %v1827 = vunpack.c.h.b16 %v320
  %v1828 = vunpack.c.l.b16 %v321
  %v1829 = vunpack.c.h.b16 %v321
  %v1830 = vunpack.c.l.b16 %v322
  %v1831 = vunpack.c.h.b16 %v322
  %v1832 = vunpack.c.l.b16 %v323
  %v1833 = vunpack.c.h.b16 %v323
  %v1834 = vunpack.c.l.b16 %v324
  %v1835 = vunpack.c.h.b16 %v324
  %v1836 = vunpack.c.l.b16 %v325
  %v1837 = vunpack.c.h.b16 %v325
  %v1838 = vunpack.c.l.b16 %v326
  %v1839 = vunpack.c.h.b16 %v326
  %v1840 = vunpack.c.l.b16 %v327
  %v1841 = vunpack.c.h.b16 %v327
  %v1842 = vunpack.c.l.b16 %v328
  %v1843 = vunpack.c.h.b16 %v328
  %v1844 = vunpack.c.l.b16 %v329
  %v1845 = vunpack.c.h.b16 %v329
  %v1846 = vunpack.c.l.b16 %v330
  %v1847 = vunpack.c.h.b16 %v330
  %v1848 = vunpack.c.l.b16 %v331
  %v1849 = vunpack.c.h.b16 %v331
  %v1850 = vunpack.c.l.b16 %v332
  %v1851 = vunpack.c.h.b16 %v332
  %v1852 = vunpack.c.l.b16 %v333
  %v1853 = vunpack.c.h.b16 %v333
  %v1854 = vunpack.c.l.b16 %v334
  %v1855 = vunpack.c.h.b16 %v334
  %v1856 = vunpack.c.l.b16 %v335
  %v1857 = vunpack.c.h.b16 %v335
  %v1858 = vunpack.c.l.b16 %v336
  %v1859 = vunpack.c.h.b16 %v336
  %v1860 = vunpack.c.l.b16 %v337
  %v1861 = vunpack.c.h.b16 %v337
  %v1862 = vunpack.c.l.b16 %v338
  %v1863 = vunpack.c.h.b16 %v338
  %v1864 = vunpack.c.l.b16 %v339
  %v1865 = vunpack.c.h.b16 %v339
  %v1866 = vunpack.c.l.b16 %v340
  %v1867 = vunpack.c.h.b16 %v340
  %v1868 = vunpack.c.l.b16 %v341
  %v1869 = vunpack.c.h.b16 %v341
  %v1870 = vunpack.c.l.b16 %v342
  %v1871 = vunpack.c.h.b16 %v342
  %v1872 = vunpack.c.l.b16 %v343
  %v1873 = vunpack.c.h.b16 %v343
  %v1874 = vunpack.c.l.b16 %v344
  %v1875 = vunpack.c.h.b16 %v344
  %v1876 = vunpack.c.l.b16 %v345
  %v1877 = vunpack.c.h.b16 %v345
  %v1878 = vunpack.c.l.b16 %v346
  %v1879 = vunpack.c.h.b16 %v346
  %v1880 = vunpack.c.l.b16 %v347
  %v1881 = vunpack.c.h.b16 %v347
  %v1882 = vunpack.c.l.b16 %v348
  %v1883 = vunpack.c.h.b16 %v348
  %v1884 = vunpack.c.l.b16 %v349
  %v1885 = vunpack.c.h.b16 %v349
  %v1886 = vunpack.c.l.b16 %v350
  %v1887 = vunpack.c.h.b16 %v350
  %v1888 = vunpack.c.l.b16 %v351
  %v1889 = vunpack.c.h.b16 %v351
  %v1890 = vunpack.c.l.b16 %v352
  %v1891 = vunpack.c.h.b16 %v352
  %v1892 = vunpack.c.l.b16 %v353
  %v1893 = vunpack.c.h.b16 %v353
  %v1894 = vunpack.c.l.b16 %v354
  %v1895 = vunpack.c.h.b16 %v354
  %v1896 = vunpack.c.l.b16 %v355
  %v1897 = vunpack.c.h.b16 %v355
  %v1898 = vunpack.c.l.b16 %v356
  %v1899 = vunpack.c.h.b16 %v356
  %v1900 = vunpack.c.l.b16 %v357
  %v1901 = vunpack.c.h.b16 %v357
  %v1902 = vunpack.c.l.b16 %v358
  %v1903 = vunpack.c.h.b16 %v358
  %v1904 = vunpack.c.l.b16 %v359
  %v1905 = vunpack.c.h.b16 %v359
  %v1906 = vunpack.c.l.b16 %v360
  %v1907 = vunpack.c.h.b16 %v360
  %v1908 = vunpack.c.l.b16 %v361
  %v1909 = vunpack.c.h.b16 %v361
  %v1910 = vunpack.c.l.b16 %v362
  %v1911 = vunpack.c.h.b16 %v362
  %v1912 = vunpack.c.l.b16 %v363
  %v1913 = vunpack.c.h.b16 %v363
  %v1914 = vunpack.c.l.b16 %v364
  %v1915 = vunpack.c.h.b16 %v364
  %v1916 = vunpack.c.l.b16 %v365
  %v1917 = vunpack.c.h.b16 %v365
  %v1918 = vunpack.c.l.b16 %v366
  %v1919 = vunpack.c.h.b16 %v366
  %v1920 = vunpack.c.l.b16 %v367
  %v1921 = vunpack.c.h.b16 %v367
  %v1922 = vunpack.c.l.b16 %v368
  %v1923 = vunpack.c.h.b16 %v368
  %v1924 = vunpack.c.l.b16 %v369
  %v1925 = vunpack.c.h.b16 %v369
  %v1926 = vunpack.c.l.b16 %v370
  %v1927 = vunpack.c.h.b16 %v370
  %v1928 = vunpack.c.l.b16 %v371
  %v1929 = vunpack.c.h.b16 %v371
  %v1930 = vunpack.c.l.b16 %v372
  %v1931 = vunpack.c.h.b16 %v372
  %v1932 = vunpack.c.l.b16 %v373
  %v1933 = vunpack.c.h.b16 %v373
  %v1934 = vunpack.c.l.b16 %v374
  %v1935 = vunpack.c.h.b16 %v374
  %v1936 = vunpack.c.l.b16 %v375
  %v1937 = vunpack.c.h.b16 %v375
  %v1938 = vunpack.c.l.b16 %v376
  %v1939 = vunpack.c.h.b16 %v376
  %v1940 = vunpack.c.l.b16 %v377
  %v1941 = vunpack.c.h.b16 %v377
  %v1942 = vunpack.c.l.b16 %v378
  %v1943 = vunpack.c.h.b16 %v378
  %v1944 = vunpack.c.l.b16 %v379
  %v1945 = vunpack.c.h.b16 %v379
  %v1946 = vunpack.c.l.b16 %v380
  %v1947 = vunpack.c.h.b16 %v380
  %v1948 = vunpack.c.l.b16 %v381
  %v1949 = vunpack.c.h.b16 %v381
  %v1950 = vunpack.c.l.b16 %v382
  %v1951 = vunpack.c.h.b16 %v382
  %v1952 = vunpack.c.l.b16 %v383
  %v1953 = vunpack.c.h.b16 %v383
  %v1954 = vunpack.c.l.b16 %v384
  %v1955 = vunpack.c.h.b16 %v384
  %v1956 = vunpack.c.l.b16 %v385
  %v1957 = vunpack.c.h.b16 %v385
  %v1958 = vunpack.c.l.b16 %v386
  %v1959 = vunpack.c.h.b16 %v386
  %v1960 = vunpack.c.l.b16 %v387
  %v1961 = vunpack.c.h.b16 %v387
  %v1962 = vunpack.c.l.b16 %v388
  %v1963 = vunpack.c.h.b16 %v388
  %v1964 = vunpack.c.l.b16 %v389
  %v1965 = vunpack.c.h.b16 %v389
  %v1966 = vunpack.c.l.b16 %v390
  %v1967 = vunpack.c.h.b16 %v390
  %v1968 = vunpack.c.l.b16 %v391
  %v1969 = vunpack.c.h.b16 %v391
  %v1970 = vunpack.c.l.b16 %v392
  %v1971 = vunpack.c.h.b16 %v392
  %v1972 = vunpack.c.l.b16 %v393
  %v1973 = vunpack.c.h.b16 %v393
  %v1974 = vunpack.c.l.b16 %v394
  %v1975 = vunpack.c.h.b16 %v394
  %v1976 = vunpack.c.l.b16 %v395
  %v1977 = vunpack.c.h.b16 %v395
  %v1978 = vunpack.c.l.b16 %v396
  %v1979 = vunpack.c.h.b16 %v396
  %v1980 = vunpack.c.l.b16 %v397
  %v1981 = vunpack.c.h.b16 %v397
  %v1982 = vunpack.c.l.b16 %v398
  %v1983 = vunpack.c.h.b16 %v398
  %v1984 = vunpack.c.l.b16 %v399
  %v1985 = vunpack.c.h.b16 %v399
  %v1986 = vunpack.c.l.b16 %v400
  %v1987 = vunpack.c.h.b16 %v400
  %v1988 = vunpack.c.l.b16 %v401
  %v1989 = vunpack.c.h.b16 %v401
  %v1990 = vunpack.c.l.b16 %v402
  %v1991 = vunpack.c.h.b16 %v402
  %v1992 = vunpack.c.l.b16 %v403
  %v1993 = vunpack.c.h.b16 %v403
  %v1994 = vunpack.c.l.b16 %v404
  %v1995 = vunpack.c.h.b16 %v404
  %v1996 = vunpack.c.l.b16 %v405
  %v1997 = vunpack.c.h.b16 %v405
  %v1998 = vunpack.c.l.b16 %v406
  %v1999 = vunpack.c.h.b16 %v406
  %v2000 = vunpack.c.l.b16 %v407
  %v2001 = vunpack.c.h.b16 %v407
  %v2002 = vunpack.c.l.b16 %v408
  %v2003 = vunpack.c.h.b16 %v408
  %v2004 = vunpack.c.l.b16 %v409
  %v2005 = vunpack.c.h.b16 %v409
  %v2006 = vunpack.c.l.b16 %v410
  %v2007 = vunpack.c.h.b16 %v410
  %v2008 = vunpack.c.l.b16 %v411
  %v2009 = vunpack.c.h.b16 %v411
  %v2010 = vunpack.c.l.b16 %v412
  %v2011 = vunpack.c.h.b16 %v412
  %v2012 = vunpack.c.l.b16 %v413
  %v2013 = vunpack.c.h.b16 %v413
  %v2014 = vunpack.c.l.b16 %v414
  %v2015 = vunpack.c.h.b16 %v414
  %v2016 = vunpack.c.l.b16 %v415
  %v2017 = vunpack.c.h.b16 %v415
  %v2018 = vunpack.c.l.b16 %v416
  %v2019 = vunpack.c.h.b16 %v416
  %v2020 = vunpack.c.l.b16 %v417
  %v2021 = vunpack.c.h.b16 %v417
  %v2022 = vunpack.c.l.b16 %v418
  %v2023 = vunpack.c.h.b16 %v418
  %v2024 = vunpack.c.l.b16 %v419
  %v2025 = vunpack.c.h.b16 %v419
  %v2026 = vunpack.c.l.b16 %v420
  %v2027 = vunpack.c.h.b16 %v420
  %v2028 = vunpack.c.l.b16 %v421
  %v2029 = vunpack.c.h.b16 %v421
  %v2030 = vunpack.c.l.b16 %v422
  %v2031 = vunpack.c.h.b16 %v422
  %v2032 = vunpack.c.l.b16 %v423
  %v2033 = vunpack.c.h.b16 %v423
  %v2034 = vunpack.c.l.b16 %v424
  %v2035 = vunpack.c.h.b16 %v424
  %v2036 = vunpack.c.l.b16 %v425
  %v2037 = vunpack.c.h.b16 %v425
  %v2038 = vunpack.c.l.b16 %v426
  %v2039 = vunpack.c.h.b16 %v426
  %v2040 = vunpack.c.l.b16 %v427
  %v2041 = vunpack.c.h.b16 %v427
  %v2042 = vunpack.c.l.b16 %v428
  %v2043 = vunpack.c.h.b16 %v428
  %v2044 = vunpack.c.l.b16 %v429
  %v2045 = vunpack.c.h.b16 %v429
  %v2046 = vunpack.c.l.b16 %v430
  %v2047 = vunpack.c.h.b16 %v430
  %v2048 = vunpack.c.l.b16 %v431
  %v2049 = vunpack.c.h.b16 %v431
  %v2050 = vunpack.c.l.b16 %v432
  %v2051 = vunpack.c.h.b16 %v432
  %v2052 = vunpack.c.l.b16 %v433
  %v2053 = vunpack.c.h.b16 %v433
  %v2054 = vunpack.c.l.b16 %v434
  %v2055 = vunpack.c.h.b16 %v434
  %v2056 = vunpack.c.l.b16 %v435
  %v2057 = vunpack.c.h.b16 %v435
  %v2058 = vunpack.c.l.b16 %v436
  %v2059 = vunpack.c.h.b16 %v436
  %v2060 = vunpack.c.l.b16 %v437
  %v2061 = vunpack.c.h.b16 %v437
  %v2062 = vunpack.c.l.b16 %v438
  %v2063 = vunpack.c.h.b16 %v438
  %v2064 = vunpack.c.l.b16 %v439
  %v2065 = vunpack.c.h.b16 %v439
  %v2066 = vunpack.c.l.b16 %v440
  %v2067 = vunpack.c.h.b16 %v440
  %v2068 = vunpack.c.l.b16 %v441
  %v2069 = vunpack.c.h.b16 %v441
  %v2070 = vunpack.c.l.b16 %v442
  %v2071 = vunpack.c.h.b16 %v442
  %v2072 = vunpack.c.l.b16 %v443
  %v2073 = vunpack.c.h.b16 %v443
  %v2074 = vunpack.c.l.b16 %v444
  %v2075 = vunpack.c.h.b16 %v444
  %v2076 = vunpack.c.l.b16 %v445
  %v2077 = vunpack.c.h.b16 %v445
  %v2078 = vunpack.c.l.b16 %v446
  %v2079 = vunpack.c.h.b16 %v446
  %v2080 = vunpack.c.l.b16 %v447
  %v2081 = vunpack.c.h.b16 %v447
  %v2082 = vunpack.c.l.b16 %v448
  %v2083 = vunpack.c.h.b16 %v448
  %v2084 = vunpack.c.l.b16 %v449
  %v2085 = vunpack.c.h.b16 %v449
  %v2086 = vunpack.c.l.b16 %v450
  %v2087 = vunpack.c.h.b16 %v450
  %v2088 = vunpack.c.l.b16 %v451
  %v2089 = vunpack.c.h.b16 %v451
  %v2090 = vunpack.c.l.b16 %v452
  %v2091 = vunpack.c.h.b16 %v452
  %v2092 = vunpack.c.l.b16 %v453
  %v2093 = vunpack.c.h.b16 %v453
  %v2094 = vunpack.c.l.b16 %v454
  %v2095 = vunpack.c.h.b16 %v454
  %v2096 = vunpack.c.l.b16 %v455
  %v2097 = vunpack.c.h.b16 %v455
  %v2098 = vunpack.c.l.b16 %v456
  %v2099 = vunpack.c.h.b16 %v456
  %v2100 = vunpack.c.l.b16 %v457
  %v2101 = vunpack.c.h.b16 %v457
  %v2102 = vpack.c.b16 %v1532, %v1526
  %v2103 = vpack.c.b16 %v1533, %v1527
  %v2104 = vpack.c.b16 %v1534, %v1528
  %v2105 = vpack.c.b16 %v1535, %v1529
  %v2106 = vpack.c.b16 %v1536, %v1530
  %v2107 = vpack.c.b16 %v1537, %v1531
  %v2108 = vpack.c.b16 %v1544, %v1538
  %v2109 = vpack.c.b16 %v1545, %v1539
  %v2110 = vpack.c.b16 %v1546, %v1540
  %v2111 = vpack.c.b16 %v1547, %v1541
  %v2112 = vpack.c.b16 %v1548, %v1542
  %v2113 = vpack.c.b16 %v1549, %v1543
  %v2114 = vpack.c.b16 %v1556, %v1550
  %v2115 = vpack.c.b16 %v1557, %v1551
  %v2116 = vpack.c.b16 %v1558, %v1552
  %v2117 = vpack.c.b16 %v1559, %v1553
  %v2118 = vpack.c.b16 %v1560, %v1554
  %v2119 = vpack.c.b16 %v1561, %v1555
  %v2120 = vpack.c.b16 %v1568, %v1562
  %v2121 = vpack.c.b16 %v1569, %v1563
  %v2122 = vpack.c.b16 %v1570, %v1564
  %v2123 = vpack.c.b16 %v1571, %v1565
  %v2124 = vpack.c.b16 %v1572, %v1566
  %v2125 = vpack.c.b16 %v1573, %v1567
  %v2126 = vpack.c.b16 %v1580, %v1574
  %v2127 = vpack.c.b16 %v1581, %v1575
  %v2128 = vpack.c.b16 %v1582, %v1576
  %v2129 = vpack.c.b16 %v1583, %v1577
  %v2130 = vpack.c.b16 %v1584, %v1578
  %v2131 = vpack.c.b16 %v1585, %v1579
  %v2132 = vpack.c.b16 %v1592, %v1586
  %v2133 = vpack.c.b16 %v1593, %v1587
  %v2134 = vpack.c.b16 %v1594, %v1588
  %v2135 = vpack.c.b16 %v1595, %v1589
  %v2136 = vpack.c.b16 %v1596, %v1590
  %v2137 = vpack.c.b16 %v1597, %v1591
  %v2138 = vpack.c.b16 %v1604, %v1598
  %v2139 = vpack.c.b16 %v1605, %v1599
  %v2140 = vpack.c.b16 %v1606, %v1600
  %v2141 = vpack.c.b16 %v1607, %v1601
  %v2142 = vpack.c.b16 %v1608, %v1602
  %v2143 = vpack.c.b16 %v1609, %v1603
  %v2144 = vpack.c.b16 %v1616, %v1610
  %v2145 = vpack.c.b16 %v1617, %v1611
  %v2146 = vpack.c.b16 %v1618, %v1612
  %v2147 = vpack.c.b16 %v1619, %v1613
  %v2148 = vpack.c.b16 %v1620, %v1614
  %v2149 = vpack.c.b16 %v1621, %v1615
  %v2150 = vpack.c.b16 %v1628, %v1622
  %v2151 = vpack.c.b16 %v1629, %v1623
  %v2152 = vpack.c.b16 %v1630, %v1624
  %v2153 = vpack.c.b16 %v1631, %v1625
  %v2154 = vpack.c.b16 %v1632, %v1626
  %v2155 = vpack.c.b16 %v1633, %v1627
  %v2156 = vpack.c.b16 %v1640, %v1634
  %v2157 = vpack.c.b16 %v1641, %v1635
  %v2158 = vpack.c.b16 %v1642, %v1636
  %v2159 = vpack.c.b16 %v1643, %v1637
  %v2160 = vpack.c.b16 %v1644, %v1638
  %v2161 = vpack.c.b16 %v1645, %v1639
  %v2162 = vpack.c.b16 %v1652, %v1646
  %v2163 = vpack.c.b16 %v1653, %v1647
  %v2164 = vpack.c.b16 %v1654, %v1648
  %v2165 = vpack.c.b16 %v1655, %v1649
  %v2166 = vpack.c.b16 %v1656, %v1650
  %v2167 = vpack.c.b16 %v1657, %v1651
  %v2168 = vpack.c.b16 %v1664, %v1658
  %v2169 = vpack.c.b16 %v1665, %v1659
  %v2170 = vpack.c.b16 %v1666, %v1660
  %v2171 = vpack.c.b16 %v1667, %v1661
  %v2172 = vpack.c.b16 %v1668, %v1662
  %v2173 = vpack.c.b16 %v1669, %v1663
  %v2174 = vpack.c.b16 %v1676, %v1670
  %v2175 = vpack.c.b16 %v1677, %v1671
  %v2176 = vpack.c.b16 %v1678, %v1672
  %v2177 = vpack.c.b16 %v1679, %v1673
  %v2178 = vpack.c.b16 %v1680, %v1674
  %v2179 = vpack.c.b16 %v1681, %v1675
  %v2180 = vpack.c.b16 %v1688, %v1682
  %v2181 = vpack.c.b16 %v1689, %v1683
  %v2182 = vpack.c.b16 %v1690, %v1684
  %v2183 = vpack.c.b16 %v1691, %v1685
  %v2184 = vpack.c.b16 %v1692, %v1686
  %v2185 = vpack.c.b16 %v1693, %v1687
  %v2186 = vpack.c.b16 %v1700, %v1694
  %v2187 = vpack.c.b16 %v1701, %v1695
  %v2188 = vpack.c.b16 %v1702, %v1696
  %v2189 = vpack.c.b16 %v1703, %v1697
  %v2190 = vpack.c.b16 %v1704, %v1698
  %v2191 = vpack.c.b16 %v1705, %v1699
  %v2192 = vpack.c.b16 %v1712, %v1706
  %v2193 = vpack.c.b16 %v1713, %v1707
  %v2194 = vpack.c.b16 %v1714, %v1708
  %v2195 = vpack.c.b16 %v1715, %v1709
  %v2196 = vpack.c.b16 %v1716, %v1710
  %v2197 = vpack.c.b16 %v1717, %v1711
  %v2198 = vpack.c.b16 %v1724, %v1718
  %v2199 = vpack.c.b16 %v1725, %v1719
  %v2200 = vpack.c.b16 %v1726, %v1720
  %v2201 = vpack.c.b16 %v1727, %v1721
  %v2202 = vpack.c.b16 %v1728, %v1722
  %v2203 = vpack.c.b16 %v1729, %v1723
  %v2204 = vpack.c.b16 %v1736, %v1730
  %v2205 = vpack.c.b16 %v1737, %v1731
  %v2206 = vpack.c.b16 %v1738, %v1732
  %v2207 = vpack.c.b16 %v1739, %v1733
  %v2208 = vpack.c.b16 %v1740, %v1734
  %v2209 = vpack.c.b16 %v1741, %v1735
  %v2210 = vpack.c.b16 %v1748, %v1742
  %v2211 = vpack.c.b16 %v1749, %v1743
  %v2212 = vpack.c.b16 %v1750, %v1744
  %v2213 = vpack.c.b16 %v1751, %v1745
  %v2214 = vpack.c.b16 %v1752, %v1746
  %v2215 = vpack.c.b16 %v1753, %v1747
  %v2216 = vpack.c.b16 %v1760, %v1754
  %v2217 = vpack.c.b16 %v1761, %v1755
  %v2218 = vpack.c.b16 %v1762, %v1756
  %v2219 = vpack.c.b16 %v1763, %v1757
  %v2220 = vpack.c.b16 %v1764, %v1758
  %v2221 = vpack.c.b16 %v1765, %v1759
  %v2222 = vpack.c.b16 %v1772, %v1766
  %v2223 = vpack.c.b16 %v1773, %v1767
  %v2224 = vpack.c.b16 %v1774, %v1768
  %v2225 = vpack.c.b16 %v1775, %v1769
  %v2226 = vpack.c.b16 %v1776, %v1770
  %v2227 = vpack.c.b16 %v1777, %v1771
  %v2228 = vpack.c.b16 %v1784, %v1778
  %v2229 = vpack.c.b16 %v1785, %v1779
  %v2230 = vpack.c.b16 %v1786, %v1780
  %v2231 = vpack.c.b16 %v1787, %v1781
  %v2232 = vpack.c.b16 %v1788, %v1782
  %v2233 = vpack.c.b16 %v1789, %v1783
  %v2234 = vpack.c.b16 %v1796, %v1790
  %v2235 = vpack.c.b16 %v1797, %v1791
  %v2236 = vpack.c.b16 %v1798, %v1792
  %v2237 = vpack.c.b16 %v1799, %v1793
  %v2238 = vpack.c.b16 %v1800, %v1794
  %v2239 = vpack.c.b16 %v1801, %v1795
  %v2240 = vpack.c.b16 %v1808, %v1802
  %v2241 = vpack.c.b16 %v1809, %v1803
  %v2242 = vpack.c.b16 %v1810, %v1804
  %v2243 = vpack.c.b16 %v1811, %v1805
  %v2244 = vpack.c.b16 %v1812, %v1806
  %v2245 = vpack.c.b16 %v1813, %v1807
  %v2246 = vpack.c.b16 %v1820, %v1814
  %v2247 = vpack.c.b16 %v1821, %v1815
  %v2248 = vpack.c.b16 %v1822, %v1816
  %v2249 = vpack.c.b16 %v1823, %v1817
  %v2250 = vpack.c.b16 %v1824, %v1818
  %v2251 = vpack.c.b16 %v1825, %v1819
  %v2252 = vpack.c.b16 %v1832, %v1826
  %v2253 = vpack.c.b16 %v1833, %v1827
  %v2254 = vpack.c.b16 %v1834, %v1828
  %v2255 = vpack.c.b16 %v1835, %v1829
  %v2256 = vpack.c.b16 %v1836, %v1830
  %v2257 = vpack.c.b16 %v1837, %v1831
  %v2258 = vpack.c.b16 %v1844, %v1838
  %v2259 = vpack.c.b16 %v1845, %v1839
  %v2260 = vpack.c.b16 %v1846, %v1840
  %v2261 = vpack.c.b16 %v1847, %v1841
  %v2262 = vpack.c.b16 %v1848, %v1842
  %v2263 = vpack.c.b16 %v1849, %v1843
  %v2264 = vpack.c.b16 %v1856, %v1850
  %v2265 = vpack.c.b16 %v1857, %v1851
  %v2266 = vpack.c.b16 %v1858, %v1852
  %v2267 = vpack.c.b16 %v1859, %v1853
  %v2268 = vpack.c.b16 %v1860, %v1854
  %v2269 = vpack.c.b16 %v1861, %v1855
  %v2270 = vpack.c.b16 %v1868, %v1862
  %v2271 = vpack.c.b16 %v1869, %v1863
  %v2272 = vpack.c.b16 %v1870, %v1864
  %v2273 = vpack.c.b16 %v1871, %v1865
  %v2274 = vpack.c.b16 %v1872, %v1866
  %v2275 = vpack.c.b16 %v1873, %v1867
  %v2276 = vpack.c.b16 %v1880, %v1874
  %v2277 = vpack.c.b16 %v1881, %v1875
  %v2278 = vpack.c.b16 %v1882, %v1876
  %v2279 = vpack.c.b16 %v1883, %v1877
  %v2280 = vpack.c.b16 %v1884, %v1878
  %v2281 = vpack.c.b16 %v1885, %v1879
  %v2282 = vpack.c.b16 %v1892, %v1886
  %v2283 = vpack.c.b16 %v1893, %v1887
  %v2284 = vpack.c.b16 %v1894, %v1888
  %v2285 = vpack.c.b16 %v1895, %v1889
  %v2286 = vpack.c.b16 %v1896, %v1890
  %v2287 = vpack.c.b16 %v1897, %v1891
  %v2288 = vpack.c.b16 %v1904, %v1898
  %v2289 = vpack.c.b16 %v1905, %v1899
  %v2290 = vpack.c.b16 %v1906, %v1900
  %v2291 = vpack.c.b16 %v1907, %v1901
  %v2292 = vpack.c.b16 %v1908, %v1902
  %v2293 = vpack.c.b16 %v1909, %v1903
  %v2294 = vpack.c.b16 %v1916, %v1910
  %v2295 = vpack.c.b16 %v1917, %v1911
  %v2296 = vpack.c.b16 %v1918, %v1912
  %v2297 = vpack.c.b16 %v1919, %v1913
  %v2298 = vpack.c.b16 %v1920, %v1914
  %v2299 = vpack.c.b16 %v1921, %v1915
  %v2300 = vpack.c.b16 %v1928, %v1922
  %v2301 = vpack.c.b16 %v1929, %v1923
  %v2302 = vpack.c.b16 %v1930, %v1924
  %v2303 = vpack.c.b16 %v1931, %v1925
  %v2304 = vpack.c.b16 %v1932, %v1926
  %v2305 = vpack.c.b16 %v1933, %v1927
  %v2306 = vpack.c.b16 %v1940, %v1934
  %v2307 = vpack.c.b16 %v1941, %v1935
  %v2308 = vpack.c.b16 %v1942, %v1936
  %v2309 = vpack.c.b16 %v1943, %v1937
  %v2310 = vpack.c.b16 %v1944, %v1938
  %v2311 = vpack.c.b16 %v1945, %v1939
  %v2312 = vpack.c.b16 %v1952, %v1946
  %v2313 = vpack.c.b16 %v1953, %v1947
  %v2314 = vpack.c.b16 %v1954, %v1948
  %v2315 = vpack.c.b16 %v1955, %v1949
  %v2316 = vpack.c.b16 %v1956, %v1950
  %v2317 = vpack.c.b16 %v1957, %v1951
  %v2318 = vpack.c.b16 %v1964, %v1958
  %v2319 = vpack.c.b16 %v1965, %v1959
  %v2320 = vpack.c.b16 %v1966, %v1960
  %v2321 = vpack.c.b16 %v1967, %v1961
  %v2322 = vpack.c.b16 %v1968, %v1962
  %v2323 = vpack.c.b16 %v1969, %v1963
  %v2324 = vpack.c.b16 %v1976, %v1970
  %v2325 = vpack.c.b16 %v1977, %v1971
  %v2326 = vpack.c.b16 %v1978, %v1972
  %v2327 = vpack.c.b16 %v1979, %v1973
  %v2328 = vpack.c.b16 %v1980, %v1974
  %v2329 = vpack.c.b16 %v1981, %v1975
  %v2330 = vpack.c.b16 %v1988, %v1982
  %v2331 = vpack.c.b16 %v1989, %v1983
  %v2332 = vpack.c.b16 %v1990, %v1984
  %v2333 = vpack.c.b16 %v1991, %v1985
  %v2334 = vpack.c.b16 %v1992, %v1986
  %v2335 = vpack.c.b16 %v1993, %v1987
  %v2336 = vpack.c.b16 %v2000, %v1994
  %v2337 = vpack.c.b16 %v2001, %v1995
  %v2338 = vpack.c.b16 %v2002, %v1996
  %v2339 = vpack.c.b16 %v2003, %v1997
  %v2340 = vpack.c.b16 %v2004, %v1998
  %v2341 = vpack.c.b16 %v2005, %v1999
  %v2342 = vpack.c.b16 %v2012, %v2006
  %v2343 = vpack.c.b16 %v2013, %v2007
  %v2344 = vpack.c.b16 %v2014, %v2008
  %v2345 = vpack.c.b16 %v2015, %v2009
  %v2346 = vpack.c.b16 %v2016, %v2010
  %v2347 = vpack.c.b16 %v2017, %v2011
  %v2348 = vpack.c.b16 %v2024, %v2018
  %v2349 = vpack.c.b16 %v2025, %v2019
  %v2350 = vpack.c.b16 %v2026, %v2020
  %v2351 = vpack.c.b16 %v2027, %v2021
  %v2352 = vpack.c.b16 %v2028, %v2022
  %v2353 = vpack.c.b16 %v2029, %v2023
  %v2354 = vpack.c.b16 %v2036, %v2030
  %v2355 = vpack.c.b16 %v2037, %v2031
  %v2356 = vpack.c.b16 %v2038, %v2032
  %v2357 = vpack.c.b16 %v2039, %v2033
  %v2358 = vpack.c.b16 %v2040, %v2034
  %v2359 = vpack.c.b16 %v2041, %v2035
  %v2360 = vpack.c.b16 %v2048, %v2042
  %v2361 = vpack.c.b16 %v2049, %v2043
  %v2362 = vpack.c.b16 %v2050, %v2044
  %v2363 = vpack.c.b16 %v2051, %v2045
  %v2364 = vpack.c.b16 %v2052, %v2046
  %v2365 = vpack.c.b16 %v2053, %v2047
  %v2366 = vpack.c.b16 %v2060, %v2054
  %v2367 = vpack.c.b16 %v2061, %v2055
  %v2368 = vpack.c.b16 %v2062, %v2056
  %v2369 = vpack.c.b16 %v2063, %v2057
  %v2370 = vpack.c.b16 %v2064, %v2058
  %v2371 = vpack.c.b16 %v2065, %v2059
  %v2372 = vpack.c.b16 %v2072, %v2066
  %v2373 = vpack.c.b16 %v2073, %v2067
  %v2374 = vpack.c.b16 %v2074, %v2068
  %v2375 = vpack.c.b16 %v2075, %v2069
  %v2376 = vpack.c.b16 %v2076, %v2070
  %v2377 = vpack.c.b16 %v2077, %v2071
  %v2378 = vpack.c.b16 %v2084, %v2078
  %v2379 = vpack.c.b16 %v2085, %v2079
  %v2380 = vpack.c.b16 %v2086, %v2080
  %v2381 = vpack.c.b16 %v2087, %v2081
  %v2382 = vpack.c.b16 %v2088, %v2082
  %v2383 = vpack.c.b16 %v2089, %v2083
  %v2384 = vpack.c.b16 %v2096, %v2090
  %v2385 = vpack.c.b16 %v2097, %v2091
  %v2386 = vpack.c.b16 %v2098, %v2092
  %v2387 = vpack.c.b16 %v2099, %v2093
  %v2388 = vpack.c.b16 %v2100, %v2094
  %v2389 = vpack.c.b16 %v2101, %v2095
  %2678 = vmatpush.bf16.msra.mxu0 %v2144
  %2679 = vmatpush.bf16.msra.mxu0 %v2138
  %2680 = vmatpush.bf16.msra.mxu0 %v2132
  %2681 = vmatpush.bf16.msra.mxu0 %v2126
  %2682 = vmatpush.bf16.msra.mxu0 %v2120
  %2683 = vmatpush.bf16.msra.mxu0 %v2114
  %2684 = vmatpush.bf16.msra.mxu0 %v2108
  %2685 = vmatpush.bf16.msra.mxu0 %v2102
  %2686 = vmatmul.bf16.gmra.mxu0 %v926
  %v2687 = vpop.f32.mrf.mxu0
  %v2688 = vadd.f32 0.0, %v2687
  %v2689 = vpop.f32.mrf.mxu0
  %v2690 = vadd.f32 0.0, %v2689
  %2691 = vmatmul.bf16.gmra.mxu0 %v932
  %v2692 = vpop.f32.mrf.mxu0
  %v2693 = vadd.f32 0.0, %v2692
  %v2694 = vpop.f32.mrf.mxu0
  %v2695 = vadd.f32 0.0, %v2694
  %2696 = vmatmul.bf16.gmra.mxu0 %v938
  %v2697 = vpop.f32.mrf.mxu0
  %v2698 = vadd.f32 0.0, %v2697
  %v2699 = vpop.f32.mrf.mxu0
  %v2700 = vadd.f32 0.0, %v2699
  %2701 = vmatmul.bf16.gmra.mxu0 %v944
  %v2702 = vpop.f32.mrf.mxu0
  %v2703 = vadd.f32 0.0, %v2702
  %v2704 = vpop.f32.mrf.mxu0
  %v2705 = vadd.f32 0.0, %v2704
  %2706 = vmatmul.bf16.gmra.mxu0 %v950
  %v2707 = vpop.f32.mrf.mxu0
  %v2708 = vadd.f32 0.0, %v2707
  %v2709 = vpop.f32.mrf.mxu0
  %v2710 = vadd.f32 0.0, %v2709
  %2711 = vmatmul.bf16.gmra.mxu0 %v956
  %v2712 = vpop.f32.mrf.mxu0
  %v2713 = vadd.f32 0.0, %v2712
  %v2714 = vpop.f32.mrf.mxu0
  %v2715 = vadd.f32 0.0, %v2714
  %2716 = vmatmul.bf16.gmra.mxu0 %v962
  %v2717 = vpop.f32.mrf.mxu0
  %v2718 = vadd.f32 0.0, %v2717
  %v2719 = vpop.f32.mrf.mxu0
  %v2720 = vadd.f32 0.0, %v2719
  %2721 = vmatmul.bf16.gmra.mxu0 %v968
  %v2722 = vpop.f32.mrf.mxu0
  %v2723 = vadd.f32 0.0, %v2722
  %v2724 = vpop.f32.mrf.mxu0
  %v2725 = vadd.f32 0.0, %v2724
  %2726 = vmatmul.bf16.gmra.mxu0 %v974
  %v2727 = vpop.f32.mrf.mxu0
  %v2728 = vadd.f32 0.0, %v2727
  %v2729 = vpop.f32.mrf.mxu0
  %v2730 = vadd.f32 0.0, %v2729
  %2731 = vmatmul.bf16.gmra.mxu0 %v980
  %v2732 = vpop.f32.mrf.mxu0
  %v2733 = vadd.f32 0.0, %v2732
  %v2734 = vpop.f32.mrf.mxu0
  %v2735 = vadd.f32 0.0, %v2734
  %2736 = vmatmul.bf16.gmra.mxu0 %v986
  %v2737 = vpop.f32.mrf.mxu0
  %v2738 = vadd.f32 0.0, %v2737
  %v2739 = vpop.f32.mrf.mxu0
  %v2740 = vadd.f32 0.0, %v2739
  %2741 = vmatmul.bf16.gmra.mxu0 %v992
  %v2742 = vpop.f32.mrf.mxu0
  %v2743 = vadd.f32 0.0, %v2742
  %v2744 = vpop.f32.mrf.mxu0
  %v2745 = vadd.f32 0.0, %v2744
  %2746 = vmatmul.bf16.gmra.mxu0 %v998
  %v2747 = vpop.f32.mrf.mxu0
  %v2748 = vadd.f32 0.0, %v2747
  %v2749 = vpop.f32.mrf.mxu0
  %v2750 = vadd.f32 0.0, %v2749
  %2751 = vmatmul.bf16.gmra.mxu0 %v1004
  %v2752 = vpop.f32.mrf.mxu0
  %v2753 = vadd.f32 0.0, %v2752
  %v2754 = vpop.f32.mrf.mxu0
  %v2755 = vadd.f32 0.0, %v2754
  %2756 = vmatmul.bf16.gmra.mxu0 %v1010
  %v2757 = vpop.f32.mrf.mxu0
  %v2758 = vadd.f32 0.0, %v2757
  %v2759 = vpop.f32.mrf.mxu0
  %v2760 = vadd.f32 0.0, %v2759
  %2761 = vmatmul.bf16.gmra.mxu0 %v1016
  %v2762 = vpop.f32.mrf.mxu0
  %v2763 = vadd.f32 0.0, %v2762
  %v2764 = vpop.f32.mrf.mxu0
  %v2765 = vadd.f32 0.0, %v2764
  %2766 = vmatmul.bf16.gmra.mxu0 %v1022
  %v2767 = vpop.f32.mrf.mxu0
  %v2768 = vadd.f32 0.0, %v2767
  %v2769 = vpop.f32.mrf.mxu0
  %v2770 = vadd.f32 0.0, %v2769
  %2771 = vmatmul.bf16.gmra.mxu0 %v1028
  %v2772 = vpop.f32.mrf.mxu0
  %v2773 = vadd.f32 0.0, %v2772
  %v2774 = vpop.f32.mrf.mxu0
  %v2775 = vadd.f32 0.0, %v2774
  %2776 = vmatmul.bf16.gmra.mxu0 %v1034
  %v2777 = vpop.f32.mrf.mxu0
  %v2778 = vadd.f32 0.0, %v2777
  %v2779 = vpop.f32.mrf.mxu0
  %v2780 = vadd.f32 0.0, %v2779
  %2781 = vmatmul.bf16.gmra.mxu0 %v1040
  %v2782 = vpop.f32.mrf.mxu0
  %v2783 = vadd.f32 0.0, %v2782
  %v2784 = vpop.f32.mrf.mxu0
  %v2785 = vadd.f32 0.0, %v2784
  %2786 = vmatmul.bf16.gmra.mxu0 %v1046
  %v2787 = vpop.f32.mrf.mxu0
  %v2788 = vadd.f32 0.0, %v2787
  %v2789 = vpop.f32.mrf.mxu0
  %v2790 = vadd.f32 0.0, %v2789
  %2791 = vmatmul.bf16.gmra.mxu0 %v1052
  %v2792 = vpop.f32.mrf.mxu0
  %v2793 = vadd.f32 0.0, %v2792
  %v2794 = vpop.f32.mrf.mxu0
  %v2795 = vadd.f32 0.0, %v2794
  %2796 = vmatmul.bf16.gmra.mxu0 %v1058
  %v2797 = vpop.f32.mrf.mxu0
  %v2798 = vadd.f32 0.0, %v2797
  %v2799 = vpop.f32.mrf.mxu0
  %v2800 = vadd.f32 0.0, %v2799
  %2801 = vmatmul.bf16.gmra.mxu0 %v1064
  %v2802 = vpop.f32.mrf.mxu0
  %v2803 = vadd.f32 0.0, %v2802
  %v2804 = vpop.f32.mrf.mxu0
  %v2805 = vadd.f32 0.0, %v2804
  %2806 = vmatmul.bf16.gmra.mxu0 %v1070
  %v2807 = vpop.f32.mrf.mxu0
  %v2808 = vadd.f32 0.0, %v2807
  %v2809 = vpop.f32.mrf.mxu0
  %v2810 = vadd.f32 0.0, %v2809
  %2811 = vmatmul.bf16.gmra.mxu0 %v1076
  %v2812 = vpop.f32.mrf.mxu0
  %v2813 = vadd.f32 0.0, %v2812
  %v2814 = vpop.f32.mrf.mxu0
  %v2815 = vadd.f32 0.0, %v2814
  %2816 = vdwg.mxu0
  %2817 = vmatpush.bf16.msra.mxu0 %v2192
  %2818 = vmatpush.bf16.msra.mxu0 %v2186
  %2819 = vmatpush.bf16.msra.mxu0 %v2180
  %2820 = vmatpush.bf16.msra.mxu0 %v2174
  %2821 = vmatpush.bf16.msra.mxu0 %v2168
  %2822 = vmatpush.bf16.msra.mxu0 %v2162
  %2823 = vmatpush.bf16.msra.mxu0 %v2156
  %2824 = vmatpush.bf16.msra.mxu0 %v2150
  %2825 = vmatmul.bf16.gmra.mxu0 %v927
  %v2826 = vpop.f32.mrf.mxu0
  %v2827 = vadd.f32 %v2688, %v2826
  %v2828 = vpop.f32.mrf.mxu0
  %v2829 = vadd.f32 %v2690, %v2828
  %2830 = vmatmul.bf16.gmra.mxu0 %v933
  %v2831 = vpop.f32.mrf.mxu0
  %v2832 = vadd.f32 %v2693, %v2831
  %v2833 = vpop.f32.mrf.mxu0
  %v2834 = vadd.f32 %v2695, %v2833
  %2835 = vmatmul.bf16.gmra.mxu0 %v939
  %v2836 = vpop.f32.mrf.mxu0
  %v2837 = vadd.f32 %v2698, %v2836
  %v2838 = vpop.f32.mrf.mxu0
  %v2839 = vadd.f32 %v2700, %v2838
  %2840 = vmatmul.bf16.gmra.mxu0 %v945
  %v2841 = vpop.f32.mrf.mxu0
  %v2842 = vadd.f32 %v2703, %v2841
  %v2843 = vpop.f32.mrf.mxu0
  %v2844 = vadd.f32 %v2705, %v2843
  %2845 = vmatmul.bf16.gmra.mxu0 %v951
  %v2846 = vpop.f32.mrf.mxu0
  %v2847 = vadd.f32 %v2708, %v2846
  %v2848 = vpop.f32.mrf.mxu0
  %v2849 = vadd.f32 %v2710, %v2848
  %2850 = vmatmul.bf16.gmra.mxu0 %v957
  %v2851 = vpop.f32.mrf.mxu0
  %v2852 = vadd.f32 %v2713, %v2851
  %v2853 = vpop.f32.mrf.mxu0
  %v2854 = vadd.f32 %v2715, %v2853
  %2855 = vmatmul.bf16.gmra.mxu0 %v963
  %v2856 = vpop.f32.mrf.mxu0
  %v2857 = vadd.f32 %v2718, %v2856
  %v2858 = vpop.f32.mrf.mxu0
  %v2859 = vadd.f32 %v2720, %v2858
  %2860 = vmatmul.bf16.gmra.mxu0 %v969
  %v2861 = vpop.f32.mrf.mxu0
  %v2862 = vadd.f32 %v2723, %v2861
  %v2863 = vpop.f32.mrf.mxu0
  %v2864 = vadd.f32 %v2725, %v2863
  %2865 = vmatmul.bf16.gmra.mxu0 %v975
  %v2866 = vpop.f32.mrf.mxu0
  %v2867 = vadd.f32 %v2728, %v2866
  %v2868 = vpop.f32.mrf.mxu0
  %v2869 = vadd.f32 %v2730, %v2868
  %2870 = vmatmul.bf16.gmra.mxu0 %v981
  %v2871 = vpop.f32.mrf.mxu0
  %v2872 = vadd.f32 %v2733, %v2871
  %v2873 = vpop.f32.mrf.mxu0
  %v2874 = vadd.f32 %v2735, %v2873
  %2875 = vmatmul.bf16.gmra.mxu0 %v987
  %v2876 = vpop.f32.mrf.mxu0
  %v2877 = vadd.f32 %v2738, %v2876
  %v2878 = vpop.f32.mrf.mxu0
  %v2879 = vadd.f32 %v2740, %v2878
  %2880 = vmatmul.bf16.gmra.mxu0 %v993
  %v2881 = vpop.f32.mrf.mxu0
  %v2882 = vadd.f32 %v2743, %v2881
  %v2883 = vpop.f32.mrf.mxu0
  %v2884 = vadd.f32 %v2745, %v2883
  %2885 = vmatmul.bf16.gmra.mxu0 %v999
  %v2886 = vpop.f32.mrf.mxu0
  %v2887 = vadd.f32 %v2748, %v2886
  %v2888 = vpop.f32.mrf.mxu0
  %v2889 = vadd.f32 %v2750, %v2888
  %2890 = vmatmul.bf16.gmra.mxu0 %v1005
  %v2891 = vpop.f32.mrf.mxu0
  %v2892 = vadd.f32 %v2753, %v2891
  %v2893 = vpop.f32.mrf.mxu0
  %v2894 = vadd.f32 %v2755, %v2893
  %2895 = vmatmul.bf16.gmra.mxu0 %v1011
  %v2896 = vpop.f32.mrf.mxu0
  %v2897 = vadd.f32 %v2758, %v2896
  %v2898 = vpop.f32.mrf.mxu0
  %v2899 = vadd.f32 %v2760, %v2898
  %2900 = vmatmul.bf16.gmra.mxu0 %v1017
  %v2901 = vpop.f32.mrf.mxu0
  %v2902 = vadd.f32 %v2763, %v2901
  %v2903 = vpop.f32.mrf.mxu0
  %v2904 = vadd.f32 %v2765, %v2903
  %2905 = vmatmul.bf16.gmra.mxu0 %v1023
  %v2906 = vpop.f32.mrf.mxu0
  %v2907 = vadd.f32 %v2768, %v2906
  %v2908 = vpop.f32.mrf.mxu0
  %v2909 = vadd.f32 %v2770, %v2908
  %2910 = vmatmul.bf16.gmra.mxu0 %v1029
  %v2911 = vpop.f32.mrf.mxu0
  %v2912 = vadd.f32 %v2773, %v2911
  %v2913 = vpop.f32.mrf.mxu0
  %v2914 = vadd.f32 %v2775, %v2913
  %2915 = vmatmul.bf16.gmra.mxu0 %v1035
  %v2916 = vpop.f32.mrf.mxu0
  %v2917 = vadd.f32 %v2778, %v2916
  %v2918 = vpop.f32.mrf.mxu0
  %v2919 = vadd.f32 %v2780, %v2918
  %2920 = vmatmul.bf16.gmra.mxu0 %v1041
  %v2921 = vpop.f32.mrf.mxu0
  %v2922 = vadd.f32 %v2783, %v2921
  %v2923 = vpop.f32.mrf.mxu0
  %v2924 = vadd.f32 %v2785, %v2923
  %2925 = vmatmul.bf16.gmra.mxu0 %v1047
  %v2926 = vpop.f32.mrf.mxu0
  %v2927 = vadd.f32 %v2788, %v2926
  %v2928 = vpop.f32.mrf.mxu0
  %v2929 = vadd.f32 %v2790, %v2928
  %2930 = vmatmul.bf16.gmra.mxu0 %v1053
  %v2931 = vpop.f32.mrf.mxu0
  %v2932 = vadd.f32 %v2793, %v2931
  %v2933 = vpop.f32.mrf.mxu0
  %v2934 = vadd.f32 %v2795, %v2933
  %2935 = vmatmul.bf16.gmra.mxu0 %v1059
  %v2936 = vpop.f32.mrf.mxu0
  %v2937 = vadd.f32 %v2798, %v2936
  %v2938 = vpop.f32.mrf.mxu0
  %v2939 = vadd.f32 %v2800, %v2938
  %2940 = vmatmul.bf16.gmra.mxu0 %v1065
  %v2941 = vpop.f32.mrf.mxu0
  %v2942 = vadd.f32 %v2803, %v2941
  %v2943 = vpop.f32.mrf.mxu0
  %v2944 = vadd.f32 %v2805, %v2943
  %2945 = vmatmul.bf16.gmra.mxu0 %v1071
  %v2946 = vpop.f32.mrf.mxu0
  %v2947 = vadd.f32 %v2808, %v2946
  %v2948 = vpop.f32.mrf.mxu0
  %v2949 = vadd.f32 %v2810, %v2948
  %2950 = vmatmul.bf16.gmra.mxu0 %v1077
  %v2951 = vpop.f32.mrf.mxu0
  %v2952 = vadd.f32 %v2813, %v2951
  %v2953 = vpop.f32.mrf.mxu0
  %v2954 = vadd.f32 %v2815, %v2953
  %2955 = vdwg.mxu0
  %2956 = vmatpush.bf16.msra.mxu0 %v2240
  %2957 = vmatpush.bf16.msra.mxu0 %v2234
  %2958 = vmatpush.bf16.msra.mxu0 %v2228
  %2959 = vmatpush.bf16.msra.mxu0 %v2222
  %2960 = vmatpush.bf16.msra.mxu0 %v2216
  %2961 = vmatpush.bf16.msra.mxu0 %v2210
  %2962 = vmatpush.bf16.msra.mxu0 %v2204
  %2963 = vmatpush.bf16.msra.mxu0 %v2198
  %2964 = vmatmul.bf16.gmra.mxu0 %v928
  %v2965 = vpop.f32.mrf.mxu0
  %v2966 = vadd.f32 %v2827, %v2965
  %v2967 = vpop.f32.mrf.mxu0
  %v2968 = vadd.f32 %v2829, %v2967
  %2969 = vmatmul.bf16.gmra.mxu0 %v934
  %v2970 = vpop.f32.mrf.mxu0
  %v2971 = vadd.f32 %v2832, %v2970
  %v2972 = vpop.f32.mrf.mxu0
  %v2973 = vadd.f32 %v2834, %v2972
  %2974 = vmatmul.bf16.gmra.mxu0 %v940
  %v2975 = vpop.f32.mrf.mxu0
  %v2976 = vadd.f32 %v2837, %v2975
  %v2977 = vpop.f32.mrf.mxu0
  %v2978 = vadd.f32 %v2839, %v2977
  %2979 = vmatmul.bf16.gmra.mxu0 %v946
  %v2980 = vpop.f32.mrf.mxu0
  %v2981 = vadd.f32 %v2842, %v2980
  %v2982 = vpop.f32.mrf.mxu0
  %v2983 = vadd.f32 %v2844, %v2982
  %2984 = vmatmul.bf16.gmra.mxu0 %v952
  %v2985 = vpop.f32.mrf.mxu0
  %v2986 = vadd.f32 %v2847, %v2985
  %v2987 = vpop.f32.mrf.mxu0
  %v2988 = vadd.f32 %v2849, %v2987
  %2989 = vmatmul.bf16.gmra.mxu0 %v958
  %v2990 = vpop.f32.mrf.mxu0
  %v2991 = vadd.f32 %v2852, %v2990
  %v2992 = vpop.f32.mrf.mxu0
  %v2993 = vadd.f32 %v2854, %v2992
  %2994 = vmatmul.bf16.gmra.mxu0 %v964
  %v2995 = vpop.f32.mrf.mxu0
  %v2996 = vadd.f32 %v2857, %v2995
  %v2997 = vpop.f32.mrf.mxu0
  %v2998 = vadd.f32 %v2859, %v2997
  %2999 = vmatmul.bf16.gmra.mxu0 %v970
  %v3000 = vpop.f32.mrf.mxu0
  %v3001 = vadd.f32 %v2862, %v3000
  %v3002 = vpop.f32.mrf.mxu0
  %v3003 = vadd.f32 %v2864, %v3002
  %3004 = vmatmul.bf16.gmra.mxu0 %v976
  %v3005 = vpop.f32.mrf.mxu0
  %v3006 = vadd.f32 %v2867, %v3005
  %v3007 = vpop.f32.mrf.mxu0
  %v3008 = vadd.f32 %v2869, %v3007
  %3009 = vmatmul.bf16.gmra.mxu0 %v982
  %v3010 = vpop.f32.mrf.mxu0
  %v3011 = vadd.f32 %v2872, %v3010
  %v3012 = vpop.f32.mrf.mxu0
  %v3013 = vadd.f32 %v2874, %v3012
  %3014 = vmatmul.bf16.gmra.mxu0 %v988
  %v3015 = vpop.f32.mrf.mxu0
  %v3016 = vadd.f32 %v2877, %v3015
  %v3017 = vpop.f32.mrf.mxu0
  %v3018 = vadd.f32 %v2879, %v3017
  %3019 = vmatmul.bf16.gmra.mxu0 %v994
  %v3020 = vpop.f32.mrf.mxu0
  %v3021 = vadd.f32 %v2882, %v3020
  %v3022 = vpop.f32.mrf.mxu0
  %v3023 = vadd.f32 %v2884, %v3022
  %3024 = vmatmul.bf16.gmra.mxu0 %v1000
  %v3025 = vpop.f32.mrf.mxu0
  %v3026 = vadd.f32 %v2887, %v3025
  %v3027 = vpop.f32.mrf.mxu0
  %v3028 = vadd.f32 %v2889, %v3027
  %3029 = vmatmul.bf16.gmra.mxu0 %v1006
  %v3030 = vpop.f32.mrf.mxu0
  %v3031 = vadd.f32 %v2892, %v3030
  %v3032 = vpop.f32.mrf.mxu0
  %v3033 = vadd.f32 %v2894, %v3032
  %3034 = vmatmul.bf16.gmra.mxu0 %v1012
  %v3035 = vpop.f32.mrf.mxu0
  %v3036 = vadd.f32 %v2897, %v3035
  %v3037 = vpop.f32.mrf.mxu0
  %v3038 = vadd.f32 %v2899, %v3037
  %3039 = vmatmul.bf16.gmra.mxu0 %v1018
  %v3040 = vpop.f32.mrf.mxu0
  %v3041 = vadd.f32 %v2902, %v3040
  %v3042 = vpop.f32.mrf.mxu0
  %v3043 = vadd.f32 %v2904, %v3042
  %3044 = vmatmul.bf16.gmra.mxu0 %v1024
  %v3045 = vpop.f32.mrf.mxu0
  %v3046 = vadd.f32 %v2907, %v3045
  %v3047 = vpop.f32.mrf.mxu0
  %v3048 = vadd.f32 %v2909, %v3047
  %3049 = vmatmul.bf16.gmra.mxu0 %v1030
  %v3050 = vpop.f32.mrf.mxu0
  %v3051 = vadd.f32 %v2912, %v3050
  %v3052 = vpop.f32.mrf.mxu0
  %v3053 = vadd.f32 %v2914, %v3052
  %3054 = vmatmul.bf16.gmra.mxu0 %v1036
  %v3055 = vpop.f32.mrf.mxu0
  %v3056 = vadd.f32 %v2917, %v3055
  %v3057 = vpop.f32.mrf.mxu0
  %v3058 = vadd.f32 %v2919, %v3057
  %3059 = vmatmul.bf16.gmra.mxu0 %v1042
  %v3060 = vpop.f32.mrf.mxu0
  %v3061 = vadd.f32 %v2922, %v3060
  %v3062 = vpop.f32.mrf.mxu0
  %v3063 = vadd.f32 %v2924, %v3062
  %3064 = vmatmul.bf16.gmra.mxu0 %v1048
  %v3065 = vpop.f32.mrf.mxu0
  %v3066 = vadd.f32 %v2927, %v3065
  %v3067 = vpop.f32.mrf.mxu0
  %v3068 = vadd.f32 %v2929, %v3067
  %3069 = vmatmul.bf16.gmra.mxu0 %v1054
  %v3070 = vpop.f32.mrf.mxu0
  %v3071 = vadd.f32 %v2932, %v3070
  %v3072 = vpop.f32.mrf.mxu0
  %v3073 = vadd.f32 %v2934, %v3072
  %3074 = vmatmul.bf16.gmra.mxu0 %v1060
  %v3075 = vpop.f32.mrf.mxu0
  %v3076 = vadd.f32 %v2937, %v3075
  %v3077 = vpop.f32.mrf.mxu0
  %v3078 = vadd.f32 %v2939, %v3077
  %3079 = vmatmul.bf16.gmra.mxu0 %v1066
  %v3080 = vpop.f32.mrf.mxu0
  %v3081 = vadd.f32 %v2942, %v3080
  %v3082 = vpop.f32.mrf.mxu0
  %v3083 = vadd.f32 %v2944, %v3082
  %3084 = vmatmul.bf16.gmra.mxu0 %v1072
  %v3085 = vpop.f32.mrf.mxu0
  %v3086 = vadd.f32 %v2947, %v3085
  %v3087 = vpop.f32.mrf.mxu0
  %v3088 = vadd.f32 %v2949, %v3087
  %3089 = vmatmul.bf16.gmra.mxu0 %v1078
  %v3090 = vpop.f32.mrf.mxu0
  %v3091 = vadd.f32 %v2952, %v3090
  %v3092 = vpop.f32.mrf.mxu0
  %v3093 = vadd.f32 %v2954, %v3092
  %3094 = vdwg.mxu0
  %3095 = vmatpush.bf16.msra.mxu0 %v2288
  %3096 = vmatpush.bf16.msra.mxu0 %v2282
  %3097 = vmatpush.bf16.msra.mxu0 %v2276
  %3098 = vmatpush.bf16.msra.mxu0 %v2270
  %3099 = vmatpush.bf16.msra.mxu0 %v2264
  %3100 = vmatpush.bf16.msra.mxu0 %v2258
  %3101 = vmatpush.bf16.msra.mxu0 %v2252
  %3102 = vmatpush.bf16.msra.mxu0 %v2246
  %3103 = vmatmul.bf16.gmra.mxu0 %v929
  %v3104 = vpop.f32.mrf.mxu0
  %v3105 = vadd.f32 %v2966, %v3104
  %v3106 = vpop.f32.mrf.mxu0
  %v3107 = vadd.f32 %v2968, %v3106
  %3108 = vmatmul.bf16.gmra.mxu0 %v935
  %v3109 = vpop.f32.mrf.mxu0
  %v3110 = vadd.f32 %v2971, %v3109
  %v3111 = vpop.f32.mrf.mxu0
  %v3112 = vadd.f32 %v2973, %v3111
  %3113 = vmatmul.bf16.gmra.mxu0 %v941
  %v3114 = vpop.f32.mrf.mxu0
  %v3115 = vadd.f32 %v2976, %v3114
  %v3116 = vpop.f32.mrf.mxu0
  %v3117 = vadd.f32 %v2978, %v3116
  %3118 = vmatmul.bf16.gmra.mxu0 %v947
  %v3119 = vpop.f32.mrf.mxu0
  %v3120 = vadd.f32 %v2981, %v3119
  %v3121 = vpop.f32.mrf.mxu0
  %v3122 = vadd.f32 %v2983, %v3121
  %3123 = vmatmul.bf16.gmra.mxu0 %v953
  %v3124 = vpop.f32.mrf.mxu0
  %v3125 = vadd.f32 %v2986, %v3124
  %v3126 = vpop.f32.mrf.mxu0
  %v3127 = vadd.f32 %v2988, %v3126
  %3128 = vmatmul.bf16.gmra.mxu0 %v959
  %v3129 = vpop.f32.mrf.mxu0
  %v3130 = vadd.f32 %v2991, %v3129
  %v3131 = vpop.f32.mrf.mxu0
  %v3132 = vadd.f32 %v2993, %v3131
  %3133 = vmatmul.bf16.gmra.mxu0 %v965
  %v3134 = vpop.f32.mrf.mxu0
  %v3135 = vadd.f32 %v2996, %v3134
  %v3136 = vpop.f32.mrf.mxu0
  %v3137 = vadd.f32 %v2998, %v3136
  %3138 = vmatmul.bf16.gmra.mxu0 %v971
  %v3139 = vpop.f32.mrf.mxu0
  %v3140 = vadd.f32 %v3001, %v3139
  %v3141 = vpop.f32.mrf.mxu0
  %v3142 = vadd.f32 %v3003, %v3141
  %3143 = vmatmul.bf16.gmra.mxu0 %v977
  %v3144 = vpop.f32.mrf.mxu0
  %v3145 = vadd.f32 %v3006, %v3144
  %v3146 = vpop.f32.mrf.mxu0
  %v3147 = vadd.f32 %v3008, %v3146
  %3148 = vmatmul.bf16.gmra.mxu0 %v983
  %v3149 = vpop.f32.mrf.mxu0
  %v3150 = vadd.f32 %v3011, %v3149
  %v3151 = vpop.f32.mrf.mxu0
  %v3152 = vadd.f32 %v3013, %v3151
  %3153 = vmatmul.bf16.gmra.mxu0 %v989
  %v3154 = vpop.f32.mrf.mxu0
  %v3155 = vadd.f32 %v3016, %v3154
  %v3156 = vpop.f32.mrf.mxu0
  %v3157 = vadd.f32 %v3018, %v3156
  %3158 = vmatmul.bf16.gmra.mxu0 %v995
  %v3159 = vpop.f32.mrf.mxu0
  %v3160 = vadd.f32 %v3021, %v3159
  %v3161 = vpop.f32.mrf.mxu0
  %v3162 = vadd.f32 %v3023, %v3161
  %3163 = vmatmul.bf16.gmra.mxu0 %v1001
  %v3164 = vpop.f32.mrf.mxu0
  %v3165 = vadd.f32 %v3026, %v3164
  %v3166 = vpop.f32.mrf.mxu0
  %v3167 = vadd.f32 %v3028, %v3166
  %3168 = vmatmul.bf16.gmra.mxu0 %v1007
  %v3169 = vpop.f32.mrf.mxu0
  %v3170 = vadd.f32 %v3031, %v3169
  %v3171 = vpop.f32.mrf.mxu0
  %v3172 = vadd.f32 %v3033, %v3171
  %3173 = vmatmul.bf16.gmra.mxu0 %v1013
  %v3174 = vpop.f32.mrf.mxu0
  %v3175 = vadd.f32 %v3036, %v3174
  %v3176 = vpop.f32.mrf.mxu0
  %v3177 = vadd.f32 %v3038, %v3176
  %3178 = vmatmul.bf16.gmra.mxu0 %v1019
  %v3179 = vpop.f32.mrf.mxu0
  %v3180 = vadd.f32 %v3041, %v3179
  %v3181 = vpop.f32.mrf.mxu0
  %v3182 = vadd.f32 %v3043, %v3181
  %3183 = vmatmul.bf16.gmra.mxu0 %v1025
  %v3184 = vpop.f32.mrf.mxu0
  %v3185 = vadd.f32 %v3046, %v3184
  %v3186 = vpop.f32.mrf.mxu0
  %v3187 = vadd.f32 %v3048, %v3186
  %3188 = vmatmul.bf16.gmra.mxu0 %v1031
  %v3189 = vpop.f32.mrf.mxu0
  %v3190 = vadd.f32 %v3051, %v3189
  %v3191 = vpop.f32.mrf.mxu0
  %v3192 = vadd.f32 %v3053, %v3191
  %3193 = vmatmul.bf16.gmra.mxu0 %v1037
  %v3194 = vpop.f32.mrf.mxu0
  %v3195 = vadd.f32 %v3056, %v3194
  %v3196 = vpop.f32.mrf.mxu0
  %v3197 = vadd.f32 %v3058, %v3196
  %3198 = vmatmul.bf16.gmra.mxu0 %v1043
  %v3199 = vpop.f32.mrf.mxu0
  %v3200 = vadd.f32 %v3061, %v3199
  %v3201 = vpop.f32.mrf.mxu0
  %v3202 = vadd.f32 %v3063, %v3201
  %3203 = vmatmul.bf16.gmra.mxu0 %v1049
  %v3204 = vpop.f32.mrf.mxu0
  %v3205 = vadd.f32 %v3066, %v3204
  %v3206 = vpop.f32.mrf.mxu0
  %v3207 = vadd.f32 %v3068, %v3206
  %3208 = vmatmul.bf16.gmra.mxu0 %v1055
  %v3209 = vpop.f32.mrf.mxu0
  %v3210 = vadd.f32 %v3071, %v3209
  %v3211 = vpop.f32.mrf.mxu0
  %v3212 = vadd.f32 %v3073, %v3211
  %3213 = vmatmul.bf16.gmra.mxu0 %v1061
  %v3214 = vpop.f32.mrf.mxu0
  %v3215 = vadd.f32 %v3076, %v3214
  %v3216 = vpop.f32.mrf.mxu0
  %v3217 = vadd.f32 %v3078, %v3216
  %3218 = vmatmul.bf16.gmra.mxu0 %v1067
  %v3219 = vpop.f32.mrf.mxu0
  %v3220 = vadd.f32 %v3081, %v3219
  %v3221 = vpop.f32.mrf.mxu0
  %v3222 = vadd.f32 %v3083, %v3221
  %3223 = vmatmul.bf16.gmra.mxu0 %v1073
  %v3224 = vpop.f32.mrf.mxu0
  %v3225 = vadd.f32 %v3086, %v3224
  %v3226 = vpop.f32.mrf.mxu0
  %v3227 = vadd.f32 %v3088, %v3226
  %3228 = vmatmul.bf16.gmra.mxu0 %v1079
  %v3229 = vpop.f32.mrf.mxu0
  %v3230 = vadd.f32 %v3091, %v3229
  %v3231 = vpop.f32.mrf.mxu0
  %v3232 = vadd.f32 %v3093, %v3231
  %3233 = vdwg.mxu0
  %3234 = vmatpush.bf16.msra.mxu0 %v2336
  %3235 = vmatpush.bf16.msra.mxu0 %v2330
  %3236 = vmatpush.bf16.msra.mxu0 %v2324
  %3237 = vmatpush.bf16.msra.mxu0 %v2318
  %3238 = vmatpush.bf16.msra.mxu0 %v2312
  %3239 = vmatpush.bf16.msra.mxu0 %v2306
  %3240 = vmatpush.bf16.msra.mxu0 %v2300
  %3241 = vmatpush.bf16.msra.mxu0 %v2294
  %3242 = vmatmul.bf16.gmra.mxu0 %v930
  %v3243 = vpop.f32.mrf.mxu0
  %v3244 = vadd.f32 %v3105, %v3243
  %v3245 = vpop.f32.mrf.mxu0
  %v3246 = vadd.f32 %v3107, %v3245
  %3247 = vmatmul.bf16.gmra.mxu0 %v936
  %v3248 = vpop.f32.mrf.mxu0
  %v3249 = vadd.f32 %v3110, %v3248
  %v3250 = vpop.f32.mrf.mxu0
  %v3251 = vadd.f32 %v3112, %v3250
  %3252 = vmatmul.bf16.gmra.mxu0 %v942
  %v3253 = vpop.f32.mrf.mxu0
  %v3254 = vadd.f32 %v3115, %v3253
  %v3255 = vpop.f32.mrf.mxu0
  %v3256 = vadd.f32 %v3117, %v3255
  %3257 = vmatmul.bf16.gmra.mxu0 %v948
  %v3258 = vpop.f32.mrf.mxu0
  %v3259 = vadd.f32 %v3120, %v3258
  %v3260 = vpop.f32.mrf.mxu0
  %v3261 = vadd.f32 %v3122, %v3260
  %3262 = vmatmul.bf16.gmra.mxu0 %v954
  %v3263 = vpop.f32.mrf.mxu0
  %v3264 = vadd.f32 %v3125, %v3263
  %v3265 = vpop.f32.mrf.mxu0
  %v3266 = vadd.f32 %v3127, %v3265
  %3267 = vmatmul.bf16.gmra.mxu0 %v960
  %v3268 = vpop.f32.mrf.mxu0
  %v3269 = vadd.f32 %v3130, %v3268
  %v3270 = vpop.f32.mrf.mxu0
  %v3271 = vadd.f32 %v3132, %v3270
  %3272 = vmatmul.bf16.gmra.mxu0 %v966
  %v3273 = vpop.f32.mrf.mxu0
  %v3274 = vadd.f32 %v3135, %v3273
  %v3275 = vpop.f32.mrf.mxu0
  %v3276 = vadd.f32 %v3137, %v3275
  %3277 = vmatmul.bf16.gmra.mxu0 %v972
  %v3278 = vpop.f32.mrf.mxu0
  %v3279 = vadd.f32 %v3140, %v3278
  %v3280 = vpop.f32.mrf.mxu0
  %v3281 = vadd.f32 %v3142, %v3280
  %3282 = vmatmul.bf16.gmra.mxu0 %v978
  %v3283 = vpop.f32.mrf.mxu0
  %v3284 = vadd.f32 %v3145, %v3283
  %v3285 = vpop.f32.mrf.mxu0
  %v3286 = vadd.f32 %v3147, %v3285
  %3287 = vmatmul.bf16.gmra.mxu0 %v984
  %v3288 = vpop.f32.mrf.mxu0
  %v3289 = vadd.f32 %v3150, %v3288
  %v3290 = vpop.f32.mrf.mxu0
  %v3291 = vadd.f32 %v3152, %v3290
  %3292 = vmatmul.bf16.gmra.mxu0 %v990
  %v3293 = vpop.f32.mrf.mxu0
  %v3294 = vadd.f32 %v3155, %v3293
  %v3295 = vpop.f32.mrf.mxu0
  %v3296 = vadd.f32 %v3157, %v3295
  %3297 = vmatmul.bf16.gmra.mxu0 %v996
  %v3298 = vpop.f32.mrf.mxu0
  %v3299 = vadd.f32 %v3160, %v3298
  %v3300 = vpop.f32.mrf.mxu0
  %v3301 = vadd.f32 %v3162, %v3300
  %3302 = vmatmul.bf16.gmra.mxu0 %v1002
  %v3303 = vpop.f32.mrf.mxu0
  %v3304 = vadd.f32 %v3165, %v3303
  %v3305 = vpop.f32.mrf.mxu0
  %v3306 = vadd.f32 %v3167, %v3305
  %3307 = vmatmul.bf16.gmra.mxu0 %v1008
  %v3308 = vpop.f32.mrf.mxu0
  %v3309 = vadd.f32 %v3170, %v3308
  %v3310 = vpop.f32.mrf.mxu0
  %v3311 = vadd.f32 %v3172, %v3310
  %3312 = vmatmul.bf16.gmra.mxu0 %v1014
  %v3313 = vpop.f32.mrf.mxu0
  %v3314 = vadd.f32 %v3175, %v3313
  %v3315 = vpop.f32.mrf.mxu0
  %v3316 = vadd.f32 %v3177, %v3315
  %3317 = vmatmul.bf16.gmra.mxu0 %v1020
  %v3318 = vpop.f32.mrf.mxu0
  %v3319 = vadd.f32 %v3180, %v3318
  %v3320 = vpop.f32.mrf.mxu0
  %v3321 = vadd.f32 %v3182, %v3320
  %3322 = vmatmul.bf16.gmra.mxu0 %v1026
  %v3323 = vpop.f32.mrf.mxu0
  %v3324 = vadd.f32 %v3185, %v3323
  %v3325 = vpop.f32.mrf.mxu0
  %v3326 = vadd.f32 %v3187, %v3325
  %3327 = vmatmul.bf16.gmra.mxu0 %v1032
  %v3328 = vpop.f32.mrf.mxu0
  %v3329 = vadd.f32 %v3190, %v3328
  %v3330 = vpop.f32.mrf.mxu0
  %v3331 = vadd.f32 %v3192, %v3330
  %3332 = vmatmul.bf16.gmra.mxu0 %v1038
  %v3333 = vpop.f32.mrf.mxu0
  %v3334 = vadd.f32 %v3195, %v3333
  %v3335 = vpop.f32.mrf.mxu0
  %v3336 = vadd.f32 %v3197, %v3335
  %3337 = vmatmul.bf16.gmra.mxu0 %v1044
  %v3338 = vpop.f32.mrf.mxu0
  %v3339 = vadd.f32 %v3200, %v3338
  %v3340 = vpop.f32.mrf.mxu0
  %v3341 = vadd.f32 %v3202, %v3340
  %3342 = vmatmul.bf16.gmra.mxu0 %v1050
  %v3343 = vpop.f32.mrf.mxu0
  %v3344 = vadd.f32 %v3205, %v3343
  %v3345 = vpop.f32.mrf.mxu0
  %v3346 = vadd.f32 %v3207, %v3345
  %3347 = vmatmul.bf16.gmra.mxu0 %v1056
  %v3348 = vpop.f32.mrf.mxu0
  %v3349 = vadd.f32 %v3210, %v3348
  %v3350 = vpop.f32.mrf.mxu0
  %v3351 = vadd.f32 %v3212, %v3350
  %3352 = vmatmul.bf16.gmra.mxu0 %v1062
  %v3353 = vpop.f32.mrf.mxu0
  %v3354 = vadd.f32 %v3215, %v3353
  %v3355 = vpop.f32.mrf.mxu0
  %v3356 = vadd.f32 %v3217, %v3355
  %3357 = vmatmul.bf16.gmra.mxu0 %v1068
  %v3358 = vpop.f32.mrf.mxu0
  %v3359 = vadd.f32 %v3220, %v3358
  %v3360 = vpop.f32.mrf.mxu0
  %v3361 = vadd.f32 %v3222, %v3360
  %3362 = vmatmul.bf16.gmra.mxu0 %v1074
  %v3363 = vpop.f32.mrf.mxu0
  %v3364 = vadd.f32 %v3225, %v3363
  %v3365 = vpop.f32.mrf.mxu0
  %v3366 = vadd.f32 %v3227, %v3365
  %3367 = vmatmul.bf16.gmra.mxu0 %v1080
  %v3368 = vpop.f32.mrf.mxu0
  %v3369 = vadd.f32 %v3230, %v3368
  %v3370 = vpop.f32.mrf.mxu0
  %v3371 = vadd.f32 %v3232, %v3370
  %3372 = vdwg.mxu0
  %3373 = vmatpush.bf16.msra.mxu0 %v2384
  %3374 = vmatpush.bf16.msra.mxu0 %v2378
  %3375 = vmatpush.bf16.msra.mxu0 %v2372
  %3376 = vmatpush.bf16.msra.mxu0 %v2366
  %3377 = vmatpush.bf16.msra.mxu0 %v2360
  %3378 = vmatpush.bf16.msra.mxu0 %v2354
  %3379 = vmatpush.bf16.msra.mxu0 %v2348
  %3380 = vmatpush.bf16.msra.mxu0 %v2342
  %3381 = vmatmul.bf16.gmra.mxu0 %v931
  %v3382 = vpop.f32.mrf.mxu0
  %v3383 = vadd.f32 %v3244, %v3382
  %v3384 = vpop.f32.mrf.mxu0
  %v3385 = vadd.f32 %v3246, %v3384
  %3386 = vmatmul.bf16.gmra.mxu0 %v937
  %v3387 = vpop.f32.mrf.mxu0
  %v3388 = vadd.f32 %v3249, %v3387
  %v3389 = vpop.f32.mrf.mxu0
  %v3390 = vadd.f32 %v3251, %v3389
  %3391 = vmatmul.bf16.gmra.mxu0 %v943
  %v3392 = vpop.f32.mrf.mxu0
  %v3393 = vadd.f32 %v3254, %v3392
  %v3394 = vpop.f32.mrf.mxu0
  %v3395 = vadd.f32 %v3256, %v3394
  %3396 = vmatmul.bf16.gmra.mxu0 %v949
  %v3397 = vpop.f32.mrf.mxu0
  %v3398 = vadd.f32 %v3259, %v3397
  %v3399 = vpop.f32.mrf.mxu0
  %v3400 = vadd.f32 %v3261, %v3399
  %3401 = vmatmul.bf16.gmra.mxu0 %v955
  %v3402 = vpop.f32.mrf.mxu0
  %v3403 = vadd.f32 %v3264, %v3402
  %v3404 = vpop.f32.mrf.mxu0
  %v3405 = vadd.f32 %v3266, %v3404
  %3406 = vmatmul.bf16.gmra.mxu0 %v961
  %v3407 = vpop.f32.mrf.mxu0
  %v3408 = vadd.f32 %v3269, %v3407
  %v3409 = vpop.f32.mrf.mxu0
  %v3410 = vadd.f32 %v3271, %v3409
  %3411 = vmatmul.bf16.gmra.mxu0 %v967
  %v3412 = vpop.f32.mrf.mxu0
  %v3413 = vadd.f32 %v3274, %v3412
  %v3414 = vpop.f32.mrf.mxu0
  %v3415 = vadd.f32 %v3276, %v3414
  %3416 = vmatmul.bf16.gmra.mxu0 %v973
  %v3417 = vpop.f32.mrf.mxu0
  %v3418 = vadd.f32 %v3279, %v3417
  %v3419 = vpop.f32.mrf.mxu0
  %v3420 = vadd.f32 %v3281, %v3419
  %3421 = vmatmul.bf16.gmra.mxu0 %v979
  %v3422 = vpop.f32.mrf.mxu0
  %v3423 = vadd.f32 %v3284, %v3422
  %v3424 = vpop.f32.mrf.mxu0
  %v3425 = vadd.f32 %v3286, %v3424
  %3426 = vmatmul.bf16.gmra.mxu0 %v985
  %v3427 = vpop.f32.mrf.mxu0
  %v3428 = vadd.f32 %v3289, %v3427
  %v3429 = vpop.f32.mrf.mxu0
  %v3430 = vadd.f32 %v3291, %v3429
  %3431 = vmatmul.bf16.gmra.mxu0 %v991
  %v3432 = vpop.f32.mrf.mxu0
  %v3433 = vadd.f32 %v3294, %v3432
  %v3434 = vpop.f32.mrf.mxu0
  %v3435 = vadd.f32 %v3296, %v3434
  %3436 = vmatmul.bf16.gmra.mxu0 %v997
  %v3437 = vpop.f32.mrf.mxu0
  %v3438 = vadd.f32 %v3299, %v3437
  %v3439 = vpop.f32.mrf.mxu0
  %v3440 = vadd.f32 %v3301, %v3439
  %3441 = vmatmul.bf16.gmra.mxu0 %v1003
  %v3442 = vpop.f32.mrf.mxu0
  %v3443 = vadd.f32 %v3304, %v3442
  %v3444 = vpop.f32.mrf.mxu0
  %v3445 = vadd.f32 %v3306, %v3444
  %3446 = vmatmul.bf16.gmra.mxu0 %v1009
  %v3447 = vpop.f32.mrf.mxu0
  %v3448 = vadd.f32 %v3309, %v3447
  %v3449 = vpop.f32.mrf.mxu0
  %v3450 = vadd.f32 %v3311, %v3449
  %3451 = vmatmul.bf16.gmra.mxu0 %v1015
  %v3452 = vpop.f32.mrf.mxu0
  %v3453 = vadd.f32 %v3314, %v3452
  %v3454 = vpop.f32.mrf.mxu0
  %v3455 = vadd.f32 %v3316, %v3454
  %3456 = vmatmul.bf16.gmra.mxu0 %v1021
  %v3457 = vpop.f32.mrf.mxu0
  %v3458 = vadd.f32 %v3319, %v3457
  %v3459 = vpop.f32.mrf.mxu0
  %v3460 = vadd.f32 %v3321, %v3459
  %3461 = vmatmul.bf16.gmra.mxu0 %v1027
  %v3462 = vpop.f32.mrf.mxu0
  %v3463 = vadd.f32 %v3324, %v3462
  %v3464 = vpop.f32.mrf.mxu0
  %v3465 = vadd.f32 %v3326, %v3464
  %3466 = vmatmul.bf16.gmra.mxu0 %v1033
  %v3467 = vpop.f32.mrf.mxu0
  %v3468 = vadd.f32 %v3329, %v3467
  %v3469 = vpop.f32.mrf.mxu0
  %v3470 = vadd.f32 %v3331, %v3469
  %3471 = vmatmul.bf16.gmra.mxu0 %v1039
  %v3472 = vpop.f32.mrf.mxu0
  %v3473 = vadd.f32 %v3334, %v3472
  %v3474 = vpop.f32.mrf.mxu0
  %v3475 = vadd.f32 %v3336, %v3474
  %3476 = vmatmul.bf16.gmra.mxu0 %v1045
  %v3477 = vpop.f32.mrf.mxu0
  %v3478 = vadd.f32 %v3339, %v3477
  %v3479 = vpop.f32.mrf.mxu0
  %v3480 = vadd.f32 %v3341, %v3479
  %3481 = vmatmul.bf16.gmra.mxu0 %v1051
  %v3482 = vpop.f32.mrf.mxu0
  %v3483 = vadd.f32 %v3344, %v3482
  %v3484 = vpop.f32.mrf.mxu0
  %v3485 = vadd.f32 %v3346, %v3484
  %3486 = vmatmul.bf16.gmra.mxu0 %v1057
  %v3487 = vpop.f32.mrf.mxu0
  %v3488 = vadd.f32 %v3349, %v3487
  %v3489 = vpop.f32.mrf.mxu0
  %v3490 = vadd.f32 %v3351, %v3489
  %3491 = vmatmul.bf16.gmra.mxu0 %v1063
  %v3492 = vpop.f32.mrf.mxu0
  %v3493 = vadd.f32 %v3354, %v3492
  %v3494 = vpop.f32.mrf.mxu0
  %v3495 = vadd.f32 %v3356, %v3494
  %3496 = vmatmul.bf16.gmra.mxu0 %v1069
  %v3497 = vpop.f32.mrf.mxu0
  %v3498 = vadd.f32 %v3359, %v3497
  %v3499 = vpop.f32.mrf.mxu0
  %v3500 = vadd.f32 %v3361, %v3499
  %3501 = vmatmul.bf16.gmra.mxu0 %v1075
  %v3502 = vpop.f32.mrf.mxu0
  %v3503 = vadd.f32 %v3364, %v3502
  %v3504 = vpop.f32.mrf.mxu0
  %v3505 = vadd.f32 %v3366, %v3504
  %3506 = vmatmul.bf16.gmra.mxu0 %v1081
  %v3507 = vpop.f32.mrf.mxu0
  %v3508 = vadd.f32 %v3369, %v3507
  %v3509 = vpop.f32.mrf.mxu0
  %v3510 = vadd.f32 %v3371, %v3509
  %3511 = vdwg.mxu0
  %3512 = vmatpush.bf16.msra.mxu0 %v2145
  %3513 = vmatpush.bf16.msra.mxu0 %v2139
  %3514 = vmatpush.bf16.msra.mxu0 %v2133
  %3515 = vmatpush.bf16.msra.mxu0 %v2127
  %3516 = vmatpush.bf16.msra.mxu0 %v2121
  %3517 = vmatpush.bf16.msra.mxu0 %v2115
  %3518 = vmatpush.bf16.msra.mxu0 %v2109
  %3519 = vmatpush.bf16.msra.mxu0 %v2103
  %3520 = vmatmul.bf16.gmra.mxu0 %v926
  %v3521 = vpop.f32.mrf.mxu0
  %v3522 = vadd.f32 0.0, %v3521
  %v3523 = vpop.f32.mrf.mxu0
  %v3524 = vadd.f32 0.0, %v3523
  %3525 = vmatmul.bf16.gmra.mxu0 %v932
  %v3526 = vpop.f32.mrf.mxu0
  %v3527 = vadd.f32 0.0, %v3526
  %v3528 = vpop.f32.mrf.mxu0
  %v3529 = vadd.f32 0.0, %v3528
  %3530 = vmatmul.bf16.gmra.mxu0 %v938
  %v3531 = vpop.f32.mrf.mxu0
  %v3532 = vadd.f32 0.0, %v3531
  %v3533 = vpop.f32.mrf.mxu0
  %v3534 = vadd.f32 0.0, %v3533
  %3535 = vmatmul.bf16.gmra.mxu0 %v944
  %v3536 = vpop.f32.mrf.mxu0
  %v3537 = vadd.f32 0.0, %v3536
  %v3538 = vpop.f32.mrf.mxu0
  %v3539 = vadd.f32 0.0, %v3538
  %3540 = vmatmul.bf16.gmra.mxu0 %v950
  %v3541 = vpop.f32.mrf.mxu0
  %v3542 = vadd.f32 0.0, %v3541
  %v3543 = vpop.f32.mrf.mxu0
  %v3544 = vadd.f32 0.0, %v3543
  %3545 = vmatmul.bf16.gmra.mxu0 %v956
  %v3546 = vpop.f32.mrf.mxu0
  %v3547 = vadd.f32 0.0, %v3546
  %v3548 = vpop.f32.mrf.mxu0
  %v3549 = vadd.f32 0.0, %v3548
  %3550 = vmatmul.bf16.gmra.mxu0 %v962
  %v3551 = vpop.f32.mrf.mxu0
  %v3552 = vadd.f32 0.0, %v3551
  %v3553 = vpop.f32.mrf.mxu0
  %v3554 = vadd.f32 0.0, %v3553
  %3555 = vmatmul.bf16.gmra.mxu0 %v968
  %v3556 = vpop.f32.mrf.mxu0
  %v3557 = vadd.f32 0.0, %v3556
  %v3558 = vpop.f32.mrf.mxu0
  %v3559 = vadd.f32 0.0, %v3558
  %3560 = vmatmul.bf16.gmra.mxu0 %v974
  %v3561 = vpop.f32.mrf.mxu0
  %v3562 = vadd.f32 0.0, %v3561
  %v3563 = vpop.f32.mrf.mxu0
  %v3564 = vadd.f32 0.0, %v3563
  %3565 = vmatmul.bf16.gmra.mxu0 %v980
  %v3566 = vpop.f32.mrf.mxu0
  %v3567 = vadd.f32 0.0, %v3566
  %v3568 = vpop.f32.mrf.mxu0
  %v3569 = vadd.f32 0.0, %v3568
  %3570 = vmatmul.bf16.gmra.mxu0 %v986
  %v3571 = vpop.f32.mrf.mxu0
  %v3572 = vadd.f32 0.0, %v3571
  %v3573 = vpop.f32.mrf.mxu0
  %v3574 = vadd.f32 0.0, %v3573
  %3575 = vmatmul.bf16.gmra.mxu0 %v992
  %v3576 = vpop.f32.mrf.mxu0
  %v3577 = vadd.f32 0.0, %v3576
  %v3578 = vpop.f32.mrf.mxu0
  %v3579 = vadd.f32 0.0, %v3578
  %3580 = vmatmul.bf16.gmra.mxu0 %v998
  %v3581 = vpop.f32.mrf.mxu0
  %v3582 = vadd.f32 0.0, %v3581
  %v3583 = vpop.f32.mrf.mxu0
  %v3584 = vadd.f32 0.0, %v3583
  %3585 = vmatmul.bf16.gmra.mxu0 %v1004
  %v3586 = vpop.f32.mrf.mxu0
  %v3587 = vadd.f32 0.0, %v3586
  %v3588 = vpop.f32.mrf.mxu0
  %v3589 = vadd.f32 0.0, %v3588
  %3590 = vmatmul.bf16.gmra.mxu0 %v1010
  %v3591 = vpop.f32.mrf.mxu0
  %v3592 = vadd.f32 0.0, %v3591
  %v3593 = vpop.f32.mrf.mxu0
  %v3594 = vadd.f32 0.0, %v3593
  %3595 = vmatmul.bf16.gmra.mxu0 %v1016
  %v3596 = vpop.f32.mrf.mxu0
  %v3597 = vadd.f32 0.0, %v3596
  %v3598 = vpop.f32.mrf.mxu0
  %v3599 = vadd.f32 0.0, %v3598
  %3600 = vmatmul.bf16.gmra.mxu0 %v1022
  %v3601 = vpop.f32.mrf.mxu0
  %v3602 = vadd.f32 0.0, %v3601
  %v3603 = vpop.f32.mrf.mxu0
  %v3604 = vadd.f32 0.0, %v3603
  %3605 = vmatmul.bf16.gmra.mxu0 %v1028
  %v3606 = vpop.f32.mrf.mxu0
  %v3607 = vadd.f32 0.0, %v3606
  %v3608 = vpop.f32.mrf.mxu0
  %v3609 = vadd.f32 0.0, %v3608
  %3610 = vmatmul.bf16.gmra.mxu0 %v1034
  %v3611 = vpop.f32.mrf.mxu0
  %v3612 = vadd.f32 0.0, %v3611
  %v3613 = vpop.f32.mrf.mxu0
  %v3614 = vadd.f32 0.0, %v3613
  %3615 = vmatmul.bf16.gmra.mxu0 %v1040
  %v3616 = vpop.f32.mrf.mxu0
  %v3617 = vadd.f32 0.0, %v3616
  %v3618 = vpop.f32.mrf.mxu0
  %v3619 = vadd.f32 0.0, %v3618
  %3620 = vmatmul.bf16.gmra.mxu0 %v1046
  %v3621 = vpop.f32.mrf.mxu0
  %v3622 = vadd.f32 0.0, %v3621
  %v3623 = vpop.f32.mrf.mxu0
  %v3624 = vadd.f32 0.0, %v3623
  %3625 = vmatmul.bf16.gmra.mxu0 %v1052
  %v3626 = vpop.f32.mrf.mxu0
  %v3627 = vadd.f32 0.0, %v3626
  %v3628 = vpop.f32.mrf.mxu0
  %v3629 = vadd.f32 0.0, %v3628
  %3630 = vmatmul.bf16.gmra.mxu0 %v1058
  %v3631 = vpop.f32.mrf.mxu0
  %v3632 = vadd.f32 0.0, %v3631
  %v3633 = vpop.f32.mrf.mxu0
  %v3634 = vadd.f32 0.0, %v3633
  %3635 = vmatmul.bf16.gmra.mxu0 %v1064
  %v3636 = vpop.f32.mrf.mxu0
  %v3637 = vadd.f32 0.0, %v3636
  %v3638 = vpop.f32.mrf.mxu0
  %v3639 = vadd.f32 0.0, %v3638
  %3640 = vmatmul.bf16.gmra.mxu0 %v1070
  %v3641 = vpop.f32.mrf.mxu0
  %v3642 = vadd.f32 0.0, %v3641
  %v3643 = vpop.f32.mrf.mxu0
  %v3644 = vadd.f32 0.0, %v3643
  %3645 = vmatmul.bf16.gmra.mxu0 %v1076
  %v3646 = vpop.f32.mrf.mxu0
  %v3647 = vadd.f32 0.0, %v3646
  %v3648 = vpop.f32.mrf.mxu0
  %v3649 = vadd.f32 0.0, %v3648
  %3650 = vdwg.mxu0
  %3651 = vmatpush.bf16.msra.mxu0 %v2193
  %3652 = vmatpush.bf16.msra.mxu0 %v2187
  %3653 = vmatpush.bf16.msra.mxu0 %v2181
  %3654 = vmatpush.bf16.msra.mxu0 %v2175
  %3655 = vmatpush.bf16.msra.mxu0 %v2169
  %3656 = vmatpush.bf16.msra.mxu0 %v2163
  %3657 = vmatpush.bf16.msra.mxu0 %v2157
  %3658 = vmatpush.bf16.msra.mxu0 %v2151
  %3659 = vmatmul.bf16.gmra.mxu0 %v927
  %v3660 = vpop.f32.mrf.mxu0
  %v3661 = vadd.f32 %v3522, %v3660
  %v3662 = vpop.f32.mrf.mxu0
  %v3663 = vadd.f32 %v3524, %v3662
  %3664 = vmatmul.bf16.gmra.mxu0 %v933
  %v3665 = vpop.f32.mrf.mxu0
  %v3666 = vadd.f32 %v3527, %v3665
  %v3667 = vpop.f32.mrf.mxu0
  %v3668 = vadd.f32 %v3529, %v3667
  %3669 = vmatmul.bf16.gmra.mxu0 %v939
  %v3670 = vpop.f32.mrf.mxu0
  %v3671 = vadd.f32 %v3532, %v3670
  %v3672 = vpop.f32.mrf.mxu0
  %v3673 = vadd.f32 %v3534, %v3672
  %3674 = vmatmul.bf16.gmra.mxu0 %v945
  %v3675 = vpop.f32.mrf.mxu0
  %v3676 = vadd.f32 %v3537, %v3675
  %v3677 = vpop.f32.mrf.mxu0
  %v3678 = vadd.f32 %v3539, %v3677
  %3679 = vmatmul.bf16.gmra.mxu0 %v951
  %v3680 = vpop.f32.mrf.mxu0
  %v3681 = vadd.f32 %v3542, %v3680
  %v3682 = vpop.f32.mrf.mxu0
  %v3683 = vadd.f32 %v3544, %v3682
  %3684 = vmatmul.bf16.gmra.mxu0 %v957
  %v3685 = vpop.f32.mrf.mxu0
  %v3686 = vadd.f32 %v3547, %v3685
  %v3687 = vpop.f32.mrf.mxu0
  %v3688 = vadd.f32 %v3549, %v3687
  %3689 = vmatmul.bf16.gmra.mxu0 %v963
  %v3690 = vpop.f32.mrf.mxu0
  %v3691 = vadd.f32 %v3552, %v3690
  %v3692 = vpop.f32.mrf.mxu0
  %v3693 = vadd.f32 %v3554, %v3692
  %3694 = vmatmul.bf16.gmra.mxu0 %v969
  %v3695 = vpop.f32.mrf.mxu0
  %v3696 = vadd.f32 %v3557, %v3695
  %v3697 = vpop.f32.mrf.mxu0
  %v3698 = vadd.f32 %v3559, %v3697
  %3699 = vmatmul.bf16.gmra.mxu0 %v975
  %v3700 = vpop.f32.mrf.mxu0
  %v3701 = vadd.f32 %v3562, %v3700
  %v3702 = vpop.f32.mrf.mxu0
  %v3703 = vadd.f32 %v3564, %v3702
  %3704 = vmatmul.bf16.gmra.mxu0 %v981
  %v3705 = vpop.f32.mrf.mxu0
  %v3706 = vadd.f32 %v3567, %v3705
  %v3707 = vpop.f32.mrf.mxu0
  %v3708 = vadd.f32 %v3569, %v3707
  %3709 = vmatmul.bf16.gmra.mxu0 %v987
  %v3710 = vpop.f32.mrf.mxu0
  %v3711 = vadd.f32 %v3572, %v3710
  %v3712 = vpop.f32.mrf.mxu0
  %v3713 = vadd.f32 %v3574, %v3712
  %3714 = vmatmul.bf16.gmra.mxu0 %v993
  %v3715 = vpop.f32.mrf.mxu0
  %v3716 = vadd.f32 %v3577, %v3715
  %v3717 = vpop.f32.mrf.mxu0
  %v3718 = vadd.f32 %v3579, %v3717
  %3719 = vmatmul.bf16.gmra.mxu0 %v999
  %v3720 = vpop.f32.mrf.mxu0
  %v3721 = vadd.f32 %v3582, %v3720
  %v3722 = vpop.f32.mrf.mxu0
  %v3723 = vadd.f32 %v3584, %v3722
  %3724 = vmatmul.bf16.gmra.mxu0 %v1005
  %v3725 = vpop.f32.mrf.mxu0
  %v3726 = vadd.f32 %v3587, %v3725
  %v3727 = vpop.f32.mrf.mxu0
  %v3728 = vadd.f32 %v3589, %v3727
  %3729 = vmatmul.bf16.gmra.mxu0 %v1011
  %v3730 = vpop.f32.mrf.mxu0
  %v3731 = vadd.f32 %v3592, %v3730
  %v3732 = vpop.f32.mrf.mxu0
  %v3733 = vadd.f32 %v3594, %v3732
  %3734 = vmatmul.bf16.gmra.mxu0 %v1017
  %v3735 = vpop.f32.mrf.mxu0
  %v3736 = vadd.f32 %v3597, %v3735
  %v3737 = vpop.f32.mrf.mxu0
  %v3738 = vadd.f32 %v3599, %v3737
  %3739 = vmatmul.bf16.gmra.mxu0 %v1023
  %v3740 = vpop.f32.mrf.mxu0
  %v3741 = vadd.f32 %v3602, %v3740
  %v3742 = vpop.f32.mrf.mxu0
  %v3743 = vadd.f32 %v3604, %v3742
  %3744 = vmatmul.bf16.gmra.mxu0 %v1029
  %v3745 = vpop.f32.mrf.mxu0
  %v3746 = vadd.f32 %v3607, %v3745
  %v3747 = vpop.f32.mrf.mxu0
  %v3748 = vadd.f32 %v3609, %v3747
  %3749 = vmatmul.bf16.gmra.mxu0 %v1035
  %v3750 = vpop.f32.mrf.mxu0
  %v3751 = vadd.f32 %v3612, %v3750
  %v3752 = vpop.f32.mrf.mxu0
  %v3753 = vadd.f32 %v3614, %v3752
  %3754 = vmatmul.bf16.gmra.mxu0 %v1041
  %v3755 = vpop.f32.mrf.mxu0
  %v3756 = vadd.f32 %v3617, %v3755
  %v3757 = vpop.f32.mrf.mxu0
  %v3758 = vadd.f32 %v3619, %v3757
  %3759 = vmatmul.bf16.gmra.mxu0 %v1047
  %v3760 = vpop.f32.mrf.mxu0
  %v3761 = vadd.f32 %v3622, %v3760
  %v3762 = vpop.f32.mrf.mxu0
  %v3763 = vadd.f32 %v3624, %v3762
  %3764 = vmatmul.bf16.gmra.mxu0 %v1053
  %v3765 = vpop.f32.mrf.mxu0
  %v3766 = vadd.f32 %v3627, %v3765
  %v3767 = vpop.f32.mrf.mxu0
  %v3768 = vadd.f32 %v3629, %v3767
  %3769 = vmatmul.bf16.gmra.mxu0 %v1059
  %v3770 = vpop.f32.mrf.mxu0
  %v3771 = vadd.f32 %v3632, %v3770
  %v3772 = vpop.f32.mrf.mxu0
  %v3773 = vadd.f32 %v3634, %v3772
  %3774 = vmatmul.bf16.gmra.mxu0 %v1065
  %v3775 = vpop.f32.mrf.mxu0
  %v3776 = vadd.f32 %v3637, %v3775
  %v3777 = vpop.f32.mrf.mxu0
  %v3778 = vadd.f32 %v3639, %v3777
  %3779 = vmatmul.bf16.gmra.mxu0 %v1071
  %v3780 = vpop.f32.mrf.mxu0
  %v3781 = vadd.f32 %v3642, %v3780
  %v3782 = vpop.f32.mrf.mxu0
  %v3783 = vadd.f32 %v3644, %v3782
  %3784 = vmatmul.bf16.gmra.mxu0 %v1077
  %v3785 = vpop.f32.mrf.mxu0
  %v3786 = vadd.f32 %v3647, %v3785
  %v3787 = vpop.f32.mrf.mxu0
  %v3788 = vadd.f32 %v3649, %v3787
  %3789 = vdwg.mxu0
  %3790 = vmatpush.bf16.msra.mxu0 %v2241
  %3791 = vmatpush.bf16.msra.mxu0 %v2235
  %3792 = vmatpush.bf16.msra.mxu0 %v2229
  %3793 = vmatpush.bf16.msra.mxu0 %v2223
  %3794 = vmatpush.bf16.msra.mxu0 %v2217
  %3795 = vmatpush.bf16.msra.mxu0 %v2211
  %3796 = vmatpush.bf16.msra.mxu0 %v2205
  %3797 = vmatpush.bf16.msra.mxu0 %v2199
  %3798 = vmatmul.bf16.gmra.mxu0 %v928
  %v3799 = vpop.f32.mrf.mxu0
  %v3800 = vadd.f32 %v3661, %v3799
  %v3801 = vpop.f32.mrf.mxu0
  %v3802 = vadd.f32 %v3663, %v3801
  %3803 = vmatmul.bf16.gmra.mxu0 %v934
  %v3804 = vpop.f32.mrf.mxu0
  %v3805 = vadd.f32 %v3666, %v3804
  %v3806 = vpop.f32.mrf.mxu0
  %v3807 = vadd.f32 %v3668, %v3806
  %3808 = vmatmul.bf16.gmra.mxu0 %v940
  %v3809 = vpop.f32.mrf.mxu0
  %v3810 = vadd.f32 %v3671, %v3809
  %v3811 = vpop.f32.mrf.mxu0
  %v3812 = vadd.f32 %v3673, %v3811
  %3813 = vmatmul.bf16.gmra.mxu0 %v946
  %v3814 = vpop.f32.mrf.mxu0
  %v3815 = vadd.f32 %v3676, %v3814
  %v3816 = vpop.f32.mrf.mxu0
  %v3817 = vadd.f32 %v3678, %v3816
  %3818 = vmatmul.bf16.gmra.mxu0 %v952
  %v3819 = vpop.f32.mrf.mxu0
  %v3820 = vadd.f32 %v3681, %v3819
  %v3821 = vpop.f32.mrf.mxu0
  %v3822 = vadd.f32 %v3683, %v3821
  %3823 = vmatmul.bf16.gmra.mxu0 %v958
  %v3824 = vpop.f32.mrf.mxu0
  %v3825 = vadd.f32 %v3686, %v3824
  %v3826 = vpop.f32.mrf.mxu0
  %v3827 = vadd.f32 %v3688, %v3826
  %3828 = vmatmul.bf16.gmra.mxu0 %v964
  %v3829 = vpop.f32.mrf.mxu0
  %v3830 = vadd.f32 %v3691, %v3829
  %v3831 = vpop.f32.mrf.mxu0
  %v3832 = vadd.f32 %v3693, %v3831
  %3833 = vmatmul.bf16.gmra.mxu0 %v970
  %v3834 = vpop.f32.mrf.mxu0
  %v3835 = vadd.f32 %v3696, %v3834
  %v3836 = vpop.f32.mrf.mxu0
  %v3837 = vadd.f32 %v3698, %v3836
  %3838 = vmatmul.bf16.gmra.mxu0 %v976
  %v3839 = vpop.f32.mrf.mxu0
  %v3840 = vadd.f32 %v3701, %v3839
  %v3841 = vpop.f32.mrf.mxu0
  %v3842 = vadd.f32 %v3703, %v3841
  %3843 = vmatmul.bf16.gmra.mxu0 %v982
  %v3844 = vpop.f32.mrf.mxu0
  %v3845 = vadd.f32 %v3706, %v3844
  %v3846 = vpop.f32.mrf.mxu0
  %v3847 = vadd.f32 %v3708, %v3846
  %3848 = vmatmul.bf16.gmra.mxu0 %v988
  %v3849 = vpop.f32.mrf.mxu0
  %v3850 = vadd.f32 %v3711, %v3849
  %v3851 = vpop.f32.mrf.mxu0
  %v3852 = vadd.f32 %v3713, %v3851
  %3853 = vmatmul.bf16.gmra.mxu0 %v994
  %v3854 = vpop.f32.mrf.mxu0
  %v3855 = vadd.f32 %v3716, %v3854
  %v3856 = vpop.f32.mrf.mxu0
  %v3857 = vadd.f32 %v3718, %v3856
  %3858 = vmatmul.bf16.gmra.mxu0 %v1000
  %v3859 = vpop.f32.mrf.mxu0
  %v3860 = vadd.f32 %v3721, %v3859
  %v3861 = vpop.f32.mrf.mxu0
  %v3862 = vadd.f32 %v3723, %v3861
  %3863 = vmatmul.bf16.gmra.mxu0 %v1006
  %v3864 = vpop.f32.mrf.mxu0
  %v3865 = vadd.f32 %v3726, %v3864
  %v3866 = vpop.f32.mrf.mxu0
  %v3867 = vadd.f32 %v3728, %v3866
  %3868 = vmatmul.bf16.gmra.mxu0 %v1012
  %v3869 = vpop.f32.mrf.mxu0
  %v3870 = vadd.f32 %v3731, %v3869
  %v3871 = vpop.f32.mrf.mxu0
  %v3872 = vadd.f32 %v3733, %v3871
  %3873 = vmatmul.bf16.gmra.mxu0 %v1018
  %v3874 = vpop.f32.mrf.mxu0
  %v3875 = vadd.f32 %v3736, %v3874
  %v3876 = vpop.f32.mrf.mxu0
  %v3877 = vadd.f32 %v3738, %v3876
  %3878 = vmatmul.bf16.gmra.mxu0 %v1024
  %v3879 = vpop.f32.mrf.mxu0
  %v3880 = vadd.f32 %v3741, %v3879
  %v3881 = vpop.f32.mrf.mxu0
  %v3882 = vadd.f32 %v3743, %v3881
  %3883 = vmatmul.bf16.gmra.mxu0 %v1030
  %v3884 = vpop.f32.mrf.mxu0
  %v3885 = vadd.f32 %v3746, %v3884
  %v3886 = vpop.f32.mrf.mxu0
  %v3887 = vadd.f32 %v3748, %v3886
  %3888 = vmatmul.bf16.gmra.mxu0 %v1036
  %v3889 = vpop.f32.mrf.mxu0
  %v3890 = vadd.f32 %v3751, %v3889
  %v3891 = vpop.f32.mrf.mxu0
  %v3892 = vadd.f32 %v3753, %v3891
  %3893 = vmatmul.bf16.gmra.mxu0 %v1042
  %v3894 = vpop.f32.mrf.mxu0
  %v3895 = vadd.f32 %v3756, %v3894
  %v3896 = vpop.f32.mrf.mxu0
  %v3897 = vadd.f32 %v3758, %v3896
  %3898 = vmatmul.bf16.gmra.mxu0 %v1048
  %v3899 = vpop.f32.mrf.mxu0
  %v3900 = vadd.f32 %v3761, %v3899
  %v3901 = vpop.f32.mrf.mxu0
  %v3902 = vadd.f32 %v3763, %v3901
  %3903 = vmatmul.bf16.gmra.mxu0 %v1054
  %v3904 = vpop.f32.mrf.mxu0
  %v3905 = vadd.f32 %v3766, %v3904
  %v3906 = vpop.f32.mrf.mxu0
  %v3907 = vadd.f32 %v3768, %v3906
  %3908 = vmatmul.bf16.gmra.mxu0 %v1060
  %v3909 = vpop.f32.mrf.mxu0
  %v3910 = vadd.f32 %v3771, %v3909
  %v3911 = vpop.f32.mrf.mxu0
  %v3912 = vadd.f32 %v3773, %v3911
  %3913 = vmatmul.bf16.gmra.mxu0 %v1066
  %v3914 = vpop.f32.mrf.mxu0
  %v3915 = vadd.f32 %v3776, %v3914
  %v3916 = vpop.f32.mrf.mxu0
  %v3917 = vadd.f32 %v3778, %v3916
  %3918 = vmatmul.bf16.gmra.mxu0 %v1072
  %v3919 = vpop.f32.mrf.mxu0
  %v3920 = vadd.f32 %v3781, %v3919
  %v3921 = vpop.f32.mrf.mxu0
  %v3922 = vadd.f32 %v3783, %v3921
  %3923 = vmatmul.bf16.gmra.mxu0 %v1078
  %v3924 = vpop.f32.mrf.mxu0
  %v3925 = vadd.f32 %v3786, %v3924
  %v3926 = vpop.f32.mrf.mxu0
  %v3927 = vadd.f32 %v3788, %v3926
  %3928 = vdwg.mxu0
  %3929 = vmatpush.bf16.msra.mxu0 %v2289
  %3930 = vmatpush.bf16.msra.mxu0 %v2283
  %3931 = vmatpush.bf16.msra.mxu0 %v2277
  %3932 = vmatpush.bf16.msra.mxu0 %v2271
  %3933 = vmatpush.bf16.msra.mxu0 %v2265
  %3934 = vmatpush.bf16.msra.mxu0 %v2259
  %3935 = vmatpush.bf16.msra.mxu0 %v2253
  %3936 = vmatpush.bf16.msra.mxu0 %v2247
  %3937 = vmatmul.bf16.gmra.mxu0 %v929
  %v3938 = vpop.f32.mrf.mxu0
  %v3939 = vadd.f32 %v3800, %v3938
  %v3940 = vpop.f32.mrf.mxu0
  %v3941 = vadd.f32 %v3802, %v3940
  %3942 = vmatmul.bf16.gmra.mxu0 %v935
  %v3943 = vpop.f32.mrf.mxu0
  %v3944 = vadd.f32 %v3805, %v3943
  %v3945 = vpop.f32.mrf.mxu0
  %v3946 = vadd.f32 %v3807, %v3945
  %3947 = vmatmul.bf16.gmra.mxu0 %v941
  %v3948 = vpop.f32.mrf.mxu0
  %v3949 = vadd.f32 %v3810, %v3948
  %v3950 = vpop.f32.mrf.mxu0
  %v3951 = vadd.f32 %v3812, %v3950
  %3952 = vmatmul.bf16.gmra.mxu0 %v947
  %v3953 = vpop.f32.mrf.mxu0
  %v3954 = vadd.f32 %v3815, %v3953
  %v3955 = vpop.f32.mrf.mxu0
  %v3956 = vadd.f32 %v3817, %v3955
  %3957 = vmatmul.bf16.gmra.mxu0 %v953
  %v3958 = vpop.f32.mrf.mxu0
  %v3959 = vadd.f32 %v3820, %v3958
  %v3960 = vpop.f32.mrf.mxu0
  %v3961 = vadd.f32 %v3822, %v3960
  %3962 = vmatmul.bf16.gmra.mxu0 %v959
  %v3963 = vpop.f32.mrf.mxu0
  %v3964 = vadd.f32 %v3825, %v3963
  %v3965 = vpop.f32.mrf.mxu0
  %v3966 = vadd.f32 %v3827, %v3965
  %3967 = vmatmul.bf16.gmra.mxu0 %v965
  %v3968 = vpop.f32.mrf.mxu0
  %v3969 = vadd.f32 %v3830, %v3968
  %v3970 = vpop.f32.mrf.mxu0
  %v3971 = vadd.f32 %v3832, %v3970
  %3972 = vmatmul.bf16.gmra.mxu0 %v971
  %v3973 = vpop.f32.mrf.mxu0
  %v3974 = vadd.f32 %v3835, %v3973
  %v3975 = vpop.f32.mrf.mxu0
  %v3976 = vadd.f32 %v3837, %v3975
  %3977 = vmatmul.bf16.gmra.mxu0 %v977
  %v3978 = vpop.f32.mrf.mxu0
  %v3979 = vadd.f32 %v3840, %v3978
  %v3980 = vpop.f32.mrf.mxu0
  %v3981 = vadd.f32 %v3842, %v3980
  %3982 = vmatmul.bf16.gmra.mxu0 %v983
  %v3983 = vpop.f32.mrf.mxu0
  %v3984 = vadd.f32 %v3845, %v3983
  %v3985 = vpop.f32.mrf.mxu0
  %v3986 = vadd.f32 %v3847, %v3985
  %3987 = vmatmul.bf16.gmra.mxu0 %v989
  %v3988 = vpop.f32.mrf.mxu0
  %v3989 = vadd.f32 %v3850, %v3988
  %v3990 = vpop.f32.mrf.mxu0
  %v3991 = vadd.f32 %v3852, %v3990
  %3992 = vmatmul.bf16.gmra.mxu0 %v995
  %v3993 = vpop.f32.mrf.mxu0
  %v3994 = vadd.f32 %v3855, %v3993
  %v3995 = vpop.f32.mrf.mxu0
  %v3996 = vadd.f32 %v3857, %v3995
  %3997 = vmatmul.bf16.gmra.mxu0 %v1001
  %v3998 = vpop.f32.mrf.mxu0
  %v3999 = vadd.f32 %v3860, %v3998
  %v4000 = vpop.f32.mrf.mxu0
  %v4001 = vadd.f32 %v3862, %v4000
  %4002 = vmatmul.bf16.gmra.mxu0 %v1007
  %v4003 = vpop.f32.mrf.mxu0
  %v4004 = vadd.f32 %v3865, %v4003
  %v4005 = vpop.f32.mrf.mxu0
  %v4006 = vadd.f32 %v3867, %v4005
  %4007 = vmatmul.bf16.gmra.mxu0 %v1013
  %v4008 = vpop.f32.mrf.mxu0
  %v4009 = vadd.f32 %v3870, %v4008
  %v4010 = vpop.f32.mrf.mxu0
  %v4011 = vadd.f32 %v3872, %v4010
  %4012 = vmatmul.bf16.gmra.mxu0 %v1019
  %v4013 = vpop.f32.mrf.mxu0
  %v4014 = vadd.f32 %v3875, %v4013
  %v4015 = vpop.f32.mrf.mxu0
  %v4016 = vadd.f32 %v3877, %v4015
  %4017 = vmatmul.bf16.gmra.mxu0 %v1025
  %v4018 = vpop.f32.mrf.mxu0
  %v4019 = vadd.f32 %v3880, %v4018
  %v4020 = vpop.f32.mrf.mxu0
  %v4021 = vadd.f32 %v3882, %v4020
  %4022 = vmatmul.bf16.gmra.mxu0 %v1031
  %v4023 = vpop.f32.mrf.mxu0
  %v4024 = vadd.f32 %v3885, %v4023
  %v4025 = vpop.f32.mrf.mxu0
  %v4026 = vadd.f32 %v3887, %v4025
  %4027 = vmatmul.bf16.gmra.mxu0 %v1037
  %v4028 = vpop.f32.mrf.mxu0
  %v4029 = vadd.f32 %v3890, %v4028
  %v4030 = vpop.f32.mrf.mxu0
  %v4031 = vadd.f32 %v3892, %v4030
  %4032 = vmatmul.bf16.gmra.mxu0 %v1043
  %v4033 = vpop.f32.mrf.mxu0
  %v4034 = vadd.f32 %v3895, %v4033
  %v4035 = vpop.f32.mrf.mxu0
  %v4036 = vadd.f32 %v3897, %v4035
  %4037 = vmatmul.bf16.gmra.mxu0 %v1049
  %v4038 = vpop.f32.mrf.mxu0
  %v4039 = vadd.f32 %v3900, %v4038
  %v4040 = vpop.f32.mrf.mxu0
  %v4041 = vadd.f32 %v3902, %v4040
  %4042 = vmatmul.bf16.gmra.mxu0 %v1055
  %v4043 = vpop.f32.mrf.mxu0
  %v4044 = vadd.f32 %v3905, %v4043
  %v4045 = vpop.f32.mrf.mxu0
  %v4046 = vadd.f32 %v3907, %v4045
  %4047 = vmatmul.bf16.gmra.mxu0 %v1061
  %v4048 = vpop.f32.mrf.mxu0
  %v4049 = vadd.f32 %v3910, %v4048
  %v4050 = vpop.f32.mrf.mxu0
  %v4051 = vadd.f32 %v3912, %v4050
  %4052 = vmatmul.bf16.gmra.mxu0 %v1067
  %v4053 = vpop.f32.mrf.mxu0
  %v4054 = vadd.f32 %v3915, %v4053
  %v4055 = vpop.f32.mrf.mxu0
  %v4056 = vadd.f32 %v3917, %v4055
  %4057 = vmatmul.bf16.gmra.mxu0 %v1073
  %v4058 = vpop.f32.mrf.mxu0
  %v4059 = vadd.f32 %v3920, %v4058
  %v4060 = vpop.f32.mrf.mxu0
  %v4061 = vadd.f32 %v3922, %v4060
  %4062 = vmatmul.bf16.gmra.mxu0 %v1079
  %v4063 = vpop.f32.mrf.mxu0
  %v4064 = vadd.f32 %v3925, %v4063
  %v4065 = vpop.f32.mrf.mxu0
  %v4066 = vadd.f32 %v3927, %v4065
  %4067 = vdwg.mxu0
  %4068 = vmatpush.bf16.msra.mxu0 %v2337
  %4069 = vmatpush.bf16.msra.mxu0 %v2331
  %4070 = vmatpush.bf16.msra.mxu0 %v2325
  %4071 = vmatpush.bf16.msra.mxu0 %v2319
  %4072 = vmatpush.bf16.msra.mxu0 %v2313
  %4073 = vmatpush.bf16.msra.mxu0 %v2307
  %4074 = vmatpush.bf16.msra.mxu0 %v2301
  %4075 = vmatpush.bf16.msra.mxu0 %v2295
  %4076 = vmatmul.bf16.gmra.mxu0 %v930
  %v4077 = vpop.f32.mrf.mxu0
  %v4078 = vadd.f32 %v3939, %v4077
  %v4079 = vpop.f32.mrf.mxu0
  %v4080 = vadd.f32 %v3941, %v4079
  %4081 = vmatmul.bf16.gmra.mxu0 %v936
  %v4082 = vpop.f32.mrf.mxu0
  %v4083 = vadd.f32 %v3944, %v4082
  %v4084 = vpop.f32.mrf.mxu0
  %v4085 = vadd.f32 %v3946, %v4084
  %4086 = vmatmul.bf16.gmra.mxu0 %v942
  %v4087 = vpop.f32.mrf.mxu0
  %v4088 = vadd.f32 %v3949, %v4087
  %v4089 = vpop.f32.mrf.mxu0
  %v4090 = vadd.f32 %v3951, %v4089
  %4091 = vmatmul.bf16.gmra.mxu0 %v948
  %v4092 = vpop.f32.mrf.mxu0
  %v4093 = vadd.f32 %v3954, %v4092
  %v4094 = vpop.f32.mrf.mxu0
  %v4095 = vadd.f32 %v3956, %v4094
  %4096 = vmatmul.bf16.gmra.mxu0 %v954
  %v4097 = vpop.f32.mrf.mxu0
  %v4098 = vadd.f32 %v3959, %v4097
  %v4099 = vpop.f32.mrf.mxu0
  %v4100 = vadd.f32 %v3961, %v4099
  %4101 = vmatmul.bf16.gmra.mxu0 %v960
  %v4102 = vpop.f32.mrf.mxu0
  %v4103 = vadd.f32 %v3964, %v4102
  %v4104 = vpop.f32.mrf.mxu0
  %v4105 = vadd.f32 %v3966, %v4104
  %4106 = vmatmul.bf16.gmra.mxu0 %v966
  %v4107 = vpop.f32.mrf.mxu0
  %v4108 = vadd.f32 %v3969, %v4107
  %v4109 = vpop.f32.mrf.mxu0
  %v4110 = vadd.f32 %v3971, %v4109
  %4111 = vmatmul.bf16.gmra.mxu0 %v972
  %v4112 = vpop.f32.mrf.mxu0
  %v4113 = vadd.f32 %v3974, %v4112
  %v4114 = vpop.f32.mrf.mxu0
  %v4115 = vadd.f32 %v3976, %v4114
  %4116 = vmatmul.bf16.gmra.mxu0 %v978
  %v4117 = vpop.f32.mrf.mxu0
  %v4118 = vadd.f32 %v3979, %v4117
  %v4119 = vpop.f32.mrf.mxu0
  %v4120 = vadd.f32 %v3981, %v4119
  %4121 = vmatmul.bf16.gmra.mxu0 %v984
  %v4122 = vpop.f32.mrf.mxu0
  %v4123 = vadd.f32 %v3984, %v4122
  %v4124 = vpop.f32.mrf.mxu0
  %v4125 = vadd.f32 %v3986, %v4124
  %4126 = vmatmul.bf16.gmra.mxu0 %v990
  %v4127 = vpop.f32.mrf.mxu0
  %v4128 = vadd.f32 %v3989, %v4127
  %v4129 = vpop.f32.mrf.mxu0
  %v4130 = vadd.f32 %v3991, %v4129
  %4131 = vmatmul.bf16.gmra.mxu0 %v996
  %v4132 = vpop.f32.mrf.mxu0
  %v4133 = vadd.f32 %v3994, %v4132
  %v4134 = vpop.f32.mrf.mxu0
  %v4135 = vadd.f32 %v3996, %v4134
  %4136 = vmatmul.bf16.gmra.mxu0 %v1002
  %v4137 = vpop.f32.mrf.mxu0
  %v4138 = vadd.f32 %v3999, %v4137
  %v4139 = vpop.f32.mrf.mxu0
  %v4140 = vadd.f32 %v4001, %v4139
  %4141 = vmatmul.bf16.gmra.mxu0 %v1008
  %v4142 = vpop.f32.mrf.mxu0
  %v4143 = vadd.f32 %v4004, %v4142
  %v4144 = vpop.f32.mrf.mxu0
  %v4145 = vadd.f32 %v4006, %v4144
  %4146 = vmatmul.bf16.gmra.mxu0 %v1014
  %v4147 = vpop.f32.mrf.mxu0
  %v4148 = vadd.f32 %v4009, %v4147
  %v4149 = vpop.f32.mrf.mxu0
  %v4150 = vadd.f32 %v4011, %v4149
  %4151 = vmatmul.bf16.gmra.mxu0 %v1020
  %v4152 = vpop.f32.mrf.mxu0
  %v4153 = vadd.f32 %v4014, %v4152
  %v4154 = vpop.f32.mrf.mxu0
  %v4155 = vadd.f32 %v4016, %v4154
  %4156 = vmatmul.bf16.gmra.mxu0 %v1026
  %v4157 = vpop.f32.mrf.mxu0
  %v4158 = vadd.f32 %v4019, %v4157
  %v4159 = vpop.f32.mrf.mxu0
  %v4160 = vadd.f32 %v4021, %v4159
  %4161 = vmatmul.bf16.gmra.mxu0 %v1032
  %v4162 = vpop.f32.mrf.mxu0
  %v4163 = vadd.f32 %v4024, %v4162
  %v4164 = vpop.f32.mrf.mxu0
  %v4165 = vadd.f32 %v4026, %v4164
  %4166 = vmatmul.bf16.gmra.mxu0 %v1038
  %v4167 = vpop.f32.mrf.mxu0
  %v4168 = vadd.f32 %v4029, %v4167
  %v4169 = vpop.f32.mrf.mxu0
  %v4170 = vadd.f32 %v4031, %v4169
  %4171 = vmatmul.bf16.gmra.mxu0 %v1044
  %v4172 = vpop.f32.mrf.mxu0
  %v4173 = vadd.f32 %v4034, %v4172
  %v4174 = vpop.f32.mrf.mxu0
  %v4175 = vadd.f32 %v4036, %v4174
  %4176 = vmatmul.bf16.gmra.mxu0 %v1050
  %v4177 = vpop.f32.mrf.mxu0
  %v4178 = vadd.f32 %v4039, %v4177
  %v4179 = vpop.f32.mrf.mxu0
  %v4180 = vadd.f32 %v4041, %v4179
  %4181 = vmatmul.bf16.gmra.mxu0 %v1056
  %v4182 = vpop.f32.mrf.mxu0
  %v4183 = vadd.f32 %v4044, %v4182
  %v4184 = vpop.f32.mrf.mxu0
  %v4185 = vadd.f32 %v4046, %v4184
  %4186 = vmatmul.bf16.gmra.mxu0 %v1062
  %v4187 = vpop.f32.mrf.mxu0
  %v4188 = vadd.f32 %v4049, %v4187
  %v4189 = vpop.f32.mrf.mxu0
  %v4190 = vadd.f32 %v4051, %v4189
  %4191 = vmatmul.bf16.gmra.mxu0 %v1068
  %v4192 = vpop.f32.mrf.mxu0
  %v4193 = vadd.f32 %v4054, %v4192
  %v4194 = vpop.f32.mrf.mxu0
  %v4195 = vadd.f32 %v4056, %v4194
  %4196 = vmatmul.bf16.gmra.mxu0 %v1074
  %v4197 = vpop.f32.mrf.mxu0
  %v4198 = vadd.f32 %v4059, %v4197
  %v4199 = vpop.f32.mrf.mxu0
  %v4200 = vadd.f32 %v4061, %v4199
  %4201 = vmatmul.bf16.gmra.mxu0 %v1080
  %v4202 = vpop.f32.mrf.mxu0
  %v4203 = vadd.f32 %v4064, %v4202
  %v4204 = vpop.f32.mrf.mxu0
  %v4205 = vadd.f32 %v4066, %v4204
  %4206 = vdwg.mxu0
  %4207 = vmatpush.bf16.msra.mxu0 %v2385
  %4208 = vmatpush.bf16.msra.mxu0 %v2379
  %4209 = vmatpush.bf16.msra.mxu0 %v2373
  %4210 = vmatpush.bf16.msra.mxu0 %v2367
  %4211 = vmatpush.bf16.msra.mxu0 %v2361
  %4212 = vmatpush.bf16.msra.mxu0 %v2355
  %4213 = vmatpush.bf16.msra.mxu0 %v2349
  %4214 = vmatpush.bf16.msra.mxu0 %v2343
  %4215 = vmatmul.bf16.gmra.mxu0 %v931
  %v4216 = vpop.f32.mrf.mxu0
  %v4217 = vadd.f32 %v4078, %v4216
  %v4218 = vpop.f32.mrf.mxu0
  %v4219 = vadd.f32 %v4080, %v4218
  %4220 = vmatmul.bf16.gmra.mxu0 %v937
  %v4221 = vpop.f32.mrf.mxu0
  %v4222 = vadd.f32 %v4083, %v4221
  %v4223 = vpop.f32.mrf.mxu0
  %v4224 = vadd.f32 %v4085, %v4223
  %4225 = vmatmul.bf16.gmra.mxu0 %v943
  %v4226 = vpop.f32.mrf.mxu0
  %v4227 = vadd.f32 %v4088, %v4226
  %v4228 = vpop.f32.mrf.mxu0
  %v4229 = vadd.f32 %v4090, %v4228
  %4230 = vmatmul.bf16.gmra.mxu0 %v949
  %v4231 = vpop.f32.mrf.mxu0
  %v4232 = vadd.f32 %v4093, %v4231
  %v4233 = vpop.f32.mrf.mxu0
  %v4234 = vadd.f32 %v4095, %v4233
  %4235 = vmatmul.bf16.gmra.mxu0 %v955
  %v4236 = vpop.f32.mrf.mxu0
  %v4237 = vadd.f32 %v4098, %v4236
  %v4238 = vpop.f32.mrf.mxu0
  %v4239 = vadd.f32 %v4100, %v4238
  %4240 = vmatmul.bf16.gmra.mxu0 %v961
  %v4241 = vpop.f32.mrf.mxu0
  %v4242 = vadd.f32 %v4103, %v4241
  %v4243 = vpop.f32.mrf.mxu0
  %v4244 = vadd.f32 %v4105, %v4243
  %4245 = vmatmul.bf16.gmra.mxu0 %v967
  %v4246 = vpop.f32.mrf.mxu0
  %v4247 = vadd.f32 %v4108, %v4246
  %v4248 = vpop.f32.mrf.mxu0
  %v4249 = vadd.f32 %v4110, %v4248
  %4250 = vmatmul.bf16.gmra.mxu0 %v973
  %v4251 = vpop.f32.mrf.mxu0
  %v4252 = vadd.f32 %v4113, %v4251
  %v4253 = vpop.f32.mrf.mxu0
  %v4254 = vadd.f32 %v4115, %v4253
  %4255 = vmatmul.bf16.gmra.mxu0 %v979
  %v4256 = vpop.f32.mrf.mxu0
  %v4257 = vadd.f32 %v4118, %v4256
  %v4258 = vpop.f32.mrf.mxu0
  %v4259 = vadd.f32 %v4120, %v4258
  %4260 = vmatmul.bf16.gmra.mxu0 %v985
  %v4261 = vpop.f32.mrf.mxu0
  %v4262 = vadd.f32 %v4123, %v4261
  %v4263 = vpop.f32.mrf.mxu0
  %v4264 = vadd.f32 %v4125, %v4263
  %4265 = vmatmul.bf16.gmra.mxu0 %v991
  %v4266 = vpop.f32.mrf.mxu0
  %v4267 = vadd.f32 %v4128, %v4266
  %v4268 = vpop.f32.mrf.mxu0
  %v4269 = vadd.f32 %v4130, %v4268
  %4270 = vmatmul.bf16.gmra.mxu0 %v997
  %v4271 = vpop.f32.mrf.mxu0
  %v4272 = vadd.f32 %v4133, %v4271
  %v4273 = vpop.f32.mrf.mxu0
  %v4274 = vadd.f32 %v4135, %v4273
  %4275 = vmatmul.bf16.gmra.mxu0 %v1003
  %v4276 = vpop.f32.mrf.mxu0
  %v4277 = vadd.f32 %v4138, %v4276
  %v4278 = vpop.f32.mrf.mxu0
  %v4279 = vadd.f32 %v4140, %v4278
  %4280 = vmatmul.bf16.gmra.mxu0 %v1009
  %v4281 = vpop.f32.mrf.mxu0
  %v4282 = vadd.f32 %v4143, %v4281
  %v4283 = vpop.f32.mrf.mxu0
  %v4284 = vadd.f32 %v4145, %v4283
  %4285 = vmatmul.bf16.gmra.mxu0 %v1015
  %v4286 = vpop.f32.mrf.mxu0
  %v4287 = vadd.f32 %v4148, %v4286
  %v4288 = vpop.f32.mrf.mxu0
  %v4289 = vadd.f32 %v4150, %v4288
  %4290 = vmatmul.bf16.gmra.mxu0 %v1021
  %v4291 = vpop.f32.mrf.mxu0
  %v4292 = vadd.f32 %v4153, %v4291
  %v4293 = vpop.f32.mrf.mxu0
  %v4294 = vadd.f32 %v4155, %v4293
  %4295 = vmatmul.bf16.gmra.mxu0 %v1027
  %v4296 = vpop.f32.mrf.mxu0
  %v4297 = vadd.f32 %v4158, %v4296
  %v4298 = vpop.f32.mrf.mxu0
  %v4299 = vadd.f32 %v4160, %v4298
  %4300 = vmatmul.bf16.gmra.mxu0 %v1033
  %v4301 = vpop.f32.mrf.mxu0
  %v4302 = vadd.f32 %v4163, %v4301
  %v4303 = vpop.f32.mrf.mxu0
  %v4304 = vadd.f32 %v4165, %v4303
  %4305 = vmatmul.bf16.gmra.mxu0 %v1039
  %v4306 = vpop.f32.mrf.mxu0
  %v4307 = vadd.f32 %v4168, %v4306
  %v4308 = vpop.f32.mrf.mxu0
  %v4309 = vadd.f32 %v4170, %v4308
  %4310 = vmatmul.bf16.gmra.mxu0 %v1045
  %v4311 = vpop.f32.mrf.mxu0
  %v4312 = vadd.f32 %v4173, %v4311
  %v4313 = vpop.f32.mrf.mxu0
  %v4314 = vadd.f32 %v4175, %v4313
  %4315 = vmatmul.bf16.gmra.mxu0 %v1051
  %v4316 = vpop.f32.mrf.mxu0
  %v4317 = vadd.f32 %v4178, %v4316
  %v4318 = vpop.f32.mrf.mxu0
  %v4319 = vadd.f32 %v4180, %v4318
  %4320 = vmatmul.bf16.gmra.mxu0 %v1057
  %v4321 = vpop.f32.mrf.mxu0
  %v4322 = vadd.f32 %v4183, %v4321
  %v4323 = vpop.f32.mrf.mxu0
  %v4324 = vadd.f32 %v4185, %v4323
  %4325 = vmatmul.bf16.gmra.mxu0 %v1063
  %v4326 = vpop.f32.mrf.mxu0
  %v4327 = vadd.f32 %v4188, %v4326
  %v4328 = vpop.f32.mrf.mxu0
  %v4329 = vadd.f32 %v4190, %v4328
  %4330 = vmatmul.bf16.gmra.mxu0 %v1069
  %v4331 = vpop.f32.mrf.mxu0
  %v4332 = vadd.f32 %v4193, %v4331
  %v4333 = vpop.f32.mrf.mxu0
  %v4334 = vadd.f32 %v4195, %v4333
  %4335 = vmatmul.bf16.gmra.mxu0 %v1075
  %v4336 = vpop.f32.mrf.mxu0
  %v4337 = vadd.f32 %v4198, %v4336
  %v4338 = vpop.f32.mrf.mxu0
  %v4339 = vadd.f32 %v4200, %v4338
  %4340 = vmatmul.bf16.gmra.mxu0 %v1081
  %v4341 = vpop.f32.mrf.mxu0
  %v4342 = vadd.f32 %v4203, %v4341
  %v4343 = vpop.f32.mrf.mxu0
  %v4344 = vadd.f32 %v4205, %v4343
  %4345 = vdwg.mxu0
  %4346 = vmatpush.bf16.msra.mxu0 %v2146
  %4347 = vmatpush.bf16.msra.mxu0 %v2140
  %4348 = vmatpush.bf16.msra.mxu0 %v2134
  %4349 = vmatpush.bf16.msra.mxu0 %v2128
  %4350 = vmatpush.bf16.msra.mxu0 %v2122
  %4351 = vmatpush.bf16.msra.mxu0 %v2116
  %4352 = vmatpush.bf16.msra.mxu0 %v2110
  %4353 = vmatpush.bf16.msra.mxu0 %v2104
  %4354 = vmatmul.bf16.gmra.mxu0 %v926
  %v4355 = vpop.f32.mrf.mxu0
  %v4356 = vadd.f32 0.0, %v4355
  %v4357 = vpop.f32.mrf.mxu0
  %v4358 = vadd.f32 0.0, %v4357
  %4359 = vmatmul.bf16.gmra.mxu0 %v932
  %v4360 = vpop.f32.mrf.mxu0
  %v4361 = vadd.f32 0.0, %v4360
  %v4362 = vpop.f32.mrf.mxu0
  %v4363 = vadd.f32 0.0, %v4362
  %4364 = vmatmul.bf16.gmra.mxu0 %v938
  %v4365 = vpop.f32.mrf.mxu0
  %v4366 = vadd.f32 0.0, %v4365
  %v4367 = vpop.f32.mrf.mxu0
  %v4368 = vadd.f32 0.0, %v4367
  %4369 = vmatmul.bf16.gmra.mxu0 %v944
  %v4370 = vpop.f32.mrf.mxu0
  %v4371 = vadd.f32 0.0, %v4370
  %v4372 = vpop.f32.mrf.mxu0
  %v4373 = vadd.f32 0.0, %v4372
  %4374 = vmatmul.bf16.gmra.mxu0 %v950
  %v4375 = vpop.f32.mrf.mxu0
  %v4376 = vadd.f32 0.0, %v4375
  %v4377 = vpop.f32.mrf.mxu0
  %v4378 = vadd.f32 0.0, %v4377
  %4379 = vmatmul.bf16.gmra.mxu0 %v956
  %v4380 = vpop.f32.mrf.mxu0
  %v4381 = vadd.f32 0.0, %v4380
  %v4382 = vpop.f32.mrf.mxu0
  %v4383 = vadd.f32 0.0, %v4382
  %4384 = vmatmul.bf16.gmra.mxu0 %v962
  %v4385 = vpop.f32.mrf.mxu0
  %v4386 = vadd.f32 0.0, %v4385
  %v4387 = vpop.f32.mrf.mxu0
  %v4388 = vadd.f32 0.0, %v4387
  %4389 = vmatmul.bf16.gmra.mxu0 %v968
  %v4390 = vpop.f32.mrf.mxu0
  %v4391 = vadd.f32 0.0, %v4390
  %v4392 = vpop.f32.mrf.mxu0
  %v4393 = vadd.f32 0.0, %v4392
  %4394 = vmatmul.bf16.gmra.mxu0 %v974
  %v4395 = vpop.f32.mrf.mxu0
  %v4396 = vadd.f32 0.0, %v4395
  %v4397 = vpop.f32.mrf.mxu0
  %v4398 = vadd.f32 0.0, %v4397
  %4399 = vmatmul.bf16.gmra.mxu0 %v980
  %v4400 = vpop.f32.mrf.mxu0
  %v4401 = vadd.f32 0.0, %v4400
  %v4402 = vpop.f32.mrf.mxu0
  %v4403 = vadd.f32 0.0, %v4402
  %4404 = vmatmul.bf16.gmra.mxu0 %v986
  %v4405 = vpop.f32.mrf.mxu0
  %v4406 = vadd.f32 0.0, %v4405
  %v4407 = vpop.f32.mrf.mxu0
  %v4408 = vadd.f32 0.0, %v4407
  %4409 = vmatmul.bf16.gmra.mxu0 %v992
  %v4410 = vpop.f32.mrf.mxu0
  %v4411 = vadd.f32 0.0, %v4410
  %v4412 = vpop.f32.mrf.mxu0
  %v4413 = vadd.f32 0.0, %v4412
  %4414 = vmatmul.bf16.gmra.mxu0 %v998
  %v4415 = vpop.f32.mrf.mxu0
  %v4416 = vadd.f32 0.0, %v4415
  %v4417 = vpop.f32.mrf.mxu0
  %v4418 = vadd.f32 0.0, %v4417
  %4419 = vmatmul.bf16.gmra.mxu0 %v1004
  %v4420 = vpop.f32.mrf.mxu0
  %v4421 = vadd.f32 0.0, %v4420
  %v4422 = vpop.f32.mrf.mxu0
  %v4423 = vadd.f32 0.0, %v4422
  %4424 = vmatmul.bf16.gmra.mxu0 %v1010
  %v4425 = vpop.f32.mrf.mxu0
  %v4426 = vadd.f32 0.0, %v4425
  %v4427 = vpop.f32.mrf.mxu0
  %v4428 = vadd.f32 0.0, %v4427
  %4429 = vmatmul.bf16.gmra.mxu0 %v1016
  %v4430 = vpop.f32.mrf.mxu0
  %v4431 = vadd.f32 0.0, %v4430
  %v4432 = vpop.f32.mrf.mxu0
  %v4433 = vadd.f32 0.0, %v4432
  %4434 = vmatmul.bf16.gmra.mxu0 %v1022
  %v4435 = vpop.f32.mrf.mxu0
  %v4436 = vadd.f32 0.0, %v4435
  %v4437 = vpop.f32.mrf.mxu0
  %v4438 = vadd.f32 0.0, %v4437
  %4439 = vmatmul.bf16.gmra.mxu0 %v1028
  %v4440 = vpop.f32.mrf.mxu0
  %v4441 = vadd.f32 0.0, %v4440
  %v4442 = vpop.f32.mrf.mxu0
  %v4443 = vadd.f32 0.0, %v4442
  %4444 = vmatmul.bf16.gmra.mxu0 %v1034
  %v4445 = vpop.f32.mrf.mxu0
  %v4446 = vadd.f32 0.0, %v4445
  %v4447 = vpop.f32.mrf.mxu0
  %v4448 = vadd.f32 0.0, %v4447
  %4449 = vmatmul.bf16.gmra.mxu0 %v1040
  %v4450 = vpop.f32.mrf.mxu0
  %v4451 = vadd.f32 0.0, %v4450
  %v4452 = vpop.f32.mrf.mxu0
  %v4453 = vadd.f32 0.0, %v4452
  %4454 = vmatmul.bf16.gmra.mxu0 %v1046
  %v4455 = vpop.f32.mrf.mxu0
  %v4456 = vadd.f32 0.0, %v4455
  %v4457 = vpop.f32.mrf.mxu0
  %v4458 = vadd.f32 0.0, %v4457
  %4459 = vmatmul.bf16.gmra.mxu0 %v1052
  %v4460 = vpop.f32.mrf.mxu0
  %v4461 = vadd.f32 0.0, %v4460
  %v4462 = vpop.f32.mrf.mxu0
  %v4463 = vadd.f32 0.0, %v4462
  %4464 = vmatmul.bf16.gmra.mxu0 %v1058
  %v4465 = vpop.f32.mrf.mxu0
  %v4466 = vadd.f32 0.0, %v4465
  %v4467 = vpop.f32.mrf.mxu0
  %v4468 = vadd.f32 0.0, %v4467
  %4469 = vmatmul.bf16.gmra.mxu0 %v1064
  %v4470 = vpop.f32.mrf.mxu0
  %v4471 = vadd.f32 0.0, %v4470
  %v4472 = vpop.f32.mrf.mxu0
  %v4473 = vadd.f32 0.0, %v4472
  %4474 = vmatmul.bf16.gmra.mxu0 %v1070
  %v4475 = vpop.f32.mrf.mxu0
  %v4476 = vadd.f32 0.0, %v4475
  %v4477 = vpop.f32.mrf.mxu0
  %v4478 = vadd.f32 0.0, %v4477
  %4479 = vmatmul.bf16.gmra.mxu0 %v1076
  %v4480 = vpop.f32.mrf.mxu0
  %v4481 = vadd.f32 0.0, %v4480
  %v4482 = vpop.f32.mrf.mxu0
  %v4483 = vadd.f32 0.0, %v4482
  %4484 = vdwg.mxu0
  %4485 = vmatpush.bf16.msra.mxu0 %v2194
  %4486 = vmatpush.bf16.msra.mxu0 %v2188
  %4487 = vmatpush.bf16.msra.mxu0 %v2182
  %4488 = vmatpush.bf16.msra.mxu0 %v2176
  %4489 = vmatpush.bf16.msra.mxu0 %v2170
  %4490 = vmatpush.bf16.msra.mxu0 %v2164
  %4491 = vmatpush.bf16.msra.mxu0 %v2158
  %4492 = vmatpush.bf16.msra.mxu0 %v2152
  %4493 = vmatmul.bf16.gmra.mxu0 %v927
  %v4494 = vpop.f32.mrf.mxu0
  %v4495 = vadd.f32 %v4356, %v4494
  %v4496 = vpop.f32.mrf.mxu0
  %v4497 = vadd.f32 %v4358, %v4496
  %4498 = vmatmul.bf16.gmra.mxu0 %v933
  %v4499 = vpop.f32.mrf.mxu0
  %v4500 = vadd.f32 %v4361, %v4499
  %v4501 = vpop.f32.mrf.mxu0
  %v4502 = vadd.f32 %v4363, %v4501
  %4503 = vmatmul.bf16.gmra.mxu0 %v939
  %v4504 = vpop.f32.mrf.mxu0
  %v4505 = vadd.f32 %v4366, %v4504
  %v4506 = vpop.f32.mrf.mxu0
  %v4507 = vadd.f32 %v4368, %v4506
  %4508 = vmatmul.bf16.gmra.mxu0 %v945
  %v4509 = vpop.f32.mrf.mxu0
  %v4510 = vadd.f32 %v4371, %v4509
  %v4511 = vpop.f32.mrf.mxu0
  %v4512 = vadd.f32 %v4373, %v4511
  %4513 = vmatmul.bf16.gmra.mxu0 %v951
  %v4514 = vpop.f32.mrf.mxu0
  %v4515 = vadd.f32 %v4376, %v4514
  %v4516 = vpop.f32.mrf.mxu0
  %v4517 = vadd.f32 %v4378, %v4516
  %4518 = vmatmul.bf16.gmra.mxu0 %v957
  %v4519 = vpop.f32.mrf.mxu0
  %v4520 = vadd.f32 %v4381, %v4519
  %v4521 = vpop.f32.mrf.mxu0
  %v4522 = vadd.f32 %v4383, %v4521
  %4523 = vmatmul.bf16.gmra.mxu0 %v963
  %v4524 = vpop.f32.mrf.mxu0
  %v4525 = vadd.f32 %v4386, %v4524
  %v4526 = vpop.f32.mrf.mxu0
  %v4527 = vadd.f32 %v4388, %v4526
  %4528 = vmatmul.bf16.gmra.mxu0 %v969
  %v4529 = vpop.f32.mrf.mxu0
  %v4530 = vadd.f32 %v4391, %v4529
  %v4531 = vpop.f32.mrf.mxu0
  %v4532 = vadd.f32 %v4393, %v4531
  %4533 = vmatmul.bf16.gmra.mxu0 %v975
  %v4534 = vpop.f32.mrf.mxu0
  %v4535 = vadd.f32 %v4396, %v4534
  %v4536 = vpop.f32.mrf.mxu0
  %v4537 = vadd.f32 %v4398, %v4536
  %4538 = vmatmul.bf16.gmra.mxu0 %v981
  %v4539 = vpop.f32.mrf.mxu0
  %v4540 = vadd.f32 %v4401, %v4539
  %v4541 = vpop.f32.mrf.mxu0
  %v4542 = vadd.f32 %v4403, %v4541
  %4543 = vmatmul.bf16.gmra.mxu0 %v987
  %v4544 = vpop.f32.mrf.mxu0
  %v4545 = vadd.f32 %v4406, %v4544
  %v4546 = vpop.f32.mrf.mxu0
  %v4547 = vadd.f32 %v4408, %v4546
  %4548 = vmatmul.bf16.gmra.mxu0 %v993
  %v4549 = vpop.f32.mrf.mxu0
  %v4550 = vadd.f32 %v4411, %v4549
  %v4551 = vpop.f32.mrf.mxu0
  %v4552 = vadd.f32 %v4413, %v4551
  %4553 = vmatmul.bf16.gmra.mxu0 %v999
  %v4554 = vpop.f32.mrf.mxu0
  %v4555 = vadd.f32 %v4416, %v4554
  %v4556 = vpop.f32.mrf.mxu0
  %v4557 = vadd.f32 %v4418, %v4556
  %4558 = vmatmul.bf16.gmra.mxu0 %v1005
  %v4559 = vpop.f32.mrf.mxu0
  %v4560 = vadd.f32 %v4421, %v4559
  %v4561 = vpop.f32.mrf.mxu0
  %v4562 = vadd.f32 %v4423, %v4561
  %4563 = vmatmul.bf16.gmra.mxu0 %v1011
  %v4564 = vpop.f32.mrf.mxu0
  %v4565 = vadd.f32 %v4426, %v4564
  %v4566 = vpop.f32.mrf.mxu0
  %v4567 = vadd.f32 %v4428, %v4566
  %4568 = vmatmul.bf16.gmra.mxu0 %v1017
  %v4569 = vpop.f32.mrf.mxu0
  %v4570 = vadd.f32 %v4431, %v4569
  %v4571 = vpop.f32.mrf.mxu0
  %v4572 = vadd.f32 %v4433, %v4571
  %4573 = vmatmul.bf16.gmra.mxu0 %v1023
  %v4574 = vpop.f32.mrf.mxu0
  %v4575 = vadd.f32 %v4436, %v4574
  %v4576 = vpop.f32.mrf.mxu0
  %v4577 = vadd.f32 %v4438, %v4576
  %4578 = vmatmul.bf16.gmra.mxu0 %v1029
  %v4579 = vpop.f32.mrf.mxu0
  %v4580 = vadd.f32 %v4441, %v4579
  %v4581 = vpop.f32.mrf.mxu0
  %v4582 = vadd.f32 %v4443, %v4581
  %4583 = vmatmul.bf16.gmra.mxu0 %v1035
  %v4584 = vpop.f32.mrf.mxu0
  %v4585 = vadd.f32 %v4446, %v4584
  %v4586 = vpop.f32.mrf.mxu0
  %v4587 = vadd.f32 %v4448, %v4586
  %4588 = vmatmul.bf16.gmra.mxu0 %v1041
  %v4589 = vpop.f32.mrf.mxu0
  %v4590 = vadd.f32 %v4451, %v4589
  %v4591 = vpop.f32.mrf.mxu0
  %v4592 = vadd.f32 %v4453, %v4591
  %4593 = vmatmul.bf16.gmra.mxu0 %v1047
  %v4594 = vpop.f32.mrf.mxu0
  %v4595 = vadd.f32 %v4456, %v4594
  %v4596 = vpop.f32.mrf.mxu0
  %v4597 = vadd.f32 %v4458, %v4596
  %4598 = vmatmul.bf16.gmra.mxu0 %v1053
  %v4599 = vpop.f32.mrf.mxu0
  %v4600 = vadd.f32 %v4461, %v4599
  %v4601 = vpop.f32.mrf.mxu0
  %v4602 = vadd.f32 %v4463, %v4601
  %4603 = vmatmul.bf16.gmra.mxu0 %v1059
  %v4604 = vpop.f32.mrf.mxu0
  %v4605 = vadd.f32 %v4466, %v4604
  %v4606 = vpop.f32.mrf.mxu0
  %v4607 = vadd.f32 %v4468, %v4606
  %4608 = vmatmul.bf16.gmra.mxu0 %v1065
  %v4609 = vpop.f32.mrf.mxu0
  %v4610 = vadd.f32 %v4471, %v4609
  %v4611 = vpop.f32.mrf.mxu0
  %v4612 = vadd.f32 %v4473, %v4611
  %4613 = vmatmul.bf16.gmra.mxu0 %v1071
  %v4614 = vpop.f32.mrf.mxu0
  %v4615 = vadd.f32 %v4476, %v4614
  %v4616 = vpop.f32.mrf.mxu0
  %v4617 = vadd.f32 %v4478, %v4616
  %4618 = vmatmul.bf16.gmra.mxu0 %v1077
  %v4619 = vpop.f32.mrf.mxu0
  %v4620 = vadd.f32 %v4481, %v4619
  %v4621 = vpop.f32.mrf.mxu0
  %v4622 = vadd.f32 %v4483, %v4621
  %4623 = vdwg.mxu0
  %4624 = vmatpush.bf16.msra.mxu0 %v2242
  %4625 = vmatpush.bf16.msra.mxu0 %v2236
  %4626 = vmatpush.bf16.msra.mxu0 %v2230
  %4627 = vmatpush.bf16.msra.mxu0 %v2224
  %4628 = vmatpush.bf16.msra.mxu0 %v2218
  %4629 = vmatpush.bf16.msra.mxu0 %v2212
  %4630 = vmatpush.bf16.msra.mxu0 %v2206
  %4631 = vmatpush.bf16.msra.mxu0 %v2200
  %4632 = vmatmul.bf16.gmra.mxu0 %v928
  %v4633 = vpop.f32.mrf.mxu0
  %v4634 = vadd.f32 %v4495, %v4633
  %v4635 = vpop.f32.mrf.mxu0
  %v4636 = vadd.f32 %v4497, %v4635
  %4637 = vmatmul.bf16.gmra.mxu0 %v934
  %v4638 = vpop.f32.mrf.mxu0
  %v4639 = vadd.f32 %v4500, %v4638
  %v4640 = vpop.f32.mrf.mxu0
  %v4641 = vadd.f32 %v4502, %v4640
  %4642 = vmatmul.bf16.gmra.mxu0 %v940
  %v4643 = vpop.f32.mrf.mxu0
  %v4644 = vadd.f32 %v4505, %v4643
  %v4645 = vpop.f32.mrf.mxu0
  %v4646 = vadd.f32 %v4507, %v4645
  %4647 = vmatmul.bf16.gmra.mxu0 %v946
  %v4648 = vpop.f32.mrf.mxu0
  %v4649 = vadd.f32 %v4510, %v4648
  %v4650 = vpop.f32.mrf.mxu0
  %v4651 = vadd.f32 %v4512, %v4650
  %4652 = vmatmul.bf16.gmra.mxu0 %v952
  %v4653 = vpop.f32.mrf.mxu0
  %v4654 = vadd.f32 %v4515, %v4653
  %v4655 = vpop.f32.mrf.mxu0
  %v4656 = vadd.f32 %v4517, %v4655
  %4657 = vmatmul.bf16.gmra.mxu0 %v958
  %v4658 = vpop.f32.mrf.mxu0
  %v4659 = vadd.f32 %v4520, %v4658
  %v4660 = vpop.f32.mrf.mxu0
  %v4661 = vadd.f32 %v4522, %v4660
  %4662 = vmatmul.bf16.gmra.mxu0 %v964
  %v4663 = vpop.f32.mrf.mxu0
  %v4664 = vadd.f32 %v4525, %v4663
  %v4665 = vpop.f32.mrf.mxu0
  %v4666 = vadd.f32 %v4527, %v4665
  %4667 = vmatmul.bf16.gmra.mxu0 %v970
  %v4668 = vpop.f32.mrf.mxu0
  %v4669 = vadd.f32 %v4530, %v4668
  %v4670 = vpop.f32.mrf.mxu0
  %v4671 = vadd.f32 %v4532, %v4670
  %4672 = vmatmul.bf16.gmra.mxu0 %v976
  %v4673 = vpop.f32.mrf.mxu0
  %v4674 = vadd.f32 %v4535, %v4673
  %v4675 = vpop.f32.mrf.mxu0
  %v4676 = vadd.f32 %v4537, %v4675
  %4677 = vmatmul.bf16.gmra.mxu0 %v982
  %v4678 = vpop.f32.mrf.mxu0
  %v4679 = vadd.f32 %v4540, %v4678
  %v4680 = vpop.f32.mrf.mxu0
  %v4681 = vadd.f32 %v4542, %v4680
  %4682 = vmatmul.bf16.gmra.mxu0 %v988
  %v4683 = vpop.f32.mrf.mxu0
  %v4684 = vadd.f32 %v4545, %v4683
  %v4685 = vpop.f32.mrf.mxu0
  %v4686 = vadd.f32 %v4547, %v4685
  %4687 = vmatmul.bf16.gmra.mxu0 %v994
  %v4688 = vpop.f32.mrf.mxu0
  %v4689 = vadd.f32 %v4550, %v4688
  %v4690 = vpop.f32.mrf.mxu0
  %v4691 = vadd.f32 %v4552, %v4690
  %4692 = vmatmul.bf16.gmra.mxu0 %v1000
  %v4693 = vpop.f32.mrf.mxu0
  %v4694 = vadd.f32 %v4555, %v4693
  %v4695 = vpop.f32.mrf.mxu0
  %v4696 = vadd.f32 %v4557, %v4695
  %4697 = vmatmul.bf16.gmra.mxu0 %v1006
  %v4698 = vpop.f32.mrf.mxu0
  %v4699 = vadd.f32 %v4560, %v4698
  %v4700 = vpop.f32.mrf.mxu0
  %v4701 = vadd.f32 %v4562, %v4700
  %4702 = vmatmul.bf16.gmra.mxu0 %v1012
  %v4703 = vpop.f32.mrf.mxu0
  %v4704 = vadd.f32 %v4565, %v4703
  %v4705 = vpop.f32.mrf.mxu0
  %v4706 = vadd.f32 %v4567, %v4705
  %4707 = vmatmul.bf16.gmra.mxu0 %v1018
  %v4708 = vpop.f32.mrf.mxu0
  %v4709 = vadd.f32 %v4570, %v4708
  %v4710 = vpop.f32.mrf.mxu0
  %v4711 = vadd.f32 %v4572, %v4710
  %4712 = vmatmul.bf16.gmra.mxu0 %v1024
  %v4713 = vpop.f32.mrf.mxu0
  %v4714 = vadd.f32 %v4575, %v4713
  %v4715 = vpop.f32.mrf.mxu0
  %v4716 = vadd.f32 %v4577, %v4715
  %4717 = vmatmul.bf16.gmra.mxu0 %v1030
  %v4718 = vpop.f32.mrf.mxu0
  %v4719 = vadd.f32 %v4580, %v4718
  %v4720 = vpop.f32.mrf.mxu0
  %v4721 = vadd.f32 %v4582, %v4720
  %4722 = vmatmul.bf16.gmra.mxu0 %v1036
  %v4723 = vpop.f32.mrf.mxu0
  %v4724 = vadd.f32 %v4585, %v4723
  %v4725 = vpop.f32.mrf.mxu0
  %v4726 = vadd.f32 %v4587, %v4725
  %4727 = vmatmul.bf16.gmra.mxu0 %v1042
  %v4728 = vpop.f32.mrf.mxu0
  %v4729 = vadd.f32 %v4590, %v4728
  %v4730 = vpop.f32.mrf.mxu0
  %v4731 = vadd.f32 %v4592, %v4730
  %4732 = vmatmul.bf16.gmra.mxu0 %v1048
  %v4733 = vpop.f32.mrf.mxu0
  %v4734 = vadd.f32 %v4595, %v4733
  %v4735 = vpop.f32.mrf.mxu0
  %v4736 = vadd.f32 %v4597, %v4735
  %4737 = vmatmul.bf16.gmra.mxu0 %v1054
  %v4738 = vpop.f32.mrf.mxu0
  %v4739 = vadd.f32 %v4600, %v4738
  %v4740 = vpop.f32.mrf.mxu0
  %v4741 = vadd.f32 %v4602, %v4740
  %4742 = vmatmul.bf16.gmra.mxu0 %v1060
  %v4743 = vpop.f32.mrf.mxu0
  %v4744 = vadd.f32 %v4605, %v4743
  %v4745 = vpop.f32.mrf.mxu0
  %v4746 = vadd.f32 %v4607, %v4745
  %4747 = vmatmul.bf16.gmra.mxu0 %v1066
  %v4748 = vpop.f32.mrf.mxu0
  %v4749 = vadd.f32 %v4610, %v4748
  %v4750 = vpop.f32.mrf.mxu0
  %v4751 = vadd.f32 %v4612, %v4750
  %4752 = vmatmul.bf16.gmra.mxu0 %v1072
  %v4753 = vpop.f32.mrf.mxu0
  %v4754 = vadd.f32 %v4615, %v4753
  %v4755 = vpop.f32.mrf.mxu0
  %v4756 = vadd.f32 %v4617, %v4755
  %4757 = vmatmul.bf16.gmra.mxu0 %v1078
  %v4758 = vpop.f32.mrf.mxu0
  %v4759 = vadd.f32 %v4620, %v4758
  %v4760 = vpop.f32.mrf.mxu0
  %v4761 = vadd.f32 %v4622, %v4760
  %4762 = vdwg.mxu0
  %4763 = vmatpush.bf16.msra.mxu0 %v2290
  %4764 = vmatpush.bf16.msra.mxu0 %v2284
  %4765 = vmatpush.bf16.msra.mxu0 %v2278
  %4766 = vmatpush.bf16.msra.mxu0 %v2272
  %4767 = vmatpush.bf16.msra.mxu0 %v2266
  %4768 = vmatpush.bf16.msra.mxu0 %v2260
  %4769 = vmatpush.bf16.msra.mxu0 %v2254
  %4770 = vmatpush.bf16.msra.mxu0 %v2248
  %4771 = vmatmul.bf16.gmra.mxu0 %v929
  %v4772 = vpop.f32.mrf.mxu0
  %v4773 = vadd.f32 %v4634, %v4772
  %v4774 = vpop.f32.mrf.mxu0
  %v4775 = vadd.f32 %v4636, %v4774
  %4776 = vmatmul.bf16.gmra.mxu0 %v935
  %v4777 = vpop.f32.mrf.mxu0
  %v4778 = vadd.f32 %v4639, %v4777
  %v4779 = vpop.f32.mrf.mxu0
  %v4780 = vadd.f32 %v4641, %v4779
  %4781 = vmatmul.bf16.gmra.mxu0 %v941
  %v4782 = vpop.f32.mrf.mxu0
  %v4783 = vadd.f32 %v4644, %v4782
  %v4784 = vpop.f32.mrf.mxu0
  %v4785 = vadd.f32 %v4646, %v4784
  %4786 = vmatmul.bf16.gmra.mxu0 %v947
  %v4787 = vpop.f32.mrf.mxu0
  %v4788 = vadd.f32 %v4649, %v4787
  %v4789 = vpop.f32.mrf.mxu0
  %v4790 = vadd.f32 %v4651, %v4789
  %4791 = vmatmul.bf16.gmra.mxu0 %v953
  %v4792 = vpop.f32.mrf.mxu0
  %v4793 = vadd.f32 %v4654, %v4792
  %v4794 = vpop.f32.mrf.mxu0
  %v4795 = vadd.f32 %v4656, %v4794
  %4796 = vmatmul.bf16.gmra.mxu0 %v959
  %v4797 = vpop.f32.mrf.mxu0
  %v4798 = vadd.f32 %v4659, %v4797
  %v4799 = vpop.f32.mrf.mxu0
  %v4800 = vadd.f32 %v4661, %v4799
  %4801 = vmatmul.bf16.gmra.mxu0 %v965
  %v4802 = vpop.f32.mrf.mxu0
  %v4803 = vadd.f32 %v4664, %v4802
  %v4804 = vpop.f32.mrf.mxu0
  %v4805 = vadd.f32 %v4666, %v4804
  %4806 = vmatmul.bf16.gmra.mxu0 %v971
  %v4807 = vpop.f32.mrf.mxu0
  %v4808 = vadd.f32 %v4669, %v4807
  %v4809 = vpop.f32.mrf.mxu0
  %v4810 = vadd.f32 %v4671, %v4809
  %4811 = vmatmul.bf16.gmra.mxu0 %v977
  %v4812 = vpop.f32.mrf.mxu0
  %v4813 = vadd.f32 %v4674, %v4812
  %v4814 = vpop.f32.mrf.mxu0
  %v4815 = vadd.f32 %v4676, %v4814
  %4816 = vmatmul.bf16.gmra.mxu0 %v983
  %v4817 = vpop.f32.mrf.mxu0
  %v4818 = vadd.f32 %v4679, %v4817
  %v4819 = vpop.f32.mrf.mxu0
  %v4820 = vadd.f32 %v4681, %v4819
  %4821 = vmatmul.bf16.gmra.mxu0 %v989
  %v4822 = vpop.f32.mrf.mxu0
  %v4823 = vadd.f32 %v4684, %v4822
  %v4824 = vpop.f32.mrf.mxu0
  %v4825 = vadd.f32 %v4686, %v4824
  %4826 = vmatmul.bf16.gmra.mxu0 %v995
  %v4827 = vpop.f32.mrf.mxu0
  %v4828 = vadd.f32 %v4689, %v4827
  %v4829 = vpop.f32.mrf.mxu0
  %v4830 = vadd.f32 %v4691, %v4829
  %4831 = vmatmul.bf16.gmra.mxu0 %v1001
  %v4832 = vpop.f32.mrf.mxu0
  %v4833 = vadd.f32 %v4694, %v4832
  %v4834 = vpop.f32.mrf.mxu0
  %v4835 = vadd.f32 %v4696, %v4834
  %4836 = vmatmul.bf16.gmra.mxu0 %v1007
  %v4837 = vpop.f32.mrf.mxu0
  %v4838 = vadd.f32 %v4699, %v4837
  %v4839 = vpop.f32.mrf.mxu0
  %v4840 = vadd.f32 %v4701, %v4839
  %4841 = vmatmul.bf16.gmra.mxu0 %v1013
  %v4842 = vpop.f32.mrf.mxu0
  %v4843 = vadd.f32 %v4704, %v4842
  %v4844 = vpop.f32.mrf.mxu0
  %v4845 = vadd.f32 %v4706, %v4844
  %4846 = vmatmul.bf16.gmra.mxu0 %v1019
  %v4847 = vpop.f32.mrf.mxu0
  %v4848 = vadd.f32 %v4709, %v4847
  %v4849 = vpop.f32.mrf.mxu0
  %v4850 = vadd.f32 %v4711, %v4849
  %4851 = vmatmul.bf16.gmra.mxu0 %v1025
  %v4852 = vpop.f32.mrf.mxu0
  %v4853 = vadd.f32 %v4714, %v4852
  %v4854 = vpop.f32.mrf.mxu0
  %v4855 = vadd.f32 %v4716, %v4854
  %4856 = vmatmul.bf16.gmra.mxu0 %v1031
  %v4857 = vpop.f32.mrf.mxu0
  %v4858 = vadd.f32 %v4719, %v4857
  %v4859 = vpop.f32.mrf.mxu0
  %v4860 = vadd.f32 %v4721, %v4859
  %4861 = vmatmul.bf16.gmra.mxu0 %v1037
  %v4862 = vpop.f32.mrf.mxu0
  %v4863 = vadd.f32 %v4724, %v4862
  %v4864 = vpop.f32.mrf.mxu0
  %v4865 = vadd.f32 %v4726, %v4864
  %4866 = vmatmul.bf16.gmra.mxu0 %v1043
  %v4867 = vpop.f32.mrf.mxu0
  %v4868 = vadd.f32 %v4729, %v4867
  %v4869 = vpop.f32.mrf.mxu0
  %v4870 = vadd.f32 %v4731, %v4869
  %4871 = vmatmul.bf16.gmra.mxu0 %v1049
  %v4872 = vpop.f32.mrf.mxu0
  %v4873 = vadd.f32 %v4734, %v4872
  %v4874 = vpop.f32.mrf.mxu0
  %v4875 = vadd.f32 %v4736, %v4874
  %4876 = vmatmul.bf16.gmra.mxu0 %v1055
  %v4877 = vpop.f32.mrf.mxu0
  %v4878 = vadd.f32 %v4739, %v4877
  %v4879 = vpop.f32.mrf.mxu0
  %v4880 = vadd.f32 %v4741, %v4879
  %4881 = vmatmul.bf16.gmra.mxu0 %v1061
  %v4882 = vpop.f32.mrf.mxu0
  %v4883 = vadd.f32 %v4744, %v4882
  %v4884 = vpop.f32.mrf.mxu0
  %v4885 = vadd.f32 %v4746, %v4884
  %4886 = vmatmul.bf16.gmra.mxu0 %v1067
  %v4887 = vpop.f32.mrf.mxu0
  %v4888 = vadd.f32 %v4749, %v4887
  %v4889 = vpop.f32.mrf.mxu0
  %v4890 = vadd.f32 %v4751, %v4889
  %4891 = vmatmul.bf16.gmra.mxu0 %v1073
  %v4892 = vpop.f32.mrf.mxu0
  %v4893 = vadd.f32 %v4754, %v4892
  %v4894 = vpop.f32.mrf.mxu0
  %v4895 = vadd.f32 %v4756, %v4894
  %4896 = vmatmul.bf16.gmra.mxu0 %v1079
  %v4897 = vpop.f32.mrf.mxu0
  %v4898 = vadd.f32 %v4759, %v4897
  %v4899 = vpop.f32.mrf.mxu0
  %v4900 = vadd.f32 %v4761, %v4899
  %4901 = vdwg.mxu0
  %4902 = vmatpush.bf16.msra.mxu0 %v2338
  %4903 = vmatpush.bf16.msra.mxu0 %v2332
  %4904 = vmatpush.bf16.msra.mxu0 %v2326
  %4905 = vmatpush.bf16.msra.mxu0 %v2320
  %4906 = vmatpush.bf16.msra.mxu0 %v2314
  %4907 = vmatpush.bf16.msra.mxu0 %v2308
  %4908 = vmatpush.bf16.msra.mxu0 %v2302
  %4909 = vmatpush.bf16.msra.mxu0 %v2296
  %4910 = vmatmul.bf16.gmra.mxu0 %v930
  %v4911 = vpop.f32.mrf.mxu0
  %v4912 = vadd.f32 %v4773, %v4911
  %v4913 = vpop.f32.mrf.mxu0
  %v4914 = vadd.f32 %v4775, %v4913
  %4915 = vmatmul.bf16.gmra.mxu0 %v936
  %v4916 = vpop.f32.mrf.mxu0
  %v4917 = vadd.f32 %v4778, %v4916
  %v4918 = vpop.f32.mrf.mxu0
  %v4919 = vadd.f32 %v4780, %v4918
  %4920 = vmatmul.bf16.gmra.mxu0 %v942
  %v4921 = vpop.f32.mrf.mxu0
  %v4922 = vadd.f32 %v4783, %v4921
  %v4923 = vpop.f32.mrf.mxu0
  %v4924 = vadd.f32 %v4785, %v4923
  %4925 = vmatmul.bf16.gmra.mxu0 %v948
  %v4926 = vpop.f32.mrf.mxu0
  %v4927 = vadd.f32 %v4788, %v4926
  %v4928 = vpop.f32.mrf.mxu0
  %v4929 = vadd.f32 %v4790, %v4928
  %4930 = vmatmul.bf16.gmra.mxu0 %v954
  %v4931 = vpop.f32.mrf.mxu0
  %v4932 = vadd.f32 %v4793, %v4931
  %v4933 = vpop.f32.mrf.mxu0
  %v4934 = vadd.f32 %v4795, %v4933
  %4935 = vmatmul.bf16.gmra.mxu0 %v960
  %v4936 = vpop.f32.mrf.mxu0
  %v4937 = vadd.f32 %v4798, %v4936
  %v4938 = vpop.f32.mrf.mxu0
  %v4939 = vadd.f32 %v4800, %v4938
  %4940 = vmatmul.bf16.gmra.mxu0 %v966
  %v4941 = vpop.f32.mrf.mxu0
  %v4942 = vadd.f32 %v4803, %v4941
  %v4943 = vpop.f32.mrf.mxu0
  %v4944 = vadd.f32 %v4805, %v4943
  %4945 = vmatmul.bf16.gmra.mxu0 %v972
  %v4946 = vpop.f32.mrf.mxu0
  %v4947 = vadd.f32 %v4808, %v4946
  %v4948 = vpop.f32.mrf.mxu0
  %v4949 = vadd.f32 %v4810, %v4948
  %4950 = vmatmul.bf16.gmra.mxu0 %v978
  %v4951 = vpop.f32.mrf.mxu0
  %v4952 = vadd.f32 %v4813, %v4951
  %v4953 = vpop.f32.mrf.mxu0
  %v4954 = vadd.f32 %v4815, %v4953
  %4955 = vmatmul.bf16.gmra.mxu0 %v984
  %v4956 = vpop.f32.mrf.mxu0
  %v4957 = vadd.f32 %v4818, %v4956
  %v4958 = vpop.f32.mrf.mxu0
  %v4959 = vadd.f32 %v4820, %v4958
  %4960 = vmatmul.bf16.gmra.mxu0 %v990
  %v4961 = vpop.f32.mrf.mxu0
  %v4962 = vadd.f32 %v4823, %v4961
  %v4963 = vpop.f32.mrf.mxu0
  %v4964 = vadd.f32 %v4825, %v4963
  %4965 = vmatmul.bf16.gmra.mxu0 %v996
  %v4966 = vpop.f32.mrf.mxu0
  %v4967 = vadd.f32 %v4828, %v4966
  %v4968 = vpop.f32.mrf.mxu0
  %v4969 = vadd.f32 %v4830, %v4968
  %4970 = vmatmul.bf16.gmra.mxu0 %v1002
  %v4971 = vpop.f32.mrf.mxu0
  %v4972 = vadd.f32 %v4833, %v4971
  %v4973 = vpop.f32.mrf.mxu0
  %v4974 = vadd.f32 %v4835, %v4973
  %4975 = vmatmul.bf16.gmra.mxu0 %v1008
  %v4976 = vpop.f32.mrf.mxu0
  %v4977 = vadd.f32 %v4838, %v4976
  %v4978 = vpop.f32.mrf.mxu0
  %v4979 = vadd.f32 %v4840, %v4978
  %4980 = vmatmul.bf16.gmra.mxu0 %v1014
  %v4981 = vpop.f32.mrf.mxu0
  %v4982 = vadd.f32 %v4843, %v4981
  %v4983 = vpop.f32.mrf.mxu0
  %v4984 = vadd.f32 %v4845, %v4983
  %4985 = vmatmul.bf16.gmra.mxu0 %v1020
  %v4986 = vpop.f32.mrf.mxu0
  %v4987 = vadd.f32 %v4848, %v4986
  %v4988 = vpop.f32.mrf.mxu0
  %v4989 = vadd.f32 %v4850, %v4988
  %4990 = vmatmul.bf16.gmra.mxu0 %v1026
  %v4991 = vpop.f32.mrf.mxu0
  %v4992 = vadd.f32 %v4853, %v4991
  %v4993 = vpop.f32.mrf.mxu0
  %v4994 = vadd.f32 %v4855, %v4993
  %4995 = vmatmul.bf16.gmra.mxu0 %v1032
  %v4996 = vpop.f32.mrf.mxu0
  %v4997 = vadd.f32 %v4858, %v4996
  %v4998 = vpop.f32.mrf.mxu0
  %v4999 = vadd.f32 %v4860, %v4998
  %5000 = vmatmul.bf16.gmra.mxu0 %v1038
  %v5001 = vpop.f32.mrf.mxu0
  %v5002 = vadd.f32 %v4863, %v5001
  %v5003 = vpop.f32.mrf.mxu0
  %v5004 = vadd.f32 %v4865, %v5003
  %5005 = vmatmul.bf16.gmra.mxu0 %v1044
  %v5006 = vpop.f32.mrf.mxu0
  %v5007 = vadd.f32 %v4868, %v5006
  %v5008 = vpop.f32.mrf.mxu0
  %v5009 = vadd.f32 %v4870, %v5008
  %5010 = vmatmul.bf16.gmra.mxu0 %v1050
  %v5011 = vpop.f32.mrf.mxu0
  %v5012 = vadd.f32 %v4873, %v5011
  %v5013 = vpop.f32.mrf.mxu0
  %v5014 = vadd.f32 %v4875, %v5013
  %5015 = vmatmul.bf16.gmra.mxu0 %v1056
  %v5016 = vpop.f32.mrf.mxu0
  %v5017 = vadd.f32 %v4878, %v5016
  %v5018 = vpop.f32.mrf.mxu0
  %v5019 = vadd.f32 %v4880, %v5018
  %5020 = vmatmul.bf16.gmra.mxu0 %v1062
  %v5021 = vpop.f32.mrf.mxu0
  %v5022 = vadd.f32 %v4883, %v5021
  %v5023 = vpop.f32.mrf.mxu0
  %v5024 = vadd.f32 %v4885, %v5023
  %5025 = vmatmul.bf16.gmra.mxu0 %v1068
  %v5026 = vpop.f32.mrf.mxu0
  %v5027 = vadd.f32 %v4888, %v5026
  %v5028 = vpop.f32.mrf.mxu0
  %v5029 = vadd.f32 %v4890, %v5028
  %5030 = vmatmul.bf16.gmra.mxu0 %v1074
  %v5031 = vpop.f32.mrf.mxu0
  %v5032 = vadd.f32 %v4893, %v5031
  %v5033 = vpop.f32.mrf.mxu0
  %v5034 = vadd.f32 %v4895, %v5033
  %5035 = vmatmul.bf16.gmra.mxu0 %v1080
  %v5036 = vpop.f32.mrf.mxu0
  %v5037 = vadd.f32 %v4898, %v5036
  %v5038 = vpop.f32.mrf.mxu0
  %v5039 = vadd.f32 %v4900, %v5038
  %5040 = vdwg.mxu0
  %5041 = vmatpush.bf16.msra.mxu0 %v2386
  %5042 = vmatpush.bf16.msra.mxu0 %v2380
  %5043 = vmatpush.bf16.msra.mxu0 %v2374
  %5044 = vmatpush.bf16.msra.mxu0 %v2368
  %5045 = vmatpush.bf16.msra.mxu0 %v2362
  %5046 = vmatpush.bf16.msra.mxu0 %v2356
  %5047 = vmatpush.bf16.msra.mxu0 %v2350
  %5048 = vmatpush.bf16.msra.mxu0 %v2344
  %5049 = vmatmul.bf16.gmra.mxu0 %v931
  %v5050 = vpop.f32.mrf.mxu0
  %v5051 = vadd.f32 %v4912, %v5050
  %v5052 = vpop.f32.mrf.mxu0
  %v5053 = vadd.f32 %v4914, %v5052
  %5054 = vmatmul.bf16.gmra.mxu0 %v937
  %v5055 = vpop.f32.mrf.mxu0
  %v5056 = vadd.f32 %v4917, %v5055
  %v5057 = vpop.f32.mrf.mxu0
  %v5058 = vadd.f32 %v4919, %v5057
  %5059 = vmatmul.bf16.gmra.mxu0 %v943
  %v5060 = vpop.f32.mrf.mxu0
  %v5061 = vadd.f32 %v4922, %v5060
  %v5062 = vpop.f32.mrf.mxu0
  %v5063 = vadd.f32 %v4924, %v5062
  %5064 = vmatmul.bf16.gmra.mxu0 %v949
  %v5065 = vpop.f32.mrf.mxu0
  %v5066 = vadd.f32 %v4927, %v5065
  %v5067 = vpop.f32.mrf.mxu0
  %v5068 = vadd.f32 %v4929, %v5067
  %5069 = vmatmul.bf16.gmra.mxu0 %v955
  %v5070 = vpop.f32.mrf.mxu0
  %v5071 = vadd.f32 %v4932, %v5070
  %v5072 = vpop.f32.mrf.mxu0
  %v5073 = vadd.f32 %v4934, %v5072
  %5074 = vmatmul.bf16.gmra.mxu0 %v961
  %v5075 = vpop.f32.mrf.mxu0
  %v5076 = vadd.f32 %v4937, %v5075
  %v5077 = vpop.f32.mrf.mxu0
  %v5078 = vadd.f32 %v4939, %v5077
  %5079 = vmatmul.bf16.gmra.mxu0 %v967
  %v5080 = vpop.f32.mrf.mxu0
  %v5081 = vadd.f32 %v4942, %v5080
  %v5082 = vpop.f32.mrf.mxu0
  %v5083 = vadd.f32 %v4944, %v5082
  %5084 = vmatmul.bf16.gmra.mxu0 %v973
  %v5085 = vpop.f32.mrf.mxu0
  %v5086 = vadd.f32 %v4947, %v5085
  %v5087 = vpop.f32.mrf.mxu0
  %v5088 = vadd.f32 %v4949, %v5087
  %5089 = vmatmul.bf16.gmra.mxu0 %v979
  %v5090 = vpop.f32.mrf.mxu0
  %v5091 = vadd.f32 %v4952, %v5090
  %v5092 = vpop.f32.mrf.mxu0
  %v5093 = vadd.f32 %v4954, %v5092
  %5094 = vmatmul.bf16.gmra.mxu0 %v985
  %v5095 = vpop.f32.mrf.mxu0
  %v5096 = vadd.f32 %v4957, %v5095
  %v5097 = vpop.f32.mrf.mxu0
  %v5098 = vadd.f32 %v4959, %v5097
  %5099 = vmatmul.bf16.gmra.mxu0 %v991
  %v5100 = vpop.f32.mrf.mxu0
  %v5101 = vadd.f32 %v4962, %v5100
  %v5102 = vpop.f32.mrf.mxu0
  %v5103 = vadd.f32 %v4964, %v5102
  %5104 = vmatmul.bf16.gmra.mxu0 %v997
  %v5105 = vpop.f32.mrf.mxu0
  %v5106 = vadd.f32 %v4967, %v5105
  %v5107 = vpop.f32.mrf.mxu0
  %v5108 = vadd.f32 %v4969, %v5107
  %5109 = vmatmul.bf16.gmra.mxu0 %v1003
  %v5110 = vpop.f32.mrf.mxu0
  %v5111 = vadd.f32 %v4972, %v5110
  %v5112 = vpop.f32.mrf.mxu0
  %v5113 = vadd.f32 %v4974, %v5112
  %5114 = vmatmul.bf16.gmra.mxu0 %v1009
  %v5115 = vpop.f32.mrf.mxu0
  %v5116 = vadd.f32 %v4977, %v5115
  %v5117 = vpop.f32.mrf.mxu0
  %v5118 = vadd.f32 %v4979, %v5117
  %5119 = vmatmul.bf16.gmra.mxu0 %v1015
  %v5120 = vpop.f32.mrf.mxu0
  %v5121 = vadd.f32 %v4982, %v5120
  %v5122 = vpop.f32.mrf.mxu0
  %v5123 = vadd.f32 %v4984, %v5122
  %5124 = vmatmul.bf16.gmra.mxu0 %v1021
  %v5125 = vpop.f32.mrf.mxu0
  %v5126 = vadd.f32 %v4987, %v5125
  %v5127 = vpop.f32.mrf.mxu0
  %v5128 = vadd.f32 %v4989, %v5127
  %5129 = vmatmul.bf16.gmra.mxu0 %v1027
  %v5130 = vpop.f32.mrf.mxu0
  %v5131 = vadd.f32 %v4992, %v5130
  %v5132 = vpop.f32.mrf.mxu0
  %v5133 = vadd.f32 %v4994, %v5132
  %5134 = vmatmul.bf16.gmra.mxu0 %v1033
  %v5135 = vpop.f32.mrf.mxu0
  %v5136 = vadd.f32 %v4997, %v5135
  %v5137 = vpop.f32.mrf.mxu0
  %v5138 = vadd.f32 %v4999, %v5137
  %5139 = vmatmul.bf16.gmra.mxu0 %v1039
  %v5140 = vpop.f32.mrf.mxu0
  %v5141 = vadd.f32 %v5002, %v5140
  %v5142 = vpop.f32.mrf.mxu0
  %v5143 = vadd.f32 %v5004, %v5142
  %5144 = vmatmul.bf16.gmra.mxu0 %v1045
  %v5145 = vpop.f32.mrf.mxu0
  %v5146 = vadd.f32 %v5007, %v5145
  %v5147 = vpop.f32.mrf.mxu0
  %v5148 = vadd.f32 %v5009, %v5147
  %5149 = vmatmul.bf16.gmra.mxu0 %v1051
  %v5150 = vpop.f32.mrf.mxu0
  %v5151 = vadd.f32 %v5012, %v5150
  %v5152 = vpop.f32.mrf.mxu0
  %v5153 = vadd.f32 %v5014, %v5152
  %5154 = vmatmul.bf16.gmra.mxu0 %v1057
  %v5155 = vpop.f32.mrf.mxu0
  %v5156 = vadd.f32 %v5017, %v5155
  %v5157 = vpop.f32.mrf.mxu0
  %v5158 = vadd.f32 %v5019, %v5157
  %5159 = vmatmul.bf16.gmra.mxu0 %v1063
  %v5160 = vpop.f32.mrf.mxu0
  %v5161 = vadd.f32 %v5022, %v5160
  %v5162 = vpop.f32.mrf.mxu0
  %v5163 = vadd.f32 %v5024, %v5162
  %5164 = vmatmul.bf16.gmra.mxu0 %v1069
  %v5165 = vpop.f32.mrf.mxu0
  %v5166 = vadd.f32 %v5027, %v5165
  %v5167 = vpop.f32.mrf.mxu0
  %v5168 = vadd.f32 %v5029, %v5167
  %5169 = vmatmul.bf16.gmra.mxu0 %v1075
  %v5170 = vpop.f32.mrf.mxu0
  %v5171 = vadd.f32 %v5032, %v5170
  %v5172 = vpop.f32.mrf.mxu0
  %v5173 = vadd.f32 %v5034, %v5172
  %5174 = vmatmul.bf16.gmra.mxu0 %v1081
  %v5175 = vpop.f32.mrf.mxu0
  %v5176 = vadd.f32 %v5037, %v5175
  %v5177 = vpop.f32.mrf.mxu0
  %v5178 = vadd.f32 %v5039, %v5177
  %5179 = vdwg.mxu0
  %5180 = vmatpush.bf16.msra.mxu0 %v2147
  %5181 = vmatpush.bf16.msra.mxu0 %v2141
  %5182 = vmatpush.bf16.msra.mxu0 %v2135
  %5183 = vmatpush.bf16.msra.mxu0 %v2129
  %5184 = vmatpush.bf16.msra.mxu0 %v2123
  %5185 = vmatpush.bf16.msra.mxu0 %v2117
  %5186 = vmatpush.bf16.msra.mxu0 %v2111
  %5187 = vmatpush.bf16.msra.mxu0 %v2105
  %5188 = vmatmul.bf16.gmra.mxu0 %v926
  %v5189 = vpop.f32.mrf.mxu0
  %v5190 = vadd.f32 0.0, %v5189
  %v5191 = vpop.f32.mrf.mxu0
  %v5192 = vadd.f32 0.0, %v5191
  %5193 = vmatmul.bf16.gmra.mxu0 %v932
  %v5194 = vpop.f32.mrf.mxu0
  %v5195 = vadd.f32 0.0, %v5194
  %v5196 = vpop.f32.mrf.mxu0
  %v5197 = vadd.f32 0.0, %v5196
  %5198 = vmatmul.bf16.gmra.mxu0 %v938
  %v5199 = vpop.f32.mrf.mxu0
  %v5200 = vadd.f32 0.0, %v5199
  %v5201 = vpop.f32.mrf.mxu0
  %v5202 = vadd.f32 0.0, %v5201
  %5203 = vmatmul.bf16.gmra.mxu0 %v944
  %v5204 = vpop.f32.mrf.mxu0
  %v5205 = vadd.f32 0.0, %v5204
  %v5206 = vpop.f32.mrf.mxu0
  %v5207 = vadd.f32 0.0, %v5206
  %5208 = vmatmul.bf16.gmra.mxu0 %v950
  %v5209 = vpop.f32.mrf.mxu0
  %v5210 = vadd.f32 0.0, %v5209
  %v5211 = vpop.f32.mrf.mxu0
  %v5212 = vadd.f32 0.0, %v5211
  %5213 = vmatmul.bf16.gmra.mxu0 %v956
  %v5214 = vpop.f32.mrf.mxu0
  %v5215 = vadd.f32 0.0, %v5214
  %v5216 = vpop.f32.mrf.mxu0
  %v5217 = vadd.f32 0.0, %v5216
  %5218 = vmatmul.bf16.gmra.mxu0 %v962
  %v5219 = vpop.f32.mrf.mxu0
  %v5220 = vadd.f32 0.0, %v5219
  %v5221 = vpop.f32.mrf.mxu0
  %v5222 = vadd.f32 0.0, %v5221
  %5223 = vmatmul.bf16.gmra.mxu0 %v968
  %v5224 = vpop.f32.mrf.mxu0
  %v5225 = vadd.f32 0.0, %v5224
  %v5226 = vpop.f32.mrf.mxu0
  %v5227 = vadd.f32 0.0, %v5226
  %5228 = vmatmul.bf16.gmra.mxu0 %v974
  %v5229 = vpop.f32.mrf.mxu0
  %v5230 = vadd.f32 0.0, %v5229
  %v5231 = vpop.f32.mrf.mxu0
  %v5232 = vadd.f32 0.0, %v5231
  %5233 = vmatmul.bf16.gmra.mxu0 %v980
  %v5234 = vpop.f32.mrf.mxu0
  %v5235 = vadd.f32 0.0, %v5234
  %v5236 = vpop.f32.mrf.mxu0
  %v5237 = vadd.f32 0.0, %v5236
  %5238 = vmatmul.bf16.gmra.mxu0 %v986
  %v5239 = vpop.f32.mrf.mxu0
  %v5240 = vadd.f32 0.0, %v5239
  %v5241 = vpop.f32.mrf.mxu0
  %v5242 = vadd.f32 0.0, %v5241
  %5243 = vmatmul.bf16.gmra.mxu0 %v992
  %v5244 = vpop.f32.mrf.mxu0
  %v5245 = vadd.f32 0.0, %v5244
  %v5246 = vpop.f32.mrf.mxu0
  %v5247 = vadd.f32 0.0, %v5246
  %5248 = vmatmul.bf16.gmra.mxu0 %v998
  %v5249 = vpop.f32.mrf.mxu0
  %v5250 = vadd.f32 0.0, %v5249
  %v5251 = vpop.f32.mrf.mxu0
  %v5252 = vadd.f32 0.0, %v5251
  %5253 = vmatmul.bf16.gmra.mxu0 %v1004
  %v5254 = vpop.f32.mrf.mxu0
  %v5255 = vadd.f32 0.0, %v5254
  %v5256 = vpop.f32.mrf.mxu0
  %v5257 = vadd.f32 0.0, %v5256
  %5258 = vmatmul.bf16.gmra.mxu0 %v1010
  %v5259 = vpop.f32.mrf.mxu0
  %v5260 = vadd.f32 0.0, %v5259
  %v5261 = vpop.f32.mrf.mxu0
  %v5262 = vadd.f32 0.0, %v5261
  %5263 = vmatmul.bf16.gmra.mxu0 %v1016
  %v5264 = vpop.f32.mrf.mxu0
  %v5265 = vadd.f32 0.0, %v5264
  %v5266 = vpop.f32.mrf.mxu0
  %v5267 = vadd.f32 0.0, %v5266
  %5268 = vmatmul.bf16.gmra.mxu0 %v1022
  %v5269 = vpop.f32.mrf.mxu0
  %v5270 = vadd.f32 0.0, %v5269
  %v5271 = vpop.f32.mrf.mxu0
  %v5272 = vadd.f32 0.0, %v5271
  %5273 = vmatmul.bf16.gmra.mxu0 %v1028
  %v5274 = vpop.f32.mrf.mxu0
  %v5275 = vadd.f32 0.0, %v5274
  %v5276 = vpop.f32.mrf.mxu0
  %v5277 = vadd.f32 0.0, %v5276
  %5278 = vmatmul.bf16.gmra.mxu0 %v1034
  %v5279 = vpop.f32.mrf.mxu0
  %v5280 = vadd.f32 0.0, %v5279
  %v5281 = vpop.f32.mrf.mxu0
  %v5282 = vadd.f32 0.0, %v5281
  %5283 = vmatmul.bf16.gmra.mxu0 %v1040
  %v5284 = vpop.f32.mrf.mxu0
  %v5285 = vadd.f32 0.0, %v5284
  %v5286 = vpop.f32.mrf.mxu0
  %v5287 = vadd.f32 0.0, %v5286
  %5288 = vmatmul.bf16.gmra.mxu0 %v1046
  %v5289 = vpop.f32.mrf.mxu0
  %v5290 = vadd.f32 0.0, %v5289
  %v5291 = vpop.f32.mrf.mxu0
  %v5292 = vadd.f32 0.0, %v5291
  %5293 = vmatmul.bf16.gmra.mxu0 %v1052
  %v5294 = vpop.f32.mrf.mxu0
  %v5295 = vadd.f32 0.0, %v5294
  %v5296 = vpop.f32.mrf.mxu0
  %v5297 = vadd.f32 0.0, %v5296
  %5298 = vmatmul.bf16.gmra.mxu0 %v1058
  %v5299 = vpop.f32.mrf.mxu0
  %v5300 = vadd.f32 0.0, %v5299
  %v5301 = vpop.f32.mrf.mxu0
  %v5302 = vadd.f32 0.0, %v5301
  %5303 = vmatmul.bf16.gmra.mxu0 %v1064
  %v5304 = vpop.f32.mrf.mxu0
  %v5305 = vadd.f32 0.0, %v5304
  %v5306 = vpop.f32.mrf.mxu0
  %v5307 = vadd.f32 0.0, %v5306
  %5308 = vmatmul.bf16.gmra.mxu0 %v1070
  %v5309 = vpop.f32.mrf.mxu0
  %v5310 = vadd.f32 0.0, %v5309
  %v5311 = vpop.f32.mrf.mxu0
  %v5312 = vadd.f32 0.0, %v5311
  %5313 = vmatmul.bf16.gmra.mxu0 %v1076
  %v5314 = vpop.f32.mrf.mxu0
  %v5315 = vadd.f32 0.0, %v5314
  %v5316 = vpop.f32.mrf.mxu0
  %v5317 = vadd.f32 0.0, %v5316
  %5318 = vdwg.mxu0
  %5319 = vmatpush.bf16.msra.mxu0 %v2195
  %5320 = vmatpush.bf16.msra.mxu0 %v2189
  %5321 = vmatpush.bf16.msra.mxu0 %v2183
  %5322 = vmatpush.bf16.msra.mxu0 %v2177
  %5323 = vmatpush.bf16.msra.mxu0 %v2171
  %5324 = vmatpush.bf16.msra.mxu0 %v2165
  %5325 = vmatpush.bf16.msra.mxu0 %v2159
  %5326 = vmatpush.bf16.msra.mxu0 %v2153
  %5327 = vmatmul.bf16.gmra.mxu0 %v927
  %v5328 = vpop.f32.mrf.mxu0
  %v5329 = vadd.f32 %v5190, %v5328
  %v5330 = vpop.f32.mrf.mxu0
  %v5331 = vadd.f32 %v5192, %v5330
  %5332 = vmatmul.bf16.gmra.mxu0 %v933
  %v5333 = vpop.f32.mrf.mxu0
  %v5334 = vadd.f32 %v5195, %v5333
  %v5335 = vpop.f32.mrf.mxu0
  %v5336 = vadd.f32 %v5197, %v5335
  %5337 = vmatmul.bf16.gmra.mxu0 %v939
  %v5338 = vpop.f32.mrf.mxu0
  %v5339 = vadd.f32 %v5200, %v5338
  %v5340 = vpop.f32.mrf.mxu0
  %v5341 = vadd.f32 %v5202, %v5340
  %5342 = vmatmul.bf16.gmra.mxu0 %v945
  %v5343 = vpop.f32.mrf.mxu0
  %v5344 = vadd.f32 %v5205, %v5343
  %v5345 = vpop.f32.mrf.mxu0
  %v5346 = vadd.f32 %v5207, %v5345
  %5347 = vmatmul.bf16.gmra.mxu0 %v951
  %v5348 = vpop.f32.mrf.mxu0
  %v5349 = vadd.f32 %v5210, %v5348
  %v5350 = vpop.f32.mrf.mxu0
  %v5351 = vadd.f32 %v5212, %v5350
  %5352 = vmatmul.bf16.gmra.mxu0 %v957
  %v5353 = vpop.f32.mrf.mxu0
  %v5354 = vadd.f32 %v5215, %v5353
  %v5355 = vpop.f32.mrf.mxu0
  %v5356 = vadd.f32 %v5217, %v5355
  %5357 = vmatmul.bf16.gmra.mxu0 %v963
  %v5358 = vpop.f32.mrf.mxu0
  %v5359 = vadd.f32 %v5220, %v5358
  %v5360 = vpop.f32.mrf.mxu0
  %v5361 = vadd.f32 %v5222, %v5360
  %5362 = vmatmul.bf16.gmra.mxu0 %v969
  %v5363 = vpop.f32.mrf.mxu0
  %v5364 = vadd.f32 %v5225, %v5363
  %v5365 = vpop.f32.mrf.mxu0
  %v5366 = vadd.f32 %v5227, %v5365
  %5367 = vmatmul.bf16.gmra.mxu0 %v975
  %v5368 = vpop.f32.mrf.mxu0
  %v5369 = vadd.f32 %v5230, %v5368
  %v5370 = vpop.f32.mrf.mxu0
  %v5371 = vadd.f32 %v5232, %v5370
  %5372 = vmatmul.bf16.gmra.mxu0 %v981
  %v5373 = vpop.f32.mrf.mxu0
  %v5374 = vadd.f32 %v5235, %v5373
  %v5375 = vpop.f32.mrf.mxu0
  %v5376 = vadd.f32 %v5237, %v5375
  %5377 = vmatmul.bf16.gmra.mxu0 %v987
  %v5378 = vpop.f32.mrf.mxu0
  %v5379 = vadd.f32 %v5240, %v5378
  %v5380 = vpop.f32.mrf.mxu0
  %v5381 = vadd.f32 %v5242, %v5380
  %5382 = vmatmul.bf16.gmra.mxu0 %v993
  %v5383 = vpop.f32.mrf.mxu0
  %v5384 = vadd.f32 %v5245, %v5383
  %v5385 = vpop.f32.mrf.mxu0
  %v5386 = vadd.f32 %v5247, %v5385
  %5387 = vmatmul.bf16.gmra.mxu0 %v999
  %v5388 = vpop.f32.mrf.mxu0
  %v5389 = vadd.f32 %v5250, %v5388
  %v5390 = vpop.f32.mrf.mxu0
  %v5391 = vadd.f32 %v5252, %v5390
  %5392 = vmatmul.bf16.gmra.mxu0 %v1005
  %v5393 = vpop.f32.mrf.mxu0
  %v5394 = vadd.f32 %v5255, %v5393
  %v5395 = vpop.f32.mrf.mxu0
  %v5396 = vadd.f32 %v5257, %v5395
  %5397 = vmatmul.bf16.gmra.mxu0 %v1011
  %v5398 = vpop.f32.mrf.mxu0
  %v5399 = vadd.f32 %v5260, %v5398
  %v5400 = vpop.f32.mrf.mxu0
  %v5401 = vadd.f32 %v5262, %v5400
  %5402 = vmatmul.bf16.gmra.mxu0 %v1017
  %v5403 = vpop.f32.mrf.mxu0
  %v5404 = vadd.f32 %v5265, %v5403
  %v5405 = vpop.f32.mrf.mxu0
  %v5406 = vadd.f32 %v5267, %v5405
  %5407 = vmatmul.bf16.gmra.mxu0 %v1023
  %v5408 = vpop.f32.mrf.mxu0
  %v5409 = vadd.f32 %v5270, %v5408
  %v5410 = vpop.f32.mrf.mxu0
  %v5411 = vadd.f32 %v5272, %v5410
  %5412 = vmatmul.bf16.gmra.mxu0 %v1029
  %v5413 = vpop.f32.mrf.mxu0
  %v5414 = vadd.f32 %v5275, %v5413
  %v5415 = vpop.f32.mrf.mxu0
  %v5416 = vadd.f32 %v5277, %v5415
  %5417 = vmatmul.bf16.gmra.mxu0 %v1035
  %v5418 = vpop.f32.mrf.mxu0
  %v5419 = vadd.f32 %v5280, %v5418
  %v5420 = vpop.f32.mrf.mxu0
  %v5421 = vadd.f32 %v5282, %v5420
  %5422 = vmatmul.bf16.gmra.mxu0 %v1041
  %v5423 = vpop.f32.mrf.mxu0
  %v5424 = vadd.f32 %v5285, %v5423
  %v5425 = vpop.f32.mrf.mxu0
  %v5426 = vadd.f32 %v5287, %v5425
  %5427 = vmatmul.bf16.gmra.mxu0 %v1047
  %v5428 = vpop.f32.mrf.mxu0
  %v5429 = vadd.f32 %v5290, %v5428
  %v5430 = vpop.f32.mrf.mxu0
  %v5431 = vadd.f32 %v5292, %v5430
  %5432 = vmatmul.bf16.gmra.mxu0 %v1053
  %v5433 = vpop.f32.mrf.mxu0
  %v5434 = vadd.f32 %v5295, %v5433
  %v5435 = vpop.f32.mrf.mxu0
  %v5436 = vadd.f32 %v5297, %v5435
  %5437 = vmatmul.bf16.gmra.mxu0 %v1059
  %v5438 = vpop.f32.mrf.mxu0
  %v5439 = vadd.f32 %v5300, %v5438
  %v5440 = vpop.f32.mrf.mxu0
  %v5441 = vadd.f32 %v5302, %v5440
  %5442 = vmatmul.bf16.gmra.mxu0 %v1065
  %v5443 = vpop.f32.mrf.mxu0
  %v5444 = vadd.f32 %v5305, %v5443
  %v5445 = vpop.f32.mrf.mxu0
  %v5446 = vadd.f32 %v5307, %v5445
  %5447 = vmatmul.bf16.gmra.mxu0 %v1071
  %v5448 = vpop.f32.mrf.mxu0
  %v5449 = vadd.f32 %v5310, %v5448
  %v5450 = vpop.f32.mrf.mxu0
  %v5451 = vadd.f32 %v5312, %v5450
  %5452 = vmatmul.bf16.gmra.mxu0 %v1077
  %v5453 = vpop.f32.mrf.mxu0
  %v5454 = vadd.f32 %v5315, %v5453
  %v5455 = vpop.f32.mrf.mxu0
  %v5456 = vadd.f32 %v5317, %v5455
  %5457 = vdwg.mxu0
  %5458 = vmatpush.bf16.msra.mxu0 %v2243
  %5459 = vmatpush.bf16.msra.mxu0 %v2237
  %5460 = vmatpush.bf16.msra.mxu0 %v2231
  %5461 = vmatpush.bf16.msra.mxu0 %v2225
  %5462 = vmatpush.bf16.msra.mxu0 %v2219
  %5463 = vmatpush.bf16.msra.mxu0 %v2213
  %5464 = vmatpush.bf16.msra.mxu0 %v2207
  %5465 = vmatpush.bf16.msra.mxu0 %v2201
  %5466 = vmatmul.bf16.gmra.mxu0 %v928
  %v5467 = vpop.f32.mrf.mxu0
  %v5468 = vadd.f32 %v5329, %v5467
  %v5469 = vpop.f32.mrf.mxu0
  %v5470 = vadd.f32 %v5331, %v5469
  %5471 = vmatmul.bf16.gmra.mxu0 %v934
  %v5472 = vpop.f32.mrf.mxu0
  %v5473 = vadd.f32 %v5334, %v5472
  %v5474 = vpop.f32.mrf.mxu0
  %v5475 = vadd.f32 %v5336, %v5474
  %5476 = vmatmul.bf16.gmra.mxu0 %v940
  %v5477 = vpop.f32.mrf.mxu0
  %v5478 = vadd.f32 %v5339, %v5477
  %v5479 = vpop.f32.mrf.mxu0
  %v5480 = vadd.f32 %v5341, %v5479
  %5481 = vmatmul.bf16.gmra.mxu0 %v946
  %v5482 = vpop.f32.mrf.mxu0
  %v5483 = vadd.f32 %v5344, %v5482
  %v5484 = vpop.f32.mrf.mxu0
  %v5485 = vadd.f32 %v5346, %v5484
  %5486 = vmatmul.bf16.gmra.mxu0 %v952
  %v5487 = vpop.f32.mrf.mxu0
  %v5488 = vadd.f32 %v5349, %v5487
  %v5489 = vpop.f32.mrf.mxu0
  %v5490 = vadd.f32 %v5351, %v5489
  %5491 = vmatmul.bf16.gmra.mxu0 %v958
  %v5492 = vpop.f32.mrf.mxu0
  %v5493 = vadd.f32 %v5354, %v5492
  %v5494 = vpop.f32.mrf.mxu0
  %v5495 = vadd.f32 %v5356, %v5494
  %5496 = vmatmul.bf16.gmra.mxu0 %v964
  %v5497 = vpop.f32.mrf.mxu0
  %v5498 = vadd.f32 %v5359, %v5497
  %v5499 = vpop.f32.mrf.mxu0
  %v5500 = vadd.f32 %v5361, %v5499
  %5501 = vmatmul.bf16.gmra.mxu0 %v970
  %v5502 = vpop.f32.mrf.mxu0
  %v5503 = vadd.f32 %v5364, %v5502
  %v5504 = vpop.f32.mrf.mxu0
  %v5505 = vadd.f32 %v5366, %v5504
  %5506 = vmatmul.bf16.gmra.mxu0 %v976
  %v5507 = vpop.f32.mrf.mxu0
  %v5508 = vadd.f32 %v5369, %v5507
  %v5509 = vpop.f32.mrf.mxu0
  %v5510 = vadd.f32 %v5371, %v5509
  %5511 = vmatmul.bf16.gmra.mxu0 %v982
  %v5512 = vpop.f32.mrf.mxu0
  %v5513 = vadd.f32 %v5374, %v5512
  %v5514 = vpop.f32.mrf.mxu0
  %v5515 = vadd.f32 %v5376, %v5514
  %5516 = vmatmul.bf16.gmra.mxu0 %v988
  %v5517 = vpop.f32.mrf.mxu0
  %v5518 = vadd.f32 %v5379, %v5517
  %v5519 = vpop.f32.mrf.mxu0
  %v5520 = vadd.f32 %v5381, %v5519
  %5521 = vmatmul.bf16.gmra.mxu0 %v994
  %v5522 = vpop.f32.mrf.mxu0
  %v5523 = vadd.f32 %v5384, %v5522
  %v5524 = vpop.f32.mrf.mxu0
  %v5525 = vadd.f32 %v5386, %v5524
  %5526 = vmatmul.bf16.gmra.mxu0 %v1000
  %v5527 = vpop.f32.mrf.mxu0
  %v5528 = vadd.f32 %v5389, %v5527
  %v5529 = vpop.f32.mrf.mxu0
  %v5530 = vadd.f32 %v5391, %v5529
  %5531 = vmatmul.bf16.gmra.mxu0 %v1006
  %v5532 = vpop.f32.mrf.mxu0
  %v5533 = vadd.f32 %v5394, %v5532
  %v5534 = vpop.f32.mrf.mxu0
  %v5535 = vadd.f32 %v5396, %v5534
  %5536 = vmatmul.bf16.gmra.mxu0 %v1012
  %v5537 = vpop.f32.mrf.mxu0
  %v5538 = vadd.f32 %v5399, %v5537
  %v5539 = vpop.f32.mrf.mxu0
  %v5540 = vadd.f32 %v5401, %v5539
  %5541 = vmatmul.bf16.gmra.mxu0 %v1018
  %v5542 = vpop.f32.mrf.mxu0
  %v5543 = vadd.f32 %v5404, %v5542
  %v5544 = vpop.f32.mrf.mxu0
  %v5545 = vadd.f32 %v5406, %v5544
  %5546 = vmatmul.bf16.gmra.mxu0 %v1024
  %v5547 = vpop.f32.mrf.mxu0
  %v5548 = vadd.f32 %v5409, %v5547
  %v5549 = vpop.f32.mrf.mxu0
  %v5550 = vadd.f32 %v5411, %v5549
  %5551 = vmatmul.bf16.gmra.mxu0 %v1030
  %v5552 = vpop.f32.mrf.mxu0
  %v5553 = vadd.f32 %v5414, %v5552
  %v5554 = vpop.f32.mrf.mxu0
  %v5555 = vadd.f32 %v5416, %v5554
  %5556 = vmatmul.bf16.gmra.mxu0 %v1036
  %v5557 = vpop.f32.mrf.mxu0
  %v5558 = vadd.f32 %v5419, %v5557
  %v5559 = vpop.f32.mrf.mxu0
  %v5560 = vadd.f32 %v5421, %v5559
  %5561 = vmatmul.bf16.gmra.mxu0 %v1042
  %v5562 = vpop.f32.mrf.mxu0
  %v5563 = vadd.f32 %v5424, %v5562
  %v5564 = vpop.f32.mrf.mxu0
  %v5565 = vadd.f32 %v5426, %v5564
  %5566 = vmatmul.bf16.gmra.mxu0 %v1048
  %v5567 = vpop.f32.mrf.mxu0
  %v5568 = vadd.f32 %v5429, %v5567
  %v5569 = vpop.f32.mrf.mxu0
  %v5570 = vadd.f32 %v5431, %v5569
  %5571 = vmatmul.bf16.gmra.mxu0 %v1054
  %v5572 = vpop.f32.mrf.mxu0
  %v5573 = vadd.f32 %v5434, %v5572
  %v5574 = vpop.f32.mrf.mxu0
  %v5575 = vadd.f32 %v5436, %v5574
  %5576 = vmatmul.bf16.gmra.mxu0 %v1060
  %v5577 = vpop.f32.mrf.mxu0
  %v5578 = vadd.f32 %v5439, %v5577
  %v5579 = vpop.f32.mrf.mxu0
  %v5580 = vadd.f32 %v5441, %v5579
  %5581 = vmatmul.bf16.gmra.mxu0 %v1066
  %v5582 = vpop.f32.mrf.mxu0
  %v5583 = vadd.f32 %v5444, %v5582
  %v5584 = vpop.f32.mrf.mxu0
  %v5585 = vadd.f32 %v5446, %v5584
  %5586 = vmatmul.bf16.gmra.mxu0 %v1072
  %v5587 = vpop.f32.mrf.mxu0
  %v5588 = vadd.f32 %v5449, %v5587
  %v5589 = vpop.f32.mrf.mxu0
  %v5590 = vadd.f32 %v5451, %v5589
  %5591 = vmatmul.bf16.gmra.mxu0 %v1078
  %v5592 = vpop.f32.mrf.mxu0
  %v5593 = vadd.f32 %v5454, %v5592
  %v5594 = vpop.f32.mrf.mxu0
  %v5595 = vadd.f32 %v5456, %v5594
  %5596 = vdwg.mxu0
  %5597 = vmatpush.bf16.msra.mxu0 %v2291
  %5598 = vmatpush.bf16.msra.mxu0 %v2285
  %5599 = vmatpush.bf16.msra.mxu0 %v2279
  %5600 = vmatpush.bf16.msra.mxu0 %v2273
  %5601 = vmatpush.bf16.msra.mxu0 %v2267
  %5602 = vmatpush.bf16.msra.mxu0 %v2261
  %5603 = vmatpush.bf16.msra.mxu0 %v2255
  %5604 = vmatpush.bf16.msra.mxu0 %v2249
  %5605 = vmatmul.bf16.gmra.mxu0 %v929
  %v5606 = vpop.f32.mrf.mxu0
  %v5607 = vadd.f32 %v5468, %v5606
  %v5608 = vpop.f32.mrf.mxu0
  %v5609 = vadd.f32 %v5470, %v5608
  %5610 = vmatmul.bf16.gmra.mxu0 %v935
  %v5611 = vpop.f32.mrf.mxu0
  %v5612 = vadd.f32 %v5473, %v5611
  %v5613 = vpop.f32.mrf.mxu0
  %v5614 = vadd.f32 %v5475, %v5613
  %5615 = vmatmul.bf16.gmra.mxu0 %v941
  %v5616 = vpop.f32.mrf.mxu0
  %v5617 = vadd.f32 %v5478, %v5616
  %v5618 = vpop.f32.mrf.mxu0
  %v5619 = vadd.f32 %v5480, %v5618
  %5620 = vmatmul.bf16.gmra.mxu0 %v947
  %v5621 = vpop.f32.mrf.mxu0
  %v5622 = vadd.f32 %v5483, %v5621
  %v5623 = vpop.f32.mrf.mxu0
  %v5624 = vadd.f32 %v5485, %v5623
  %5625 = vmatmul.bf16.gmra.mxu0 %v953
  %v5626 = vpop.f32.mrf.mxu0
  %v5627 = vadd.f32 %v5488, %v5626
  %v5628 = vpop.f32.mrf.mxu0
  %v5629 = vadd.f32 %v5490, %v5628
  %5630 = vmatmul.bf16.gmra.mxu0 %v959
  %v5631 = vpop.f32.mrf.mxu0
  %v5632 = vadd.f32 %v5493, %v5631
  %v5633 = vpop.f32.mrf.mxu0
  %v5634 = vadd.f32 %v5495, %v5633
  %5635 = vmatmul.bf16.gmra.mxu0 %v965
  %v5636 = vpop.f32.mrf.mxu0
  %v5637 = vadd.f32 %v5498, %v5636
  %v5638 = vpop.f32.mrf.mxu0
  %v5639 = vadd.f32 %v5500, %v5638
  %5640 = vmatmul.bf16.gmra.mxu0 %v971
  %v5641 = vpop.f32.mrf.mxu0
  %v5642 = vadd.f32 %v5503, %v5641
  %v5643 = vpop.f32.mrf.mxu0
  %v5644 = vadd.f32 %v5505, %v5643
  %5645 = vmatmul.bf16.gmra.mxu0 %v977
  %v5646 = vpop.f32.mrf.mxu0
  %v5647 = vadd.f32 %v5508, %v5646
  %v5648 = vpop.f32.mrf.mxu0
  %v5649 = vadd.f32 %v5510, %v5648
  %5650 = vmatmul.bf16.gmra.mxu0 %v983
  %v5651 = vpop.f32.mrf.mxu0
  %v5652 = vadd.f32 %v5513, %v5651
  %v5653 = vpop.f32.mrf.mxu0
  %v5654 = vadd.f32 %v5515, %v5653
  %5655 = vmatmul.bf16.gmra.mxu0 %v989
  %v5656 = vpop.f32.mrf.mxu0
  %v5657 = vadd.f32 %v5518, %v5656
  %v5658 = vpop.f32.mrf.mxu0
  %v5659 = vadd.f32 %v5520, %v5658
  %5660 = vmatmul.bf16.gmra.mxu0 %v995
  %v5661 = vpop.f32.mrf.mxu0
  %v5662 = vadd.f32 %v5523, %v5661
  %v5663 = vpop.f32.mrf.mxu0
  %v5664 = vadd.f32 %v5525, %v5663
  %5665 = vmatmul.bf16.gmra.mxu0 %v1001
  %v5666 = vpop.f32.mrf.mxu0
  %v5667 = vadd.f32 %v5528, %v5666
  %v5668 = vpop.f32.mrf.mxu0
  %v5669 = vadd.f32 %v5530, %v5668
  %5670 = vmatmul.bf16.gmra.mxu0 %v1007
  %v5671 = vpop.f32.mrf.mxu0
  %v5672 = vadd.f32 %v5533, %v5671
  %v5673 = vpop.f32.mrf.mxu0
  %v5674 = vadd.f32 %v5535, %v5673
  %5675 = vmatmul.bf16.gmra.mxu0 %v1013
  %v5676 = vpop.f32.mrf.mxu0
  %v5677 = vadd.f32 %v5538, %v5676
  %v5678 = vpop.f32.mrf.mxu0
  %v5679 = vadd.f32 %v5540, %v5678
  %5680 = vmatmul.bf16.gmra.mxu0 %v1019
  %v5681 = vpop.f32.mrf.mxu0
  %v5682 = vadd.f32 %v5543, %v5681
  %v5683 = vpop.f32.mrf.mxu0
  %v5684 = vadd.f32 %v5545, %v5683
  %5685 = vmatmul.bf16.gmra.mxu0 %v1025
  %v5686 = vpop.f32.mrf.mxu0
  %v5687 = vadd.f32 %v5548, %v5686
  %v5688 = vpop.f32.mrf.mxu0
  %v5689 = vadd.f32 %v5550, %v5688
  %5690 = vmatmul.bf16.gmra.mxu0 %v1031
  %v5691 = vpop.f32.mrf.mxu0
  %v5692 = vadd.f32 %v5553, %v5691
  %v5693 = vpop.f32.mrf.mxu0
  %v5694 = vadd.f32 %v5555, %v5693
  %5695 = vmatmul.bf16.gmra.mxu0 %v1037
  %v5696 = vpop.f32.mrf.mxu0
  %v5697 = vadd.f32 %v5558, %v5696
  %v5698 = vpop.f32.mrf.mxu0
  %v5699 = vadd.f32 %v5560, %v5698
  %5700 = vmatmul.bf16.gmra.mxu0 %v1043
  %v5701 = vpop.f32.mrf.mxu0
  %v5702 = vadd.f32 %v5563, %v5701
  %v5703 = vpop.f32.mrf.mxu0
  %v5704 = vadd.f32 %v5565, %v5703
  %5705 = vmatmul.bf16.gmra.mxu0 %v1049
  %v5706 = vpop.f32.mrf.mxu0
  %v5707 = vadd.f32 %v5568, %v5706
  %v5708 = vpop.f32.mrf.mxu0
  %v5709 = vadd.f32 %v5570, %v5708
  %5710 = vmatmul.bf16.gmra.mxu0 %v1055
  %v5711 = vpop.f32.mrf.mxu0
  %v5712 = vadd.f32 %v5573, %v5711
  %v5713 = vpop.f32.mrf.mxu0
  %v5714 = vadd.f32 %v5575, %v5713
  %5715 = vmatmul.bf16.gmra.mxu0 %v1061
  %v5716 = vpop.f32.mrf.mxu0
  %v5717 = vadd.f32 %v5578, %v5716
  %v5718 = vpop.f32.mrf.mxu0
  %v5719 = vadd.f32 %v5580, %v5718
  %5720 = vmatmul.bf16.gmra.mxu0 %v1067
  %v5721 = vpop.f32.mrf.mxu0
  %v5722 = vadd.f32 %v5583, %v5721
  %v5723 = vpop.f32.mrf.mxu0
  %v5724 = vadd.f32 %v5585, %v5723
  %5725 = vmatmul.bf16.gmra.mxu0 %v1073
  %v5726 = vpop.f32.mrf.mxu0
  %v5727 = vadd.f32 %v5588, %v5726
  %v5728 = vpop.f32.mrf.mxu0
  %v5729 = vadd.f32 %v5590, %v5728
  %5730 = vmatmul.bf16.gmra.mxu0 %v1079
  %v5731 = vpop.f32.mrf.mxu0
  %v5732 = vadd.f32 %v5593, %v5731
  %v5733 = vpop.f32.mrf.mxu0
  %v5734 = vadd.f32 %v5595, %v5733
  %5735 = vdwg.mxu0
  %5736 = vmatpush.bf16.msra.mxu0 %v2339
  %5737 = vmatpush.bf16.msra.mxu0 %v2333
  %5738 = vmatpush.bf16.msra.mxu0 %v2327
  %5739 = vmatpush.bf16.msra.mxu0 %v2321
  %5740 = vmatpush.bf16.msra.mxu0 %v2315
  %5741 = vmatpush.bf16.msra.mxu0 %v2309
  %5742 = vmatpush.bf16.msra.mxu0 %v2303
  %5743 = vmatpush.bf16.msra.mxu0 %v2297
  %5744 = vmatmul.bf16.gmra.mxu0 %v930
  %v5745 = vpop.f32.mrf.mxu0
  %v5746 = vadd.f32 %v5607, %v5745
  %v5747 = vpop.f32.mrf.mxu0
  %v5748 = vadd.f32 %v5609, %v5747
  %5749 = vmatmul.bf16.gmra.mxu0 %v936
  %v5750 = vpop.f32.mrf.mxu0
  %v5751 = vadd.f32 %v5612, %v5750
  %v5752 = vpop.f32.mrf.mxu0
  %v5753 = vadd.f32 %v5614, %v5752
  %5754 = vmatmul.bf16.gmra.mxu0 %v942
  %v5755 = vpop.f32.mrf.mxu0
  %v5756 = vadd.f32 %v5617, %v5755
  %v5757 = vpop.f32.mrf.mxu0
  %v5758 = vadd.f32 %v5619, %v5757
  %5759 = vmatmul.bf16.gmra.mxu0 %v948
  %v5760 = vpop.f32.mrf.mxu0
  %v5761 = vadd.f32 %v5622, %v5760
  %v5762 = vpop.f32.mrf.mxu0
  %v5763 = vadd.f32 %v5624, %v5762
  %5764 = vmatmul.bf16.gmra.mxu0 %v954
  %v5765 = vpop.f32.mrf.mxu0
  %v5766 = vadd.f32 %v5627, %v5765
  %v5767 = vpop.f32.mrf.mxu0
  %v5768 = vadd.f32 %v5629, %v5767
  %5769 = vmatmul.bf16.gmra.mxu0 %v960
  %v5770 = vpop.f32.mrf.mxu0
  %v5771 = vadd.f32 %v5632, %v5770
  %v5772 = vpop.f32.mrf.mxu0
  %v5773 = vadd.f32 %v5634, %v5772
  %5774 = vmatmul.bf16.gmra.mxu0 %v966
  %v5775 = vpop.f32.mrf.mxu0
  %v5776 = vadd.f32 %v5637, %v5775
  %v5777 = vpop.f32.mrf.mxu0
  %v5778 = vadd.f32 %v5639, %v5777
  %5779 = vmatmul.bf16.gmra.mxu0 %v972
  %v5780 = vpop.f32.mrf.mxu0
  %v5781 = vadd.f32 %v5642, %v5780
  %v5782 = vpop.f32.mrf.mxu0
  %v5783 = vadd.f32 %v5644, %v5782
  %5784 = vmatmul.bf16.gmra.mxu0 %v978
  %v5785 = vpop.f32.mrf.mxu0
  %v5786 = vadd.f32 %v5647, %v5785
  %v5787 = vpop.f32.mrf.mxu0
  %v5788 = vadd.f32 %v5649, %v5787
  %5789 = vmatmul.bf16.gmra.mxu0 %v984
  %v5790 = vpop.f32.mrf.mxu0
  %v5791 = vadd.f32 %v5652, %v5790
  %v5792 = vpop.f32.mrf.mxu0
  %v5793 = vadd.f32 %v5654, %v5792
  %5794 = vmatmul.bf16.gmra.mxu0 %v990
  %v5795 = vpop.f32.mrf.mxu0
  %v5796 = vadd.f32 %v5657, %v5795
  %v5797 = vpop.f32.mrf.mxu0
  %v5798 = vadd.f32 %v5659, %v5797
  %5799 = vmatmul.bf16.gmra.mxu0 %v996
  %v5800 = vpop.f32.mrf.mxu0
  %v5801 = vadd.f32 %v5662, %v5800
  %v5802 = vpop.f32.mrf.mxu0
  %v5803 = vadd.f32 %v5664, %v5802
  %5804 = vmatmul.bf16.gmra.mxu0 %v1002
  %v5805 = vpop.f32.mrf.mxu0
  %v5806 = vadd.f32 %v5667, %v5805
  %v5807 = vpop.f32.mrf.mxu0
  %v5808 = vadd.f32 %v5669, %v5807
  %5809 = vmatmul.bf16.gmra.mxu0 %v1008
  %v5810 = vpop.f32.mrf.mxu0
  %v5811 = vadd.f32 %v5672, %v5810
  %v5812 = vpop.f32.mrf.mxu0
  %v5813 = vadd.f32 %v5674, %v5812
  %5814 = vmatmul.bf16.gmra.mxu0 %v1014
  %v5815 = vpop.f32.mrf.mxu0
  %v5816 = vadd.f32 %v5677, %v5815
  %v5817 = vpop.f32.mrf.mxu0
  %v5818 = vadd.f32 %v5679, %v5817
  %5819 = vmatmul.bf16.gmra.mxu0 %v1020
  %v5820 = vpop.f32.mrf.mxu0
  %v5821 = vadd.f32 %v5682, %v5820
  %v5822 = vpop.f32.mrf.mxu0
  %v5823 = vadd.f32 %v5684, %v5822
  %5824 = vmatmul.bf16.gmra.mxu0 %v1026
  %v5825 = vpop.f32.mrf.mxu0
  %v5826 = vadd.f32 %v5687, %v5825
  %v5827 = vpop.f32.mrf.mxu0
  %v5828 = vadd.f32 %v5689, %v5827
  %5829 = vmatmul.bf16.gmra.mxu0 %v1032
  %v5830 = vpop.f32.mrf.mxu0
  %v5831 = vadd.f32 %v5692, %v5830
  %v5832 = vpop.f32.mrf.mxu0
  %v5833 = vadd.f32 %v5694, %v5832
  %5834 = vmatmul.bf16.gmra.mxu0 %v1038
  %v5835 = vpop.f32.mrf.mxu0
  %v5836 = vadd.f32 %v5697, %v5835
  %v5837 = vpop.f32.mrf.mxu0
  %v5838 = vadd.f32 %v5699, %v5837
  %5839 = vmatmul.bf16.gmra.mxu0 %v1044
  %v5840 = vpop.f32.mrf.mxu0
  %v5841 = vadd.f32 %v5702, %v5840
  %v5842 = vpop.f32.mrf.mxu0
  %v5843 = vadd.f32 %v5704, %v5842
  %5844 = vmatmul.bf16.gmra.mxu0 %v1050
  %v5845 = vpop.f32.mrf.mxu0
  %v5846 = vadd.f32 %v5707, %v5845
  %v5847 = vpop.f32.mrf.mxu0
  %v5848 = vadd.f32 %v5709, %v5847
  %5849 = vmatmul.bf16.gmra.mxu0 %v1056
  %v5850 = vpop.f32.mrf.mxu0
  %v5851 = vadd.f32 %v5712, %v5850
  %v5852 = vpop.f32.mrf.mxu0
  %v5853 = vadd.f32 %v5714, %v5852
  %5854 = vmatmul.bf16.gmra.mxu0 %v1062
  %v5855 = vpop.f32.mrf.mxu0
  %v5856 = vadd.f32 %v5717, %v5855
  %v5857 = vpop.f32.mrf.mxu0
  %v5858 = vadd.f32 %v5719, %v5857
  %5859 = vmatmul.bf16.gmra.mxu0 %v1068
  %v5860 = vpop.f32.mrf.mxu0
  %v5861 = vadd.f32 %v5722, %v5860
  %v5862 = vpop.f32.mrf.mxu0
  %v5863 = vadd.f32 %v5724, %v5862
  %5864 = vmatmul.bf16.gmra.mxu0 %v1074
  %v5865 = vpop.f32.mrf.mxu0
  %v5866 = vadd.f32 %v5727, %v5865
  %v5867 = vpop.f32.mrf.mxu0
  %v5868 = vadd.f32 %v5729, %v5867
  %5869 = vmatmul.bf16.gmra.mxu0 %v1080
  %v5870 = vpop.f32.mrf.mxu0
  %v5871 = vadd.f32 %v5732, %v5870
  %v5872 = vpop.f32.mrf.mxu0
  %v5873 = vadd.f32 %v5734, %v5872
  %5874 = vdwg.mxu0
  %5875 = vmatpush.bf16.msra.mxu0 %v2387
  %5876 = vmatpush.bf16.msra.mxu0 %v2381
  %5877 = vmatpush.bf16.msra.mxu0 %v2375
  %5878 = vmatpush.bf16.msra.mxu0 %v2369
  %5879 = vmatpush.bf16.msra.mxu0 %v2363
  %5880 = vmatpush.bf16.msra.mxu0 %v2357
  %5881 = vmatpush.bf16.msra.mxu0 %v2351
  %5882 = vmatpush.bf16.msra.mxu0 %v2345
  %5883 = vmatmul.bf16.gmra.mxu0 %v931
  %v5884 = vpop.f32.mrf.mxu0
  %v5885 = vadd.f32 %v5746, %v5884
  %v5886 = vpop.f32.mrf.mxu0
  %v5887 = vadd.f32 %v5748, %v5886
  %5888 = vmatmul.bf16.gmra.mxu0 %v937
  %v5889 = vpop.f32.mrf.mxu0
  %v5890 = vadd.f32 %v5751, %v5889
  %v5891 = vpop.f32.mrf.mxu0
  %v5892 = vadd.f32 %v5753, %v5891
  %5893 = vmatmul.bf16.gmra.mxu0 %v943
  %v5894 = vpop.f32.mrf.mxu0
  %v5895 = vadd.f32 %v5756, %v5894
  %v5896 = vpop.f32.mrf.mxu0
  %v5897 = vadd.f32 %v5758, %v5896
  %5898 = vmatmul.bf16.gmra.mxu0 %v949
  %v5899 = vpop.f32.mrf.mxu0
  %v5900 = vadd.f32 %v5761, %v5899
  %v5901 = vpop.f32.mrf.mxu0
  %v5902 = vadd.f32 %v5763, %v5901
  %5903 = vmatmul.bf16.gmra.mxu0 %v955
  %v5904 = vpop.f32.mrf.mxu0
  %v5905 = vadd.f32 %v5766, %v5904
  %v5906 = vpop.f32.mrf.mxu0
  %v5907 = vadd.f32 %v5768, %v5906
  %5908 = vmatmul.bf16.gmra.mxu0 %v961
  %v5909 = vpop.f32.mrf.mxu0
  %v5910 = vadd.f32 %v5771, %v5909
  %v5911 = vpop.f32.mrf.mxu0
  %v5912 = vadd.f32 %v5773, %v5911
  %5913 = vmatmul.bf16.gmra.mxu0 %v967
  %v5914 = vpop.f32.mrf.mxu0
  %v5915 = vadd.f32 %v5776, %v5914
  %v5916 = vpop.f32.mrf.mxu0
  %v5917 = vadd.f32 %v5778, %v5916
  %5918 = vmatmul.bf16.gmra.mxu0 %v973
  %v5919 = vpop.f32.mrf.mxu0
  %v5920 = vadd.f32 %v5781, %v5919
  %v5921 = vpop.f32.mrf.mxu0
  %v5922 = vadd.f32 %v5783, %v5921
  %5923 = vmatmul.bf16.gmra.mxu0 %v979
  %v5924 = vpop.f32.mrf.mxu0
  %v5925 = vadd.f32 %v5786, %v5924
  %v5926 = vpop.f32.mrf.mxu0
  %v5927 = vadd.f32 %v5788, %v5926
  %5928 = vmatmul.bf16.gmra.mxu0 %v985
  %v5929 = vpop.f32.mrf.mxu0
  %v5930 = vadd.f32 %v5791, %v5929
  %v5931 = vpop.f32.mrf.mxu0
  %v5932 = vadd.f32 %v5793, %v5931
  %5933 = vmatmul.bf16.gmra.mxu0 %v991
  %v5934 = vpop.f32.mrf.mxu0
  %v5935 = vadd.f32 %v5796, %v5934
  %v5936 = vpop.f32.mrf.mxu0
  %v5937 = vadd.f32 %v5798, %v5936
  %5938 = vmatmul.bf16.gmra.mxu0 %v997
  %v5939 = vpop.f32.mrf.mxu0
  %v5940 = vadd.f32 %v5801, %v5939
  %v5941 = vpop.f32.mrf.mxu0
  %v5942 = vadd.f32 %v5803, %v5941
  %5943 = vmatmul.bf16.gmra.mxu0 %v1003
  %v5944 = vpop.f32.mrf.mxu0
  %v5945 = vadd.f32 %v5806, %v5944
  %v5946 = vpop.f32.mrf.mxu0
  %v5947 = vadd.f32 %v5808, %v5946
  %5948 = vmatmul.bf16.gmra.mxu0 %v1009
  %v5949 = vpop.f32.mrf.mxu0
  %v5950 = vadd.f32 %v5811, %v5949
  %v5951 = vpop.f32.mrf.mxu0
  %v5952 = vadd.f32 %v5813, %v5951
  %5953 = vmatmul.bf16.gmra.mxu0 %v1015
  %v5954 = vpop.f32.mrf.mxu0
  %v5955 = vadd.f32 %v5816, %v5954
  %v5956 = vpop.f32.mrf.mxu0
  %v5957 = vadd.f32 %v5818, %v5956
  %5958 = vmatmul.bf16.gmra.mxu0 %v1021
  %v5959 = vpop.f32.mrf.mxu0
  %v5960 = vadd.f32 %v5821, %v5959
  %v5961 = vpop.f32.mrf.mxu0
  %v5962 = vadd.f32 %v5823, %v5961
  %5963 = vmatmul.bf16.gmra.mxu0 %v1027
  %v5964 = vpop.f32.mrf.mxu0
  %v5965 = vadd.f32 %v5826, %v5964
  %v5966 = vpop.f32.mrf.mxu0
  %v5967 = vadd.f32 %v5828, %v5966
  %5968 = vmatmul.bf16.gmra.mxu0 %v1033
  %v5969 = vpop.f32.mrf.mxu0
  %v5970 = vadd.f32 %v5831, %v5969
  %v5971 = vpop.f32.mrf.mxu0
  %v5972 = vadd.f32 %v5833, %v5971
  %5973 = vmatmul.bf16.gmra.mxu0 %v1039
  %v5974 = vpop.f32.mrf.mxu0
  %v5975 = vadd.f32 %v5836, %v5974
  %v5976 = vpop.f32.mrf.mxu0
  %v5977 = vadd.f32 %v5838, %v5976
  %5978 = vmatmul.bf16.gmra.mxu0 %v1045
  %v5979 = vpop.f32.mrf.mxu0
  %v5980 = vadd.f32 %v5841, %v5979
  %v5981 = vpop.f32.mrf.mxu0
  %v5982 = vadd.f32 %v5843, %v5981
  %5983 = vmatmul.bf16.gmra.mxu0 %v1051
  %v5984 = vpop.f32.mrf.mxu0
  %v5985 = vadd.f32 %v5846, %v5984
  %v5986 = vpop.f32.mrf.mxu0
  %v5987 = vadd.f32 %v5848, %v5986
  %5988 = vmatmul.bf16.gmra.mxu0 %v1057
  %v5989 = vpop.f32.mrf.mxu0
  %v5990 = vadd.f32 %v5851, %v5989
  %v5991 = vpop.f32.mrf.mxu0
  %v5992 = vadd.f32 %v5853, %v5991
  %5993 = vmatmul.bf16.gmra.mxu0 %v1063
  %v5994 = vpop.f32.mrf.mxu0
  %v5995 = vadd.f32 %v5856, %v5994
  %v5996 = vpop.f32.mrf.mxu0
  %v5997 = vadd.f32 %v5858, %v5996
  %5998 = vmatmul.bf16.gmra.mxu0 %v1069
  %v5999 = vpop.f32.mrf.mxu0
  %v6000 = vadd.f32 %v5861, %v5999
  %v6001 = vpop.f32.mrf.mxu0
  %v6002 = vadd.f32 %v5863, %v6001
  %6003 = vmatmul.bf16.gmra.mxu0 %v1075
  %v6004 = vpop.f32.mrf.mxu0
  %v6005 = vadd.f32 %v5866, %v6004
  %v6006 = vpop.f32.mrf.mxu0
  %v6007 = vadd.f32 %v5868, %v6006
  %6008 = vmatmul.bf16.gmra.mxu0 %v1081
  %v6009 = vpop.f32.mrf.mxu0
  %v6010 = vadd.f32 %v5871, %v6009
  %v6011 = vpop.f32.mrf.mxu0
  %v6012 = vadd.f32 %v5873, %v6011
  %6013 = vdwg.mxu0
  %6014 = vmatpush.bf16.msra.mxu0 %v2148
  %6015 = vmatpush.bf16.msra.mxu0 %v2142
  %6016 = vmatpush.bf16.msra.mxu0 %v2136
  %6017 = vmatpush.bf16.msra.mxu0 %v2130
  %6018 = vmatpush.bf16.msra.mxu0 %v2124
  %6019 = vmatpush.bf16.msra.mxu0 %v2118
  %6020 = vmatpush.bf16.msra.mxu0 %v2112
  %6021 = vmatpush.bf16.msra.mxu0 %v2106
  %6022 = vmatmul.bf16.gmra.mxu0 %v926
  %v6023 = vpop.f32.mrf.mxu0
  %v6024 = vadd.f32 0.0, %v6023
  %v6025 = vpop.f32.mrf.mxu0
  %v6026 = vadd.f32 0.0, %v6025
  %6027 = vmatmul.bf16.gmra.mxu0 %v932
  %v6028 = vpop.f32.mrf.mxu0
  %v6029 = vadd.f32 0.0, %v6028
  %v6030 = vpop.f32.mrf.mxu0
  %v6031 = vadd.f32 0.0, %v6030
  %6032 = vmatmul.bf16.gmra.mxu0 %v938
  %v6033 = vpop.f32.mrf.mxu0
  %v6034 = vadd.f32 0.0, %v6033
  %v6035 = vpop.f32.mrf.mxu0
  %v6036 = vadd.f32 0.0, %v6035
  %6037 = vmatmul.bf16.gmra.mxu0 %v944
  %v6038 = vpop.f32.mrf.mxu0
  %v6039 = vadd.f32 0.0, %v6038
  %v6040 = vpop.f32.mrf.mxu0
  %v6041 = vadd.f32 0.0, %v6040
  %6042 = vmatmul.bf16.gmra.mxu0 %v950
  %v6043 = vpop.f32.mrf.mxu0
  %v6044 = vadd.f32 0.0, %v6043
  %v6045 = vpop.f32.mrf.mxu0
  %v6046 = vadd.f32 0.0, %v6045
  %6047 = vmatmul.bf16.gmra.mxu0 %v956
  %v6048 = vpop.f32.mrf.mxu0
  %v6049 = vadd.f32 0.0, %v6048
  %v6050 = vpop.f32.mrf.mxu0
  %v6051 = vadd.f32 0.0, %v6050
  %6052 = vmatmul.bf16.gmra.mxu0 %v962
  %v6053 = vpop.f32.mrf.mxu0
  %v6054 = vadd.f32 0.0, %v6053
  %v6055 = vpop.f32.mrf.mxu0
  %v6056 = vadd.f32 0.0, %v6055
  %6057 = vmatmul.bf16.gmra.mxu0 %v968
  %v6058 = vpop.f32.mrf.mxu0
  %v6059 = vadd.f32 0.0, %v6058
  %v6060 = vpop.f32.mrf.mxu0
  %v6061 = vadd.f32 0.0, %v6060
  %6062 = vmatmul.bf16.gmra.mxu0 %v974
  %v6063 = vpop.f32.mrf.mxu0
  %v6064 = vadd.f32 0.0, %v6063
  %v6065 = vpop.f32.mrf.mxu0
  %v6066 = vadd.f32 0.0, %v6065
  %6067 = vmatmul.bf16.gmra.mxu0 %v980
  %v6068 = vpop.f32.mrf.mxu0
  %v6069 = vadd.f32 0.0, %v6068
  %v6070 = vpop.f32.mrf.mxu0
  %v6071 = vadd.f32 0.0, %v6070
  %6072 = vmatmul.bf16.gmra.mxu0 %v986
  %v6073 = vpop.f32.mrf.mxu0
  %v6074 = vadd.f32 0.0, %v6073
  %v6075 = vpop.f32.mrf.mxu0
  %v6076 = vadd.f32 0.0, %v6075
  %6077 = vmatmul.bf16.gmra.mxu0 %v992
  %v6078 = vpop.f32.mrf.mxu0
  %v6079 = vadd.f32 0.0, %v6078
  %v6080 = vpop.f32.mrf.mxu0
  %v6081 = vadd.f32 0.0, %v6080
  %6082 = vmatmul.bf16.gmra.mxu0 %v998
  %v6083 = vpop.f32.mrf.mxu0
  %v6084 = vadd.f32 0.0, %v6083
  %v6085 = vpop.f32.mrf.mxu0
  %v6086 = vadd.f32 0.0, %v6085
  %6087 = vmatmul.bf16.gmra.mxu0 %v1004
  %v6088 = vpop.f32.mrf.mxu0
  %v6089 = vadd.f32 0.0, %v6088
  %v6090 = vpop.f32.mrf.mxu0
  %v6091 = vadd.f32 0.0, %v6090
  %6092 = vmatmul.bf16.gmra.mxu0 %v1010
  %v6093 = vpop.f32.mrf.mxu0
  %v6094 = vadd.f32 0.0, %v6093
  %v6095 = vpop.f32.mrf.mxu0
  %v6096 = vadd.f32 0.0, %v6095
  %6097 = vmatmul.bf16.gmra.mxu0 %v1016
  %v6098 = vpop.f32.mrf.mxu0
  %v6099 = vadd.f32 0.0, %v6098
  %v6100 = vpop.f32.mrf.mxu0
  %v6101 = vadd.f32 0.0, %v6100
  %6102 = vmatmul.bf16.gmra.mxu0 %v1022
  %v6103 = vpop.f32.mrf.mxu0
  %v6104 = vadd.f32 0.0, %v6103
  %v6105 = vpop.f32.mrf.mxu0
  %v6106 = vadd.f32 0.0, %v6105
  %6107 = vmatmul.bf16.gmra.mxu0 %v1028
  %v6108 = vpop.f32.mrf.mxu0
  %v6109 = vadd.f32 0.0, %v6108
  %v6110 = vpop.f32.mrf.mxu0
  %v6111 = vadd.f32 0.0, %v6110
  %6112 = vmatmul.bf16.gmra.mxu0 %v1034
  %v6113 = vpop.f32.mrf.mxu0
  %v6114 = vadd.f32 0.0, %v6113
  %v6115 = vpop.f32.mrf.mxu0
  %v6116 = vadd.f32 0.0, %v6115
  %6117 = vmatmul.bf16.gmra.mxu0 %v1040
  %v6118 = vpop.f32.mrf.mxu0
  %v6119 = vadd.f32 0.0, %v6118
  %v6120 = vpop.f32.mrf.mxu0
  %v6121 = vadd.f32 0.0, %v6120
  %6122 = vmatmul.bf16.gmra.mxu0 %v1046
  %v6123 = vpop.f32.mrf.mxu0
  %v6124 = vadd.f32 0.0, %v6123
  %v6125 = vpop.f32.mrf.mxu0
  %v6126 = vadd.f32 0.0, %v6125
  %6127 = vmatmul.bf16.gmra.mxu0 %v1052
  %v6128 = vpop.f32.mrf.mxu0
  %v6129 = vadd.f32 0.0, %v6128
  %v6130 = vpop.f32.mrf.mxu0
  %v6131 = vadd.f32 0.0, %v6130
  %6132 = vmatmul.bf16.gmra.mxu0 %v1058
  %v6133 = vpop.f32.mrf.mxu0
  %v6134 = vadd.f32 0.0, %v6133
  %v6135 = vpop.f32.mrf.mxu0
  %v6136 = vadd.f32 0.0, %v6135
  %6137 = vmatmul.bf16.gmra.mxu0 %v1064
  %v6138 = vpop.f32.mrf.mxu0
  %v6139 = vadd.f32 0.0, %v6138
  %v6140 = vpop.f32.mrf.mxu0
  %v6141 = vadd.f32 0.0, %v6140
  %6142 = vmatmul.bf16.gmra.mxu0 %v1070
  %v6143 = vpop.f32.mrf.mxu0
  %v6144 = vadd.f32 0.0, %v6143
  %v6145 = vpop.f32.mrf.mxu0
  %v6146 = vadd.f32 0.0, %v6145
  %6147 = vmatmul.bf16.gmra.mxu0 %v1076
  %v6148 = vpop.f32.mrf.mxu0
  %v6149 = vadd.f32 0.0, %v6148
  %v6150 = vpop.f32.mrf.mxu0
  %v6151 = vadd.f32 0.0, %v6150
  %6152 = vdwg.mxu0
  %6153 = vmatpush.bf16.msra.mxu0 %v2196
  %6154 = vmatpush.bf16.msra.mxu0 %v2190
  %6155 = vmatpush.bf16.msra.mxu0 %v2184
  %6156 = vmatpush.bf16.msra.mxu0 %v2178
  %6157 = vmatpush.bf16.msra.mxu0 %v2172
  %6158 = vmatpush.bf16.msra.mxu0 %v2166
  %6159 = vmatpush.bf16.msra.mxu0 %v2160
  %6160 = vmatpush.bf16.msra.mxu0 %v2154
  %6161 = vmatmul.bf16.gmra.mxu0 %v927
  %v6162 = vpop.f32.mrf.mxu0
  %v6163 = vadd.f32 %v6024, %v6162
  %v6164 = vpop.f32.mrf.mxu0
  %v6165 = vadd.f32 %v6026, %v6164
  %6166 = vmatmul.bf16.gmra.mxu0 %v933
  %v6167 = vpop.f32.mrf.mxu0
  %v6168 = vadd.f32 %v6029, %v6167
  %v6169 = vpop.f32.mrf.mxu0
  %v6170 = vadd.f32 %v6031, %v6169
  %6171 = vmatmul.bf16.gmra.mxu0 %v939
  %v6172 = vpop.f32.mrf.mxu0
  %v6173 = vadd.f32 %v6034, %v6172
  %v6174 = vpop.f32.mrf.mxu0
  %v6175 = vadd.f32 %v6036, %v6174
  %6176 = vmatmul.bf16.gmra.mxu0 %v945
  %v6177 = vpop.f32.mrf.mxu0
  %v6178 = vadd.f32 %v6039, %v6177
  %v6179 = vpop.f32.mrf.mxu0
  %v6180 = vadd.f32 %v6041, %v6179
  %6181 = vmatmul.bf16.gmra.mxu0 %v951
  %v6182 = vpop.f32.mrf.mxu0
  %v6183 = vadd.f32 %v6044, %v6182
  %v6184 = vpop.f32.mrf.mxu0
  %v6185 = vadd.f32 %v6046, %v6184
  %6186 = vmatmul.bf16.gmra.mxu0 %v957
  %v6187 = vpop.f32.mrf.mxu0
  %v6188 = vadd.f32 %v6049, %v6187
  %v6189 = vpop.f32.mrf.mxu0
  %v6190 = vadd.f32 %v6051, %v6189
  %6191 = vmatmul.bf16.gmra.mxu0 %v963
  %v6192 = vpop.f32.mrf.mxu0
  %v6193 = vadd.f32 %v6054, %v6192
  %v6194 = vpop.f32.mrf.mxu0
  %v6195 = vadd.f32 %v6056, %v6194
  %6196 = vmatmul.bf16.gmra.mxu0 %v969
  %v6197 = vpop.f32.mrf.mxu0
  %v6198 = vadd.f32 %v6059, %v6197
  %v6199 = vpop.f32.mrf.mxu0
  %v6200 = vadd.f32 %v6061, %v6199
  %6201 = vmatmul.bf16.gmra.mxu0 %v975
  %v6202 = vpop.f32.mrf.mxu0
  %v6203 = vadd.f32 %v6064, %v6202
  %v6204 = vpop.f32.mrf.mxu0
  %v6205 = vadd.f32 %v6066, %v6204
  %6206 = vmatmul.bf16.gmra.mxu0 %v981
  %v6207 = vpop.f32.mrf.mxu0
  %v6208 = vadd.f32 %v6069, %v6207
  %v6209 = vpop.f32.mrf.mxu0
  %v6210 = vadd.f32 %v6071, %v6209
  %6211 = vmatmul.bf16.gmra.mxu0 %v987
  %v6212 = vpop.f32.mrf.mxu0
  %v6213 = vadd.f32 %v6074, %v6212
  %v6214 = vpop.f32.mrf.mxu0
  %v6215 = vadd.f32 %v6076, %v6214
  %6216 = vmatmul.bf16.gmra.mxu0 %v993
  %v6217 = vpop.f32.mrf.mxu0
  %v6218 = vadd.f32 %v6079, %v6217
  %v6219 = vpop.f32.mrf.mxu0
  %v6220 = vadd.f32 %v6081, %v6219
  %6221 = vmatmul.bf16.gmra.mxu0 %v999
  %v6222 = vpop.f32.mrf.mxu0
  %v6223 = vadd.f32 %v6084, %v6222
  %v6224 = vpop.f32.mrf.mxu0
  %v6225 = vadd.f32 %v6086, %v6224
  %6226 = vmatmul.bf16.gmra.mxu0 %v1005
  %v6227 = vpop.f32.mrf.mxu0
  %v6228 = vadd.f32 %v6089, %v6227
  %v6229 = vpop.f32.mrf.mxu0
  %v6230 = vadd.f32 %v6091, %v6229
  %6231 = vmatmul.bf16.gmra.mxu0 %v1011
  %v6232 = vpop.f32.mrf.mxu0
  %v6233 = vadd.f32 %v6094, %v6232
  %v6234 = vpop.f32.mrf.mxu0
  %v6235 = vadd.f32 %v6096, %v6234
  %6236 = vmatmul.bf16.gmra.mxu0 %v1017
  %v6237 = vpop.f32.mrf.mxu0
  %v6238 = vadd.f32 %v6099, %v6237
  %v6239 = vpop.f32.mrf.mxu0
  %v6240 = vadd.f32 %v6101, %v6239
  %6241 = vmatmul.bf16.gmra.mxu0 %v1023
  %v6242 = vpop.f32.mrf.mxu0
  %v6243 = vadd.f32 %v6104, %v6242
  %v6244 = vpop.f32.mrf.mxu0
  %v6245 = vadd.f32 %v6106, %v6244
  %6246 = vmatmul.bf16.gmra.mxu0 %v1029
  %v6247 = vpop.f32.mrf.mxu0
  %v6248 = vadd.f32 %v6109, %v6247
  %v6249 = vpop.f32.mrf.mxu0
  %v6250 = vadd.f32 %v6111, %v6249
  %6251 = vmatmul.bf16.gmra.mxu0 %v1035
  %v6252 = vpop.f32.mrf.mxu0
  %v6253 = vadd.f32 %v6114, %v6252
  %v6254 = vpop.f32.mrf.mxu0
  %v6255 = vadd.f32 %v6116, %v6254
  %6256 = vmatmul.bf16.gmra.mxu0 %v1041
  %v6257 = vpop.f32.mrf.mxu0
  %v6258 = vadd.f32 %v6119, %v6257
  %v6259 = vpop.f32.mrf.mxu0
  %v6260 = vadd.f32 %v6121, %v6259
  %6261 = vmatmul.bf16.gmra.mxu0 %v1047
  %v6262 = vpop.f32.mrf.mxu0
  %v6263 = vadd.f32 %v6124, %v6262
  %v6264 = vpop.f32.mrf.mxu0
  %v6265 = vadd.f32 %v6126, %v6264
  %6266 = vmatmul.bf16.gmra.mxu0 %v1053
  %v6267 = vpop.f32.mrf.mxu0
  %v6268 = vadd.f32 %v6129, %v6267
  %v6269 = vpop.f32.mrf.mxu0
  %v6270 = vadd.f32 %v6131, %v6269
  %6271 = vmatmul.bf16.gmra.mxu0 %v1059
  %v6272 = vpop.f32.mrf.mxu0
  %v6273 = vadd.f32 %v6134, %v6272
  %v6274 = vpop.f32.mrf.mxu0
  %v6275 = vadd.f32 %v6136, %v6274
  %6276 = vmatmul.bf16.gmra.mxu0 %v1065
  %v6277 = vpop.f32.mrf.mxu0
  %v6278 = vadd.f32 %v6139, %v6277
  %v6279 = vpop.f32.mrf.mxu0
  %v6280 = vadd.f32 %v6141, %v6279
  %6281 = vmatmul.bf16.gmra.mxu0 %v1071
  %v6282 = vpop.f32.mrf.mxu0
  %v6283 = vadd.f32 %v6144, %v6282
  %v6284 = vpop.f32.mrf.mxu0
  %v6285 = vadd.f32 %v6146, %v6284
  %6286 = vmatmul.bf16.gmra.mxu0 %v1077
  %v6287 = vpop.f32.mrf.mxu0
  %v6288 = vadd.f32 %v6149, %v6287
  %v6289 = vpop.f32.mrf.mxu0
  %v6290 = vadd.f32 %v6151, %v6289
  %6291 = vdwg.mxu0
  %6292 = vmatpush.bf16.msra.mxu0 %v2244
  %6293 = vmatpush.bf16.msra.mxu0 %v2238
  %6294 = vmatpush.bf16.msra.mxu0 %v2232
  %6295 = vmatpush.bf16.msra.mxu0 %v2226
  %6296 = vmatpush.bf16.msra.mxu0 %v2220
  %6297 = vmatpush.bf16.msra.mxu0 %v2214
  %6298 = vmatpush.bf16.msra.mxu0 %v2208
  %6299 = vmatpush.bf16.msra.mxu0 %v2202
  %6300 = vmatmul.bf16.gmra.mxu0 %v928
  %v6301 = vpop.f32.mrf.mxu0
  %v6302 = vadd.f32 %v6163, %v6301
  %v6303 = vpop.f32.mrf.mxu0
  %v6304 = vadd.f32 %v6165, %v6303
  %6305 = vmatmul.bf16.gmra.mxu0 %v934
  %v6306 = vpop.f32.mrf.mxu0
  %v6307 = vadd.f32 %v6168, %v6306
  %v6308 = vpop.f32.mrf.mxu0
  %v6309 = vadd.f32 %v6170, %v6308
  %6310 = vmatmul.bf16.gmra.mxu0 %v940
  %v6311 = vpop.f32.mrf.mxu0
  %v6312 = vadd.f32 %v6173, %v6311
  %v6313 = vpop.f32.mrf.mxu0
  %v6314 = vadd.f32 %v6175, %v6313
  %6315 = vmatmul.bf16.gmra.mxu0 %v946
  %v6316 = vpop.f32.mrf.mxu0
  %v6317 = vadd.f32 %v6178, %v6316
  %v6318 = vpop.f32.mrf.mxu0
  %v6319 = vadd.f32 %v6180, %v6318
  %6320 = vmatmul.bf16.gmra.mxu0 %v952
  %v6321 = vpop.f32.mrf.mxu0
  %v6322 = vadd.f32 %v6183, %v6321
  %v6323 = vpop.f32.mrf.mxu0
  %v6324 = vadd.f32 %v6185, %v6323
  %6325 = vmatmul.bf16.gmra.mxu0 %v958
  %v6326 = vpop.f32.mrf.mxu0
  %v6327 = vadd.f32 %v6188, %v6326
  %v6328 = vpop.f32.mrf.mxu0
  %v6329 = vadd.f32 %v6190, %v6328
  %6330 = vmatmul.bf16.gmra.mxu0 %v964
  %v6331 = vpop.f32.mrf.mxu0
  %v6332 = vadd.f32 %v6193, %v6331
  %v6333 = vpop.f32.mrf.mxu0
  %v6334 = vadd.f32 %v6195, %v6333
  %6335 = vmatmul.bf16.gmra.mxu0 %v970
  %v6336 = vpop.f32.mrf.mxu0
  %v6337 = vadd.f32 %v6198, %v6336
  %v6338 = vpop.f32.mrf.mxu0
  %v6339 = vadd.f32 %v6200, %v6338
  %6340 = vmatmul.bf16.gmra.mxu0 %v976
  %v6341 = vpop.f32.mrf.mxu0
  %v6342 = vadd.f32 %v6203, %v6341
  %v6343 = vpop.f32.mrf.mxu0
  %v6344 = vadd.f32 %v6205, %v6343
  %6345 = vmatmul.bf16.gmra.mxu0 %v982
  %v6346 = vpop.f32.mrf.mxu0
  %v6347 = vadd.f32 %v6208, %v6346
  %v6348 = vpop.f32.mrf.mxu0
  %v6349 = vadd.f32 %v6210, %v6348
  %6350 = vmatmul.bf16.gmra.mxu0 %v988
  %v6351 = vpop.f32.mrf.mxu0
  %v6352 = vadd.f32 %v6213, %v6351
  %v6353 = vpop.f32.mrf.mxu0
  %v6354 = vadd.f32 %v6215, %v6353
  %6355 = vmatmul.bf16.gmra.mxu0 %v994
  %v6356 = vpop.f32.mrf.mxu0
  %v6357 = vadd.f32 %v6218, %v6356
  %v6358 = vpop.f32.mrf.mxu0
  %v6359 = vadd.f32 %v6220, %v6358
  %6360 = vmatmul.bf16.gmra.mxu0 %v1000
  %v6361 = vpop.f32.mrf.mxu0
  %v6362 = vadd.f32 %v6223, %v6361
  %v6363 = vpop.f32.mrf.mxu0
  %v6364 = vadd.f32 %v6225, %v6363
  %6365 = vmatmul.bf16.gmra.mxu0 %v1006
  %v6366 = vpop.f32.mrf.mxu0
  %v6367 = vadd.f32 %v6228, %v6366
  %v6368 = vpop.f32.mrf.mxu0
  %v6369 = vadd.f32 %v6230, %v6368
  %6370 = vmatmul.bf16.gmra.mxu0 %v1012
  %v6371 = vpop.f32.mrf.mxu0
  %v6372 = vadd.f32 %v6233, %v6371
  %v6373 = vpop.f32.mrf.mxu0
  %v6374 = vadd.f32 %v6235, %v6373
  %6375 = vmatmul.bf16.gmra.mxu0 %v1018
  %v6376 = vpop.f32.mrf.mxu0
  %v6377 = vadd.f32 %v6238, %v6376
  %v6378 = vpop.f32.mrf.mxu0
  %v6379 = vadd.f32 %v6240, %v6378
  %6380 = vmatmul.bf16.gmra.mxu0 %v1024
  %v6381 = vpop.f32.mrf.mxu0
  %v6382 = vadd.f32 %v6243, %v6381
  %v6383 = vpop.f32.mrf.mxu0
  %v6384 = vadd.f32 %v6245, %v6383
  %6385 = vmatmul.bf16.gmra.mxu0 %v1030
  %v6386 = vpop.f32.mrf.mxu0
  %v6387 = vadd.f32 %v6248, %v6386
  %v6388 = vpop.f32.mrf.mxu0
  %v6389 = vadd.f32 %v6250, %v6388
  %6390 = vmatmul.bf16.gmra.mxu0 %v1036
  %v6391 = vpop.f32.mrf.mxu0
  %v6392 = vadd.f32 %v6253, %v6391
  %v6393 = vpop.f32.mrf.mxu0
  %v6394 = vadd.f32 %v6255, %v6393
  %6395 = vmatmul.bf16.gmra.mxu0 %v1042
  %v6396 = vpop.f32.mrf.mxu0
  %v6397 = vadd.f32 %v6258, %v6396
  %v6398 = vpop.f32.mrf.mxu0
  %v6399 = vadd.f32 %v6260, %v6398
  %6400 = vmatmul.bf16.gmra.mxu0 %v1048
  %v6401 = vpop.f32.mrf.mxu0
  %v6402 = vadd.f32 %v6263, %v6401
  %v6403 = vpop.f32.mrf.mxu0
  %v6404 = vadd.f32 %v6265, %v6403
  %6405 = vmatmul.bf16.gmra.mxu0 %v1054
  %v6406 = vpop.f32.mrf.mxu0
  %v6407 = vadd.f32 %v6268, %v6406
  %v6408 = vpop.f32.mrf.mxu0
  %v6409 = vadd.f32 %v6270, %v6408
  %6410 = vmatmul.bf16.gmra.mxu0 %v1060
  %v6411 = vpop.f32.mrf.mxu0
  %v6412 = vadd.f32 %v6273, %v6411
  %v6413 = vpop.f32.mrf.mxu0
  %v6414 = vadd.f32 %v6275, %v6413
  %6415 = vmatmul.bf16.gmra.mxu0 %v1066
  %v6416 = vpop.f32.mrf.mxu0
  %v6417 = vadd.f32 %v6278, %v6416
  %v6418 = vpop.f32.mrf.mxu0
  %v6419 = vadd.f32 %v6280, %v6418
  %6420 = vmatmul.bf16.gmra.mxu0 %v1072
  %v6421 = vpop.f32.mrf.mxu0
  %v6422 = vadd.f32 %v6283, %v6421
  %v6423 = vpop.f32.mrf.mxu0
  %v6424 = vadd.f32 %v6285, %v6423
  %6425 = vmatmul.bf16.gmra.mxu0 %v1078
  %v6426 = vpop.f32.mrf.mxu0
  %v6427 = vadd.f32 %v6288, %v6426
  %v6428 = vpop.f32.mrf.mxu0
  %v6429 = vadd.f32 %v6290, %v6428
  %6430 = vdwg.mxu0
  %6431 = vmatpush.bf16.msra.mxu0 %v2292
  %6432 = vmatpush.bf16.msra.mxu0 %v2286
  %6433 = vmatpush.bf16.msra.mxu0 %v2280
  %6434 = vmatpush.bf16.msra.mxu0 %v2274
  %6435 = vmatpush.bf16.msra.mxu0 %v2268
  %6436 = vmatpush.bf16.msra.mxu0 %v2262
  %6437 = vmatpush.bf16.msra.mxu0 %v2256
  %6438 = vmatpush.bf16.msra.mxu0 %v2250
  %6439 = vmatmul.bf16.gmra.mxu0 %v929
  %v6440 = vpop.f32.mrf.mxu0
  %v6441 = vadd.f32 %v6302, %v6440
  %v6442 = vpop.f32.mrf.mxu0
  %v6443 = vadd.f32 %v6304, %v6442
  %6444 = vmatmul.bf16.gmra.mxu0 %v935
  %v6445 = vpop.f32.mrf.mxu0
  %v6446 = vadd.f32 %v6307, %v6445
  %v6447 = vpop.f32.mrf.mxu0
  %v6448 = vadd.f32 %v6309, %v6447
  %6449 = vmatmul.bf16.gmra.mxu0 %v941
  %v6450 = vpop.f32.mrf.mxu0
  %v6451 = vadd.f32 %v6312, %v6450
  %v6452 = vpop.f32.mrf.mxu0
  %v6453 = vadd.f32 %v6314, %v6452
  %6454 = vmatmul.bf16.gmra.mxu0 %v947
  %v6455 = vpop.f32.mrf.mxu0
  %v6456 = vadd.f32 %v6317, %v6455
  %v6457 = vpop.f32.mrf.mxu0
  %v6458 = vadd.f32 %v6319, %v6457
  %6459 = vmatmul.bf16.gmra.mxu0 %v953
  %v6460 = vpop.f32.mrf.mxu0
  %v6461 = vadd.f32 %v6322, %v6460
  %v6462 = vpop.f32.mrf.mxu0
  %v6463 = vadd.f32 %v6324, %v6462
  %6464 = vmatmul.bf16.gmra.mxu0 %v959
  %v6465 = vpop.f32.mrf.mxu0
  %v6466 = vadd.f32 %v6327, %v6465
  %v6467 = vpop.f32.mrf.mxu0
  %v6468 = vadd.f32 %v6329, %v6467
  %6469 = vmatmul.bf16.gmra.mxu0 %v965
  %v6470 = vpop.f32.mrf.mxu0
  %v6471 = vadd.f32 %v6332, %v6470
  %v6472 = vpop.f32.mrf.mxu0
  %v6473 = vadd.f32 %v6334, %v6472
  %6474 = vmatmul.bf16.gmra.mxu0 %v971
  %v6475 = vpop.f32.mrf.mxu0
  %v6476 = vadd.f32 %v6337, %v6475
  %v6477 = vpop.f32.mrf.mxu0
  %v6478 = vadd.f32 %v6339, %v6477
  %6479 = vmatmul.bf16.gmra.mxu0 %v977
  %v6480 = vpop.f32.mrf.mxu0
  %v6481 = vadd.f32 %v6342, %v6480
  %v6482 = vpop.f32.mrf.mxu0
  %v6483 = vadd.f32 %v6344, %v6482
  %6484 = vmatmul.bf16.gmra.mxu0 %v983
  %v6485 = vpop.f32.mrf.mxu0
  %v6486 = vadd.f32 %v6347, %v6485
  %v6487 = vpop.f32.mrf.mxu0
  %v6488 = vadd.f32 %v6349, %v6487
  %6489 = vmatmul.bf16.gmra.mxu0 %v989
  %v6490 = vpop.f32.mrf.mxu0
  %v6491 = vadd.f32 %v6352, %v6490
  %v6492 = vpop.f32.mrf.mxu0
  %v6493 = vadd.f32 %v6354, %v6492
  %6494 = vmatmul.bf16.gmra.mxu0 %v995
  %v6495 = vpop.f32.mrf.mxu0
  %v6496 = vadd.f32 %v6357, %v6495
  %v6497 = vpop.f32.mrf.mxu0
  %v6498 = vadd.f32 %v6359, %v6497
  %6499 = vmatmul.bf16.gmra.mxu0 %v1001
  %v6500 = vpop.f32.mrf.mxu0
  %v6501 = vadd.f32 %v6362, %v6500
  %v6502 = vpop.f32.mrf.mxu0
  %v6503 = vadd.f32 %v6364, %v6502
  %6504 = vmatmul.bf16.gmra.mxu0 %v1007
  %v6505 = vpop.f32.mrf.mxu0
  %v6506 = vadd.f32 %v6367, %v6505
  %v6507 = vpop.f32.mrf.mxu0
  %v6508 = vadd.f32 %v6369, %v6507
  %6509 = vmatmul.bf16.gmra.mxu0 %v1013
  %v6510 = vpop.f32.mrf.mxu0
  %v6511 = vadd.f32 %v6372, %v6510
  %v6512 = vpop.f32.mrf.mxu0
  %v6513 = vadd.f32 %v6374, %v6512
  %6514 = vmatmul.bf16.gmra.mxu0 %v1019
  %v6515 = vpop.f32.mrf.mxu0
  %v6516 = vadd.f32 %v6377, %v6515
  %v6517 = vpop.f32.mrf.mxu0
  %v6518 = vadd.f32 %v6379, %v6517
  %6519 = vmatmul.bf16.gmra.mxu0 %v1025
  %v6520 = vpop.f32.mrf.mxu0
  %v6521 = vadd.f32 %v6382, %v6520
  %v6522 = vpop.f32.mrf.mxu0
  %v6523 = vadd.f32 %v6384, %v6522
  %6524 = vmatmul.bf16.gmra.mxu0 %v1031
  %v6525 = vpop.f32.mrf.mxu0
  %v6526 = vadd.f32 %v6387, %v6525
  %v6527 = vpop.f32.mrf.mxu0
  %v6528 = vadd.f32 %v6389, %v6527
  %6529 = vmatmul.bf16.gmra.mxu0 %v1037
  %v6530 = vpop.f32.mrf.mxu0
  %v6531 = vadd.f32 %v6392, %v6530
  %v6532 = vpop.f32.mrf.mxu0
  %v6533 = vadd.f32 %v6394, %v6532
  %6534 = vmatmul.bf16.gmra.mxu0 %v1043
  %v6535 = vpop.f32.mrf.mxu0
  %v6536 = vadd.f32 %v6397, %v6535
  %v6537 = vpop.f32.mrf.mxu0
  %v6538 = vadd.f32 %v6399, %v6537
  %6539 = vmatmul.bf16.gmra.mxu0 %v1049
  %v6540 = vpop.f32.mrf.mxu0
  %v6541 = vadd.f32 %v6402, %v6540
  %v6542 = vpop.f32.mrf.mxu0
  %v6543 = vadd.f32 %v6404, %v6542
  %6544 = vmatmul.bf16.gmra.mxu0 %v1055
  %v6545 = vpop.f32.mrf.mxu0
  %v6546 = vadd.f32 %v6407, %v6545
  %v6547 = vpop.f32.mrf.mxu0
  %v6548 = vadd.f32 %v6409, %v6547
  %6549 = vmatmul.bf16.gmra.mxu0 %v1061
  %v6550 = vpop.f32.mrf.mxu0
  %v6551 = vadd.f32 %v6412, %v6550
  %v6552 = vpop.f32.mrf.mxu0
  %v6553 = vadd.f32 %v6414, %v6552
  %6554 = vmatmul.bf16.gmra.mxu0 %v1067
  %v6555 = vpop.f32.mrf.mxu0
  %v6556 = vadd.f32 %v6417, %v6555
  %v6557 = vpop.f32.mrf.mxu0
  %v6558 = vadd.f32 %v6419, %v6557
  %6559 = vmatmul.bf16.gmra.mxu0 %v1073
  %v6560 = vpop.f32.mrf.mxu0
  %v6561 = vadd.f32 %v6422, %v6560
  %v6562 = vpop.f32.mrf.mxu0
  %v6563 = vadd.f32 %v6424, %v6562
  %6564 = vmatmul.bf16.gmra.mxu0 %v1079
  %v6565 = vpop.f32.mrf.mxu0
  %v6566 = vadd.f32 %v6427, %v6565
  %v6567 = vpop.f32.mrf.mxu0
  %v6568 = vadd.f32 %v6429, %v6567
  %6569 = vdwg.mxu0
  %6570 = vmatpush.bf16.msra.mxu0 %v2340
  %6571 = vmatpush.bf16.msra.mxu0 %v2334
  %6572 = vmatpush.bf16.msra.mxu0 %v2328
  %6573 = vmatpush.bf16.msra.mxu0 %v2322
  %6574 = vmatpush.bf16.msra.mxu0 %v2316
  %6575 = vmatpush.bf16.msra.mxu0 %v2310
  %6576 = vmatpush.bf16.msra.mxu0 %v2304
  %6577 = vmatpush.bf16.msra.mxu0 %v2298
  %6578 = vmatmul.bf16.gmra.mxu0 %v930
  %v6579 = vpop.f32.mrf.mxu0
  %v6580 = vadd.f32 %v6441, %v6579
  %v6581 = vpop.f32.mrf.mxu0
  %v6582 = vadd.f32 %v6443, %v6581
  %6583 = vmatmul.bf16.gmra.mxu0 %v936
  %v6584 = vpop.f32.mrf.mxu0
  %v6585 = vadd.f32 %v6446, %v6584
  %v6586 = vpop.f32.mrf.mxu0
  %v6587 = vadd.f32 %v6448, %v6586
  %6588 = vmatmul.bf16.gmra.mxu0 %v942
  %v6589 = vpop.f32.mrf.mxu0
  %v6590 = vadd.f32 %v6451, %v6589
  %v6591 = vpop.f32.mrf.mxu0
  %v6592 = vadd.f32 %v6453, %v6591
  %6593 = vmatmul.bf16.gmra.mxu0 %v948
  %v6594 = vpop.f32.mrf.mxu0
  %v6595 = vadd.f32 %v6456, %v6594
  %v6596 = vpop.f32.mrf.mxu0
  %v6597 = vadd.f32 %v6458, %v6596
  %6598 = vmatmul.bf16.gmra.mxu0 %v954
  %v6599 = vpop.f32.mrf.mxu0
  %v6600 = vadd.f32 %v6461, %v6599
  %v6601 = vpop.f32.mrf.mxu0
  %v6602 = vadd.f32 %v6463, %v6601
  %6603 = vmatmul.bf16.gmra.mxu0 %v960
  %v6604 = vpop.f32.mrf.mxu0
  %v6605 = vadd.f32 %v6466, %v6604
  %v6606 = vpop.f32.mrf.mxu0
  %v6607 = vadd.f32 %v6468, %v6606
  %6608 = vmatmul.bf16.gmra.mxu0 %v966
  %v6609 = vpop.f32.mrf.mxu0
  %v6610 = vadd.f32 %v6471, %v6609
  %v6611 = vpop.f32.mrf.mxu0
  %v6612 = vadd.f32 %v6473, %v6611
  %6613 = vmatmul.bf16.gmra.mxu0 %v972
  %v6614 = vpop.f32.mrf.mxu0
  %v6615 = vadd.f32 %v6476, %v6614
  %v6616 = vpop.f32.mrf.mxu0
  %v6617 = vadd.f32 %v6478, %v6616
  %6618 = vmatmul.bf16.gmra.mxu0 %v978
  %v6619 = vpop.f32.mrf.mxu0
  %v6620 = vadd.f32 %v6481, %v6619
  %v6621 = vpop.f32.mrf.mxu0
  %v6622 = vadd.f32 %v6483, %v6621
  %6623 = vmatmul.bf16.gmra.mxu0 %v984
  %v6624 = vpop.f32.mrf.mxu0
  %v6625 = vadd.f32 %v6486, %v6624
  %v6626 = vpop.f32.mrf.mxu0
  %v6627 = vadd.f32 %v6488, %v6626
  %6628 = vmatmul.bf16.gmra.mxu0 %v990
  %v6629 = vpop.f32.mrf.mxu0
  %v6630 = vadd.f32 %v6491, %v6629
  %v6631 = vpop.f32.mrf.mxu0
  %v6632 = vadd.f32 %v6493, %v6631
  %6633 = vmatmul.bf16.gmra.mxu0 %v996
  %v6634 = vpop.f32.mrf.mxu0
  %v6635 = vadd.f32 %v6496, %v6634
  %v6636 = vpop.f32.mrf.mxu0
  %v6637 = vadd.f32 %v6498, %v6636
  %6638 = vmatmul.bf16.gmra.mxu0 %v1002
  %v6639 = vpop.f32.mrf.mxu0
  %v6640 = vadd.f32 %v6501, %v6639
  %v6641 = vpop.f32.mrf.mxu0
  %v6642 = vadd.f32 %v6503, %v6641
  %6643 = vmatmul.bf16.gmra.mxu0 %v1008
  %v6644 = vpop.f32.mrf.mxu0
  %v6645 = vadd.f32 %v6506, %v6644
  %v6646 = vpop.f32.mrf.mxu0
  %v6647 = vadd.f32 %v6508, %v6646
  %6648 = vmatmul.bf16.gmra.mxu0 %v1014
  %v6649 = vpop.f32.mrf.mxu0
  %v6650 = vadd.f32 %v6511, %v6649
  %v6651 = vpop.f32.mrf.mxu0
  %v6652 = vadd.f32 %v6513, %v6651
  %6653 = vmatmul.bf16.gmra.mxu0 %v1020
  %v6654 = vpop.f32.mrf.mxu0
  %v6655 = vadd.f32 %v6516, %v6654
  %v6656 = vpop.f32.mrf.mxu0
  %v6657 = vadd.f32 %v6518, %v6656
  %6658 = vmatmul.bf16.gmra.mxu0 %v1026
  %v6659 = vpop.f32.mrf.mxu0
  %v6660 = vadd.f32 %v6521, %v6659
  %v6661 = vpop.f32.mrf.mxu0
  %v6662 = vadd.f32 %v6523, %v6661
  %6663 = vmatmul.bf16.gmra.mxu0 %v1032
  %v6664 = vpop.f32.mrf.mxu0
  %v6665 = vadd.f32 %v6526, %v6664
  %v6666 = vpop.f32.mrf.mxu0
  %v6667 = vadd.f32 %v6528, %v6666
  %6668 = vmatmul.bf16.gmra.mxu0 %v1038
  %v6669 = vpop.f32.mrf.mxu0
  %v6670 = vadd.f32 %v6531, %v6669
  %v6671 = vpop.f32.mrf.mxu0
  %v6672 = vadd.f32 %v6533, %v6671
  %6673 = vmatmul.bf16.gmra.mxu0 %v1044
  %v6674 = vpop.f32.mrf.mxu0
  %v6675 = vadd.f32 %v6536, %v6674
  %v6676 = vpop.f32.mrf.mxu0
  %v6677 = vadd.f32 %v6538, %v6676
  %6678 = vmatmul.bf16.gmra.mxu0 %v1050
  %v6679 = vpop.f32.mrf.mxu0
  %v6680 = vadd.f32 %v6541, %v6679
  %v6681 = vpop.f32.mrf.mxu0
  %v6682 = vadd.f32 %v6543, %v6681
  %6683 = vmatmul.bf16.gmra.mxu0 %v1056
  %v6684 = vpop.f32.mrf.mxu0
  %v6685 = vadd.f32 %v6546, %v6684
  %v6686 = vpop.f32.mrf.mxu0
  %v6687 = vadd.f32 %v6548, %v6686
  %6688 = vmatmul.bf16.gmra.mxu0 %v1062
  %v6689 = vpop.f32.mrf.mxu0
  %v6690 = vadd.f32 %v6551, %v6689
  %v6691 = vpop.f32.mrf.mxu0
  %v6692 = vadd.f32 %v6553, %v6691
  %6693 = vmatmul.bf16.gmra.mxu0 %v1068
  %v6694 = vpop.f32.mrf.mxu0
  %v6695 = vadd.f32 %v6556, %v6694
  %v6696 = vpop.f32.mrf.mxu0
  %v6697 = vadd.f32 %v6558, %v6696
  %6698 = vmatmul.bf16.gmra.mxu0 %v1074
  %v6699 = vpop.f32.mrf.mxu0
  %v6700 = vadd.f32 %v6561, %v6699
  %v6701 = vpop.f32.mrf.mxu0
  %v6702 = vadd.f32 %v6563, %v6701
  %6703 = vmatmul.bf16.gmra.mxu0 %v1080
  %v6704 = vpop.f32.mrf.mxu0
  %v6705 = vadd.f32 %v6566, %v6704
  %v6706 = vpop.f32.mrf.mxu0
  %v6707 = vadd.f32 %v6568, %v6706
  %6708 = vdwg.mxu0
  %6709 = vmatpush.bf16.msra.mxu0 %v2388
  %6710 = vmatpush.bf16.msra.mxu0 %v2382
  %6711 = vmatpush.bf16.msra.mxu0 %v2376
  %6712 = vmatpush.bf16.msra.mxu0 %v2370
  %6713 = vmatpush.bf16.msra.mxu0 %v2364
  %6714 = vmatpush.bf16.msra.mxu0 %v2358
  %6715 = vmatpush.bf16.msra.mxu0 %v2352
  %6716 = vmatpush.bf16.msra.mxu0 %v2346
  %6717 = vmatmul.bf16.gmra.mxu0 %v931
  %v6718 = vpop.f32.mrf.mxu0
  %v6719 = vadd.f32 %v6580, %v6718
  %v6720 = vpop.f32.mrf.mxu0
  %v6721 = vadd.f32 %v6582, %v6720
  %6722 = vmatmul.bf16.gmra.mxu0 %v937
  %v6723 = vpop.f32.mrf.mxu0
  %v6724 = vadd.f32 %v6585, %v6723
  %v6725 = vpop.f32.mrf.mxu0
  %v6726 = vadd.f32 %v6587, %v6725
  %6727 = vmatmul.bf16.gmra.mxu0 %v943
  %v6728 = vpop.f32.mrf.mxu0
  %v6729 = vadd.f32 %v6590, %v6728
  %v6730 = vpop.f32.mrf.mxu0
  %v6731 = vadd.f32 %v6592, %v6730
  %6732 = vmatmul.bf16.gmra.mxu0 %v949
  %v6733 = vpop.f32.mrf.mxu0
  %v6734 = vadd.f32 %v6595, %v6733
  %v6735 = vpop.f32.mrf.mxu0
  %v6736 = vadd.f32 %v6597, %v6735
  %6737 = vmatmul.bf16.gmra.mxu0 %v955
  %v6738 = vpop.f32.mrf.mxu0
  %v6739 = vadd.f32 %v6600, %v6738
  %v6740 = vpop.f32.mrf.mxu0
  %v6741 = vadd.f32 %v6602, %v6740
  %6742 = vmatmul.bf16.gmra.mxu0 %v961
  %v6743 = vpop.f32.mrf.mxu0
  %v6744 = vadd.f32 %v6605, %v6743
  %v6745 = vpop.f32.mrf.mxu0
  %v6746 = vadd.f32 %v6607, %v6745
  %6747 = vmatmul.bf16.gmra.mxu0 %v967
  %v6748 = vpop.f32.mrf.mxu0
  %v6749 = vadd.f32 %v6610, %v6748
  %v6750 = vpop.f32.mrf.mxu0
  %v6751 = vadd.f32 %v6612, %v6750
  %6752 = vmatmul.bf16.gmra.mxu0 %v973
  %v6753 = vpop.f32.mrf.mxu0
  %v6754 = vadd.f32 %v6615, %v6753
  %v6755 = vpop.f32.mrf.mxu0
  %v6756 = vadd.f32 %v6617, %v6755
  %6757 = vmatmul.bf16.gmra.mxu0 %v979
  %v6758 = vpop.f32.mrf.mxu0
  %v6759 = vadd.f32 %v6620, %v6758
  %v6760 = vpop.f32.mrf.mxu0
  %v6761 = vadd.f32 %v6622, %v6760
  %6762 = vmatmul.bf16.gmra.mxu0 %v985
  %v6763 = vpop.f32.mrf.mxu0
  %v6764 = vadd.f32 %v6625, %v6763
  %v6765 = vpop.f32.mrf.mxu0
  %v6766 = vadd.f32 %v6627, %v6765
  %6767 = vmatmul.bf16.gmra.mxu0 %v991
  %v6768 = vpop.f32.mrf.mxu0
  %v6769 = vadd.f32 %v6630, %v6768
  %v6770 = vpop.f32.mrf.mxu0
  %v6771 = vadd.f32 %v6632, %v6770
  %6772 = vmatmul.bf16.gmra.mxu0 %v997
  %v6773 = vpop.f32.mrf.mxu0
  %v6774 = vadd.f32 %v6635, %v6773
  %v6775 = vpop.f32.mrf.mxu0
  %v6776 = vadd.f32 %v6637, %v6775
  %6777 = vmatmul.bf16.gmra.mxu0 %v1003
  %v6778 = vpop.f32.mrf.mxu0
  %v6779 = vadd.f32 %v6640, %v6778
  %v6780 = vpop.f32.mrf.mxu0
  %v6781 = vadd.f32 %v6642, %v6780
  %6782 = vmatmul.bf16.gmra.mxu0 %v1009
  %v6783 = vpop.f32.mrf.mxu0
  %v6784 = vadd.f32 %v6645, %v6783
  %v6785 = vpop.f32.mrf.mxu0
  %v6786 = vadd.f32 %v6647, %v6785
  %6787 = vmatmul.bf16.gmra.mxu0 %v1015
  %v6788 = vpop.f32.mrf.mxu0
  %v6789 = vadd.f32 %v6650, %v6788
  %v6790 = vpop.f32.mrf.mxu0
  %v6791 = vadd.f32 %v6652, %v6790
  %6792 = vmatmul.bf16.gmra.mxu0 %v1021
  %v6793 = vpop.f32.mrf.mxu0
  %v6794 = vadd.f32 %v6655, %v6793
  %v6795 = vpop.f32.mrf.mxu0
  %v6796 = vadd.f32 %v6657, %v6795
  %6797 = vmatmul.bf16.gmra.mxu0 %v1027
  %v6798 = vpop.f32.mrf.mxu0
  %v6799 = vadd.f32 %v6660, %v6798
  %v6800 = vpop.f32.mrf.mxu0
  %v6801 = vadd.f32 %v6662, %v6800
  %6802 = vmatmul.bf16.gmra.mxu0 %v1033
  %v6803 = vpop.f32.mrf.mxu0
  %v6804 = vadd.f32 %v6665, %v6803
  %v6805 = vpop.f32.mrf.mxu0
  %v6806 = vadd.f32 %v6667, %v6805
  %6807 = vmatmul.bf16.gmra.mxu0 %v1039
  %v6808 = vpop.f32.mrf.mxu0
  %v6809 = vadd.f32 %v6670, %v6808
  %v6810 = vpop.f32.mrf.mxu0
  %v6811 = vadd.f32 %v6672, %v6810
  %6812 = vmatmul.bf16.gmra.mxu0 %v1045
  %v6813 = vpop.f32.mrf.mxu0
  %v6814 = vadd.f32 %v6675, %v6813
  %v6815 = vpop.f32.mrf.mxu0
  %v6816 = vadd.f32 %v6677, %v6815
  %6817 = vmatmul.bf16.gmra.mxu0 %v1051
  %v6818 = vpop.f32.mrf.mxu0
  %v6819 = vadd.f32 %v6680, %v6818
  %v6820 = vpop.f32.mrf.mxu0
  %v6821 = vadd.f32 %v6682, %v6820
  %6822 = vmatmul.bf16.gmra.mxu0 %v1057
  %v6823 = vpop.f32.mrf.mxu0
  %v6824 = vadd.f32 %v6685, %v6823
  %v6825 = vpop.f32.mrf.mxu0
  %v6826 = vadd.f32 %v6687, %v6825
  %6827 = vmatmul.bf16.gmra.mxu0 %v1063
  %v6828 = vpop.f32.mrf.mxu0
  %v6829 = vadd.f32 %v6690, %v6828
  %v6830 = vpop.f32.mrf.mxu0
  %v6831 = vadd.f32 %v6692, %v6830
  %6832 = vmatmul.bf16.gmra.mxu0 %v1069
  %v6833 = vpop.f32.mrf.mxu0
  %v6834 = vadd.f32 %v6695, %v6833
  %v6835 = vpop.f32.mrf.mxu0
  %v6836 = vadd.f32 %v6697, %v6835
  %6837 = vmatmul.bf16.gmra.mxu0 %v1075
  %v6838 = vpop.f32.mrf.mxu0
  %v6839 = vadd.f32 %v6700, %v6838
  %v6840 = vpop.f32.mrf.mxu0
  %v6841 = vadd.f32 %v6702, %v6840
  %6842 = vmatmul.bf16.gmra.mxu0 %v1081
  %v6843 = vpop.f32.mrf.mxu0
  %v6844 = vadd.f32 %v6705, %v6843
  %v6845 = vpop.f32.mrf.mxu0
  %v6846 = vadd.f32 %v6707, %v6845
  %6847 = vdwg.mxu0
  %6848 = vmatpush.bf16.msra.mxu0 %v2149
  %6849 = vmatpush.bf16.msra.mxu0 %v2143
  %6850 = vmatpush.bf16.msra.mxu0 %v2137
  %6851 = vmatpush.bf16.msra.mxu0 %v2131
  %6852 = vmatpush.bf16.msra.mxu0 %v2125
  %6853 = vmatpush.bf16.msra.mxu0 %v2119
  %6854 = vmatpush.bf16.msra.mxu0 %v2113
  %6855 = vmatpush.bf16.msra.mxu0 %v2107
  %6856 = vmatmul.bf16.gmra.mxu0 %v926
  %v6857 = vpop.f32.mrf.mxu0
  %v6858 = vadd.f32 0.0, %v6857
  %v6859 = vpop.f32.mrf.mxu0
  %v6860 = vadd.f32 0.0, %v6859
  %6861 = vmatmul.bf16.gmra.mxu0 %v932
  %v6862 = vpop.f32.mrf.mxu0
  %v6863 = vadd.f32 0.0, %v6862
  %v6864 = vpop.f32.mrf.mxu0
  %v6865 = vadd.f32 0.0, %v6864
  %6866 = vmatmul.bf16.gmra.mxu0 %v938
  %v6867 = vpop.f32.mrf.mxu0
  %v6868 = vadd.f32 0.0, %v6867
  %v6869 = vpop.f32.mrf.mxu0
  %v6870 = vadd.f32 0.0, %v6869
  %6871 = vmatmul.bf16.gmra.mxu0 %v944
  %v6872 = vpop.f32.mrf.mxu0
  %v6873 = vadd.f32 0.0, %v6872
  %v6874 = vpop.f32.mrf.mxu0
  %v6875 = vadd.f32 0.0, %v6874
  %6876 = vmatmul.bf16.gmra.mxu0 %v950
  %v6877 = vpop.f32.mrf.mxu0
  %v6878 = vadd.f32 0.0, %v6877
  %v6879 = vpop.f32.mrf.mxu0
  %v6880 = vadd.f32 0.0, %v6879
  %6881 = vmatmul.bf16.gmra.mxu0 %v956
  %v6882 = vpop.f32.mrf.mxu0
  %v6883 = vadd.f32 0.0, %v6882
  %v6884 = vpop.f32.mrf.mxu0
  %v6885 = vadd.f32 0.0, %v6884
  %6886 = vmatmul.bf16.gmra.mxu0 %v962
  %v6887 = vpop.f32.mrf.mxu0
  %v6888 = vadd.f32 0.0, %v6887
  %v6889 = vpop.f32.mrf.mxu0
  %v6890 = vadd.f32 0.0, %v6889
  %6891 = vmatmul.bf16.gmra.mxu0 %v968
  %v6892 = vpop.f32.mrf.mxu0
  %v6893 = vadd.f32 0.0, %v6892
  %v6894 = vpop.f32.mrf.mxu0
  %v6895 = vadd.f32 0.0, %v6894
  %6896 = vmatmul.bf16.gmra.mxu0 %v974
  %v6897 = vpop.f32.mrf.mxu0
  %v6898 = vadd.f32 0.0, %v6897
  %v6899 = vpop.f32.mrf.mxu0
  %v6900 = vadd.f32 0.0, %v6899
  %6901 = vmatmul.bf16.gmra.mxu0 %v980
  %v6902 = vpop.f32.mrf.mxu0
  %v6903 = vadd.f32 0.0, %v6902
  %v6904 = vpop.f32.mrf.mxu0
  %v6905 = vadd.f32 0.0, %v6904
  %6906 = vmatmul.bf16.gmra.mxu0 %v986
  %v6907 = vpop.f32.mrf.mxu0
  %v6908 = vadd.f32 0.0, %v6907
  %v6909 = vpop.f32.mrf.mxu0
  %v6910 = vadd.f32 0.0, %v6909
  %6911 = vmatmul.bf16.gmra.mxu0 %v992
  %v6912 = vpop.f32.mrf.mxu0
  %v6913 = vadd.f32 0.0, %v6912
  %v6914 = vpop.f32.mrf.mxu0
  %v6915 = vadd.f32 0.0, %v6914
  %6916 = vmatmul.bf16.gmra.mxu0 %v998
  %v6917 = vpop.f32.mrf.mxu0
  %v6918 = vadd.f32 0.0, %v6917
  %v6919 = vpop.f32.mrf.mxu0
  %v6920 = vadd.f32 0.0, %v6919
  %6921 = vmatmul.bf16.gmra.mxu0 %v1004
  %v6922 = vpop.f32.mrf.mxu0
  %v6923 = vadd.f32 0.0, %v6922
  %v6924 = vpop.f32.mrf.mxu0
  %v6925 = vadd.f32 0.0, %v6924
  %6926 = vmatmul.bf16.gmra.mxu0 %v1010
  %v6927 = vpop.f32.mrf.mxu0
  %v6928 = vadd.f32 0.0, %v6927
  %v6929 = vpop.f32.mrf.mxu0
  %v6930 = vadd.f32 0.0, %v6929
  %6931 = vmatmul.bf16.gmra.mxu0 %v1016
  %v6932 = vpop.f32.mrf.mxu0
  %v6933 = vadd.f32 0.0, %v6932
  %v6934 = vpop.f32.mrf.mxu0
  %v6935 = vadd.f32 0.0, %v6934
  %6936 = vmatmul.bf16.gmra.mxu0 %v1022
  %v6937 = vpop.f32.mrf.mxu0
  %v6938 = vadd.f32 0.0, %v6937
  %v6939 = vpop.f32.mrf.mxu0
  %v6940 = vadd.f32 0.0, %v6939
  %6941 = vmatmul.bf16.gmra.mxu0 %v1028
  %v6942 = vpop.f32.mrf.mxu0
  %v6943 = vadd.f32 0.0, %v6942
  %v6944 = vpop.f32.mrf.mxu0
  %v6945 = vadd.f32 0.0, %v6944
  %6946 = vmatmul.bf16.gmra.mxu0 %v1034
  %v6947 = vpop.f32.mrf.mxu0
  %v6948 = vadd.f32 0.0, %v6947
  %v6949 = vpop.f32.mrf.mxu0
  %v6950 = vadd.f32 0.0, %v6949
  %6951 = vmatmul.bf16.gmra.mxu0 %v1040
  %v6952 = vpop.f32.mrf.mxu0
  %v6953 = vadd.f32 0.0, %v6952
  %v6954 = vpop.f32.mrf.mxu0
  %v6955 = vadd.f32 0.0, %v6954
  %6956 = vmatmul.bf16.gmra.mxu0 %v1046
  %v6957 = vpop.f32.mrf.mxu0
  %v6958 = vadd.f32 0.0, %v6957
  %v6959 = vpop.f32.mrf.mxu0
  %v6960 = vadd.f32 0.0, %v6959
  %6961 = vmatmul.bf16.gmra.mxu0 %v1052
  %v6962 = vpop.f32.mrf.mxu0
  %v6963 = vadd.f32 0.0, %v6962
  %v6964 = vpop.f32.mrf.mxu0
  %v6965 = vadd.f32 0.0, %v6964
  %6966 = vmatmul.bf16.gmra.mxu0 %v1058
  %v6967 = vpop.f32.mrf.mxu0
  %v6968 = vadd.f32 0.0, %v6967
  %v6969 = vpop.f32.mrf.mxu0
  %v6970 = vadd.f32 0.0, %v6969
  %6971 = vmatmul.bf16.gmra.mxu0 %v1064
  %v6972 = vpop.f32.mrf.mxu0
  %v6973 = vadd.f32 0.0, %v6972
  %v6974 = vpop.f32.mrf.mxu0
  %v6975 = vadd.f32 0.0, %v6974
  %6976 = vmatmul.bf16.gmra.mxu0 %v1070
  %v6977 = vpop.f32.mrf.mxu0
  %v6978 = vadd.f32 0.0, %v6977
  %v6979 = vpop.f32.mrf.mxu0
  %v6980 = vadd.f32 0.0, %v6979
  %6981 = vmatmul.bf16.gmra.mxu0 %v1076
  %v6982 = vpop.f32.mrf.mxu0
  %v6983 = vadd.f32 0.0, %v6982
  %v6984 = vpop.f32.mrf.mxu0
  %v6985 = vadd.f32 0.0, %v6984
  %6986 = vdwg.mxu0
  %6987 = vmatpush.bf16.msra.mxu0 %v2197
  %6988 = vmatpush.bf16.msra.mxu0 %v2191
  %6989 = vmatpush.bf16.msra.mxu0 %v2185
  %6990 = vmatpush.bf16.msra.mxu0 %v2179
  %6991 = vmatpush.bf16.msra.mxu0 %v2173
  %6992 = vmatpush.bf16.msra.mxu0 %v2167
  %6993 = vmatpush.bf16.msra.mxu0 %v2161
  %6994 = vmatpush.bf16.msra.mxu0 %v2155
  %6995 = vmatmul.bf16.gmra.mxu0 %v927
  %v6996 = vpop.f32.mrf.mxu0
  %v6997 = vadd.f32 %v6858, %v6996
  %v6998 = vpop.f32.mrf.mxu0
  %v6999 = vadd.f32 %v6860, %v6998
  %7000 = vmatmul.bf16.gmra.mxu0 %v933
  %v7001 = vpop.f32.mrf.mxu0
  %v7002 = vadd.f32 %v6863, %v7001
  %v7003 = vpop.f32.mrf.mxu0
  %v7004 = vadd.f32 %v6865, %v7003
  %7005 = vmatmul.bf16.gmra.mxu0 %v939
  %v7006 = vpop.f32.mrf.mxu0
  %v7007 = vadd.f32 %v6868, %v7006
  %v7008 = vpop.f32.mrf.mxu0
  %v7009 = vadd.f32 %v6870, %v7008
  %7010 = vmatmul.bf16.gmra.mxu0 %v945
  %v7011 = vpop.f32.mrf.mxu0
  %v7012 = vadd.f32 %v6873, %v7011
  %v7013 = vpop.f32.mrf.mxu0
  %v7014 = vadd.f32 %v6875, %v7013
  %7015 = vmatmul.bf16.gmra.mxu0 %v951
  %v7016 = vpop.f32.mrf.mxu0
  %v7017 = vadd.f32 %v6878, %v7016
  %v7018 = vpop.f32.mrf.mxu0
  %v7019 = vadd.f32 %v6880, %v7018
  %7020 = vmatmul.bf16.gmra.mxu0 %v957
  %v7021 = vpop.f32.mrf.mxu0
  %v7022 = vadd.f32 %v6883, %v7021
  %v7023 = vpop.f32.mrf.mxu0
  %v7024 = vadd.f32 %v6885, %v7023
  %7025 = vmatmul.bf16.gmra.mxu0 %v963
  %v7026 = vpop.f32.mrf.mxu0
  %v7027 = vadd.f32 %v6888, %v7026
  %v7028 = vpop.f32.mrf.mxu0
  %v7029 = vadd.f32 %v6890, %v7028
  %7030 = vmatmul.bf16.gmra.mxu0 %v969
  %v7031 = vpop.f32.mrf.mxu0
  %v7032 = vadd.f32 %v6893, %v7031
  %v7033 = vpop.f32.mrf.mxu0
  %v7034 = vadd.f32 %v6895, %v7033
  %7035 = vmatmul.bf16.gmra.mxu0 %v975
  %v7036 = vpop.f32.mrf.mxu0
  %v7037 = vadd.f32 %v6898, %v7036
  %v7038 = vpop.f32.mrf.mxu0
  %v7039 = vadd.f32 %v6900, %v7038
  %7040 = vmatmul.bf16.gmra.mxu0 %v981
  %v7041 = vpop.f32.mrf.mxu0
  %v7042 = vadd.f32 %v6903, %v7041
  %v7043 = vpop.f32.mrf.mxu0
  %v7044 = vadd.f32 %v6905, %v7043
  %7045 = vmatmul.bf16.gmra.mxu0 %v987
  %v7046 = vpop.f32.mrf.mxu0
  %v7047 = vadd.f32 %v6908, %v7046
  %v7048 = vpop.f32.mrf.mxu0
  %v7049 = vadd.f32 %v6910, %v7048
  %7050 = vmatmul.bf16.gmra.mxu0 %v993
  %v7051 = vpop.f32.mrf.mxu0
  %v7052 = vadd.f32 %v6913, %v7051
  %v7053 = vpop.f32.mrf.mxu0
  %v7054 = vadd.f32 %v6915, %v7053
  %7055 = vmatmul.bf16.gmra.mxu0 %v999
  %v7056 = vpop.f32.mrf.mxu0
  %v7057 = vadd.f32 %v6918, %v7056
  %v7058 = vpop.f32.mrf.mxu0
  %v7059 = vadd.f32 %v6920, %v7058
  %7060 = vmatmul.bf16.gmra.mxu0 %v1005
  %v7061 = vpop.f32.mrf.mxu0
  %v7062 = vadd.f32 %v6923, %v7061
  %v7063 = vpop.f32.mrf.mxu0
  %v7064 = vadd.f32 %v6925, %v7063
  %7065 = vmatmul.bf16.gmra.mxu0 %v1011
  %v7066 = vpop.f32.mrf.mxu0
  %v7067 = vadd.f32 %v6928, %v7066
  %v7068 = vpop.f32.mrf.mxu0
  %v7069 = vadd.f32 %v6930, %v7068
  %7070 = vmatmul.bf16.gmra.mxu0 %v1017
  %v7071 = vpop.f32.mrf.mxu0
  %v7072 = vadd.f32 %v6933, %v7071
  %v7073 = vpop.f32.mrf.mxu0
  %v7074 = vadd.f32 %v6935, %v7073
  %7075 = vmatmul.bf16.gmra.mxu0 %v1023
  %v7076 = vpop.f32.mrf.mxu0
  %v7077 = vadd.f32 %v6938, %v7076
  %v7078 = vpop.f32.mrf.mxu0
  %v7079 = vadd.f32 %v6940, %v7078
  %7080 = vmatmul.bf16.gmra.mxu0 %v1029
  %v7081 = vpop.f32.mrf.mxu0
  %v7082 = vadd.f32 %v6943, %v7081
  %v7083 = vpop.f32.mrf.mxu0
  %v7084 = vadd.f32 %v6945, %v7083
  %7085 = vmatmul.bf16.gmra.mxu0 %v1035
  %v7086 = vpop.f32.mrf.mxu0
  %v7087 = vadd.f32 %v6948, %v7086
  %v7088 = vpop.f32.mrf.mxu0
  %v7089 = vadd.f32 %v6950, %v7088
  %7090 = vmatmul.bf16.gmra.mxu0 %v1041
  %v7091 = vpop.f32.mrf.mxu0
  %v7092 = vadd.f32 %v6953, %v7091
  %v7093 = vpop.f32.mrf.mxu0
  %v7094 = vadd.f32 %v6955, %v7093
  %7095 = vmatmul.bf16.gmra.mxu0 %v1047
  %v7096 = vpop.f32.mrf.mxu0
  %v7097 = vadd.f32 %v6958, %v7096
  %v7098 = vpop.f32.mrf.mxu0
  %v7099 = vadd.f32 %v6960, %v7098
  %7100 = vmatmul.bf16.gmra.mxu0 %v1053
  %v7101 = vpop.f32.mrf.mxu0
  %v7102 = vadd.f32 %v6963, %v7101
  %v7103 = vpop.f32.mrf.mxu0
  %v7104 = vadd.f32 %v6965, %v7103
  %7105 = vmatmul.bf16.gmra.mxu0 %v1059
  %v7106 = vpop.f32.mrf.mxu0
  %v7107 = vadd.f32 %v6968, %v7106
  %v7108 = vpop.f32.mrf.mxu0
  %v7109 = vadd.f32 %v6970, %v7108
  %7110 = vmatmul.bf16.gmra.mxu0 %v1065
  %v7111 = vpop.f32.mrf.mxu0
  %v7112 = vadd.f32 %v6973, %v7111
  %v7113 = vpop.f32.mrf.mxu0
  %v7114 = vadd.f32 %v6975, %v7113
  %7115 = vmatmul.bf16.gmra.mxu0 %v1071
  %v7116 = vpop.f32.mrf.mxu0
  %v7117 = vadd.f32 %v6978, %v7116
  %v7118 = vpop.f32.mrf.mxu0
  %v7119 = vadd.f32 %v6980, %v7118
  %7120 = vmatmul.bf16.gmra.mxu0 %v1077
  %v7121 = vpop.f32.mrf.mxu0
  %v7122 = vadd.f32 %v6983, %v7121
  %v7123 = vpop.f32.mrf.mxu0
  %v7124 = vadd.f32 %v6985, %v7123
  %7125 = vdwg.mxu0
  %7126 = vmatpush.bf16.msra.mxu0 %v2245
  %7127 = vmatpush.bf16.msra.mxu0 %v2239
  %7128 = vmatpush.bf16.msra.mxu0 %v2233
  %7129 = vmatpush.bf16.msra.mxu0 %v2227
  %7130 = vmatpush.bf16.msra.mxu0 %v2221
  %7131 = vmatpush.bf16.msra.mxu0 %v2215
  %7132 = vmatpush.bf16.msra.mxu0 %v2209
  %7133 = vmatpush.bf16.msra.mxu0 %v2203
  %7134 = vmatmul.bf16.gmra.mxu0 %v928
  %v7135 = vpop.f32.mrf.mxu0
  %v7136 = vadd.f32 %v6997, %v7135
  %v7137 = vpop.f32.mrf.mxu0
  %v7138 = vadd.f32 %v6999, %v7137
  %7139 = vmatmul.bf16.gmra.mxu0 %v934
  %v7140 = vpop.f32.mrf.mxu0
  %v7141 = vadd.f32 %v7002, %v7140
  %v7142 = vpop.f32.mrf.mxu0
  %v7143 = vadd.f32 %v7004, %v7142
  %7144 = vmatmul.bf16.gmra.mxu0 %v940
  %v7145 = vpop.f32.mrf.mxu0
  %v7146 = vadd.f32 %v7007, %v7145
  %v7147 = vpop.f32.mrf.mxu0
  %v7148 = vadd.f32 %v7009, %v7147
  %7149 = vmatmul.bf16.gmra.mxu0 %v946
  %v7150 = vpop.f32.mrf.mxu0
  %v7151 = vadd.f32 %v7012, %v7150
  %v7152 = vpop.f32.mrf.mxu0
  %v7153 = vadd.f32 %v7014, %v7152
  %7154 = vmatmul.bf16.gmra.mxu0 %v952
  %v7155 = vpop.f32.mrf.mxu0
  %v7156 = vadd.f32 %v7017, %v7155
  %v7157 = vpop.f32.mrf.mxu0
  %v7158 = vadd.f32 %v7019, %v7157
  %7159 = vmatmul.bf16.gmra.mxu0 %v958
  %v7160 = vpop.f32.mrf.mxu0
  %v7161 = vadd.f32 %v7022, %v7160
  %v7162 = vpop.f32.mrf.mxu0
  %v7163 = vadd.f32 %v7024, %v7162
  %7164 = vmatmul.bf16.gmra.mxu0 %v964
  %v7165 = vpop.f32.mrf.mxu0
  %v7166 = vadd.f32 %v7027, %v7165
  %v7167 = vpop.f32.mrf.mxu0
  %v7168 = vadd.f32 %v7029, %v7167
  %7169 = vmatmul.bf16.gmra.mxu0 %v970
  %v7170 = vpop.f32.mrf.mxu0
  %v7171 = vadd.f32 %v7032, %v7170
  %v7172 = vpop.f32.mrf.mxu0
  %v7173 = vadd.f32 %v7034, %v7172
  %7174 = vmatmul.bf16.gmra.mxu0 %v976
  %v7175 = vpop.f32.mrf.mxu0
  %v7176 = vadd.f32 %v7037, %v7175
  %v7177 = vpop.f32.mrf.mxu0
  %v7178 = vadd.f32 %v7039, %v7177
  %7179 = vmatmul.bf16.gmra.mxu0 %v982
  %v7180 = vpop.f32.mrf.mxu0
  %v7181 = vadd.f32 %v7042, %v7180
  %v7182 = vpop.f32.mrf.mxu0
  %v7183 = vadd.f32 %v7044, %v7182
  %7184 = vmatmul.bf16.gmra.mxu0 %v988
  %v7185 = vpop.f32.mrf.mxu0
  %v7186 = vadd.f32 %v7047, %v7185
  %v7187 = vpop.f32.mrf.mxu0
  %v7188 = vadd.f32 %v7049, %v7187
  %7189 = vmatmul.bf16.gmra.mxu0 %v994
  %v7190 = vpop.f32.mrf.mxu0
  %v7191 = vadd.f32 %v7052, %v7190
  %v7192 = vpop.f32.mrf.mxu0
  %v7193 = vadd.f32 %v7054, %v7192
  %7194 = vmatmul.bf16.gmra.mxu0 %v1000
  %v7195 = vpop.f32.mrf.mxu0
  %v7196 = vadd.f32 %v7057, %v7195
  %v7197 = vpop.f32.mrf.mxu0
  %v7198 = vadd.f32 %v7059, %v7197
  %7199 = vmatmul.bf16.gmra.mxu0 %v1006
  %v7200 = vpop.f32.mrf.mxu0
  %v7201 = vadd.f32 %v7062, %v7200
  %v7202 = vpop.f32.mrf.mxu0
  %v7203 = vadd.f32 %v7064, %v7202
  %7204 = vmatmul.bf16.gmra.mxu0 %v1012
  %v7205 = vpop.f32.mrf.mxu0
  %v7206 = vadd.f32 %v7067, %v7205
  %v7207 = vpop.f32.mrf.mxu0
  %v7208 = vadd.f32 %v7069, %v7207
  %7209 = vmatmul.bf16.gmra.mxu0 %v1018
  %v7210 = vpop.f32.mrf.mxu0
  %v7211 = vadd.f32 %v7072, %v7210
  %v7212 = vpop.f32.mrf.mxu0
  %v7213 = vadd.f32 %v7074, %v7212
  %7214 = vmatmul.bf16.gmra.mxu0 %v1024
  %v7215 = vpop.f32.mrf.mxu0
  %v7216 = vadd.f32 %v7077, %v7215
  %v7217 = vpop.f32.mrf.mxu0
  %v7218 = vadd.f32 %v7079, %v7217
  %7219 = vmatmul.bf16.gmra.mxu0 %v1030
  %v7220 = vpop.f32.mrf.mxu0
  %v7221 = vadd.f32 %v7082, %v7220
  %v7222 = vpop.f32.mrf.mxu0
  %v7223 = vadd.f32 %v7084, %v7222
  %7224 = vmatmul.bf16.gmra.mxu0 %v1036
  %v7225 = vpop.f32.mrf.mxu0
  %v7226 = vadd.f32 %v7087, %v7225
  %v7227 = vpop.f32.mrf.mxu0
  %v7228 = vadd.f32 %v7089, %v7227
  %7229 = vmatmul.bf16.gmra.mxu0 %v1042
  %v7230 = vpop.f32.mrf.mxu0
  %v7231 = vadd.f32 %v7092, %v7230
  %v7232 = vpop.f32.mrf.mxu0
  %v7233 = vadd.f32 %v7094, %v7232
  %7234 = vmatmul.bf16.gmra.mxu0 %v1048
  %v7235 = vpop.f32.mrf.mxu0
  %v7236 = vadd.f32 %v7097, %v7235
  %v7237 = vpop.f32.mrf.mxu0
  %v7238 = vadd.f32 %v7099, %v7237
  %7239 = vmatmul.bf16.gmra.mxu0 %v1054
  %v7240 = vpop.f32.mrf.mxu0
  %v7241 = vadd.f32 %v7102, %v7240
  %v7242 = vpop.f32.mrf.mxu0
  %v7243 = vadd.f32 %v7104, %v7242
  %7244 = vmatmul.bf16.gmra.mxu0 %v1060
  %v7245 = vpop.f32.mrf.mxu0
  %v7246 = vadd.f32 %v7107, %v7245
  %v7247 = vpop.f32.mrf.mxu0
  %v7248 = vadd.f32 %v7109, %v7247
  %7249 = vmatmul.bf16.gmra.mxu0 %v1066
  %v7250 = vpop.f32.mrf.mxu0
  %v7251 = vadd.f32 %v7112, %v7250
  %v7252 = vpop.f32.mrf.mxu0
  %v7253 = vadd.f32 %v7114, %v7252
  %7254 = vmatmul.bf16.gmra.mxu0 %v1072
  %v7255 = vpop.f32.mrf.mxu0
  %v7256 = vadd.f32 %v7117, %v7255
  %v7257 = vpop.f32.mrf.mxu0
  %v7258 = vadd.f32 %v7119, %v7257
  %7259 = vmatmul.bf16.gmra.mxu0 %v1078
  %v7260 = vpop.f32.mrf.mxu0
  %v7261 = vadd.f32 %v7122, %v7260
  %v7262 = vpop.f32.mrf.mxu0
  %v7263 = vadd.f32 %v7124, %v7262
  %7264 = vdwg.mxu0
  %7265 = vmatpush.bf16.msra.mxu0 %v2293
  %7266 = vmatpush.bf16.msra.mxu0 %v2287
  %7267 = vmatpush.bf16.msra.mxu0 %v2281
  %7268 = vmatpush.bf16.msra.mxu0 %v2275
  %7269 = vmatpush.bf16.msra.mxu0 %v2269
  %7270 = vmatpush.bf16.msra.mxu0 %v2263
  %7271 = vmatpush.bf16.msra.mxu0 %v2257
  %7272 = vmatpush.bf16.msra.mxu0 %v2251
  %7273 = vmatmul.bf16.gmra.mxu0 %v929
  %v7274 = vpop.f32.mrf.mxu0
  %v7275 = vadd.f32 %v7136, %v7274
  %v7276 = vpop.f32.mrf.mxu0
  %v7277 = vadd.f32 %v7138, %v7276
  %7278 = vmatmul.bf16.gmra.mxu0 %v935
  %v7279 = vpop.f32.mrf.mxu0
  %v7280 = vadd.f32 %v7141, %v7279
  %v7281 = vpop.f32.mrf.mxu0
  %v7282 = vadd.f32 %v7143, %v7281
  %7283 = vmatmul.bf16.gmra.mxu0 %v941
  %v7284 = vpop.f32.mrf.mxu0
  %v7285 = vadd.f32 %v7146, %v7284
  %v7286 = vpop.f32.mrf.mxu0
  %v7287 = vadd.f32 %v7148, %v7286
  %7288 = vmatmul.bf16.gmra.mxu0 %v947
  %v7289 = vpop.f32.mrf.mxu0
  %v7290 = vadd.f32 %v7151, %v7289
  %v7291 = vpop.f32.mrf.mxu0
  %v7292 = vadd.f32 %v7153, %v7291
  %7293 = vmatmul.bf16.gmra.mxu0 %v953
  %v7294 = vpop.f32.mrf.mxu0
  %v7295 = vadd.f32 %v7156, %v7294
  %v7296 = vpop.f32.mrf.mxu0
  %v7297 = vadd.f32 %v7158, %v7296
  %7298 = vmatmul.bf16.gmra.mxu0 %v959
  %v7299 = vpop.f32.mrf.mxu0
  %v7300 = vadd.f32 %v7161, %v7299
  %v7301 = vpop.f32.mrf.mxu0
  %v7302 = vadd.f32 %v7163, %v7301
  %7303 = vmatmul.bf16.gmra.mxu0 %v965
  %v7304 = vpop.f32.mrf.mxu0
  %v7305 = vadd.f32 %v7166, %v7304
  %v7306 = vpop.f32.mrf.mxu0
  %v7307 = vadd.f32 %v7168, %v7306
  %7308 = vmatmul.bf16.gmra.mxu0 %v971
  %v7309 = vpop.f32.mrf.mxu0
  %v7310 = vadd.f32 %v7171, %v7309
  %v7311 = vpop.f32.mrf.mxu0
  %v7312 = vadd.f32 %v7173, %v7311
  %7313 = vmatmul.bf16.gmra.mxu0 %v977
  %v7314 = vpop.f32.mrf.mxu0
  %v7315 = vadd.f32 %v7176, %v7314
  %v7316 = vpop.f32.mrf.mxu0
  %v7317 = vadd.f32 %v7178, %v7316
  %7318 = vmatmul.bf16.gmra.mxu0 %v983
  %v7319 = vpop.f32.mrf.mxu0
  %v7320 = vadd.f32 %v7181, %v7319
  %v7321 = vpop.f32.mrf.mxu0
  %v7322 = vadd.f32 %v7183, %v7321
  %7323 = vmatmul.bf16.gmra.mxu0 %v989
  %v7324 = vpop.f32.mrf.mxu0
  %v7325 = vadd.f32 %v7186, %v7324
  %v7326 = vpop.f32.mrf.mxu0
  %v7327 = vadd.f32 %v7188, %v7326
  %7328 = vmatmul.bf16.gmra.mxu0 %v995
  %v7329 = vpop.f32.mrf.mxu0
  %v7330 = vadd.f32 %v7191, %v7329
  %v7331 = vpop.f32.mrf.mxu0
  %v7332 = vadd.f32 %v7193, %v7331
  %7333 = vmatmul.bf16.gmra.mxu0 %v1001
  %v7334 = vpop.f32.mrf.mxu0
  %v7335 = vadd.f32 %v7196, %v7334
  %v7336 = vpop.f32.mrf.mxu0
  %v7337 = vadd.f32 %v7198, %v7336
  %7338 = vmatmul.bf16.gmra.mxu0 %v1007
  %v7339 = vpop.f32.mrf.mxu0
  %v7340 = vadd.f32 %v7201, %v7339
  %v7341 = vpop.f32.mrf.mxu0
  %v7342 = vadd.f32 %v7203, %v7341
  %7343 = vmatmul.bf16.gmra.mxu0 %v1013
  %v7344 = vpop.f32.mrf.mxu0
  %v7345 = vadd.f32 %v7206, %v7344
  %v7346 = vpop.f32.mrf.mxu0
  %v7347 = vadd.f32 %v7208, %v7346
  %7348 = vmatmul.bf16.gmra.mxu0 %v1019
  %v7349 = vpop.f32.mrf.mxu0
  %v7350 = vadd.f32 %v7211, %v7349
  %v7351 = vpop.f32.mrf.mxu0
  %v7352 = vadd.f32 %v7213, %v7351
  %7353 = vmatmul.bf16.gmra.mxu0 %v1025
  %v7354 = vpop.f32.mrf.mxu0
  %v7355 = vadd.f32 %v7216, %v7354
  %v7356 = vpop.f32.mrf.mxu0
  %v7357 = vadd.f32 %v7218, %v7356
  %7358 = vmatmul.bf16.gmra.mxu0 %v1031
  %v7359 = vpop.f32.mrf.mxu0
  %v7360 = vadd.f32 %v7221, %v7359
  %v7361 = vpop.f32.mrf.mxu0
  %v7362 = vadd.f32 %v7223, %v7361
  %7363 = vmatmul.bf16.gmra.mxu0 %v1037
  %v7364 = vpop.f32.mrf.mxu0
  %v7365 = vadd.f32 %v7226, %v7364
  %v7366 = vpop.f32.mrf.mxu0
  %v7367 = vadd.f32 %v7228, %v7366
  %7368 = vmatmul.bf16.gmra.mxu0 %v1043
  %v7369 = vpop.f32.mrf.mxu0
  %v7370 = vadd.f32 %v7231, %v7369
  %v7371 = vpop.f32.mrf.mxu0
  %v7372 = vadd.f32 %v7233, %v7371
  %7373 = vmatmul.bf16.gmra.mxu0 %v1049
  %v7374 = vpop.f32.mrf.mxu0
  %v7375 = vadd.f32 %v7236, %v7374
  %v7376 = vpop.f32.mrf.mxu0
  %v7377 = vadd.f32 %v7238, %v7376
  %7378 = vmatmul.bf16.gmra.mxu0 %v1055
  %v7379 = vpop.f32.mrf.mxu0
  %v7380 = vadd.f32 %v7241, %v7379
  %v7381 = vpop.f32.mrf.mxu0
  %v7382 = vadd.f32 %v7243, %v7381
  %7383 = vmatmul.bf16.gmra.mxu0 %v1061
  %v7384 = vpop.f32.mrf.mxu0
  %v7385 = vadd.f32 %v7246, %v7384
  %v7386 = vpop.f32.mrf.mxu0
  %v7387 = vadd.f32 %v7248, %v7386
  %7388 = vmatmul.bf16.gmra.mxu0 %v1067
  %v7389 = vpop.f32.mrf.mxu0
  %v7390 = vadd.f32 %v7251, %v7389
  %v7391 = vpop.f32.mrf.mxu0
  %v7392 = vadd.f32 %v7253, %v7391
  %7393 = vmatmul.bf16.gmra.mxu0 %v1073
  %v7394 = vpop.f32.mrf.mxu0
  %v7395 = vadd.f32 %v7256, %v7394
  %v7396 = vpop.f32.mrf.mxu0
  %v7397 = vadd.f32 %v7258, %v7396
  %7398 = vmatmul.bf16.gmra.mxu0 %v1079
  %v7399 = vpop.f32.mrf.mxu0
  %v7400 = vadd.f32 %v7261, %v7399
  %v7401 = vpop.f32.mrf.mxu0
  %v7402 = vadd.f32 %v7263, %v7401
  %7403 = vdwg.mxu0
  %7404 = vmatpush.bf16.msra.mxu0 %v2341
  %7405 = vmatpush.bf16.msra.mxu0 %v2335
  %7406 = vmatpush.bf16.msra.mxu0 %v2329
  %7407 = vmatpush.bf16.msra.mxu0 %v2323
  %7408 = vmatpush.bf16.msra.mxu0 %v2317
  %7409 = vmatpush.bf16.msra.mxu0 %v2311
  %7410 = vmatpush.bf16.msra.mxu0 %v2305
  %7411 = vmatpush.bf16.msra.mxu0 %v2299
  %7412 = vmatmul.bf16.gmra.mxu0 %v930
  %v7413 = vpop.f32.mrf.mxu0
  %v7414 = vadd.f32 %v7275, %v7413
  %v7415 = vpop.f32.mrf.mxu0
  %v7416 = vadd.f32 %v7277, %v7415
  %7417 = vmatmul.bf16.gmra.mxu0 %v936
  %v7418 = vpop.f32.mrf.mxu0
  %v7419 = vadd.f32 %v7280, %v7418
  %v7420 = vpop.f32.mrf.mxu0
  %v7421 = vadd.f32 %v7282, %v7420
  %7422 = vmatmul.bf16.gmra.mxu0 %v942
  %v7423 = vpop.f32.mrf.mxu0
  %v7424 = vadd.f32 %v7285, %v7423
  %v7425 = vpop.f32.mrf.mxu0
  %v7426 = vadd.f32 %v7287, %v7425
  %7427 = vmatmul.bf16.gmra.mxu0 %v948
  %v7428 = vpop.f32.mrf.mxu0
  %v7429 = vadd.f32 %v7290, %v7428
  %v7430 = vpop.f32.mrf.mxu0
  %v7431 = vadd.f32 %v7292, %v7430
  %7432 = vmatmul.bf16.gmra.mxu0 %v954
  %v7433 = vpop.f32.mrf.mxu0
  %v7434 = vadd.f32 %v7295, %v7433
  %v7435 = vpop.f32.mrf.mxu0
  %v7436 = vadd.f32 %v7297, %v7435
  %7437 = vmatmul.bf16.gmra.mxu0 %v960
  %v7438 = vpop.f32.mrf.mxu0
  %v7439 = vadd.f32 %v7300, %v7438
  %v7440 = vpop.f32.mrf.mxu0
  %v7441 = vadd.f32 %v7302, %v7440
  %7442 = vmatmul.bf16.gmra.mxu0 %v966
  %v7443 = vpop.f32.mrf.mxu0
  %v7444 = vadd.f32 %v7305, %v7443
  %v7445 = vpop.f32.mrf.mxu0
  %v7446 = vadd.f32 %v7307, %v7445
  %7447 = vmatmul.bf16.gmra.mxu0 %v972
  %v7448 = vpop.f32.mrf.mxu0
  %v7449 = vadd.f32 %v7310, %v7448
  %v7450 = vpop.f32.mrf.mxu0
  %v7451 = vadd.f32 %v7312, %v7450
  %7452 = vmatmul.bf16.gmra.mxu0 %v978
  %v7453 = vpop.f32.mrf.mxu0
  %v7454 = vadd.f32 %v7315, %v7453
  %v7455 = vpop.f32.mrf.mxu0
  %v7456 = vadd.f32 %v7317, %v7455
  %7457 = vmatmul.bf16.gmra.mxu0 %v984
  %v7458 = vpop.f32.mrf.mxu0
  %v7459 = vadd.f32 %v7320, %v7458
  %v7460 = vpop.f32.mrf.mxu0
  %v7461 = vadd.f32 %v7322, %v7460
  %7462 = vmatmul.bf16.gmra.mxu0 %v990
  %v7463 = vpop.f32.mrf.mxu0
  %v7464 = vadd.f32 %v7325, %v7463
  %v7465 = vpop.f32.mrf.mxu0
  %v7466 = vadd.f32 %v7327, %v7465
  %7467 = vmatmul.bf16.gmra.mxu0 %v996
  %v7468 = vpop.f32.mrf.mxu0
  %v7469 = vadd.f32 %v7330, %v7468
  %v7470 = vpop.f32.mrf.mxu0
  %v7471 = vadd.f32 %v7332, %v7470
  %7472 = vmatmul.bf16.gmra.mxu0 %v1002
  %v7473 = vpop.f32.mrf.mxu0
  %v7474 = vadd.f32 %v7335, %v7473
  %v7475 = vpop.f32.mrf.mxu0
  %v7476 = vadd.f32 %v7337, %v7475
  %7477 = vmatmul.bf16.gmra.mxu0 %v1008
  %v7478 = vpop.f32.mrf.mxu0
  %v7479 = vadd.f32 %v7340, %v7478
  %v7480 = vpop.f32.mrf.mxu0
  %v7481 = vadd.f32 %v7342, %v7480
  %7482 = vmatmul.bf16.gmra.mxu0 %v1014
  %v7483 = vpop.f32.mrf.mxu0
  %v7484 = vadd.f32 %v7345, %v7483
  %v7485 = vpop.f32.mrf.mxu0
  %v7486 = vadd.f32 %v7347, %v7485
  %7487 = vmatmul.bf16.gmra.mxu0 %v1020
  %v7488 = vpop.f32.mrf.mxu0
  %v7489 = vadd.f32 %v7350, %v7488
  %v7490 = vpop.f32.mrf.mxu0
  %v7491 = vadd.f32 %v7352, %v7490
  %7492 = vmatmul.bf16.gmra.mxu0 %v1026
  %v7493 = vpop.f32.mrf.mxu0
  %v7494 = vadd.f32 %v7355, %v7493
  %v7495 = vpop.f32.mrf.mxu0
  %v7496 = vadd.f32 %v7357, %v7495
  %7497 = vmatmul.bf16.gmra.mxu0 %v1032
  %v7498 = vpop.f32.mrf.mxu0
  %v7499 = vadd.f32 %v7360, %v7498
  %v7500 = vpop.f32.mrf.mxu0
  %v7501 = vadd.f32 %v7362, %v7500
  %7502 = vmatmul.bf16.gmra.mxu0 %v1038
  %v7503 = vpop.f32.mrf.mxu0
  %v7504 = vadd.f32 %v7365, %v7503
  %v7505 = vpop.f32.mrf.mxu0
  %v7506 = vadd.f32 %v7367, %v7505
  %7507 = vmatmul.bf16.gmra.mxu0 %v1044
  %v7508 = vpop.f32.mrf.mxu0
  %v7509 = vadd.f32 %v7370, %v7508
  %v7510 = vpop.f32.mrf.mxu0
  %v7511 = vadd.f32 %v7372, %v7510
  %7512 = vmatmul.bf16.gmra.mxu0 %v1050
  %v7513 = vpop.f32.mrf.mxu0
  %v7514 = vadd.f32 %v7375, %v7513
  %v7515 = vpop.f32.mrf.mxu0
  %v7516 = vadd.f32 %v7377, %v7515
  %7517 = vmatmul.bf16.gmra.mxu0 %v1056
  %v7518 = vpop.f32.mrf.mxu0
  %v7519 = vadd.f32 %v7380, %v7518
  %v7520 = vpop.f32.mrf.mxu0
  %v7521 = vadd.f32 %v7382, %v7520
  %7522 = vmatmul.bf16.gmra.mxu0 %v1062
  %v7523 = vpop.f32.mrf.mxu0
  %v7524 = vadd.f32 %v7385, %v7523
  %v7525 = vpop.f32.mrf.mxu0
  %v7526 = vadd.f32 %v7387, %v7525
  %7527 = vmatmul.bf16.gmra.mxu0 %v1068
  %v7528 = vpop.f32.mrf.mxu0
  %v7529 = vadd.f32 %v7390, %v7528
  %v7530 = vpop.f32.mrf.mxu0
  %v7531 = vadd.f32 %v7392, %v7530
  %7532 = vmatmul.bf16.gmra.mxu0 %v1074
  %v7533 = vpop.f32.mrf.mxu0
  %v7534 = vadd.f32 %v7395, %v7533
  %v7535 = vpop.f32.mrf.mxu0
  %v7536 = vadd.f32 %v7397, %v7535
  %7537 = vmatmul.bf16.gmra.mxu0 %v1080
  %v7538 = vpop.f32.mrf.mxu0
  %v7539 = vadd.f32 %v7400, %v7538
  %v7540 = vpop.f32.mrf.mxu0
  %v7541 = vadd.f32 %v7402, %v7540
  %7542 = vdwg.mxu0
  %7543 = vmatpush.bf16.msra.mxu0 %v2389
  %7544 = vmatpush.bf16.msra.mxu0 %v2383
  %7545 = vmatpush.bf16.msra.mxu0 %v2377
  %7546 = vmatpush.bf16.msra.mxu0 %v2371
  %7547 = vmatpush.bf16.msra.mxu0 %v2365
  %7548 = vmatpush.bf16.msra.mxu0 %v2359
  %7549 = vmatpush.bf16.msra.mxu0 %v2353
  %7550 = vmatpush.bf16.msra.mxu0 %v2347
  %7551 = vmatmul.bf16.gmra.mxu0 %v931
  %v7552 = vpop.f32.mrf.mxu0
  %v7553 = vadd.f32 %v7414, %v7552
  %v7554 = vpop.f32.mrf.mxu0
  %v7555 = vadd.f32 %v7416, %v7554
  %7556 = vmatmul.bf16.gmra.mxu0 %v937
  %v7557 = vpop.f32.mrf.mxu0
  %v7558 = vadd.f32 %v7419, %v7557
  %v7559 = vpop.f32.mrf.mxu0
  %v7560 = vadd.f32 %v7421, %v7559
  %7561 = vmatmul.bf16.gmra.mxu0 %v943
  %v7562 = vpop.f32.mrf.mxu0
  %v7563 = vadd.f32 %v7424, %v7562
  %v7564 = vpop.f32.mrf.mxu0
  %v7565 = vadd.f32 %v7426, %v7564
  %7566 = vmatmul.bf16.gmra.mxu0 %v949
  %v7567 = vpop.f32.mrf.mxu0
  %v7568 = vadd.f32 %v7429, %v7567
  %v7569 = vpop.f32.mrf.mxu0
  %v7570 = vadd.f32 %v7431, %v7569
  %7571 = vmatmul.bf16.gmra.mxu0 %v955
  %v7572 = vpop.f32.mrf.mxu0
  %v7573 = vadd.f32 %v7434, %v7572
  %v7574 = vpop.f32.mrf.mxu0
  %v7575 = vadd.f32 %v7436, %v7574
  %7576 = vmatmul.bf16.gmra.mxu0 %v961
  %v7577 = vpop.f32.mrf.mxu0
  %v7578 = vadd.f32 %v7439, %v7577
  %v7579 = vpop.f32.mrf.mxu0
  %v7580 = vadd.f32 %v7441, %v7579
  %7581 = vmatmul.bf16.gmra.mxu0 %v967
  %v7582 = vpop.f32.mrf.mxu0
  %v7583 = vadd.f32 %v7444, %v7582
  %v7584 = vpop.f32.mrf.mxu0
  %v7585 = vadd.f32 %v7446, %v7584
  %7586 = vmatmul.bf16.gmra.mxu0 %v973
  %v7587 = vpop.f32.mrf.mxu0
  %v7588 = vadd.f32 %v7449, %v7587
  %v7589 = vpop.f32.mrf.mxu0
  %v7590 = vadd.f32 %v7451, %v7589
  %7591 = vmatmul.bf16.gmra.mxu0 %v979
  %v7592 = vpop.f32.mrf.mxu0
  %v7593 = vadd.f32 %v7454, %v7592
  %v7594 = vpop.f32.mrf.mxu0
  %v7595 = vadd.f32 %v7456, %v7594
  %7596 = vmatmul.bf16.gmra.mxu0 %v985
  %v7597 = vpop.f32.mrf.mxu0
  %v7598 = vadd.f32 %v7459, %v7597
  %v7599 = vpop.f32.mrf.mxu0
  %v7600 = vadd.f32 %v7461, %v7599
  %7601 = vmatmul.bf16.gmra.mxu0 %v991
  %v7602 = vpop.f32.mrf.mxu0
  %v7603 = vadd.f32 %v7464, %v7602
  %v7604 = vpop.f32.mrf.mxu0
  %v7605 = vadd.f32 %v7466, %v7604
  %7606 = vmatmul.bf16.gmra.mxu0 %v997
  %v7607 = vpop.f32.mrf.mxu0
  %v7608 = vadd.f32 %v7469, %v7607
  %v7609 = vpop.f32.mrf.mxu0
  %v7610 = vadd.f32 %v7471, %v7609
  %7611 = vmatmul.bf16.gmra.mxu0 %v1003
  %v7612 = vpop.f32.mrf.mxu0
  %v7613 = vadd.f32 %v7474, %v7612
  %v7614 = vpop.f32.mrf.mxu0
  %v7615 = vadd.f32 %v7476, %v7614
  %7616 = vmatmul.bf16.gmra.mxu0 %v1009
  %v7617 = vpop.f32.mrf.mxu0
  %v7618 = vadd.f32 %v7479, %v7617
  %v7619 = vpop.f32.mrf.mxu0
  %v7620 = vadd.f32 %v7481, %v7619
  %7621 = vmatmul.bf16.gmra.mxu0 %v1015
  %v7622 = vpop.f32.mrf.mxu0
  %v7623 = vadd.f32 %v7484, %v7622
  %v7624 = vpop.f32.mrf.mxu0
  %v7625 = vadd.f32 %v7486, %v7624
  %7626 = vmatmul.bf16.gmra.mxu0 %v1021
  %v7627 = vpop.f32.mrf.mxu0
  %v7628 = vadd.f32 %v7489, %v7627
  %v7629 = vpop.f32.mrf.mxu0
  %v7630 = vadd.f32 %v7491, %v7629
  %7631 = vmatmul.bf16.gmra.mxu0 %v1027
  %v7632 = vpop.f32.mrf.mxu0
  %v7633 = vadd.f32 %v7494, %v7632
  %v7634 = vpop.f32.mrf.mxu0
  %v7635 = vadd.f32 %v7496, %v7634
  %7636 = vmatmul.bf16.gmra.mxu0 %v1033
  %v7637 = vpop.f32.mrf.mxu0
  %v7638 = vadd.f32 %v7499, %v7637
  %v7639 = vpop.f32.mrf.mxu0
  %v7640 = vadd.f32 %v7501, %v7639
  %7641 = vmatmul.bf16.gmra.mxu0 %v1039
  %v7642 = vpop.f32.mrf.mxu0
  %v7643 = vadd.f32 %v7504, %v7642
  %v7644 = vpop.f32.mrf.mxu0
  %v7645 = vadd.f32 %v7506, %v7644
  %7646 = vmatmul.bf16.gmra.mxu0 %v1045
  %v7647 = vpop.f32.mrf.mxu0
  %v7648 = vadd.f32 %v7509, %v7647
  %v7649 = vpop.f32.mrf.mxu0
  %v7650 = vadd.f32 %v7511, %v7649
  %7651 = vmatmul.bf16.gmra.mxu0 %v1051
  %v7652 = vpop.f32.mrf.mxu0
  %v7653 = vadd.f32 %v7514, %v7652
  %v7654 = vpop.f32.mrf.mxu0
  %v7655 = vadd.f32 %v7516, %v7654
  %7656 = vmatmul.bf16.gmra.mxu0 %v1057
  %v7657 = vpop.f32.mrf.mxu0
  %v7658 = vadd.f32 %v7519, %v7657
  %v7659 = vpop.f32.mrf.mxu0
  %v7660 = vadd.f32 %v7521, %v7659
  %7661 = vmatmul.bf16.gmra.mxu0 %v1063
  %v7662 = vpop.f32.mrf.mxu0
  %v7663 = vadd.f32 %v7524, %v7662
  %v7664 = vpop.f32.mrf.mxu0
  %v7665 = vadd.f32 %v7526, %v7664
  %7666 = vmatmul.bf16.gmra.mxu0 %v1069
  %v7667 = vpop.f32.mrf.mxu0
  %v7668 = vadd.f32 %v7529, %v7667
  %v7669 = vpop.f32.mrf.mxu0
  %v7670 = vadd.f32 %v7531, %v7669
  %7671 = vmatmul.bf16.gmra.mxu0 %v1075
  %v7672 = vpop.f32.mrf.mxu0
  %v7673 = vadd.f32 %v7534, %v7672
  %v7674 = vpop.f32.mrf.mxu0
  %v7675 = vadd.f32 %v7536, %v7674
  %7676 = vmatmul.bf16.gmra.mxu0 %v1081
  %v7677 = vpop.f32.mrf.mxu0
  %v7678 = vadd.f32 %v7539, %v7677
  %v7679 = vpop.f32.mrf.mxu0
  %v7680 = vadd.f32 %v7541, %v7679
  %7681 = vdwg.mxu0
  %7682 = vst [vmem:[#allocation2] sm:$0xff] %v3383
  %7683 = vst [vmem:[#allocation2 + $0x8] sm:$0xff] %v4217
  %7684 = vst [vmem:[#allocation2 + $0x10] sm:$0xff] %v5051
  %7685 = vst [vmem:[#allocation2 + $0x18] sm:$0xff] %v5885
  %7686 = vst [vmem:[#allocation2 + $0x20] sm:$0xff] %v6719
  %7687 = vst [vmem:[#allocation2 + $0x28] sm:$0xff] %v7553
  %7688 = vst [vmem:[#allocation2 + $0x30] sm:$0xff] %v3385
  %7689 = vst [vmem:[#allocation2 + $0x38] sm:$0xff] %v4219
  %7690 = vst [vmem:[#allocation2 + $0x40] sm:$0xff] %v5053
  %7691 = vst [vmem:[#allocation2 + $0x48] sm:$0xff] %v5887
  %7692 = vst [vmem:[#allocation2 + $0x50] sm:$0xff] %v6721
  %7693 = vst [vmem:[#allocation2 + $0x58] sm:$0xff] %v7555
  %7694 = vst [vmem:[#allocation2 + $0x60] sm:$0xff] %v3388
  %7695 = vst [vmem:[#allocation2 + $0x68] sm:$0xff] %v4222
  %7696 = vst [vmem:[#allocation2 + $0x70] sm:$0xff] %v5056
  %7697 = vst [vmem:[#allocation2 + $0x78] sm:$0xff] %v5890
  %7698 = vst [vmem:[#allocation2 + $0x80] sm:$0xff] %v6724
  %7699 = vst [vmem:[#allocation2 + $0x88] sm:$0xff] %v7558
  %7700 = vst [vmem:[#allocation2 + $0x90] sm:$0xff] %v3390
  %7701 = vst [vmem:[#allocation2 + $0x98] sm:$0xff] %v4224
  %7702 = vst [vmem:[#allocation2 + $0xa0] sm:$0xff] %v5058
  %7703 = vst [vmem:[#allocation2 + $0xa8] sm:$0xff] %v5892
  %7704 = vst [vmem:[#allocation2 + $0xb0] sm:$0xff] %v6726
  %7705 = vst [vmem:[#allocation2 + $0xb8] sm:$0xff] %v7560
  %7706 = vst [vmem:[#allocation2 + $0xc0] sm:$0xff] %v3393
  %7707 = vst [vmem:[#allocation2 + $0xc8] sm:$0xff] %v4227
  %7708 = vst [vmem:[#allocation2 + $0xd0] sm:$0xff] %v5061
  %7709 = vst [vmem:[#allocation2 + $0xd8] sm:$0xff] %v5895
  %7710 = vst [vmem:[#allocation2 + $0xe0] sm:$0xff] %v6729
  %7711 = vst [vmem:[#allocation2 + $0xe8] sm:$0xff] %v7563
  %7712 = vst [vmem:[#allocation2 + $0xf0] sm:$0xff] %v3395
  %7713 = vst [vmem:[#allocation2 + $0xf8] sm:$0xff] %v4229
  %7714 = vst [vmem:[#allocation2 + $0x100] sm:$0xff] %v5063
  %7715 = vst [vmem:[#allocation2 + $0x108] sm:$0xff] %v5897
  %7716 = vst [vmem:[#allocation2 + $0x110] sm:$0xff] %v6731
  %7717 = vst [vmem:[#allocation2 + $0x118] sm:$0xff] %v7565
  %7718 = vst [vmem:[#allocation2 + $0x120] sm:$0xff] %v3398
  %7719 = vst [vmem:[#allocation2 + $0x128] sm:$0xff] %v4232
  %7720 = vst [vmem:[#allocation2 + $0x130] sm:$0xff] %v5066
  %7721 = vst [vmem:[#allocation2 + $0x138] sm:$0xff] %v5900
  %7722 = vst [vmem:[#allocation2 + $0x140] sm:$0xff] %v6734
  %7723 = vst [vmem:[#allocation2 + $0x148] sm:$0xff] %v7568
  %7724 = vst [vmem:[#allocation2 + $0x150] sm:$0xff] %v3400
  %7725 = vst [vmem:[#allocation2 + $0x158] sm:$0xff] %v4234
  %7726 = vst [vmem:[#allocation2 + $0x160] sm:$0xff] %v5068
  %7727 = vst [vmem:[#allocation2 + $0x168] sm:$0xff] %v5902
  %7728 = vst [vmem:[#allocation2 + $0x170] sm:$0xff] %v6736
  %7729 = vst [vmem:[#allocation2 + $0x178] sm:$0xff] %v7570
  %7730 = vst [vmem:[#allocation2 + $0x180] sm:$0xff] %v3403
  %7731 = vst [vmem:[#allocation2 + $0x188] sm:$0xff] %v4237
  %7732 = vst [vmem:[#allocation2 + $0x190] sm:$0xff] %v5071
  %7733 = vst [vmem:[#allocation2 + $0x198] sm:$0xff] %v5905
  %7734 = vst [vmem:[#allocation2 + $0x1a0] sm:$0xff] %v6739
  %7735 = vst [vmem:[#allocation2 + $0x1a8] sm:$0xff] %v7573
  %7736 = vst [vmem:[#allocation2 + $0x1b0] sm:$0xff] %v3405
  %7737 = vst [vmem:[#allocation2 + $0x1b8] sm:$0xff] %v4239
  %7738 = vst [vmem:[#allocation2 + $0x1c0] sm:$0xff] %v5073
  %7739 = vst [vmem:[#allocation2 + $0x1c8] sm:$0xff] %v5907
  %7740 = vst [vmem:[#allocation2 + $0x1d0] sm:$0xff] %v6741
  %7741 = vst [vmem:[#allocation2 + $0x1d8] sm:$0xff] %v7575
  %7742 = vst [vmem:[#allocation2 + $0x1e0] sm:$0xff] %v3408
  %7743 = vst [vmem:[#allocation2 + $0x1e8] sm:$0xff] %v4242
  %7744 = vst [vmem:[#allocation2 + $0x1f0] sm:$0xff] %v5076
  %7745 = vst [vmem:[#allocation2 + $0x1f8] sm:$0xff] %v5910
  %7746 = vst [vmem:[#allocation2 + $0x200] sm:$0xff] %v6744
  %7747 = vst [vmem:[#allocation2 + $0x208] sm:$0xff] %v7578
  %7748 = vst [vmem:[#allocation2 + $0x210] sm:$0xff] %v3410
  %7749 = vst [vmem:[#allocation2 + $0x218] sm:$0xff] %v4244
  %7750 = vst [vmem:[#allocation2 + $0x220] sm:$0xff] %v5078
  %7751 = vst [vmem:[#allocation2 + $0x228] sm:$0xff] %v5912
  %7752 = vst [vmem:[#allocation2 + $0x230] sm:$0xff] %v6746
  %7753 = vst [vmem:[#allocation2 + $0x238] sm:$0xff] %v7580
  %7754 = vst [vmem:[#allocation2 + $0x240] sm:$0xff] %v3413
  %7755 = vst [vmem:[#allocation2 + $0x248] sm:$0xff] %v4247
  %7756 = vst [vmem:[#allocation2 + $0x250] sm:$0xff] %v5081
  %7757 = vst [vmem:[#allocation2 + $0x258] sm:$0xff] %v5915
  %7758 = vst [vmem:[#allocation2 + $0x260] sm:$0xff] %v6749
  %7759 = vst [vmem:[#allocation2 + $0x268] sm:$0xff] %v7583
  %7760 = vst [vmem:[#allocation2 + $0x270] sm:$0xff] %v3415
  %7761 = vst [vmem:[#allocation2 + $0x278] sm:$0xff] %v4249
  %7762 = vst [vmem:[#allocation2 + $0x280] sm:$0xff] %v5083
  %7763 = vst [vmem:[#allocation2 + $0x288] sm:$0xff] %v5917
  %7764 = vst [vmem:[#allocation2 + $0x290] sm:$0xff] %v6751
  %7765 = vst [vmem:[#allocation2 + $0x298] sm:$0xff] %v7585
  %7766 = vst [vmem:[#allocation2 + $0x2a0] sm:$0xff] %v3418
  %7767 = vst [vmem:[#allocation2 + $0x2a8] sm:$0xff] %v4252
  %7768 = vst [vmem:[#allocation2 + $0x2b0] sm:$0xff] %v5086
  %7769 = vst [vmem:[#allocation2 + $0x2b8] sm:$0xff] %v5920
  %7770 = vst [vmem:[#allocation2 + $0x2c0] sm:$0xff] %v6754
  %7771 = vst [vmem:[#allocation2 + $0x2c8] sm:$0xff] %v7588
  %7772 = vst [vmem:[#allocation2 + $0x2d0] sm:$0xff] %v3420
  %7773 = vst [vmem:[#allocation2 + $0x2d8] sm:$0xff] %v4254
  %7774 = vst [vmem:[#allocation2 + $0x2e0] sm:$0xff] %v5088
  %7775 = vst [vmem:[#allocation2 + $0x2e8] sm:$0xff] %v5922
  %7776 = vst [vmem:[#allocation2 + $0x2f0] sm:$0xff] %v6756
  %7777 = vst [vmem:[#allocation2 + $0x2f8] sm:$0xff] %v7590
  %7778 = vst [vmem:[#allocation2 + $0x300] sm:$0xff] %v3423
  %7779 = vst [vmem:[#allocation2 + $0x308] sm:$0xff] %v4257
  %7780 = vst [vmem:[#allocation2 + $0x310] sm:$0xff] %v5091
  %7781 = vst [vmem:[#allocation2 + $0x318] sm:$0xff] %v5925
  %7782 = vst [vmem:[#allocation2 + $0x320] sm:$0xff] %v6759
  %7783 = vst [vmem:[#allocation2 + $0x328] sm:$0xff] %v7593
  %7784 = vst [vmem:[#allocation2 + $0x330] sm:$0xff] %v3425
  %7785 = vst [vmem:[#allocation2 + $0x338] sm:$0xff] %v4259
  %7786 = vst [vmem:[#allocation2 + $0x340] sm:$0xff] %v5093
  %7787 = vst [vmem:[#allocation2 + $0x348] sm:$0xff] %v5927
  %7788 = vst [vmem:[#allocation2 + $0x350] sm:$0xff] %v6761
  %7789 = vst [vmem:[#allocation2 + $0x358] sm:$0xff] %v7595
  %7790 = vst [vmem:[#allocation2 + $0x360] sm:$0xff] %v3428
  %7791 = vst [vmem:[#allocation2 + $0x368] sm:$0xff] %v4262
  %7792 = vst [vmem:[#allocation2 + $0x370] sm:$0xff] %v5096
  %7793 = vst [vmem:[#allocation2 + $0x378] sm:$0xff] %v5930
  %7794 = vst [vmem:[#allocation2 + $0x380] sm:$0xff] %v6764
  %7795 = vst [vmem:[#allocation2 + $0x388] sm:$0xff] %v7598
  %7796 = vst [vmem:[#allocation2 + $0x390] sm:$0xff] %v3430
  %7797 = vst [vmem:[#allocation2 + $0x398] sm:$0xff] %v4264
  %7798 = vst [vmem:[#allocation2 + $0x3a0] sm:$0xff] %v5098
  %7799 = vst [vmem:[#allocation2 + $0x3a8] sm:$0xff] %v5932
  %7800 = vst [vmem:[#allocation2 + $0x3b0] sm:$0xff] %v6766
  %7801 = vst [vmem:[#allocation2 + $0x3b8] sm:$0xff] %v7600
  %7802 = vst [vmem:[#allocation2 + $0x3c0] sm:$0xff] %v3433
  %7803 = vst [vmem:[#allocation2 + $0x3c8] sm:$0xff] %v4267
  %7804 = vst [vmem:[#allocation2 + $0x3d0] sm:$0xff] %v5101
  %7805 = vst [vmem:[#allocation2 + $0x3d8] sm:$0xff] %v5935
  %7806 = vst [vmem:[#allocation2 + $0x3e0] sm:$0xff] %v6769
  %7807 = vst [vmem:[#allocation2 + $0x3e8] sm:$0xff] %v7603
  %7808 = vst [vmem:[#allocation2 + $0x3f0] sm:$0xff] %v3435
  %7809 = vst [vmem:[#allocation2 + $0x3f8] sm:$0xff] %v4269
  %7810 = vst [vmem:[#allocation2 + $0x400] sm:$0xff] %v5103
  %7811 = vst [vmem:[#allocation2 + $0x408] sm:$0xff] %v5937
  %7812 = vst [vmem:[#allocation2 + $0x410] sm:$0xff] %v6771
  %7813 = vst [vmem:[#allocation2 + $0x418] sm:$0xff] %v7605
  %7814 = vst [vmem:[#allocation2 + $0x420] sm:$0xff] %v3438
  %7815 = vst [vmem:[#allocation2 + $0x428] sm:$0xff] %v4272
  %7816 = vst [vmem:[#allocation2 + $0x430] sm:$0xff] %v5106
  %7817 = vst [vmem:[#allocation2 + $0x438] sm:$0xff] %v5940
  %7818 = vst [vmem:[#allocation2 + $0x440] sm:$0xff] %v6774
  %7819 = vst [vmem:[#allocation2 + $0x448] sm:$0xff] %v7608
  %7820 = vst [vmem:[#allocation2 + $0x450] sm:$0xff] %v3440
  %7821 = vst [vmem:[#allocation2 + $0x458] sm:$0xff] %v4274
  %7822 = vst [vmem:[#allocation2 + $0x460] sm:$0xff] %v5108
  %7823 = vst [vmem:[#allocation2 + $0x468] sm:$0xff] %v5942
  %7824 = vst [vmem:[#allocation2 + $0x470] sm:$0xff] %v6776
  %7825 = vst [vmem:[#allocation2 + $0x478] sm:$0xff] %v7610
  %7826 = vst [vmem:[#allocation2 + $0x480] sm:$0xff] %v3443
  %7827 = vst [vmem:[#allocation2 + $0x488] sm:$0xff] %v4277
  %7828 = vst [vmem:[#allocation2 + $0x490] sm:$0xff] %v5111
  %7829 = vst [vmem:[#allocation2 + $0x498] sm:$0xff] %v5945
  %7830 = vst [vmem:[#allocation2 + $0x4a0] sm:$0xff] %v6779
  %7831 = vst [vmem:[#allocation2 + $0x4a8] sm:$0xff] %v7613
  %7832 = vst [vmem:[#allocation2 + $0x4b0] sm:$0xff] %v3445
  %7833 = vst [vmem:[#allocation2 + $0x4b8] sm:$0xff] %v4279
  %7834 = vst [vmem:[#allocation2 + $0x4c0] sm:$0xff] %v5113
  %7835 = vst [vmem:[#allocation2 + $0x4c8] sm:$0xff] %v5947
  %7836 = vst [vmem:[#allocation2 + $0x4d0] sm:$0xff] %v6781
  %7837 = vst [vmem:[#allocation2 + $0x4d8] sm:$0xff] %v7615
  %7838 = vst [vmem:[#allocation2 + $0x4e0] sm:$0xff] %v3448
  %7839 = vst [vmem:[#allocation2 + $0x4e8] sm:$0xff] %v4282
  %7840 = vst [vmem:[#allocation2 + $0x4f0] sm:$0xff] %v5116
  %7841 = vst [vmem:[#allocation2 + $0x4f8] sm:$0xff] %v5950
  %7842 = vst [vmem:[#allocation2 + $0x500] sm:$0xff] %v6784
  %7843 = vst [vmem:[#allocation2 + $0x508] sm:$0xff] %v7618
  %7844 = vst [vmem:[#allocation2 + $0x510] sm:$0xff] %v3450
  %7845 = vst [vmem:[#allocation2 + $0x518] sm:$0xff] %v4284
  %7846 = vst [vmem:[#allocation2 + $0x520] sm:$0xff] %v5118
  %7847 = vst [vmem:[#allocation2 + $0x528] sm:$0xff] %v5952
  %7848 = vst [vmem:[#allocation2 + $0x530] sm:$0xff] %v6786
  %7849 = vst [vmem:[#allocation2 + $0x538] sm:$0xff] %v7620
  %7850 = vst [vmem:[#allocation2 + $0x540] sm:$0xff] %v3453
  %7851 = vst [vmem:[#allocation2 + $0x548] sm:$0xff] %v4287
  %7852 = vst [vmem:[#allocation2 + $0x550] sm:$0xff] %v5121
  %7853 = vst [vmem:[#allocation2 + $0x558] sm:$0xff] %v5955
  %7854 = vst [vmem:[#allocation2 + $0x560] sm:$0xff] %v6789
  %7855 = vst [vmem:[#allocation2 + $0x568] sm:$0xff] %v7623
  %7856 = vst [vmem:[#allocation2 + $0x570] sm:$0xff] %v3455
  %7857 = vst [vmem:[#allocation2 + $0x578] sm:$0xff] %v4289
  %7858 = vst [vmem:[#allocation2 + $0x580] sm:$0xff] %v5123
  %7859 = vst [vmem:[#allocation2 + $0x588] sm:$0xff] %v5957
  %7860 = vst [vmem:[#allocation2 + $0x590] sm:$0xff] %v6791
  %7861 = vst [vmem:[#allocation2 + $0x598] sm:$0xff] %v7625
  %7862 = vst [vmem:[#allocation2 + $0x5a0] sm:$0xff] %v3458
  %7863 = vst [vmem:[#allocation2 + $0x5a8] sm:$0xff] %v4292
  %7864 = vst [vmem:[#allocation2 + $0x5b0] sm:$0xff] %v5126
  %7865 = vst [vmem:[#allocation2 + $0x5b8] sm:$0xff] %v5960
  %7866 = vst [vmem:[#allocation2 + $0x5c0] sm:$0xff] %v6794
  %7867 = vst [vmem:[#allocation2 + $0x5c8] sm:$0xff] %v7628
  %7868 = vst [vmem:[#allocation2 + $0x5d0] sm:$0xff] %v3460
  %7869 = vst [vmem:[#allocation2 + $0x5d8] sm:$0xff] %v4294
  %7870 = vst [vmem:[#allocation2 + $0x5e0] sm:$0xff] %v5128
  %7871 = vst [vmem:[#allocation2 + $0x5e8] sm:$0xff] %v5962
  %7872 = vst [vmem:[#allocation2 + $0x5f0] sm:$0xff] %v6796
  %7873 = vst [vmem:[#allocation2 + $0x5f8] sm:$0xff] %v7630
  %7874 = vst [vmem:[#allocation2 + $0x600] sm:$0xff] %v3463
  %7875 = vst [vmem:[#allocation2 + $0x608] sm:$0xff] %v4297
  %7876 = vst [vmem:[#allocation2 + $0x610] sm:$0xff] %v5131
  %7877 = vst [vmem:[#allocation2 + $0x618] sm:$0xff] %v5965
  %7878 = vst [vmem:[#allocation2 + $0x620] sm:$0xff] %v6799
  %7879 = vst [vmem:[#allocation2 + $0x628] sm:$0xff] %v7633
  %7880 = vst [vmem:[#allocation2 + $0x630] sm:$0xff] %v3465
  %7881 = vst [vmem:[#allocation2 + $0x638] sm:$0xff] %v4299
  %7882 = vst [vmem:[#allocation2 + $0x640] sm:$0xff] %v5133
  %7883 = vst [vmem:[#allocation2 + $0x648] sm:$0xff] %v5967
  %7884 = vst [vmem:[#allocation2 + $0x650] sm:$0xff] %v6801
  %7885 = vst [vmem:[#allocation2 + $0x658] sm:$0xff] %v7635
  %7886 = vst [vmem:[#allocation2 + $0x660] sm:$0xff] %v3468
  %7887 = vst [vmem:[#allocation2 + $0x668] sm:$0xff] %v4302
  %7888 = vst [vmem:[#allocation2 + $0x670] sm:$0xff] %v5136
  %7889 = vst [vmem:[#allocation2 + $0x678] sm:$0xff] %v5970
  %7890 = vst [vmem:[#allocation2 + $0x680] sm:$0xff] %v6804
  %7891 = vst [vmem:[#allocation2 + $0x688] sm:$0xff] %v7638
  %7892 = vst [vmem:[#allocation2 + $0x690] sm:$0xff] %v3470
  %7893 = vst [vmem:[#allocation2 + $0x698] sm:$0xff] %v4304
  %7894 = vst [vmem:[#allocation2 + $0x6a0] sm:$0xff] %v5138
  %7895 = vst [vmem:[#allocation2 + $0x6a8] sm:$0xff] %v5972
  %7896 = vst [vmem:[#allocation2 + $0x6b0] sm:$0xff] %v6806
  %7897 = vst [vmem:[#allocation2 + $0x6b8] sm:$0xff] %v7640
  %7898 = vst [vmem:[#allocation2 + $0x6c0] sm:$0xff] %v3473
  %7899 = vst [vmem:[#allocation2 + $0x6c8] sm:$0xff] %v4307
  %7900 = vst [vmem:[#allocation2 + $0x6d0] sm:$0xff] %v5141
  %7901 = vst [vmem:[#allocation2 + $0x6d8] sm:$0xff] %v5975
  %7902 = vst [vmem:[#allocation2 + $0x6e0] sm:$0xff] %v6809
  %7903 = vst [vmem:[#allocation2 + $0x6e8] sm:$0xff] %v7643
  %7904 = vst [vmem:[#allocation2 + $0x6f0] sm:$0xff] %v3475
  %7905 = vst [vmem:[#allocation2 + $0x6f8] sm:$0xff] %v4309
  %7906 = vst [vmem:[#allocation2 + $0x700] sm:$0xff] %v5143
  %7907 = vst [vmem:[#allocation2 + $0x708] sm:$0xff] %v5977
  %7908 = vst [vmem:[#allocation2 + $0x710] sm:$0xff] %v6811
  %7909 = vst [vmem:[#allocation2 + $0x718] sm:$0xff] %v7645
  %7910 = vst [vmem:[#allocation2 + $0x720] sm:$0xff] %v3478
  %7911 = vst [vmem:[#allocation2 + $0x728] sm:$0xff] %v4312
  %7912 = vst [vmem:[#allocation2 + $0x730] sm:$0xff] %v5146
  %7913 = vst [vmem:[#allocation2 + $0x738] sm:$0xff] %v5980
  %7914 = vst [vmem:[#allocation2 + $0x740] sm:$0xff] %v6814
  %7915 = vst [vmem:[#allocation2 + $0x748] sm:$0xff] %v7648
  %7916 = vst [vmem:[#allocation2 + $0x750] sm:$0xff] %v3480
  %7917 = vst [vmem:[#allocation2 + $0x758] sm:$0xff] %v4314
  %7918 = vst [vmem:[#allocation2 + $0x760] sm:$0xff] %v5148
  %7919 = vst [vmem:[#allocation2 + $0x768] sm:$0xff] %v5982
  %7920 = vst [vmem:[#allocation2 + $0x770] sm:$0xff] %v6816
  %7921 = vst [vmem:[#allocation2 + $0x778] sm:$0xff] %v7650
  %7922 = vst [vmem:[#allocation2 + $0x780] sm:$0xff] %v3483
  %7923 = vst [vmem:[#allocation2 + $0x788] sm:$0xff] %v4317
  %7924 = vst [vmem:[#allocation2 + $0x790] sm:$0xff] %v5151
  %7925 = vst [vmem:[#allocation2 + $0x798] sm:$0xff] %v5985
  %7926 = vst [vmem:[#allocation2 + $0x7a0] sm:$0xff] %v6819
  %7927 = vst [vmem:[#allocation2 + $0x7a8] sm:$0xff] %v7653
  %7928 = vst [vmem:[#allocation2 + $0x7b0] sm:$0xff] %v3485
  %7929 = vst [vmem:[#allocation2 + $0x7b8] sm:$0xff] %v4319
  %7930 = vst [vmem:[#allocation2 + $0x7c0] sm:$0xff] %v5153
  %7931 = vst [vmem:[#allocation2 + $0x7c8] sm:$0xff] %v5987
  %7932 = vst [vmem:[#allocation2 + $0x7d0] sm:$0xff] %v6821
  %7933 = vst [vmem:[#allocation2 + $0x7d8] sm:$0xff] %v7655
  %7934 = vst [vmem:[#allocation2 + $0x7e0] sm:$0xff] %v3488
  %7935 = vst [vmem:[#allocation2 + $0x7e8] sm:$0xff] %v4322
  %7936 = vst [vmem:[#allocation2 + $0x7f0] sm:$0xff] %v5156
  %7937 = vst [vmem:[#allocation2 + $0x7f8] sm:$0xff] %v5990
  %7938 = vst [vmem:[#allocation2 + $0x800] sm:$0xff] %v6824
  %7939 = vst [vmem:[#allocation2 + $0x808] sm:$0xff] %v7658
  %7940 = vst [vmem:[#allocation2 + $0x810] sm:$0xff] %v3490
  %7941 = vst [vmem:[#allocation2 + $0x818] sm:$0xff] %v4324
  %7942 = vst [vmem:[#allocation2 + $0x820] sm:$0xff] %v5158
  %7943 = vst [vmem:[#allocation2 + $0x828] sm:$0xff] %v5992
  %7944 = vst [vmem:[#allocation2 + $0x830] sm:$0xff] %v6826
  %7945 = vst [vmem:[#allocation2 + $0x838] sm:$0xff] %v7660
  %7946 = vst [vmem:[#allocation2 + $0x840] sm:$0xff] %v3493
  %7947 = vst [vmem:[#allocation2 + $0x848] sm:$0xff] %v4327
  %7948 = vst [vmem:[#allocation2 + $0x850] sm:$0xff] %v5161
  %7949 = vst [vmem:[#allocation2 + $0x858] sm:$0xff] %v5995
  %7950 = vst [vmem:[#allocation2 + $0x860] sm:$0xff] %v6829
  %7951 = vst [vmem:[#allocation2 + $0x868] sm:$0xff] %v7663
  %7952 = vst [vmem:[#allocation2 + $0x870] sm:$0xff] %v3495
  %7953 = vst [vmem:[#allocation2 + $0x878] sm:$0xff] %v4329
  %7954 = vst [vmem:[#allocation2 + $0x880] sm:$0xff] %v5163
  %7955 = vst [vmem:[#allocation2 + $0x888] sm:$0xff] %v5997
  %7956 = vst [vmem:[#allocation2 + $0x890] sm:$0xff] %v6831
  %7957 = vst [vmem:[#allocation2 + $0x898] sm:$0xff] %v7665
  %7958 = vst [vmem:[#allocation2 + $0x8a0] sm:$0xff] %v3498
  %7959 = vst [vmem:[#allocation2 + $0x8a8] sm:$0xff] %v4332
  %7960 = vst [vmem:[#allocation2 + $0x8b0] sm:$0xff] %v5166
  %7961 = vst [vmem:[#allocation2 + $0x8b8] sm:$0xff] %v6000
  %7962 = vst [vmem:[#allocation2 + $0x8c0] sm:$0xff] %v6834
  %7963 = vst [vmem:[#allocation2 + $0x8c8] sm:$0xff] %v7668
  %7964 = vst [vmem:[#allocation2 + $0x8d0] sm:$0xff] %v3500
  %7965 = vst [vmem:[#allocation2 + $0x8d8] sm:$0xff] %v4334
  %7966 = vst [vmem:[#allocation2 + $0x8e0] sm:$0xff] %v5168
  %7967 = vst [vmem:[#allocation2 + $0x8e8] sm:$0xff] %v6002
  %7968 = vst [vmem:[#allocation2 + $0x8f0] sm:$0xff] %v6836
  %7969 = vst [vmem:[#allocation2 + $0x8f8] sm:$0xff] %v7670
  %7970 = vst [vmem:[#allocation2 + $0x900] sm:$0xff] %v3503
  %7971 = vst [vmem:[#allocation2 + $0x908] sm:$0xff] %v4337
  %7972 = vst [vmem:[#allocation2 + $0x910] sm:$0xff] %v5171
  %7973 = vst [vmem:[#allocation2 + $0x918] sm:$0xff] %v6005
  %7974 = vst [vmem:[#allocation2 + $0x920] sm:$0xff] %v6839
  %7975 = vst [vmem:[#allocation2 + $0x928] sm:$0xff] %v7673
  %7976 = vst [vmem:[#allocation2 + $0x930] sm:$0xff] %v3505
  %7977 = vst [vmem:[#allocation2 + $0x938] sm:$0xff] %v4339
  %7978 = vst [vmem:[#allocation2 + $0x940] sm:$0xff] %v5173
  %7979 = vst [vmem:[#allocation2 + $0x948] sm:$0xff] %v6007
  %7980 = vst [vmem:[#allocation2 + $0x950] sm:$0xff] %v6841
  %7981 = vst [vmem:[#allocation2 + $0x958] sm:$0xff] %v7675
  %7982 = vst [vmem:[#allocation2 + $0x960] sm:$0xff] %v3508
  %7983 = vst [vmem:[#allocation2 + $0x968] sm:$0xff] %v4342
  %7984 = vst [vmem:[#allocation2 + $0x970] sm:$0xff] %v5176
  %7985 = vst [vmem:[#allocation2 + $0x978] sm:$0xff] %v6010
  %7986 = vst [vmem:[#allocation2 + $0x980] sm:$0xff] %v6844
  %7987 = vst [vmem:[#allocation2 + $0x988] sm:$0xff] %v7678
  %7988 = vst [vmem:[#allocation2 + $0x990] sm:$0xff] %v3510
  %7989 = vst [vmem:[#allocation2 + $0x998] sm:$0xff] %v4344
  %7990 = vst [vmem:[#allocation2 + $0x9a0] sm:$0xff] %v5178
  %7991 = vst [vmem:[#allocation2 + $0x9a8] sm:$0xff] %v6012
  %7992 = vst [vmem:[#allocation2 + $0x9b0] sm:$0xff] %v6846
  %7993 = vst [vmem:[#allocation2 + $0x9b8] sm:$0xff] %v7680
  %v7994 = vld [vmem:[%s2] sm:$0xff]
  %v7995 = vld [vmem:[%s2 + $0x8] sm:$0xff]
  %v7996 = vld [vmem:[%s2 + $0x10] sm:$0xff]
  %v7997 = vld [vmem:[%s2 + $0x18] sm:$0xff]
  %v7998 = vld [vmem:[%s2 + $0x20] sm:$0xff]
  %v7999 = vld [vmem:[%s2 + $0x28] sm:$0xff]
  %v8000 = vld [vmem:[%s2 + $0x30] sm:$0xff]
  %v8001 = vld [vmem:[%s2 + $0x38] sm:$0xff]
  %v8002 = vld [vmem:[%s2 + $0x40] sm:$0xff]
  %v8003 = vld [vmem:[%s2 + $0x48] sm:$0xff]
  %v8004 = vld [vmem:[%s2 + $0x50] sm:$0xff]
  %v8005 = vld [vmem:[%s2 + $0x58] sm:$0xff]
  %v8006 = vld [vmem:[%s2 + $0x60] sm:$0xff]
  %v8007 = vld [vmem:[%s2 + $0x68] sm:$0xff]
  %v8008 = vld [vmem:[%s2 + $0x70] sm:$0xff]
  %v8009 = vld [vmem:[%s2 + $0x78] sm:$0xff]
  %v8010 = vld [vmem:[%s2 + $0x80] sm:$0xff]
  %v8011 = vld [vmem:[%s2 + $0x88] sm:$0xff]
  %v8012 = vld [vmem:[%s2 + $0x90] sm:$0xff]
  %v8013 = vld [vmem:[%s2 + $0x98] sm:$0xff]
  %v8014 = vld [vmem:[%s2 + $0xa0] sm:$0xff]
  %v8015 = vld [vmem:[%s2 + $0xa8] sm:$0xff]
  %v8016 = vld [vmem:[%s2 + $0xb0] sm:$0xff]
  %v8017 = vld [vmem:[%s2 + $0xb8] sm:$0xff]
  %v8018 = vld [vmem:[%s2 + $0xc0] sm:$0xff]
  %v8019 = vld [vmem:[%s2 + $0xc8] sm:$0xff]
  %v8020 = vld [vmem:[%s2 + $0xd0] sm:$0xff]
  %v8021 = vld [vmem:[%s2 + $0xd8] sm:$0xff]
  %v8022 = vld [vmem:[%s2 + $0xe0] sm:$0xff]
  %v8023 = vld [vmem:[%s2 + $0xe8] sm:$0xff]
  %v8024 = vld [vmem:[%s2 + $0xf0] sm:$0xff]
  %v8025 = vld [vmem:[%s2 + $0xf8] sm:$0xff]
  %v8026 = vld [vmem:[%s2 + $0x100] sm:$0xff]
  %v8027 = vld [vmem:[%s2 + $0x108] sm:$0xff]
  %v8028 = vld [vmem:[%s2 + $0x110] sm:$0xff]
  %v8029 = vld [vmem:[%s2 + $0x118] sm:$0xff]
  %v8030 = vld [vmem:[%s2 + $0x120] sm:$0xff]
  %v8031 = vld [vmem:[%s2 + $0x128] sm:$0xff]
  %v8032 = vld [vmem:[%s2 + $0x130] sm:$0xff]
  %v8033 = vld [vmem:[%s2 + $0x138] sm:$0xff]
  %v8034 = vld [vmem:[%s2 + $0x140] sm:$0xff]
  %v8035 = vld [vmem:[%s2 + $0x148] sm:$0xff]
  %v8036 = vld [vmem:[%s2 + $0x150] sm:$0xff]
  %v8037 = vld [vmem:[%s2 + $0x158] sm:$0xff]
  %v8038 = vld [vmem:[%s2 + $0x160] sm:$0xff]
  %v8039 = vld [vmem:[%s2 + $0x168] sm:$0xff]
  %v8040 = vld [vmem:[%s2 + $0x170] sm:$0xff]
  %v8041 = vld [vmem:[%s2 + $0x178] sm:$0xff]
  %v8042 = vld [vmem:[%s2 + $0x180] sm:$0xff]
  %v8043 = vld [vmem:[%s2 + $0x188] sm:$0xff]
  %v8044 = vld [vmem:[%s2 + $0x190] sm:$0xff]
  %v8045 = vld [vmem:[%s2 + $0x198] sm:$0xff]
  %v8046 = vld [vmem:[%s2 + $0x1a0] sm:$0xff]
  %v8047 = vld [vmem:[%s2 + $0x1a8] sm:$0xff]
  %v8048 = vld [vmem:[%s2 + $0x1b0] sm:$0xff]
  %v8049 = vld [vmem:[%s2 + $0x1b8] sm:$0xff]
  %v8050 = vld [vmem:[%s2 + $0x1c0] sm:$0xff]
  %v8051 = vld [vmem:[%s2 + $0x1c8] sm:$0xff]
  %v8052 = vld [vmem:[%s2 + $0x1d0] sm:$0xff]
  %v8053 = vld [vmem:[%s2 + $0x1d8] sm:$0xff]
  %v8054 = vld [vmem:[%s2 + $0x1e0] sm:$0xff]
  %v8055 = vld [vmem:[%s2 + $0x1e8] sm:$0xff]
  %v8056 = vld [vmem:[%s2 + $0x1f0] sm:$0xff]
  %v8057 = vld [vmem:[%s2 + $0x1f8] sm:$0xff]
  %v8058 = vld [vmem:[%s2 + $0x200] sm:$0xff]
  %v8059 = vld [vmem:[%s2 + $0x208] sm:$0xff]
  %v8060 = vld [vmem:[%s2 + $0x210] sm:$0xff]
  %v8061 = vld [vmem:[%s2 + $0x218] sm:$0xff]
  %v8062 = vld [vmem:[%s2 + $0x220] sm:$0xff]
  %v8063 = vld [vmem:[%s2 + $0x228] sm:$0xff]
  %v8064 = vld [vmem:[%s2 + $0x230] sm:$0xff]
  %v8065 = vld [vmem:[%s2 + $0x238] sm:$0xff]
  %v8066 = vld [vmem:[%s2 + $0x240] sm:$0xff]
  %v8067 = vld [vmem:[%s2 + $0x248] sm:$0xff]
  %v8068 = vld [vmem:[%s2 + $0x250] sm:$0xff]
  %v8069 = vld [vmem:[%s2 + $0x258] sm:$0xff]
  %v8070 = vld [vmem:[%s2 + $0x260] sm:$0xff]
  %v8071 = vld [vmem:[%s2 + $0x268] sm:$0xff]
  %v8072 = vld [vmem:[%s2 + $0x270] sm:$0xff]
  %v8073 = vld [vmem:[%s2 + $0x278] sm:$0xff]
  %v8074 = vld [vmem:[%s2 + $0x280] sm:$0xff]
  %v8075 = vld [vmem:[%s2 + $0x288] sm:$0xff]
  %v8076 = vld [vmem:[%s2 + $0x290] sm:$0xff]
  %v8077 = vld [vmem:[%s2 + $0x298] sm:$0xff]
  %v8078 = vld [vmem:[%s2 + $0x2a0] sm:$0xff]
  %v8079 = vld [vmem:[%s2 + $0x2a8] sm:$0xff]
  %v8080 = vld [vmem:[%s2 + $0x2b0] sm:$0xff]
  %v8081 = vld [vmem:[%s2 + $0x2b8] sm:$0xff]
  %v8082 = vld [vmem:[%s2 + $0x2c0] sm:$0xff]
  %v8083 = vld [vmem:[%s2 + $0x2c8] sm:$0xff]
  %v8084 = vld [vmem:[%s2 + $0x2d0] sm:$0xff]
  %v8085 = vld [vmem:[%s2 + $0x2d8] sm:$0xff]
  %v8086 = vld [vmem:[%s2 + $0x2e0] sm:$0xff]
  %v8087 = vld [vmem:[%s2 + $0x2e8] sm:$0xff]
  %v8088 = vld [vmem:[%s2 + $0x2f0] sm:$0xff]
  %v8089 = vld [vmem:[%s2 + $0x2f8] sm:$0xff]
  %v8090 = vld [vmem:[%s2 + $0x300] sm:$0xff]
  %v8091 = vld [vmem:[%s2 + $0x308] sm:$0xff]
  %v8092 = vld [vmem:[%s2 + $0x310] sm:$0xff]
  %v8093 = vld [vmem:[%s2 + $0x318] sm:$0xff]
  %v8094 = vld [vmem:[%s2 + $0x320] sm:$0xff]
  %v8095 = vld [vmem:[%s2 + $0x328] sm:$0xff]
  %v8096 = vld [vmem:[%s2 + $0x330] sm:$0xff]
  %v8097 = vld [vmem:[%s2 + $0x338] sm:$0xff]
  %v8098 = vld [vmem:[%s2 + $0x340] sm:$0xff]
  %v8099 = vld [vmem:[%s2 + $0x348] sm:$0xff]
  %v8100 = vld [vmem:[%s2 + $0x350] sm:$0xff]
  %v8101 = vld [vmem:[%s2 + $0x358] sm:$0xff]
  %v8102 = vld [vmem:[%s2 + $0x360] sm:$0xff]
  %v8103 = vld [vmem:[%s2 + $0x368] sm:$0xff]
  %v8104 = vld [vmem:[%s2 + $0x370] sm:$0xff]
  %v8105 = vld [vmem:[%s2 + $0x378] sm:$0xff]
  %v8106 = vld [vmem:[%s2 + $0x380] sm:$0xff]
  %v8107 = vld [vmem:[%s2 + $0x388] sm:$0xff]
  %v8108 = vld [vmem:[%s2 + $0x390] sm:$0xff]
  %v8109 = vld [vmem:[%s2 + $0x398] sm:$0xff]
  %v8110 = vld [vmem:[%s2 + $0x3a0] sm:$0xff]
  %v8111 = vld [vmem:[%s2 + $0x3a8] sm:$0xff]
  %v8112 = vld [vmem:[%s2 + $0x3b0] sm:$0xff]
  %v8113 = vld [vmem:[%s2 + $0x3b8] sm:$0xff]
  %v8114 = vld [vmem:[%s2 + $0x3c0] sm:$0xff]
  %v8115 = vld [vmem:[%s2 + $0x3c8] sm:$0xff]
  %v8116 = vld [vmem:[%s2 + $0x3d0] sm:$0xff]
  %v8117 = vld [vmem:[%s2 + $0x3d8] sm:$0xff]
  %v8118 = vld [vmem:[%s2 + $0x3e0] sm:$0xff]
  %v8119 = vld [vmem:[%s2 + $0x3e8] sm:$0xff]
  %v8120 = vld [vmem:[%s2 + $0x3f0] sm:$0xff]
  %v8121 = vld [vmem:[%s2 + $0x3f8] sm:$0xff]
  %v8122 = vld [vmem:[%s2 + $0x400] sm:$0xff]
  %v8123 = vld [vmem:[%s2 + $0x408] sm:$0xff]
  %v8124 = vld [vmem:[%s2 + $0x410] sm:$0xff]
  %v8125 = vld [vmem:[%s2 + $0x418] sm:$0xff]
  %v8126 = vld [vmem:[%s2 + $0x420] sm:$0xff]
  %v8127 = vld [vmem:[%s2 + $0x428] sm:$0xff]
  %v8128 = vld [vmem:[%s2 + $0x430] sm:$0xff]
  %v8129 = vld [vmem:[%s2 + $0x438] sm:$0xff]
  %v8130 = vld [vmem:[%s2 + $0x440] sm:$0xff]
  %v8131 = vld [vmem:[%s2 + $0x448] sm:$0xff]
  %v8132 = vld [vmem:[%s2 + $0x450] sm:$0xff]
  %v8133 = vld [vmem:[%s2 + $0x458] sm:$0xff]
  %v8134 = vld [vmem:[%s2 + $0x460] sm:$0xff]
  %v8135 = vld [vmem:[%s2 + $0x468] sm:$0xff]
  %v8136 = vld [vmem:[%s2 + $0x470] sm:$0xff]
  %v8137 = vld [vmem:[%s2 + $0x478] sm:$0xff]
  %v8138 = vld [vmem:[%s2 + $0x480] sm:$0x1f]
  %v8139 = vld [vmem:[%s2 + $0x488] sm:$0x1f]
  %v8140 = vld [vmem:[%s2 + $0x490] sm:$0x1f]
  %v8141 = vld [vmem:[%s2 + $0x498] sm:$0x1f]
  %v8142 = vld [vmem:[%s2 + $0x4a0] sm:$0x1f]
  %v8143 = vld [vmem:[%s2 + $0x4a8] sm:$0x1f]
  %v8144 = vld [vmem:[#allocation2] sm:$0xff]
  %v8145 = vld [vmem:[#allocation2 + $0x8] sm:$0xff]
  %v8146 = vld [vmem:[#allocation2 + $0x10] sm:$0xff]
  %v8147 = vld [vmem:[#allocation2 + $0x18] sm:$0xff]
  %v8148 = vld [vmem:[#allocation2 + $0x20] sm:$0xff]
  %v8149 = vld [vmem:[#allocation2 + $0x28] sm:$0xff]
  %v8150 = vld [vmem:[#allocation2 + $0x30] sm:$0xff]
  %v8151 = vld [vmem:[#allocation2 + $0x38] sm:$0xff]
  %v8152 = vld [vmem:[#allocation2 + $0x40] sm:$0xff]
  %v8153 = vld [vmem:[#allocation2 + $0x48] sm:$0xff]
  %v8154 = vld [vmem:[#allocation2 + $0x50] sm:$0xff]
  %v8155 = vld [vmem:[#allocation2 + $0x58] sm:$0xff]
  %v8156 = vld [vmem:[#allocation2 + $0x60] sm:$0xff]
  %v8157 = vld [vmem:[#allocation2 + $0x68] sm:$0xff]
  %v8158 = vld [vmem:[#allocation2 + $0x70] sm:$0xff]
  %v8159 = vld [vmem:[#allocation2 + $0x78] sm:$0xff]
  %v8160 = vld [vmem:[#allocation2 + $0x80] sm:$0xff]
  %v8161 = vld [vmem:[#allocation2 + $0x88] sm:$0xff]
  %v8162 = vld [vmem:[#allocation2 + $0x90] sm:$0xff]
  %v8163 = vld [vmem:[#allocation2 + $0x98] sm:$0xff]
  %v8164 = vld [vmem:[#allocation2 + $0xa0] sm:$0xff]
  %v8165 = vld [vmem:[#allocation2 + $0xa8] sm:$0xff]
  %v8166 = vld [vmem:[#allocation2 + $0xb0] sm:$0xff]
  %v8167 = vld [vmem:[#allocation2 + $0xb8] sm:$0xff]
  %v8168 = vld [vmem:[#allocation2 + $0xc0] sm:$0xff]
  %v8169 = vld [vmem:[#allocation2 + $0xc8] sm:$0xff]
  %v8170 = vld [vmem:[#allocation2 + $0xd0] sm:$0xff]
  %v8171 = vld [vmem:[#allocation2 + $0xd8] sm:$0xff]
  %v8172 = vld [vmem:[#allocation2 + $0xe0] sm:$0xff]
  %v8173 = vld [vmem:[#allocation2 + $0xe8] sm:$0xff]
  %v8174 = vld [vmem:[#allocation2 + $0xf0] sm:$0xff]
  %v8175 = vld [vmem:[#allocation2 + $0xf8] sm:$0xff]
  %v8176 = vld [vmem:[#allocation2 + $0x100] sm:$0xff]
  %v8177 = vld [vmem:[#allocation2 + $0x108] sm:$0xff]
  %v8178 = vld [vmem:[#allocation2 + $0x110] sm:$0xff]
  %v8179 = vld [vmem:[#allocation2 + $0x118] sm:$0xff]
  %v8180 = vld [vmem:[#allocation2 + $0x120] sm:$0xff]
  %v8181 = vld [vmem:[#allocation2 + $0x128] sm:$0xff]
  %v8182 = vld [vmem:[#allocation2 + $0x130] sm:$0xff]
  %v8183 = vld [vmem:[#allocation2 + $0x138] sm:$0xff]
  %v8184 = vld [vmem:[#allocation2 + $0x140] sm:$0xff]
  %v8185 = vld [vmem:[#allocation2 + $0x148] sm:$0xff]
  %v8186 = vld [vmem:[#allocation2 + $0x150] sm:$0xff]
  %v8187 = vld [vmem:[#allocation2 + $0x158] sm:$0xff]
  %v8188 = vld [vmem:[#allocation2 + $0x160] sm:$0xff]
  %v8189 = vld [vmem:[#allocation2 + $0x168] sm:$0xff]
  %v8190 = vld [vmem:[#allocation2 + $0x170] sm:$0xff]
  %v8191 = vld [vmem:[#allocation2 + $0x178] sm:$0xff]
  %v8192 = vld [vmem:[#allocation2 + $0x180] sm:$0xff]
  %v8193 = vld [vmem:[#allocation2 + $0x188] sm:$0xff]
  %v8194 = vld [vmem:[#allocation2 + $0x190] sm:$0xff]
  %v8195 = vld [vmem:[#allocation2 + $0x198] sm:$0xff]
  %v8196 = vld [vmem:[#allocation2 + $0x1a0] sm:$0xff]
  %v8197 = vld [vmem:[#allocation2 + $0x1a8] sm:$0xff]
  %v8198 = vld [vmem:[#allocation2 + $0x1b0] sm:$0xff]
  %v8199 = vld [vmem:[#allocation2 + $0x1b8] sm:$0xff]
  %v8200 = vld [vmem:[#allocation2 + $0x1c0] sm:$0xff]
  %v8201 = vld [vmem:[#allocation2 + $0x1c8] sm:$0xff]
  %v8202 = vld [vmem:[#allocation2 + $0x1d0] sm:$0xff]
  %v8203 = vld [vmem:[#allocation2 + $0x1d8] sm:$0xff]
  %v8204 = vld [vmem:[#allocation2 + $0x1e0] sm:$0xff]
  %v8205 = vld [vmem:[#allocation2 + $0x1e8] sm:$0xff]
  %v8206 = vld [vmem:[#allocation2 + $0x1f0] sm:$0xff]
  %v8207 = vld [vmem:[#allocation2 + $0x1f8] sm:$0xff]
  %v8208 = vld [vmem:[#allocation2 + $0x200] sm:$0xff]
  %v8209 = vld [vmem:[#allocation2 + $0x208] sm:$0xff]
  %v8210 = vld [vmem:[#allocation2 + $0x210] sm:$0xff]
  %v8211 = vld [vmem:[#allocation2 + $0x218] sm:$0xff]
  %v8212 = vld [vmem:[#allocation2 + $0x220] sm:$0xff]
  %v8213 = vld [vmem:[#allocation2 + $0x228] sm:$0xff]
  %v8214 = vld [vmem:[#allocation2 + $0x230] sm:$0xff]
  %v8215 = vld [vmem:[#allocation2 + $0x238] sm:$0xff]
  %v8216 = vld [vmem:[#allocation2 + $0x240] sm:$0xff]
  %v8217 = vld [vmem:[#allocation2 + $0x248] sm:$0xff]
  %v8218 = vld [vmem:[#allocation2 + $0x250] sm:$0xff]
  %v8219 = vld [vmem:[#allocation2 + $0x258] sm:$0xff]
  %v8220 = vld [vmem:[#allocation2 + $0x260] sm:$0xff]
  %v8221 = vld [vmem:[#allocation2 + $0x268] sm:$0xff]
  %v8222 = vld [vmem:[#allocation2 + $0x270] sm:$0xff]
  %v8223 = vld [vmem:[#allocation2 + $0x278] sm:$0xff]
  %v8224 = vld [vmem:[#allocation2 + $0x280] sm:$0xff]
  %v8225 = vld [vmem:[#allocation2 + $0x288] sm:$0xff]
  %v8226 = vld [vmem:[#allocation2 + $0x290] sm:$0xff]
  %v8227 = vld [vmem:[#allocation2 + $0x298] sm:$0xff]
  %v8228 = vld [vmem:[#allocation2 + $0x2a0] sm:$0xff]
  %v8229 = vld [vmem:[#allocation2 + $0x2a8] sm:$0xff]
  %v8230 = vld [vmem:[#allocation2 + $0x2b0] sm:$0xff]
  %v8231 = vld [vmem:[#allocation2 + $0x2b8] sm:$0xff]
  %v8232 = vld [vmem:[#allocation2 + $0x2c0] sm:$0xff]
  %v8233 = vld [vmem:[#allocation2 + $0x2c8] sm:$0xff]
  %v8234 = vld [vmem:[#allocation2 + $0x2d0] sm:$0xff]
  %v8235 = vld [vmem:[#allocation2 + $0x2d8] sm:$0xff]
  %v8236 = vld [vmem:[#allocation2 + $0x2e0] sm:$0xff]
  %v8237 = vld [vmem:[#allocation2 + $0x2e8] sm:$0xff]
  %v8238 = vld [vmem:[#allocation2 + $0x2f0] sm:$0xff]
  %v8239 = vld [vmem:[#allocation2 + $0x2f8] sm:$0xff]
  %v8240 = vld [vmem:[#allocation2 + $0x300] sm:$0xff]
  %v8241 = vld [vmem:[#allocation2 + $0x308] sm:$0xff]
  %v8242 = vld [vmem:[#allocation2 + $0x310] sm:$0xff]
  %v8243 = vld [vmem:[#allocation2 + $0x318] sm:$0xff]
  %v8244 = vld [vmem:[#allocation2 + $0x320] sm:$0xff]
  %v8245 = vld [vmem:[#allocation2 + $0x328] sm:$0xff]
  %v8246 = vld [vmem:[#allocation2 + $0x330] sm:$0xff]
  %v8247 = vld [vmem:[#allocation2 + $0x338] sm:$0xff]
  %v8248 = vld [vmem:[#allocation2 + $0x340] sm:$0xff]
  %v8249 = vld [vmem:[#allocation2 + $0x348] sm:$0xff]
  %v8250 = vld [vmem:[#allocation2 + $0x350] sm:$0xff]
  %v8251 = vld [vmem:[#allocation2 + $0x358] sm:$0xff]
  %v8252 = vld [vmem:[#allocation2 + $0x360] sm:$0xff]
  %v8253 = vld [vmem:[#allocation2 + $0x368] sm:$0xff]
  %v8254 = vld [vmem:[#allocation2 + $0x370] sm:$0xff]
  %v8255 = vld [vmem:[#allocation2 + $0x378] sm:$0xff]
  %v8256 = vld [vmem:[#allocation2 + $0x380] sm:$0xff]
  %v8257 = vld [vmem:[#allocation2 + $0x388] sm:$0xff]
  %v8258 = vld [vmem:[#allocation2 + $0x390] sm:$0xff]
  %v8259 = vld [vmem:[#allocation2 + $0x398] sm:$0xff]
  %v8260 = vld [vmem:[#allocation2 + $0x3a0] sm:$0xff]
  %v8261 = vld [vmem:[#allocation2 + $0x3a8] sm:$0xff]
  %v8262 = vld [vmem:[#allocation2 + $0x3b0] sm:$0xff]
  %v8263 = vld [vmem:[#allocation2 + $0x3b8] sm:$0xff]
  %v8264 = vld [vmem:[#allocation2 + $0x3c0] sm:$0xff]
  %v8265 = vld [vmem:[#allocation2 + $0x3c8] sm:$0xff]
  %v8266 = vld [vmem:[#allocation2 + $0x3d0] sm:$0xff]
  %v8267 = vld [vmem:[#allocation2 + $0x3d8] sm:$0xff]
  %v8268 = vld [vmem:[#allocation2 + $0x3e0] sm:$0xff]
  %v8269 = vld [vmem:[#allocation2 + $0x3e8] sm:$0xff]
  %v8270 = vld [vmem:[#allocation2 + $0x3f0] sm:$0xff]
  %v8271 = vld [vmem:[#allocation2 + $0x3f8] sm:$0xff]
  %v8272 = vld [vmem:[#allocation2 + $0x400] sm:$0xff]
  %v8273 = vld [vmem:[#allocation2 + $0x408] sm:$0xff]
  %v8274 = vld [vmem:[#allocation2 + $0x410] sm:$0xff]
  %v8275 = vld [vmem:[#allocation2 + $0x418] sm:$0xff]
  %v8276 = vld [vmem:[#allocation2 + $0x420] sm:$0xff]
  %v8277 = vld [vmem:[#allocation2 + $0x428] sm:$0xff]
  %v8278 = vld [vmem:[#allocation2 + $0x430] sm:$0xff]
  %v8279 = vld [vmem:[#allocation2 + $0x438] sm:$0xff]
  %v8280 = vld [vmem:[#allocation2 + $0x440] sm:$0xff]
  %v8281 = vld [vmem:[#allocation2 + $0x448] sm:$0xff]
  %v8282 = vld [vmem:[#allocation2 + $0x450] sm:$0xff]
  %v8283 = vld [vmem:[#allocation2 + $0x458] sm:$0xff]
  %v8284 = vld [vmem:[#allocation2 + $0x460] sm:$0xff]
  %v8285 = vld [vmem:[#allocation2 + $0x468] sm:$0xff]
  %v8286 = vld [vmem:[#allocation2 + $0x470] sm:$0xff]
  %v8287 = vld [vmem:[#allocation2 + $0x478] sm:$0xff]
  %v8288 = vld [vmem:[#allocation2 + $0x480] sm:$0x1f]
  %v8289 = vld [vmem:[#allocation2 + $0x488] sm:$0x1f]
  %v8290 = vld [vmem:[#allocation2 + $0x490] sm:$0x1f]
  %v8291 = vld [vmem:[#allocation2 + $0x498] sm:$0x1f]
  %v8292 = vld [vmem:[#allocation2 + $0x4a0] sm:$0x1f]
  %v8293 = vld [vmem:[#allocation2 + $0x4a8] sm:$0x1f]
  %v8294 = vadd.f32 %v8144, %v7994
  %v8295 = vadd.f32 %v8145, %v7995
  %v8296 = vadd.f32 %v8146, %v7996
  %v8297 = vadd.f32 %v8147, %v7997
  %v8298 = vadd.f32 %v8148, %v7998
  %v8299 = vadd.f32 %v8149, %v7999
  %v8300 = vadd.f32 %v8150, %v8000
  %v8301 = vadd.f32 %v8151, %v8001
  %v8302 = vadd.f32 %v8152, %v8002
  %v8303 = vadd.f32 %v8153, %v8003
  %v8304 = vadd.f32 %v8154, %v8004
  %v8305 = vadd.f32 %v8155, %v8005
  %v8306 = vadd.f32 %v8156, %v8006
  %v8307 = vadd.f32 %v8157, %v8007
  %v8308 = vadd.f32 %v8158, %v8008
  %v8309 = vadd.f32 %v8159, %v8009
  %v8310 = vadd.f32 %v8160, %v8010
  %v8311 = vadd.f32 %v8161, %v8011
  %v8312 = vadd.f32 %v8162, %v8012
  %v8313 = vadd.f32 %v8163, %v8013
  %v8314 = vadd.f32 %v8164, %v8014
  %v8315 = vadd.f32 %v8165, %v8015
  %v8316 = vadd.f32 %v8166, %v8016
  %v8317 = vadd.f32 %v8167, %v8017
  %v8318 = vadd.f32 %v8168, %v8018
  %v8319 = vadd.f32 %v8169, %v8019
  %v8320 = vadd.f32 %v8170, %v8020
  %v8321 = vadd.f32 %v8171, %v8021
  %v8322 = vadd.f32 %v8172, %v8022
  %v8323 = vadd.f32 %v8173, %v8023
  %v8324 = vadd.f32 %v8174, %v8024
  %v8325 = vadd.f32 %v8175, %v8025
  %v8326 = vadd.f32 %v8176, %v8026
  %v8327 = vadd.f32 %v8177, %v8027
  %v8328 = vadd.f32 %v8178, %v8028
  %v8329 = vadd.f32 %v8179, %v8029
  %v8330 = vadd.f32 %v8180, %v8030
  %v8331 = vadd.f32 %v8181, %v8031
  %v8332 = vadd.f32 %v8182, %v8032
  %v8333 = vadd.f32 %v8183, %v8033
  %v8334 = vadd.f32 %v8184, %v8034
  %v8335 = vadd.f32 %v8185, %v8035
  %v8336 = vadd.f32 %v8186, %v8036
  %v8337 = vadd.f32 %v8187, %v8037
  %v8338 = vadd.f32 %v8188, %v8038
  %v8339 = vadd.f32 %v8189, %v8039
  %v8340 = vadd.f32 %v8190, %v8040
  %v8341 = vadd.f32 %v8191, %v8041
  %v8342 = vadd.f32 %v8192, %v8042
  %v8343 = vadd.f32 %v8193, %v8043
  %v8344 = vadd.f32 %v8194, %v8044
  %v8345 = vadd.f32 %v8195, %v8045
  %v8346 = vadd.f32 %v8196, %v8046
  %v8347 = vadd.f32 %v8197, %v8047
  %v8348 = vadd.f32 %v8198, %v8048
  %v8349 = vadd.f32 %v8199, %v8049
  %v8350 = vadd.f32 %v8200, %v8050
  %v8351 = vadd.f32 %v8201, %v8051
  %v8352 = vadd.f32 %v8202, %v8052
  %v8353 = vadd.f32 %v8203, %v8053
  %v8354 = vadd.f32 %v8204, %v8054
  %v8355 = vadd.f32 %v8205, %v8055
  %v8356 = vadd.f32 %v8206, %v8056
  %v8357 = vadd.f32 %v8207, %v8057
  %v8358 = vadd.f32 %v8208, %v8058
  %v8359 = vadd.f32 %v8209, %v8059
  %v8360 = vadd.f32 %v8210, %v8060
  %v8361 = vadd.f32 %v8211, %v8061
  %v8362 = vadd.f32 %v8212, %v8062
  %v8363 = vadd.f32 %v8213, %v8063
  %v8364 = vadd.f32 %v8214, %v8064
  %v8365 = vadd.f32 %v8215, %v8065
  %v8366 = vadd.f32 %v8216, %v8066
  %v8367 = vadd.f32 %v8217, %v8067
  %v8368 = vadd.f32 %v8218, %v8068
  %v8369 = vadd.f32 %v8219, %v8069
  %v8370 = vadd.f32 %v8220, %v8070
  %v8371 = vadd.f32 %v8221, %v8071
  %v8372 = vadd.f32 %v8222, %v8072
  %v8373 = vadd.f32 %v8223, %v8073
  %v8374 = vadd.f32 %v8224, %v8074
  %v8375 = vadd.f32 %v8225, %v8075
  %v8376 = vadd.f32 %v8226, %v8076
  %v8377 = vadd.f32 %v8227, %v8077
  %v8378 = vadd.f32 %v8228, %v8078
  %v8379 = vadd.f32 %v8229, %v8079
  %v8380 = vadd.f32 %v8230, %v8080
  %v8381 = vadd.f32 %v8231, %v8081
  %v8382 = vadd.f32 %v8232, %v8082
  %v8383 = vadd.f32 %v8233, %v8083
  %v8384 = vadd.f32 %v8234, %v8084
  %v8385 = vadd.f32 %v8235, %v8085
  %v8386 = vadd.f32 %v8236, %v8086
  %v8387 = vadd.f32 %v8237, %v8087
  %v8388 = vadd.f32 %v8238, %v8088
  %v8389 = vadd.f32 %v8239, %v8089
  %v8390 = vadd.f32 %v8240, %v8090
  %v8391 = vadd.f32 %v8241, %v8091
  %v8392 = vadd.f32 %v8242, %v8092
  %v8393 = vadd.f32 %v8243, %v8093
  %v8394 = vadd.f32 %v8244, %v8094
  %v8395 = vadd.f32 %v8245, %v8095
  %v8396 = vadd.f32 %v8246, %v8096
  %v8397 = vadd.f32 %v8247, %v8097
  %v8398 = vadd.f32 %v8248, %v8098
  %v8399 = vadd.f32 %v8249, %v8099
  %v8400 = vadd.f32 %v8250, %v8100
  %v8401 = vadd.f32 %v8251, %v8101
  %v8402 = vadd.f32 %v8252, %v8102
  %v8403 = vadd.f32 %v8253, %v8103
  %v8404 = vadd.f32 %v8254, %v8104
  %v8405 = vadd.f32 %v8255, %v8105
  %v8406 = vadd.f32 %v8256, %v8106
  %v8407 = vadd.f32 %v8257, %v8107
  %v8408 = vadd.f32 %v8258, %v8108
  %v8409 = vadd.f32 %v8259, %v8109
  %v8410 = vadd.f32 %v8260, %v8110
  %v8411 = vadd.f32 %v8261, %v8111
  %v8412 = vadd.f32 %v8262, %v8112
  %v8413 = vadd.f32 %v8263, %v8113
  %v8414 = vadd.f32 %v8264, %v8114
  %v8415 = vadd.f32 %v8265, %v8115
  %v8416 = vadd.f32 %v8266, %v8116
  %v8417 = vadd.f32 %v8267, %v8117
  %v8418 = vadd.f32 %v8268, %v8118
  %v8419 = vadd.f32 %v8269, %v8119
  %v8420 = vadd.f32 %v8270, %v8120
  %v8421 = vadd.f32 %v8271, %v8121
  %v8422 = vadd.f32 %v8272, %v8122
  %v8423 = vadd.f32 %v8273, %v8123
  %v8424 = vadd.f32 %v8274, %v8124
  %v8425 = vadd.f32 %v8275, %v8125
  %v8426 = vadd.f32 %v8276, %v8126
  %v8427 = vadd.f32 %v8277, %v8127
  %v8428 = vadd.f32 %v8278, %v8128
  %v8429 = vadd.f32 %v8279, %v8129
  %v8430 = vadd.f32 %v8280, %v8130
  %v8431 = vadd.f32 %v8281, %v8131
  %v8432 = vadd.f32 %v8282, %v8132
  %v8433 = vadd.f32 %v8283, %v8133
  %v8434 = vadd.f32 %v8284, %v8134
  %v8435 = vadd.f32 %v8285, %v8135
  %v8436 = vadd.f32 %v8286, %v8136
  %v8437 = vadd.f32 %v8287, %v8137
  %v8438 = vadd.f32 %v8288, %v8138
  %v8439 = vadd.f32 %v8289, %v8139
  %v8440 = vadd.f32 %v8290, %v8140
  %v8441 = vadd.f32 %v8291, %v8141
  %v8442 = vadd.f32 %v8292, %v8142
  %v8443 = vadd.f32 %v8293, %v8143
  %8444 = vst [vmem:[%s3] sm:$0xff] %v8294
  %8445 = vst [vmem:[%s3 + $0x8] sm:$0xff] %v8295
  %8446 = vst [vmem:[%s3 + $0x10] sm:$0xff] %v8296
  %8447 = vst [vmem:[%s3 + $0x18] sm:$0xff] %v8297
  %8448 = vst [vmem:[%s3 + $0x20] sm:$0xff] %v8298
  %8449 = vst [vmem:[%s3 + $0x28] sm:$0xff] %v8299
  %8450 = vst [vmem:[%s3 + $0x30] sm:$0xff] %v8300
  %8451 = vst [vmem:[%s3 + $0x38] sm:$0xff] %v8301
  %8452 = vst [vmem:[%s3 + $0x40] sm:$0xff] %v8302
  %8453 = vst [vmem:[%s3 + $0x48] sm:$0xff] %v8303
  %8454 = vst [vmem:[%s3 + $0x50] sm:$0xff] %v8304
  %8455 = vst [vmem:[%s3 + $0x58] sm:$0xff] %v8305
  %8456 = vst [vmem:[%s3 + $0x60] sm:$0xff] %v8306
  %8457 = vst [vmem:[%s3 + $0x68] sm:$0xff] %v8307
  %8458 = vst [vmem:[%s3 + $0x70] sm:$0xff] %v8308
  %8459 = vst [vmem:[%s3 + $0x78] sm:$0xff] %v8309
  %8460 = vst [vmem:[%s3 + $0x80] sm:$0xff] %v8310
  %8461 = vst [vmem:[%s3 + $0x88] sm:$0xff] %v8311
  %8462 = vst [vmem:[%s3 + $0x90] sm:$0xff] %v8312
  %8463 = vst [vmem:[%s3 + $0x98] sm:$0xff] %v8313
  %8464 = vst [vmem:[%s3 + $0xa0] sm:$0xff] %v8314
  %8465 = vst [vmem:[%s3 + $0xa8] sm:$0xff] %v8315
  %8466 = vst [vmem:[%s3 + $0xb0] sm:$0xff] %v8316
  %8467 = vst [vmem:[%s3 + $0xb8] sm:$0xff] %v8317
  %8468 = vst [vmem:[%s3 + $0xc0] sm:$0xff] %v8318
  %8469 = vst [vmem:[%s3 + $0xc8] sm:$0xff] %v8319
  %8470 = vst [vmem:[%s3 + $0xd0] sm:$0xff] %v8320
  %8471 = vst [vmem:[%s3 + $0xd8] sm:$0xff] %v8321
  %8472 = vst [vmem:[%s3 + $0xe0] sm:$0xff] %v8322
  %8473 = vst [vmem:[%s3 + $0xe8] sm:$0xff] %v8323
  %8474 = vst [vmem:[%s3 + $0xf0] sm:$0xff] %v8324
  %8475 = vst [vmem:[%s3 + $0xf8] sm:$0xff] %v8325
  %8476 = vst [vmem:[%s3 + $0x100] sm:$0xff] %v8326
  %8477 = vst [vmem:[%s3 + $0x108] sm:$0xff] %v8327
  %8478 = vst [vmem:[%s3 + $0x110] sm:$0xff] %v8328
  %8479 = vst [vmem:[%s3 + $0x118] sm:$0xff] %v8329
  %8480 = vst [vmem:[%s3 + $0x120] sm:$0xff] %v8330
  %8481 = vst [vmem:[%s3 + $0x128] sm:$0xff] %v8331
  %8482 = vst [vmem:[%s3 + $0x130] sm:$0xff] %v8332
  %8483 = vst [vmem:[%s3 + $0x138] sm:$0xff] %v8333
  %8484 = vst [vmem:[%s3 + $0x140] sm:$0xff] %v8334
  %8485 = vst [vmem:[%s3 + $0x148] sm:$0xff] %v8335
  %8486 = vst [vmem:[%s3 + $0x150] sm:$0xff] %v8336
  %8487 = vst [vmem:[%s3 + $0x158] sm:$0xff] %v8337
  %8488 = vst [vmem:[%s3 + $0x160] sm:$0xff] %v8338
  %8489 = vst [vmem:[%s3 + $0x168] sm:$0xff] %v8339
  %8490 = vst [vmem:[%s3 + $0x170] sm:$0xff] %v8340
  %8491 = vst [vmem:[%s3 + $0x178] sm:$0xff] %v8341
  %8492 = vst [vmem:[%s3 + $0x180] sm:$0xff] %v8342
  %8493 = vst [vmem:[%s3 + $0x188] sm:$0xff] %v8343
  %8494 = vst [vmem:[%s3 + $0x190] sm:$0xff] %v8344
  %8495 = vst [vmem:[%s3 + $0x198] sm:$0xff] %v8345
  %8496 = vst [vmem:[%s3 + $0x1a0] sm:$0xff] %v8346
  %8497 = vst [vmem:[%s3 + $0x1a8] sm:$0xff] %v8347
  %8498 = vst [vmem:[%s3 + $0x1b0] sm:$0xff] %v8348
  %8499 = vst [vmem:[%s3 + $0x1b8] sm:$0xff] %v8349
  %8500 = vst [vmem:[%s3 + $0x1c0] sm:$0xff] %v8350
  %8501 = vst [vmem:[%s3 + $0x1c8] sm:$0xff] %v8351
  %8502 = vst [vmem:[%s3 + $0x1d0] sm:$0xff] %v8352
  %8503 = vst [vmem:[%s3 + $0x1d8] sm:$0xff] %v8353
  %8504 = vst [vmem:[%s3 + $0x1e0] sm:$0xff] %v8354
  %8505 = vst [vmem:[%s3 + $0x1e8] sm:$0xff] %v8355
  %8506 = vst [vmem:[%s3 + $0x1f0] sm:$0xff] %v8356
  %8507 = vst [vmem:[%s3 + $0x1f8] sm:$0xff] %v8357
  %8508 = vst [vmem:[%s3 + $0x200] sm:$0xff] %v8358
  %8509 = vst [vmem:[%s3 + $0x208] sm:$0xff] %v8359
  %8510 = vst [vmem:[%s3 + $0x210] sm:$0xff] %v8360
  %8511 = vst [vmem:[%s3 + $0x218] sm:$0xff] %v8361
  %8512 = vst [vmem:[%s3 + $0x220] sm:$0xff] %v8362
  %8513 = vst [vmem:[%s3 + $0x228] sm:$0xff] %v8363
  %8514 = vst [vmem:[%s3 + $0x230] sm:$0xff] %v8364
  %8515 = vst [vmem:[%s3 + $0x238] sm:$0xff] %v8365
  %8516 = vst [vmem:[%s3 + $0x240] sm:$0xff] %v8366
  %8517 = vst [vmem:[%s3 + $0x248] sm:$0xff] %v8367
  %8518 = vst [vmem:[%s3 + $0x250] sm:$0xff] %v8368
  %8519 = vst [vmem:[%s3 + $0x258] sm:$0xff] %v8369
  %8520 = vst [vmem:[%s3 + $0x260] sm:$0xff] %v8370
  %8521 = vst [vmem:[%s3 + $0x268] sm:$0xff] %v8371
  %8522 = vst [vmem:[%s3 + $0x270] sm:$0xff] %v8372
  %8523 = vst [vmem:[%s3 + $0x278] sm:$0xff] %v8373
  %8524 = vst [vmem:[%s3 + $0x280] sm:$0xff] %v8374
  %8525 = vst [vmem:[%s3 + $0x288] sm:$0xff] %v8375
  %8526 = vst [vmem:[%s3 + $0x290] sm:$0xff] %v8376
  %8527 = vst [vmem:[%s3 + $0x298] sm:$0xff] %v8377
  %8528 = vst [vmem:[%s3 + $0x2a0] sm:$0xff] %v8378
  %8529 = vst [vmem:[%s3 + $0x2a8] sm:$0xff] %v8379
  %8530 = vst [vmem:[%s3 + $0x2b0] sm:$0xff] %v8380
  %8531 = vst [vmem:[%s3 + $0x2b8] sm:$0xff] %v8381
  %8532 = vst [vmem:[%s3 + $0x2c0] sm:$0xff] %v8382
  %8533 = vst [vmem:[%s3 + $0x2c8] sm:$0xff] %v8383
  %8534 = vst [vmem:[%s3 + $0x2d0] sm:$0xff] %v8384
  %8535 = vst [vmem:[%s3 + $0x2d8] sm:$0xff] %v8385
  %8536 = vst [vmem:[%s3 + $0x2e0] sm:$0xff] %v8386
  %8537 = vst [vmem:[%s3 + $0x2e8] sm:$0xff] %v8387
  %8538 = vst [vmem:[%s3 + $0x2f0] sm:$0xff] %v8388
  %8539 = vst [vmem:[%s3 + $0x2f8] sm:$0xff] %v8389
  %8540 = vst [vmem:[%s3 + $0x300] sm:$0xff] %v8390
  %8541 = vst [vmem:[%s3 + $0x308] sm:$0xff] %v8391
  %8542 = vst [vmem:[%s3 + $0x310] sm:$0xff] %v8392
  %8543 = vst [vmem:[%s3 + $0x318] sm:$0xff] %v8393
  %8544 = vst [vmem:[%s3 + $0x320] sm:$0xff] %v8394
  %8545 = vst [vmem:[%s3 + $0x328] sm:$0xff] %v8395
  %8546 = vst [vmem:[%s3 + $0x330] sm:$0xff] %v8396
  %8547 = vst [vmem:[%s3 + $0x338] sm:$0xff] %v8397
  %8548 = vst [vmem:[%s3 + $0x340] sm:$0xff] %v8398
  %8549 = vst [vmem:[%s3 + $0x348] sm:$0xff] %v8399
  %8550 = vst [vmem:[%s3 + $0x350] sm:$0xff] %v8400
  %8551 = vst [vmem:[%s3 + $0x358] sm:$0xff] %v8401
  %8552 = vst [vmem:[%s3 + $0x360] sm:$0xff] %v8402
  %8553 = vst [vmem:[%s3 + $0x368] sm:$0xff] %v8403
  %8554 = vst [vmem:[%s3 + $0x370] sm:$0xff] %v8404
  %8555 = vst [vmem:[%s3 + $0x378] sm:$0xff] %v8405
  %8556 = vst [vmem:[%s3 + $0x380] sm:$0xff] %v8406
  %8557 = vst [vmem:[%s3 + $0x388] sm:$0xff] %v8407
  %8558 = vst [vmem:[%s3 + $0x390] sm:$0xff] %v8408
  %8559 = vst [vmem:[%s3 + $0x398] sm:$0xff] %v8409
  %8560 = vst [vmem:[%s3 + $0x3a0] sm:$0xff] %v8410
  %8561 = vst [vmem:[%s3 + $0x3a8] sm:$0xff] %v8411
  %8562 = vst [vmem:[%s3 + $0x3b0] sm:$0xff] %v8412
  %8563 = vst [vmem:[%s3 + $0x3b8] sm:$0xff] %v8413
  %8564 = vst [vmem:[%s3 + $0x3c0] sm:$0xff] %v8414
  %8565 = vst [vmem:[%s3 + $0x3c8] sm:$0xff] %v8415
  %8566 = vst [vmem:[%s3 + $0x3d0] sm:$0xff] %v8416
  %8567 = vst [vmem:[%s3 + $0x3d8] sm:$0xff] %v8417
  %8568 = vst [vmem:[%s3 + $0x3e0] sm:$0xff] %v8418
  %8569 = vst [vmem:[%s3 + $0x3e8] sm:$0xff] %v8419
  %8570 = vst [vmem:[%s3 + $0x3f0] sm:$0xff] %v8420
  %8571 = vst [vmem:[%s3 + $0x3f8] sm:$0xff] %v8421
  %8572 = vst [vmem:[%s3 + $0x400] sm:$0xff] %v8422
  %8573 = vst [vmem:[%s3 + $0x408] sm:$0xff] %v8423
  %8574 = vst [vmem:[%s3 + $0x410] sm:$0xff] %v8424
  %8575 = vst [vmem:[%s3 + $0x418] sm:$0xff] %v8425
  %8576 = vst [vmem:[%s3 + $0x420] sm:$0xff] %v8426
  %8577 = vst [vmem:[%s3 + $0x428] sm:$0xff] %v8427
  %8578 = vst [vmem:[%s3 + $0x430] sm:$0xff] %v8428
  %8579 = vst [vmem:[%s3 + $0x438] sm:$0xff] %v8429
  %8580 = vst [vmem:[%s3 + $0x440] sm:$0xff] %v8430
  %8581 = vst [vmem:[%s3 + $0x448] sm:$0xff] %v8431
  %8582 = vst [vmem:[%s3 + $0x450] sm:$0xff] %v8432
  %8583 = vst [vmem:[%s3 + $0x458] sm:$0xff] %v8433
  %8584 = vst [vmem:[%s3 + $0x460] sm:$0xff] %v8434
  %8585 = vst [vmem:[%s3 + $0x468] sm:$0xff] %v8435
  %8586 = vst [vmem:[%s3 + $0x470] sm:$0xff] %v8436
  %8587 = vst [vmem:[%s3 + $0x478] sm:$0xff] %v8437
  %8588 = vst [vmem:[%s3 + $0x480] sm:$0x1f] %v8438
  %8589 = vst [vmem:[%s3 + $0x488] sm:$0x1f] %v8439
  %8590 = vst [vmem:[%s3 + $0x490] sm:$0x1f] %v8440
  %8591 = vst [vmem:[%s3 + $0x498] sm:$0x1f] %v8441
  %8592 = vst [vmem:[%s3 + $0x4a0] sm:$0x1f] %v8442
  %8593 = vst [vmem:[%s3 + $0x4a8] sm:$0x1f] %v8443
  %v8594 = vld [vmem:[#allocation2 + $0x4e0] sm:$0xff]
  %v8595 = vld [vmem:[#allocation2 + $0x4e8] sm:$0xff]
  %v8596 = vld [vmem:[#allocation2 + $0x4f0] sm:$0xff]
  %v8597 = vld [vmem:[#allocation2 + $0x4f8] sm:$0xff]
  %v8598 = vld [vmem:[#allocation2 + $0x500] sm:$0xff]
  %v8599 = vld [vmem:[#allocation2 + $0x508] sm:$0xff]
  %v8600 = vld [vmem:[#allocation2 + $0x510] sm:$0xff]
  %v8601 = vld [vmem:[#allocation2 + $0x518] sm:$0xff]
  %v8602 = vld [vmem:[#allocation2 + $0x520] sm:$0xff]
  %v8603 = vld [vmem:[#allocation2 + $0x528] sm:$0xff]
  %v8604 = vld [vmem:[#allocation2 + $0x530] sm:$0xff]
  %v8605 = vld [vmem:[#allocation2 + $0x538] sm:$0xff]
  %v8606 = vld [vmem:[#allocation2 + $0x540] sm:$0xff]
  %v8607 = vld [vmem:[#allocation2 + $0x548] sm:$0xff]
  %v8608 = vld [vmem:[#allocation2 + $0x550] sm:$0xff]
  %v8609 = vld [vmem:[#allocation2 + $0x558] sm:$0xff]
  %v8610 = vld [vmem:[#allocation2 + $0x560] sm:$0xff]
  %v8611 = vld [vmem:[#allocation2 + $0x568] sm:$0xff]
  %v8612 = vld [vmem:[#allocation2 + $0x570] sm:$0xff]
  %v8613 = vld [vmem:[#allocation2 + $0x578] sm:$0xff]
  %v8614 = vld [vmem:[#allocation2 + $0x580] sm:$0xff]
  %v8615 = vld [vmem:[#allocation2 + $0x588] sm:$0xff]
  %v8616 = vld [vmem:[#allocation2 + $0x590] sm:$0xff]
  %v8617 = vld [vmem:[#allocation2 + $0x598] sm:$0xff]
  %v8618 = vld [vmem:[#allocation2 + $0x5a0] sm:$0xff]
  %v8619 = vld [vmem:[#allocation2 + $0x5a8] sm:$0xff]
  %v8620 = vld [vmem:[#allocation2 + $0x5b0] sm:$0xff]
  %v8621 = vld [vmem:[#allocation2 + $0x5b8] sm:$0xff]
  %v8622 = vld [vmem:[#allocation2 + $0x5c0] sm:$0xff]
  %v8623 = vld [vmem:[#allocation2 + $0x5c8] sm:$0xff]
  %v8624 = vld [vmem:[#allocation2 + $0x5d0] sm:$0xff]
  %v8625 = vld [vmem:[#allocation2 + $0x5d8] sm:$0xff]
  %v8626 = vld [vmem:[#allocation2 + $0x5e0] sm:$0xff]
  %v8627 = vld [vmem:[#allocation2 + $0x5e8] sm:$0xff]
  %v8628 = vld [vmem:[#allocation2 + $0x5f0] sm:$0xff]
  %v8629 = vld [vmem:[#allocation2 + $0x5f8] sm:$0xff]
  %v8630 = vld [vmem:[#allocation2 + $0x600] sm:$0xff]
  %v8631 = vld [vmem:[#allocation2 + $0x608] sm:$0xff]
  %v8632 = vld [vmem:[#allocation2 + $0x610] sm:$0xff]
  %v8633 = vld [vmem:[#allocation2 + $0x618] sm:$0xff]
  %v8634 = vld [vmem:[#allocation2 + $0x620] sm:$0xff]
  %v8635 = vld [vmem:[#allocation2 + $0x628] sm:$0xff]
  %v8636 = vld [vmem:[#allocation2 + $0x630] sm:$0xff]
  %v8637 = vld [vmem:[#allocation2 + $0x638] sm:$0xff]
  %v8638 = vld [vmem:[#allocation2 + $0x640] sm:$0xff]
  %v8639 = vld [vmem:[#allocation2 + $0x648] sm:$0xff]
  %v8640 = vld [vmem:[#allocation2 + $0x650] sm:$0xff]
  %v8641 = vld [vmem:[#allocation2 + $0x658] sm:$0xff]
  %v8642 = vld [vmem:[#allocation2 + $0x660] sm:$0xff]
  %v8643 = vld [vmem:[#allocation2 + $0x668] sm:$0xff]
  %v8644 = vld [vmem:[#allocation2 + $0x670] sm:$0xff]
  %v8645 = vld [vmem:[#allocation2 + $0x678] sm:$0xff]
  %v8646 = vld [vmem:[#allocation2 + $0x680] sm:$0xff]
  %v8647 = vld [vmem:[#allocation2 + $0x688] sm:$0xff]
  %v8648 = vld [vmem:[#allocation2 + $0x690] sm:$0xff]
  %v8649 = vld [vmem:[#allocation2 + $0x698] sm:$0xff]
  %v8650 = vld [vmem:[#allocation2 + $0x6a0] sm:$0xff]
  %v8651 = vld [vmem:[#allocation2 + $0x6a8] sm:$0xff]
  %v8652 = vld [vmem:[#allocation2 + $0x6b0] sm:$0xff]
  %v8653 = vld [vmem:[#allocation2 + $0x6b8] sm:$0xff]
  %v8654 = vld [vmem:[#allocation2 + $0x6c0] sm:$0xff]
  %v8655 = vld [vmem:[#allocation2 + $0x6c8] sm:$0xff]
  %v8656 = vld [vmem:[#allocation2 + $0x6d0] sm:$0xff]
  %v8657 = vld [vmem:[#allocation2 + $0x6d8] sm:$0xff]
  %v8658 = vld [vmem:[#allocation2 + $0x6e0] sm:$0xff]
  %v8659 = vld [vmem:[#allocation2 + $0x6e8] sm:$0xff]
  %v8660 = vld [vmem:[#allocation2 + $0x6f0] sm:$0xff]
  %v8661 = vld [vmem:[#allocation2 + $0x6f8] sm:$0xff]
  %v8662 = vld [vmem:[#allocation2 + $0x700] sm:$0xff]
  %v8663 = vld [vmem:[#allocation2 + $0x708] sm:$0xff]
  %v8664 = vld [vmem:[#allocation2 + $0x710] sm:$0xff]
  %v8665 = vld [vmem:[#allocation2 + $0x718] sm:$0xff]
  %v8666 = vld [vmem:[#allocation2 + $0x720] sm:$0xff]
  %v8667 = vld [vmem:[#allocation2 + $0x728] sm:$0xff]
  %v8668 = vld [vmem:[#allocation2 + $0x730] sm:$0xff]
  %v8669 = vld [vmem:[#allocation2 + $0x738] sm:$0xff]
  %v8670 = vld [vmem:[#allocation2 + $0x740] sm:$0xff]
  %v8671 = vld [vmem:[#allocation2 + $0x748] sm:$0xff]
  %v8672 = vld [vmem:[#allocation2 + $0x750] sm:$0xff]
  %v8673 = vld [vmem:[#allocation2 + $0x758] sm:$0xff]
  %v8674 = vld [vmem:[#allocation2 + $0x760] sm:$0xff]
  %v8675 = vld [vmem:[#allocation2 + $0x768] sm:$0xff]
  %v8676 = vld [vmem:[#allocation2 + $0x770] sm:$0xff]
  %v8677 = vld [vmem:[#allocation2 + $0x778] sm:$0xff]
  %v8678 = vld [vmem:[#allocation2 + $0x780] sm:$0xff]
  %v8679 = vld [vmem:[#allocation2 + $0x788] sm:$0xff]
  %v8680 = vld [vmem:[#allocation2 + $0x790] sm:$0xff]
  %v8681 = vld [vmem:[#allocation2 + $0x798] sm:$0xff]
  %v8682 = vld [vmem:[#allocation2 + $0x7a0] sm:$0xff]
  %v8683 = vld [vmem:[#allocation2 + $0x7a8] sm:$0xff]
  %v8684 = vld [vmem:[#allocation2 + $0x7b0] sm:$0xff]
  %v8685 = vld [vmem:[#allocation2 + $0x7b8] sm:$0xff]
  %v8686 = vld [vmem:[#allocation2 + $0x7c0] sm:$0xff]
  %v8687 = vld [vmem:[#allocation2 + $0x7c8] sm:$0xff]
  %v8688 = vld [vmem:[#allocation2 + $0x7d0] sm:$0xff]
  %v8689 = vld [vmem:[#allocation2 + $0x7d8] sm:$0xff]
  %v8690 = vld [vmem:[#allocation2 + $0x7e0] sm:$0xff]
  %v8691 = vld [vmem:[#allocation2 + $0x7e8] sm:$0xff]
  %v8692 = vld [vmem:[#allocation2 + $0x7f0] sm:$0xff]
  %v8693 = vld [vmem:[#allocation2 + $0x7f8] sm:$0xff]
  %v8694 = vld [vmem:[#allocation2 + $0x800] sm:$0xff]
  %v8695 = vld [vmem:[#allocation2 + $0x808] sm:$0xff]
  %v8696 = vld [vmem:[#allocation2 + $0x810] sm:$0xff]
  %v8697 = vld [vmem:[#allocation2 + $0x818] sm:$0xff]
  %v8698 = vld [vmem:[#allocation2 + $0x820] sm:$0xff]
  %v8699 = vld [vmem:[#allocation2 + $0x828] sm:$0xff]
  %v8700 = vld [vmem:[#allocation2 + $0x830] sm:$0xff]
  %v8701 = vld [vmem:[#allocation2 + $0x838] sm:$0xff]
  %v8702 = vld [vmem:[#allocation2 + $0x840] sm:$0xff]
  %v8703 = vld [vmem:[#allocation2 + $0x848] sm:$0xff]
  %v8704 = vld [vmem:[#allocation2 + $0x850] sm:$0xff]
  %v8705 = vld [vmem:[#allocation2 + $0x858] sm:$0xff]
  %v8706 = vld [vmem:[#allocation2 + $0x860] sm:$0xff]
  %v8707 = vld [vmem:[#allocation2 + $0x868] sm:$0xff]
  %v8708 = vld [vmem:[#allocation2 + $0x870] sm:$0xff]
  %v8709 = vld [vmem:[#allocation2 + $0x878] sm:$0xff]
  %v8710 = vld [vmem:[#allocation2 + $0x880] sm:$0xff]
  %v8711 = vld [vmem:[#allocation2 + $0x888] sm:$0xff]
  %v8712 = vld [vmem:[#allocation2 + $0x890] sm:$0xff]
  %v8713 = vld [vmem:[#allocation2 + $0x898] sm:$0xff]
  %v8714 = vld [vmem:[#allocation2 + $0x8a0] sm:$0xff]
  %v8715 = vld [vmem:[#allocation2 + $0x8a8] sm:$0xff]
  %v8716 = vld [vmem:[#allocation2 + $0x8b0] sm:$0xff]
  %v8717 = vld [vmem:[#allocation2 + $0x8b8] sm:$0xff]
  %v8718 = vld [vmem:[#allocation2 + $0x8c0] sm:$0xff]
  %v8719 = vld [vmem:[#allocation2 + $0x8c8] sm:$0xff]
  %v8720 = vld [vmem:[#allocation2 + $0x8d0] sm:$0xff]
  %v8721 = vld [vmem:[#allocation2 + $0x8d8] sm:$0xff]
  %v8722 = vld [vmem:[#allocation2 + $0x8e0] sm:$0xff]
  %v8723 = vld [vmem:[#allocation2 + $0x8e8] sm:$0xff]
  %v8724 = vld [vmem:[#allocation2 + $0x8f0] sm:$0xff]
  %v8725 = vld [vmem:[#allocation2 + $0x8f8] sm:$0xff]
  %v8726 = vld [vmem:[#allocation2 + $0x900] sm:$0xff]
  %v8727 = vld [vmem:[#allocation2 + $0x908] sm:$0xff]
  %v8728 = vld [vmem:[#allocation2 + $0x910] sm:$0xff]
  %v8729 = vld [vmem:[#allocation2 + $0x918] sm:$0xff]
  %v8730 = vld [vmem:[#allocation2 + $0x920] sm:$0xff]
  %v8731 = vld [vmem:[#allocation2 + $0x928] sm:$0xff]
  %v8732 = vld [vmem:[#allocation2 + $0x930] sm:$0xff]
  %v8733 = vld [vmem:[#allocation2 + $0x938] sm:$0xff]
  %v8734 = vld [vmem:[#allocation2 + $0x940] sm:$0xff]
  %v8735 = vld [vmem:[#allocation2 + $0x948] sm:$0xff]
  %v8736 = vld [vmem:[#allocation2 + $0x950] sm:$0xff]
  %v8737 = vld [vmem:[#allocation2 + $0x958] sm:$0xff]
  %v8738 = vld [vmem:[#allocation2 + $0x960] sm:$0x1f]
  %v8739 = vld [vmem:[#allocation2 + $0x968] sm:$0x1f]
  %v8740 = vld [vmem:[#allocation2 + $0x970] sm:$0x1f]
  %v8741 = vld [vmem:[#allocation2 + $0x978] sm:$0x1f]
  %v8742 = vld [vmem:[#allocation2 + $0x980] sm:$0x1f]
  %v8743 = vld [vmem:[#allocation2 + $0x988] sm:$0x1f]
  %v8744 = vadd.f32 %v8594, %v7994
  %v8745 = vadd.f32 %v8595, %v7995
  %v8746 = vadd.f32 %v8596, %v7996
  %v8747 = vadd.f32 %v8597, %v7997
  %v8748 = vadd.f32 %v8598, %v7998
  %v8749 = vadd.f32 %v8599, %v7999
  %v8750 = vadd.f32 %v8600, %v8000
  %v8751 = vadd.f32 %v8601, %v8001
  %v8752 = vadd.f32 %v8602, %v8002
  %v8753 = vadd.f32 %v8603, %v8003
  %v8754 = vadd.f32 %v8604, %v8004
  %v8755 = vadd.f32 %v8605, %v8005
  %v8756 = vadd.f32 %v8606, %v8006
  %v8757 = vadd.f32 %v8607, %v8007
  %v8758 = vadd.f32 %v8608, %v8008
  %v8759 = vadd.f32 %v8609, %v8009
  %v8760 = vadd.f32 %v8610, %v8010
  %v8761 = vadd.f32 %v8611, %v8011
  %v8762 = vadd.f32 %v8612, %v8012
  %v8763 = vadd.f32 %v8613, %v8013
  %v8764 = vadd.f32 %v8614, %v8014
  %v8765 = vadd.f32 %v8615, %v8015
  %v8766 = vadd.f32 %v8616, %v8016
  %v8767 = vadd.f32 %v8617, %v8017
  %v8768 = vadd.f32 %v8618, %v8018
  %v8769 = vadd.f32 %v8619, %v8019
  %v8770 = vadd.f32 %v8620, %v8020
  %v8771 = vadd.f32 %v8621, %v8021
  %v8772 = vadd.f32 %v8622, %v8022
  %v8773 = vadd.f32 %v8623, %v8023
  %v8774 = vadd.f32 %v8624, %v8024
  %v8775 = vadd.f32 %v8625, %v8025
  %v8776 = vadd.f32 %v8626, %v8026
  %v8777 = vadd.f32 %v8627, %v8027
  %v8778 = vadd.f32 %v8628, %v8028
  %v8779 = vadd.f32 %v8629, %v8029
  %v8780 = vadd.f32 %v8630, %v8030
  %v8781 = vadd.f32 %v8631, %v8031
  %v8782 = vadd.f32 %v8632, %v8032
  %v8783 = vadd.f32 %v8633, %v8033
  %v8784 = vadd.f32 %v8634, %v8034
  %v8785 = vadd.f32 %v8635, %v8035
  %v8786 = vadd.f32 %v8636, %v8036
  %v8787 = vadd.f32 %v8637, %v8037
  %v8788 = vadd.f32 %v8638, %v8038
  %v8789 = vadd.f32 %v8639, %v8039
  %v8790 = vadd.f32 %v8640, %v8040
  %v8791 = vadd.f32 %v8641, %v8041
  %v8792 = vadd.f32 %v8642, %v8042
  %v8793 = vadd.f32 %v8643, %v8043
  %v8794 = vadd.f32 %v8644, %v8044
  %v8795 = vadd.f32 %v8645, %v8045
  %v8796 = vadd.f32 %v8646, %v8046
  %v8797 = vadd.f32 %v8647, %v8047
  %v8798 = vadd.f32 %v8648, %v8048
  %v8799 = vadd.f32 %v8649, %v8049
  %v8800 = vadd.f32 %v8650, %v8050
  %v8801 = vadd.f32 %v8651, %v8051
  %v8802 = vadd.f32 %v8652, %v8052
  %v8803 = vadd.f32 %v8653, %v8053
  %v8804 = vadd.f32 %v8654, %v8054
  %v8805 = vadd.f32 %v8655, %v8055
  %v8806 = vadd.f32 %v8656, %v8056
  %v8807 = vadd.f32 %v8657, %v8057
  %v8808 = vadd.f32 %v8658, %v8058
  %v8809 = vadd.f32 %v8659, %v8059
  %v8810 = vadd.f32 %v8660, %v8060
  %v8811 = vadd.f32 %v8661, %v8061
  %v8812 = vadd.f32 %v8662, %v8062
  %v8813 = vadd.f32 %v8663, %v8063
  %v8814 = vadd.f32 %v8664, %v8064
  %v8815 = vadd.f32 %v8665, %v8065
  %v8816 = vadd.f32 %v8666, %v8066
  %v8817 = vadd.f32 %v8667, %v8067
  %v8818 = vadd.f32 %v8668, %v8068
  %v8819 = vadd.f32 %v8669, %v8069
  %v8820 = vadd.f32 %v8670, %v8070
  %v8821 = vadd.f32 %v8671, %v8071
  %v8822 = vadd.f32 %v8672, %v8072
  %v8823 = vadd.f32 %v8673, %v8073
  %v8824 = vadd.f32 %v8674, %v8074
  %v8825 = vadd.f32 %v8675, %v8075
  %v8826 = vadd.f32 %v8676, %v8076
  %v8827 = vadd.f32 %v8677, %v8077
  %v8828 = vadd.f32 %v8678, %v8078
  %v8829 = vadd.f32 %v8679, %v8079
  %v8830 = vadd.f32 %v8680, %v8080
  %v8831 = vadd.f32 %v8681, %v8081
  %v8832 = vadd.f32 %v8682, %v8082
  %v8833 = vadd.f32 %v8683, %v8083
  %v8834 = vadd.f32 %v8684, %v8084
  %v8835 = vadd.f32 %v8685, %v8085
  %v8836 = vadd.f32 %v8686, %v8086
  %v8837 = vadd.f32 %v8687, %v8087
  %v8838 = vadd.f32 %v8688, %v8088
  %v8839 = vadd.f32 %v8689, %v8089
  %v8840 = vadd.f32 %v8690, %v8090
  %v8841 = vadd.f32 %v8691, %v8091
  %v8842 = vadd.f32 %v8692, %v8092
  %v8843 = vadd.f32 %v8693, %v8093
  %v8844 = vadd.f32 %v8694, %v8094
  %v8845 = vadd.f32 %v8695, %v8095
  %v8846 = vadd.f32 %v8696, %v8096
  %v8847 = vadd.f32 %v8697, %v8097
  %v8848 = vadd.f32 %v8698, %v8098
  %v8849 = vadd.f32 %v8699, %v8099
  %v8850 = vadd.f32 %v8700, %v8100
  %v8851 = vadd.f32 %v8701, %v8101
  %v8852 = vadd.f32 %v8702, %v8102
  %v8853 = vadd.f32 %v8703, %v8103
  %v8854 = vadd.f32 %v8704, %v8104
  %v8855 = vadd.f32 %v8705, %v8105
  %v8856 = vadd.f32 %v8706, %v8106
  %v8857 = vadd.f32 %v8707, %v8107
  %v8858 = vadd.f32 %v8708, %v8108
  %v8859 = vadd.f32 %v8709, %v8109
  %v8860 = vadd.f32 %v8710, %v8110
  %v8861 = vadd.f32 %v8711, %v8111
  %v8862 = vadd.f32 %v8712, %v8112
  %v8863 = vadd.f32 %v8713, %v8113
  %v8864 = vadd.f32 %v8714, %v8114
  %v8865 = vadd.f32 %v8715, %v8115
  %v8866 = vadd.f32 %v8716, %v8116
  %v8867 = vadd.f32 %v8717, %v8117
  %v8868 = vadd.f32 %v8718, %v8118
  %v8869 = vadd.f32 %v8719, %v8119
  %v8870 = vadd.f32 %v8720, %v8120
  %v8871 = vadd.f32 %v8721, %v8121
  %v8872 = vadd.f32 %v8722, %v8122
  %v8873 = vadd.f32 %v8723, %v8123
  %v8874 = vadd.f32 %v8724, %v8124
  %v8875 = vadd.f32 %v8725, %v8125
  %v8876 = vadd.f32 %v8726, %v8126
  %v8877 = vadd.f32 %v8727, %v8127
  %v8878 = vadd.f32 %v8728, %v8128
  %v8879 = vadd.f32 %v8729, %v8129
  %v8880 = vadd.f32 %v8730, %v8130
  %v8881 = vadd.f32 %v8731, %v8131
  %v8882 = vadd.f32 %v8732, %v8132
  %v8883 = vadd.f32 %v8733, %v8133
  %v8884 = vadd.f32 %v8734, %v8134
  %v8885 = vadd.f32 %v8735, %v8135
  %v8886 = vadd.f32 %v8736, %v8136
  %v8887 = vadd.f32 %v8737, %v8137
  %v8888 = vadd.f32 %v8738, %v8138
  %v8889 = vadd.f32 %v8739, %v8139
  %v8890 = vadd.f32 %v8740, %v8140
  %v8891 = vadd.f32 %v8741, %v8141
  %v8892 = vadd.f32 %v8742, %v8142
  %v8893 = vadd.f32 %v8743, %v8143
  %s8894 = scalar_lea.vmem %s3, 1200
  %8895 = vst [vmem:[%s8894] sm:$0xff] %v8744
  %8896 = vst [vmem:[%s8894 + $0x8] sm:$0xff] %v8745
  %8897 = vst [vmem:[%s8894 + $0x10] sm:$0xff] %v8746
  %8898 = vst [vmem:[%s8894 + $0x18] sm:$0xff] %v8747
  %8899 = vst [vmem:[%s8894 + $0x20] sm:$0xff] %v8748
  %8900 = vst [vmem:[%s8894 + $0x28] sm:$0xff] %v8749
  %8901 = vst [vmem:[%s8894 + $0x30] sm:$0xff] %v8750
  %8902 = vst [vmem:[%s8894 + $0x38] sm:$0xff] %v8751
  %8903 = vst [vmem:[%s8894 + $0x40] sm:$0xff] %v8752
  %8904 = vst [vmem:[%s8894 + $0x48] sm:$0xff] %v8753
  %8905 = vst [vmem:[%s8894 + $0x50] sm:$0xff] %v8754
  %8906 = vst [vmem:[%s8894 + $0x58] sm:$0xff] %v8755
  %8907 = vst [vmem:[%s8894 + $0x60] sm:$0xff] %v8756
  %8908 = vst [vmem:[%s8894 + $0x68] sm:$0xff] %v8757
  %8909 = vst [vmem:[%s8894 + $0x70] sm:$0xff] %v8758
  %8910 = vst [vmem:[%s8894 + $0x78] sm:$0xff] %v8759
  %8911 = vst [vmem:[%s8894 + $0x80] sm:$0xff] %v8760
  %8912 = vst [vmem:[%s8894 + $0x88] sm:$0xff] %v8761
  %8913 = vst [vmem:[%s8894 + $0x90] sm:$0xff] %v8762
  %8914 = vst [vmem:[%s8894 + $0x98] sm:$0xff] %v8763
  %8915 = vst [vmem:[%s8894 + $0xa0] sm:$0xff] %v8764
  %8916 = vst [vmem:[%s8894 + $0xa8] sm:$0xff] %v8765
  %8917 = vst [vmem:[%s8894 + $0xb0] sm:$0xff] %v8766
  %8918 = vst [vmem:[%s8894 + $0xb8] sm:$0xff] %v8767
  %8919 = vst [vmem:[%s8894 + $0xc0] sm:$0xff] %v8768
  %8920 = vst [vmem:[%s8894 + $0xc8] sm:$0xff] %v8769
  %8921 = vst [vmem:[%s8894 + $0xd0] sm:$0xff] %v8770
  %8922 = vst [vmem:[%s8894 + $0xd8] sm:$0xff] %v8771
  %8923 = vst [vmem:[%s8894 + $0xe0] sm:$0xff] %v8772
  %8924 = vst [vmem:[%s8894 + $0xe8] sm:$0xff] %v8773
  %8925 = vst [vmem:[%s8894 + $0xf0] sm:$0xff] %v8774
  %8926 = vst [vmem:[%s8894 + $0xf8] sm:$0xff] %v8775
  %8927 = vst [vmem:[%s8894 + $0x100] sm:$0xff] %v8776
  %8928 = vst [vmem:[%s8894 + $0x108] sm:$0xff] %v8777
  %8929 = vst [vmem:[%s8894 + $0x110] sm:$0xff] %v8778
  %8930 = vst [vmem:[%s8894 + $0x118] sm:$0xff] %v8779
  %8931 = vst [vmem:[%s8894 + $0x120] sm:$0xff] %v8780
  %8932 = vst [vmem:[%s8894 + $0x128] sm:$0xff] %v8781
  %8933 = vst [vmem:[%s8894 + $0x130] sm:$0xff] %v8782
  %8934 = vst [vmem:[%s8894 + $0x138] sm:$0xff] %v8783
  %8935 = vst [vmem:[%s8894 + $0x140] sm:$0xff] %v8784
  %8936 = vst [vmem:[%s8894 + $0x148] sm:$0xff] %v8785
  %8937 = vst [vmem:[%s8894 + $0x150] sm:$0xff] %v8786
  %8938 = vst [vmem:[%s8894 + $0x158] sm:$0xff] %v8787
  %8939 = vst [vmem:[%s8894 + $0x160] sm:$0xff] %v8788
  %8940 = vst [vmem:[%s8894 + $0x168] sm:$0xff] %v8789
  %8941 = vst [vmem:[%s8894 + $0x170] sm:$0xff] %v8790
  %8942 = vst [vmem:[%s8894 + $0x178] sm:$0xff] %v8791
  %8943 = vst [vmem:[%s8894 + $0x180] sm:$0xff] %v8792
  %8944 = vst [vmem:[%s8894 + $0x188] sm:$0xff] %v8793
  %8945 = vst [vmem:[%s8894 + $0x190] sm:$0xff] %v8794
  %8946 = vst [vmem:[%s8894 + $0x198] sm:$0xff] %v8795
  %8947 = vst [vmem:[%s8894 + $0x1a0] sm:$0xff] %v8796
  %8948 = vst [vmem:[%s8894 + $0x1a8] sm:$0xff] %v8797
  %8949 = vst [vmem:[%s8894 + $0x1b0] sm:$0xff] %v8798
  %8950 = vst [vmem:[%s8894 + $0x1b8] sm:$0xff] %v8799
  %8951 = vst [vmem:[%s8894 + $0x1c0] sm:$0xff] %v8800
  %8952 = vst [vmem:[%s8894 + $0x1c8] sm:$0xff] %v8801
  %8953 = vst [vmem:[%s8894 + $0x1d0] sm:$0xff] %v8802
  %8954 = vst [vmem:[%s8894 + $0x1d8] sm:$0xff] %v8803
  %8955 = vst [vmem:[%s8894 + $0x1e0] sm:$0xff] %v8804
  %8956 = vst [vmem:[%s8894 + $0x1e8] sm:$0xff] %v8805
  %8957 = vst [vmem:[%s8894 + $0x1f0] sm:$0xff] %v8806
  %8958 = vst [vmem:[%s8894 + $0x1f8] sm:$0xff] %v8807
  %8959 = vst [vmem:[%s8894 + $0x200] sm:$0xff] %v8808
  %8960 = vst [vmem:[%s8894 + $0x208] sm:$0xff] %v8809
  %8961 = vst [vmem:[%s8894 + $0x210] sm:$0xff] %v8810
  %8962 = vst [vmem:[%s8894 + $0x218] sm:$0xff] %v8811
  %8963 = vst [vmem:[%s8894 + $0x220] sm:$0xff] %v8812
  %8964 = vst [vmem:[%s8894 + $0x228] sm:$0xff] %v8813
  %8965 = vst [vmem:[%s8894 + $0x230] sm:$0xff] %v8814
  %8966 = vst [vmem:[%s8894 + $0x238] sm:$0xff] %v8815
  %8967 = vst [vmem:[%s8894 + $0x240] sm:$0xff] %v8816
  %8968 = vst [vmem:[%s8894 + $0x248] sm:$0xff] %v8817
  %8969 = vst [vmem:[%s8894 + $0x250] sm:$0xff] %v8818
  %8970 = vst [vmem:[%s8894 + $0x258] sm:$0xff] %v8819
  %8971 = vst [vmem:[%s8894 + $0x260] sm:$0xff] %v8820
  %8972 = vst [vmem:[%s8894 + $0x268] sm:$0xff] %v8821
  %8973 = vst [vmem:[%s8894 + $0x270] sm:$0xff] %v8822
  %8974 = vst [vmem:[%s8894 + $0x278] sm:$0xff] %v8823
  %8975 = vst [vmem:[%s8894 + $0x280] sm:$0xff] %v8824
  %8976 = vst [vmem:[%s8894 + $0x288] sm:$0xff] %v8825
  %8977 = vst [vmem:[%s8894 + $0x290] sm:$0xff] %v8826
  %8978 = vst [vmem:[%s8894 + $0x298] sm:$0xff] %v8827
  %8979 = vst [vmem:[%s8894 + $0x2a0] sm:$0xff] %v8828
  %8980 = vst [vmem:[%s8894 + $0x2a8] sm:$0xff] %v8829
  %8981 = vst [vmem:[%s8894 + $0x2b0] sm:$0xff] %v8830
  %8982 = vst [vmem:[%s8894 + $0x2b8] sm:$0xff] %v8831
  %8983 = vst [vmem:[%s8894 + $0x2c0] sm:$0xff] %v8832
  %8984 = vst [vmem:[%s8894 + $0x2c8] sm:$0xff] %v8833
  %8985 = vst [vmem:[%s8894 + $0x2d0] sm:$0xff] %v8834
  %8986 = vst [vmem:[%s8894 + $0x2d8] sm:$0xff] %v8835
  %8987 = vst [vmem:[%s8894 + $0x2e0] sm:$0xff] %v8836
  %8988 = vst [vmem:[%s8894 + $0x2e8] sm:$0xff] %v8837
  %8989 = vst [vmem:[%s8894 + $0x2f0] sm:$0xff] %v8838
  %8990 = vst [vmem:[%s8894 + $0x2f8] sm:$0xff] %v8839
  %8991 = vst [vmem:[%s8894 + $0x300] sm:$0xff] %v8840
  %8992 = vst [vmem:[%s8894 + $0x308] sm:$0xff] %v8841
  %8993 = vst [vmem:[%s8894 + $0x310] sm:$0xff] %v8842
  %8994 = vst [vmem:[%s8894 + $0x318] sm:$0xff] %v8843
  %8995 = vst [vmem:[%s8894 + $0x320] sm:$0xff] %v8844
  %8996 = vst [vmem:[%s8894 + $0x328] sm:$0xff] %v8845
  %8997 = vst [vmem:[%s8894 + $0x330] sm:$0xff] %v8846
  %8998 = vst [vmem:[%s8894 + $0x338] sm:$0xff] %v8847
  %8999 = vst [vmem:[%s8894 + $0x340] sm:$0xff] %v8848
  %9000 = vst [vmem:[%s8894 + $0x348] sm:$0xff] %v8849
  %9001 = vst [vmem:[%s8894 + $0x350] sm:$0xff] %v8850
  %9002 = vst [vmem:[%s8894 + $0x358] sm:$0xff] %v8851
  %9003 = vst [vmem:[%s8894 + $0x360] sm:$0xff] %v8852
  %9004 = vst [vmem:[%s8894 + $0x368] sm:$0xff] %v8853
  %9005 = vst [vmem:[%s8894 + $0x370] sm:$0xff] %v8854
  %9006 = vst [vmem:[%s8894 + $0x378] sm:$0xff] %v8855
  %9007 = vst [vmem:[%s8894 + $0x380] sm:$0xff] %v8856
  %9008 = vst [vmem:[%s8894 + $0x388] sm:$0xff] %v8857
  %9009 = vst [vmem:[%s8894 + $0x390] sm:$0xff] %v8858
  %9010 = vst [vmem:[%s8894 + $0x398] sm:$0xff] %v8859
  %9011 = vst [vmem:[%s8894 + $0x3a0] sm:$0xff] %v8860
  %9012 = vst [vmem:[%s8894 + $0x3a8] sm:$0xff] %v8861
  %9013 = vst [vmem:[%s8894 + $0x3b0] sm:$0xff] %v8862
  %9014 = vst [vmem:[%s8894 + $0x3b8] sm:$0xff] %v8863
  %9015 = vst [vmem:[%s8894 + $0x3c0] sm:$0xff] %v8864
  %9016 = vst [vmem:[%s8894 + $0x3c8] sm:$0xff] %v8865
  %9017 = vst [vmem:[%s8894 + $0x3d0] sm:$0xff] %v8866
  %9018 = vst [vmem:[%s8894 + $0x3d8] sm:$0xff] %v8867
  %9019 = vst [vmem:[%s8894 + $0x3e0] sm:$0xff] %v8868
  %9020 = vst [vmem:[%s8894 + $0x3e8] sm:$0xff] %v8869
  %9021 = vst [vmem:[%s8894 + $0x3f0] sm:$0xff] %v8870
  %9022 = vst [vmem:[%s8894 + $0x3f8] sm:$0xff] %v8871
  %9023 = vst [vmem:[%s8894 + $0x400] sm:$0xff] %v8872
  %9024 = vst [vmem:[%s8894 + $0x408] sm:$0xff] %v8873
  %9025 = vst [vmem:[%s8894 + $0x410] sm:$0xff] %v8874
  %9026 = vst [vmem:[%s8894 + $0x418] sm:$0xff] %v8875
  %9027 = vst [vmem:[%s8894 + $0x420] sm:$0xff] %v8876
  %9028 = vst [vmem:[%s8894 + $0x428] sm:$0xff] %v8877
  %9029 = vst [vmem:[%s8894 + $0x430] sm:$0xff] %v8878
  %9030 = vst [vmem:[%s8894 + $0x438] sm:$0xff] %v8879
  %9031 = vst [vmem:[%s8894 + $0x440] sm:$0xff] %v8880
  %9032 = vst [vmem:[%s8894 + $0x448] sm:$0xff] %v8881
  %9033 = vst [vmem:[%s8894 + $0x450] sm:$0xff] %v8882
  %9034 = vst [vmem:[%s8894 + $0x458] sm:$0xff] %v8883
  %9035 = vst [vmem:[%s8894 + $0x460] sm:$0xff] %v8884
  %9036 = vst [vmem:[%s8894 + $0x468] sm:$0xff] %v8885
  %9037 = vst [vmem:[%s8894 + $0x470] sm:$0xff] %v8886
  %9038 = vst [vmem:[%s8894 + $0x478] sm:$0xff] %v8887
  %9039 = vst [vmem:[%s8894 + $0x480] sm:$0x1f] %v8888
  %9040 = vst [vmem:[%s8894 + $0x488] sm:$0x1f] %v8889
  %9041 = vst [vmem:[%s8894 + $0x490] sm:$0x1f] %v8890
  %9042 = vst [vmem:[%s8894 + $0x498] sm:$0x1f] %v8891
  %9043 = vst [vmem:[%s8894 + $0x4a0] sm:$0x1f] %v8892
  %9044 = vst [vmem:[%s8894 + $0x4a8] sm:$0x1f] %v8893
  // Predicated region
  $region14: #{up_to_encoder.1} parent=0 // pred_check
    _
  $region15: #{up_to_encoder.1} parent=0 // pred_check_branch
    %9046 = sbr.rel (0) target = $region17
  $region16: #{up_to_encoder.1} parent=0 // pred_region
    _
  $region17: #{up_to_encoder.1} parent=0 // pred_fallthru
    _
  // Predicated region
  $region18: #{up_to_encoder.1} parent=0 // pred_check
    _
  $region19: #{up_to_encoder.1} parent=0 // pred_check_branch
    %9048 = sbr.rel (0) target = $region21
  $region20: #{up_to_encoder.1} parent=0 // pred_region
    _
  $region21: #{up_to_encoder.1} parent=0 // pred_fallthru
    _

</llo_original>
